<compile_context>
chip_gen: v7x
topology: tpu7x:2x2x1
jax: 0.10.0
libtpu: 0.0.40
codegen_flags: <defaults>
</compile_context>

<pallas_src>
import functools

import jax
import jax.numpy as jnp
from jax.experimental import pallas as pl
from jax.experimental.pallas import tpu as pltpu

NEG_SLOPE = 0.01   # nn.LeakyReLU default negative slope
BN_EPS = 1e-5      # nn.BatchNorm2d default eps


def _resblock_kernel(x_ref, w1_ref, s1_ref, b1_ref, w2_ref, s2_ref, b2_ref,
                     o_ref, xpad_ref, ypad_ref, patch_ref, *, H, W, C, TH):
    """Fused ResBlock: o = x + act(bn2(conv2(act(bn1(conv1(x)))))).

    x_ref  : (H, W, C)        f32   input image (batch dim squeezed)
    w*_ref : (9*C, C)         bf16  3x3 conv weights, (ky, kx, cin)-major
    s*_ref : (1, C)           f32   fused BN scale  (gamma / sqrt(var + eps))
    b*_ref : (1, C)           f32   fused bias      ((conv_b - mean)*scale + beta)
    o_ref  : (H, W, C)        f32   output
    xpad_ref, ypad_ref : (H+2, W+2, C) bf16 scratch with zero halo
    patch_ref          : (TH, W, 9*C)  bf16 persistent im2col scratch
    """

    def zero_halo(pad_ref):
        # Only the 1-pixel halo is zeroed; the interior is fully overwritten
        # below, so zeroing it would be wasted (serialized) store traffic.
        pad_ref[pl.ds(0, 1), :, :] = jnp.zeros((1, W + 2, C), pad_ref.dtype)
        pad_ref[pl.ds(H + 1, 1), :, :] = jnp.zeros((1, W + 2, C), pad_ref.dtype)
        pad_ref[:, pl.ds(0, 1), :] = jnp.zeros((H + 2, 1, C), pad_ref.dtype)
        pad_ref[:, pl.ds(W + 1, 1), :] = jnp.zeros((H + 2, 1, C), pad_ref.dtype)

    zero_halo(xpad_ref)
    zero_halo(ypad_ref)
    # Single f32 -> bf16 cast of the whole input; the 9 taps below read bf16
    # directly (no per-tap re-casts).
    xpad_ref[pl.ds(1, H), pl.ds(1, W), :] = x_ref[...].astype(jnp.bfloat16)

    # Hoist weight / scale / bias loads out of the tile loops.
    w1 = w1_ref[...]
    w2 = w2_ref[...]
    s1 = s1_ref[...]
    b1 = b1_ref[...]
    s2 = s2_ref[...]
    b2 = b2_ref[...]

    def conv_tile(pad_ref, w_flat, scale, bias, r0, th):
        # im2col into the persistent bf16 patch scratch, then one MXU matmul
        # with M = th*W, K = 9*C, N = C (f32 accumulation).
        for ky in range(3):
            for kx in range(3):
                k = ky * 3 + kx
                patch_ref[pl.ds(0, th), :, pl.ds(k * C, C)] = (
                    pad_ref[pl.ds(r0 + ky, th), pl.ds(kx, W), :])
        patch = patch_ref[pl.ds(0, th), :, :].reshape(th * W, 9 * C)
        acc = jnp.dot(patch, w_flat, preferred_element_type=jnp.float32)
        y = acc * scale + bias                     # conv bias + BN folded in
        y = jnp.where(y > 0, y, NEG_SLOPE * y)     # LeakyReLU
        return y.reshape(th, W, C)

    # conv1: activation stays in VMEM (interior of ypad), never touches HBM.
    for r0 in range(0, H, TH):
        th = min(TH, H - r0)
        y1 = conv_tile(xpad_ref, w1, s1, b1, r0, th)
        ypad_ref[pl.ds(1 + r0, th), pl.ds(1, W), :] = y1.astype(jnp.bfloat16)

    # conv2 + residual add, streamed straight to the output block.
    for r0 in range(0, H, TH):
        th = min(TH, H - r0)
        y2 = conv_tile(ypad_ref, w2, s2, b2, r0, th)
        o_ref[pl.ds(r0, th), :, :] = x_ref[pl.ds(r0, th), :, :] + y2


def resblock_forward(x_nchw, params):
    """ResBlock.forward: NCHW in / NCHW out (PyTorch convention)."""
    x = jnp.transpose(x_nchw, (0, 2, 3, 1)).astype(jnp.float32)   # -> NHWC
    N, H, W, C = x.shape
    TH = max(1, min(H, 512 // W))    # target M ~= 512 rows per MXU matmul

    w1 = params["w1"].reshape(9 * C, C).astype(jnp.bfloat16)
    w2 = params["w2"].reshape(9 * C, C).astype(jnp.bfloat16)
    s1 = params["s1"].reshape(1, C)
    b1 = params["b1"].reshape(1, C)
    s2 = params["s2"].reshape(1, C)
    b2 = params["b2"].reshape(1, C)

    kernel = functools.partial(_resblock_kernel, H=H, W=W, C=C, TH=TH)

    img_spec = pl.BlockSpec((None, H, W, C), lambda n: (n, 0, 0, 0))
    rep2 = lambda n: (0, 0)    # replicated params (weights / scale / bias)

    # Explicit VMEM budget (double-buffered blocks + scratch), with headroom;
    # clamped so it is safe on every generation (v7x physical VMEM = 64 MiB).
    vmem_bytes = (
        4 * H * W * C * 4                       # x + out blocks (f32, 2 bufs each)
        + 2 * 2 * (9 * C * C) * 2               # w1 + w2 (bf16, 2 bufs each)
        + 2 * (H + 2) * (W + 2) * C * 2         # xpad + ypad scratch (bf16)
        + TH * W * 9 * C * 2                    # im2col patch scratch (bf16)
    )
    vmem_limit = int(min(64 * 1024 * 1024, max(16 * 1024 * 1024, 2 * vmem_bytes)))

    out = pl.pallas_call(
        kernel,
        out_shape=jax.ShapeDtypeStruct((N, H, W, C), jnp.float32),
        grid=(N,),
        in_specs=[
            img_spec,                                   # x
            pl.BlockSpec((9 * C, C), rep2),             # w1 (im2col layout)
            pl.BlockSpec((1, C), rep2),                 # s1
            pl.BlockSpec((1, C), rep2),                 # b1
            pl.BlockSpec((9 * C, C), rep2),             # w2
            pl.BlockSpec((1, C), rep2),                 # s2
            pl.BlockSpec((1, C), rep2),                 # b2
        ],
        out_specs=pl.BlockSpec((None, H, W, C), lambda n: (n, 0, 0, 0)),
        scratch_shapes=[
            pltpu.VMEM((H + 2, W + 2, C), jnp.bfloat16),   # padded input
            pltpu.VMEM((H + 2, W + 2, C), jnp.bfloat16),   # padded conv1 output
            pltpu.VMEM((TH, W, 9 * C), jnp.bfloat16),      # im2col patch
        ],
        compiler_params=pltpu.CompilerParams(
            dimension_semantics=("parallel",),             # 2 TCs on v7x
            vmem_limit_bytes=vmem_limit),
    )(x, w1, s1, b1, w2, s2, b2)
    return jnp.transpose(out, (0, 3, 1, 2))                # -> NCHW


def make_conv_bn_params(key, c):
    """Deterministic synthetic Conv+BN params, BN (eval-mode) folded."""
    k = jax.random.split(key, 6)
    w = jax.random.normal(k[0], (3, 3, c, c), jnp.float32) / jnp.sqrt(9.0 * c)
    conv_b = 0.01 * jax.random.normal(k[1], (c,), jnp.float32)
    gamma = 1.0 + 0.1 * jax.random.normal(k[2], (c,), jnp.float32)
    beta = 0.1 * jax.random.normal(k[3], (c,), jnp.float32)
    mean = 0.1 * jax.random.normal(k[4], (c,), jnp.float32)
    var = jax.random.uniform(k[5], (c,), jnp.float32, minval=0.5, maxval=1.5)
    scale = gamma / jnp.sqrt(var + BN_EPS)
    bias = (conv_b - mean) * scale + beta
    return w, scale, bias


# ------------------------- pure-JAX reference -------------------------------
def _conv_bn_lrelu_ref(x_nhwc, w_hwio, scale, bias):
    y = jax.lax.conv_general_dilated(
        x_nhwc, w_hwio, window_strides=(1, 1), padding=((1, 1), (1, 1)),
        dimension_numbers=("NHWC", "HWIO", "NHWC"),
        precision=jax.lax.Precision.HIGHEST)
    y = y * scale + bias
    return jnp.where(y > 0, y, NEG_SLOPE * y)


def resblock_ref(x_nchw, params):
    x = jnp.transpose(x_nchw, (0, 2, 3, 1)).astype(jnp.float32)
    y = _conv_bn_lrelu_ref(x, params["w1"], params["s1"], params["b1"])
    y = _conv_bn_lrelu_ref(y, params["w2"], params["s2"], params["b2"])
    return jnp.transpose(x + y, (0, 3, 1, 2))


if __name__ == "__main__":
    key = jax.random.PRNGKey(0)
    key, kx, k1, k2 = jax.random.split(key, 4)

    batch, n_ch, hw = 2, 128, 16          # ResBlock(n=128), 16x16 images
    w1, s1, b1 = make_conv_bn_params(k1, n_ch)
    w2, s2, b2 = make_conv_bn_params(k2, n_ch)
    params = {"w1": w1, "s1": s1, "b1": b1, "w2": w2, "s2": s2, "b2": b2}

    x = jax.random.normal(kx, (batch, n_ch, hw, hw), jnp.float32)   # NCHW

    out = jax.block_until_ready(resblock_forward(x, params))
    assert out.shape == (batch, n_ch, hw, hw), out.shape
    assert bool(jnp.all(jnp.isfinite(out)))

    ref = resblock_ref(x, params)
    abs_err = float(jnp.max(jnp.abs(out - ref)))
    rel_err = abs_err / (float(jnp.max(jnp.abs(ref))) + 1e-12)
    assert abs_err < 1e-1, f"max abs err too large: {abs_err}"
    assert rel_err < 2e-2, f"relative err too large: {rel_err} (abs {abs_err})"

    print("KERNEL_OK")
</pallas_src>

<mosaic_0001>
module attributes {stable_mosaic.version = 11 : i64} {
  func.func @_resblock_kernel(%arg0: i32, %arg1: memref<1x16x16x128xf32, #tpu.memory_space<vmem>>, %arg2: memref<1152x128xbf16, #tpu.memory_space<vmem>>, %arg3: memref<1x128xf32, #tpu.memory_space<vmem>>, %arg4: memref<1x128xf32, #tpu.memory_space<vmem>>, %arg5: memref<1152x128xbf16, #tpu.memory_space<vmem>>, %arg6: memref<1x128xf32, #tpu.memory_space<vmem>>, %arg7: memref<1x128xf32, #tpu.memory_space<vmem>>, %arg8: memref<1x16x16x128xf32, #tpu.memory_space<vmem>>, %arg9: memref<18x18x128xbf16, #tpu.memory_space<vmem>>, %arg10: memref<18x18x128xbf16, #tpu.memory_space<vmem>>, %arg11: memref<16x16x1152xbf16, #tpu.memory_space<vmem>>) attributes {dimension_semantics = [#tpu.dimension_semantics<parallel>], iteration_bounds = array<i64: 2>, scalar_prefetch = 0 : i64, scratch_operands = 3 : i64, tpu.core_type = #tpu.core_type<tc>, window_params = [{transform_indices = @transform_0, window_bounds = array<i64: 1, 16, 16, 128>}, {pipeline_mode = #tpu.pipeline_mode<synchronous>, transform_indices = @transform_1, window_bounds = array<i64: 1152, 128>}, {pipeline_mode = #tpu.pipeline_mode<synchronous>, transform_indices = @transform_2, window_bounds = array<i64: 1, 128>}, {pipeline_mode = #tpu.pipeline_mode<synchronous>, transform_indices = @transform_3, window_bounds = array<i64: 1, 128>}, {pipeline_mode = #tpu.pipeline_mode<synchronous>, transform_indices = @transform_4, window_bounds = array<i64: 1152, 128>}, {pipeline_mode = #tpu.pipeline_mode<synchronous>, transform_indices = @transform_5, window_bounds = array<i64: 1, 128>}, {pipeline_mode = #tpu.pipeline_mode<synchronous>, transform_indices = @transform_6, window_bounds = array<i64: 1, 128>}, {transform_indices = @transform_7, window_bounds = array<i64: 1, 16, 16, 128>}]} {
    %cst = arith.constant 0.000000e+00 : bf16
    %0 = vector.broadcast %cst : bf16 to vector<1x18x128xbf16>
    %c0 = arith.constant 0 : index
    %c0_0 = arith.constant 0 : index
    %c0_1 = arith.constant 0 : index
    %1 = vector.load %arg9[%c0, %c0_0, %c0_1] : memref<18x18x128xbf16, #tpu.memory_space<vmem>>, vector<1x18x128xbf16>
    tpu.vector_store %arg9[%c0, %c0_0, %c0_1], %0 {strides = array<i32>} : memref<18x18x128xbf16, #tpu.memory_space<vmem>>, vector<1x18x128xbf16>,
    %cst_2 = arith.constant 0.000000e+00 : bf16
    %2 = vector.broadcast %cst_2 : bf16 to vector<1x18x128xbf16>
    %c17 = arith.constant 17 : index
    %c0_3 = arith.constant 0 : index
    %c0_4 = arith.constant 0 : index
    %3 = vector.load %arg9[%c17, %c0_3, %c0_4] : memref<18x18x128xbf16, #tpu.memory_space<vmem>>, vector<1x18x128xbf16>
    tpu.vector_store %arg9[%c17, %c0_3, %c0_4], %2 {strides = array<i32>} : memref<18x18x128xbf16, #tpu.memory_space<vmem>>, vector<1x18x128xbf16>,
    %cst_5 = arith.constant 0.000000e+00 : bf16
    %4 = vector.broadcast %cst_5 : bf16 to vector<18x1x128xbf16>
    %c0_6 = arith.constant 0 : index
    %c0_7 = arith.constant 0 : index
    %c0_8 = arith.constant 0 : index
    %5 = vector.load %arg9[%c0_6, %c0_7, %c0_8] : memref<18x18x128xbf16, #tpu.memory_space<vmem>>, vector<18x1x128xbf16>
    tpu.vector_store %arg9[%c0_6, %c0_7, %c0_8], %4 {strides = array<i32>} : memref<18x18x128xbf16, #tpu.memory_space<vmem>>, vector<18x1x128xbf16>,
    %cst_9 = arith.constant 0.000000e+00 : bf16
    %6 = vector.broadcast %cst_9 : bf16 to vector<18x1x128xbf16>
    %c0_10 = arith.constant 0 : index
    %c17_11 = arith.constant 17 : index
    %c0_12 = arith.constant 0 : index
    %7 = vector.load %arg9[%c0_10, %c17_11, %c0_12] : memref<18x18x128xbf16, #tpu.memory_space<vmem>>, vector<18x1x128xbf16>
    tpu.vector_store %arg9[%c0_10, %c17_11, %c0_12], %6 {strides = array<i32>} : memref<18x18x128xbf16, #tpu.memory_space<vmem>>, vector<18x1x128xbf16>,
    %cst_13 = arith.constant 0.000000e+00 : bf16
    %8 = vector.broadcast %cst_13 : bf16 to vector<1x18x128xbf16>
    %c0_14 = arith.constant 0 : index
    %c0_15 = arith.constant 0 : index
    %c0_16 = arith.constant 0 : index
    %9 = vector.load %arg10[%c0_14, %c0_15, %c0_16] : memref<18x18x128xbf16, #tpu.memory_space<vmem>>, vector<1x18x128xbf16>
    tpu.vector_store %arg10[%c0_14, %c0_15, %c0_16], %8 {strides = array<i32>} : memref<18x18x128xbf16, #tpu.memory_space<vmem>>, vector<1x18x128xbf16>,
    %cst_17 = arith.constant 0.000000e+00 : bf16
    %10 = vector.broadcast %cst_17 : bf16 to vector<1x18x128xbf16>
    %c17_18 = arith.constant 17 : index
    %c0_19 = arith.constant 0 : index
    %c0_20 = arith.constant 0 : index
    %11 = vector.load %arg10[%c17_18, %c0_19, %c0_20] : memref<18x18x128xbf16, #tpu.memory_space<vmem>>, vector<1x18x128xbf16>
    tpu.vector_store %arg10[%c17_18, %c0_19, %c0_20], %10 {strides = array<i32>} : memref<18x18x128xbf16, #tpu.memory_space<vmem>>, vector<1x18x128xbf16>,
    %cst_21 = arith.constant 0.000000e+00 : bf16
    %12 = vector.broadcast %cst_21 : bf16 to vector<18x1x128xbf16>
    %c0_22 = arith.constant 0 : index
    %c0_23 = arith.constant 0 : index
    %c0_24 = arith.constant 0 : index
    %13 = vector.load %arg10[%c0_22, %c0_23, %c0_24] : memref<18x18x128xbf16, #tpu.memory_space<vmem>>, vector<18x1x128xbf16>
    tpu.vector_store %arg10[%c0_22, %c0_23, %c0_24], %12 {strides = array<i32>} : memref<18x18x128xbf16, #tpu.memory_space<vmem>>, vector<18x1x128xbf16>,
    %cst_25 = arith.constant 0.000000e+00 : bf16
    %14 = vector.broadcast %cst_25 : bf16 to vector<18x1x128xbf16>
    %c0_26 = arith.constant 0 : index
    %c17_27 = arith.constant 17 : index
    %c0_28 = arith.constant 0 : index
    %15 = vector.load %arg10[%c0_26, %c17_27, %c0_28] : memref<18x18x128xbf16, #tpu.memory_space<vmem>>, vector<18x1x128xbf16>
    tpu.vector_store %arg10[%c0_26, %c17_27, %c0_28], %14 {strides = array<i32>} : memref<18x18x128xbf16, #tpu.memory_space<vmem>>, vector<18x1x128xbf16>,
    %c0_29 = arith.constant 0 : index
    %c0_30 = arith.constant 0 : index
    %c0_31 = arith.constant 0 : index
    %c0_32 = arith.constant 0 : index
    %16 = vector.load %arg1[%c0_29, %c0_30, %c0_31, %c0_32] : memref<1x16x16x128xf32, #tpu.memory_space<vmem>>, vector<1x16x16x128xf32>
    %17 = vector.shape_cast %16 : vector<1x16x16x128xf32> to vector<16x16x128xf32>
    %18 = arith.truncf %17 : vector<16x16x128xf32> to vector<16x16x128xbf16>
    %c1 = arith.constant 1 : index
    %c1_33 = arith.constant 1 : index
    %c0_34 = arith.constant 0 : index
    %19 = vector.load %arg9[%c1, %c1_33, %c0_34] : memref<18x18x128xbf16, #tpu.memory_space<vmem>>, vector<16x16x128xbf16>
    tpu.vector_store %arg9[%c1, %c1_33, %c0_34], %18 {strides = array<i32>} : memref<18x18x128xbf16, #tpu.memory_space<vmem>>, vector<16x16x128xbf16>,
    %c0_35 = arith.constant 0 : index
    %c0_36 = arith.constant 0 : index
    %20 = vector.load %arg2[%c0_35, %c0_36] : memref<1152x128xbf16, #tpu.memory_space<vmem>>, vector<1152x128xbf16>
    %c0_37 = arith.constant 0 : index
    %c0_38 = arith.constant 0 : index
    %21 = vector.load %arg5[%c0_37, %c0_38] : memref<1152x128xbf16, #tpu.memory_space<vmem>>, vector<1152x128xbf16>
    %c0_39 = arith.constant 0 : index
    %c0_40 = arith.constant 0 : index
    %22 = vector.load %arg3[%c0_39, %c0_40] : memref<1x128xf32, #tpu.memory_space<vmem>>, vector<1x128xf32>
    %c0_41 = arith.constant 0 : index
    %c0_42 = arith.constant 0 : index
    %23 = vector.load %arg4[%c0_41, %c0_42] : memref<1x128xf32, #tpu.memory_space<vmem>>, vector<1x128xf32>
    %c0_43 = arith.constant 0 : index
    %c0_44 = arith.constant 0 : index
    %24 = vector.load %arg6[%c0_43, %c0_44] : memref<1x128xf32, #tpu.memory_space<vmem>>, vector<1x128xf32>
    %c0_45 = arith.constant 0 : index
    %c0_46 = arith.constant 0 : index
    %25 = vector.load %arg7[%c0_45, %c0_46] : memref<1x128xf32, #tpu.memory_space<vmem>>, vector<1x128xf32>
    %c0_47 = arith.constant 0 : index
    %c0_48 = arith.constant 0 : index
    %c0_49 = arith.constant 0 : index
    %26 = vector.load %arg9[%c0_47, %c0_48, %c0_49] : memref<18x18x128xbf16, #tpu.memory_space<vmem>>, vector<16x16x128xbf16>
    %c0_50 = arith.constant 0 : index
    %c0_51 = arith.constant 0 : index
    %c0_52 = arith.constant 0 : index
    %27 = vector.load %arg11[%c0_50, %c0_51, %c0_52] : memref<16x16x1152xbf16, #tpu.memory_space<vmem>>, vector<16x16x128xbf16>
    tpu.vector_store %arg11[%c0_50, %c0_51, %c0_52], %26 {strides = array<i32>} : memref<16x16x1152xbf16, #tpu.memory_space<vmem>>, vector<16x16x128xbf16>,
    %c0_53 = arith.constant 0 : index
    %c1_54 = arith.constant 1 : index
    %c0_55 = arith.constant 0 : index
    %28 = vector.load %arg9[%c0_53, %c1_54, %c0_55] : memref<18x18x128xbf16, #tpu.memory_space<vmem>>, vector<16x16x128xbf16>
    %c0_56 = arith.constant 0 : index
    %c0_57 = arith.constant 0 : index
    %c128 = arith.constant 128 : index
    %29 = vector.load %arg11[%c0_56, %c0_57, %c128] : memref<16x16x1152xbf16, #tpu.memory_space<vmem>>, vector<16x16x128xbf16>
    tpu.vector_store %arg11[%c0_56, %c0_57, %c128], %28 {strides = array<i32>} : memref<16x16x1152xbf16, #tpu.memory_space<vmem>>, vector<16x16x128xbf16>,
    %c0_58 = arith.constant 0 : index
    %c2 = arith.constant 2 : index
    %c0_59 = arith.constant 0 : index
    %30 = vector.load %arg9[%c0_58, %c2, %c0_59] : memref<18x18x128xbf16, #tpu.memory_space<vmem>>, vector<16x16x128xbf16>
    %c0_60 = arith.constant 0 : index
    %c0_61 = arith.constant 0 : index
    %c256 = arith.constant 256 : index
    %31 = vector.load %arg11[%c0_60, %c0_61, %c256] : memref<16x16x1152xbf16, #tpu.memory_space<vmem>>, vector<16x16x128xbf16>
    tpu.vector_store %arg11[%c0_60, %c0_61, %c256], %30 {strides = array<i32>} : memref<16x16x1152xbf16, #tpu.memory_space<vmem>>, vector<16x16x128xbf16>,
    %c1_62 = arith.constant 1 : index
    %c0_63 = arith.constant 0 : index
    %c0_64 = arith.constant 0 : index
    %32 = vector.load %arg9[%c1_62, %c0_63, %c0_64] : memref<18x18x128xbf16, #tpu.memory_space<vmem>>, vector<16x16x128xbf16>
    %c0_65 = arith.constant 0 : index
    %c0_66 = arith.constant 0 : index
    %c384 = arith.constant 384 : index
    %33 = vector.load %arg11[%c0_65, %c0_66, %c384] : memref<16x16x1152xbf16, #tpu.memory_space<vmem>>, vector<16x16x128xbf16>
    tpu.vector_store %arg11[%c0_65, %c0_66, %c384], %32 {strides = array<i32>} : memref<16x16x1152xbf16, #tpu.memory_space<vmem>>, vector<16x16x128xbf16>,
    %c1_67 = arith.constant 1 : index
    %c1_68 = arith.constant 1 : index
    %c0_69 = arith.constant 0 : index
    %34 = vector.load %arg9[%c1_67, %c1_68, %c0_69] : memref<18x18x128xbf16, #tpu.memory_space<vmem>>, vector<16x16x128xbf16>
    %c0_70 = arith.constant 0 : index
    %c0_71 = arith.constant 0 : index
    %c512 = arith.constant 512 : index
    %35 = vector.load %arg11[%c0_70, %c0_71, %c512] : memref<16x16x1152xbf16, #tpu.memory_space<vmem>>, vector<16x16x128xbf16>
    tpu.vector_store %arg11[%c0_70, %c0_71, %c512], %34 {strides = array<i32>} : memref<16x16x1152xbf16, #tpu.memory_space<vmem>>, vector<16x16x128xbf16>,
    %c1_72 = arith.constant 1 : index
    %c2_73 = arith.constant 2 : index
    %c0_74 = arith.constant 0 : index
    %36 = vector.load %arg9[%c1_72, %c2_73, %c0_74] : memref<18x18x128xbf16, #tpu.memory_space<vmem>>, vector<16x16x128xbf16>
    %c0_75 = arith.constant 0 : index
    %c0_76 = arith.constant 0 : index
    %c640 = arith.constant 640 : index
    %37 = vector.load %arg11[%c0_75, %c0_76, %c640] : memref<16x16x1152xbf16, #tpu.memory_space<vmem>>, vector<16x16x128xbf16>
    tpu.vector_store %arg11[%c0_75, %c0_76, %c640], %36 {strides = array<i32>} : memref<16x16x1152xbf16, #tpu.memory_space<vmem>>, vector<16x16x128xbf16>,
    %c2_77 = arith.constant 2 : index
    %c0_78 = arith.constant 0 : index
    %c0_79 = arith.constant 0 : index
    %38 = vector.load %arg9[%c2_77, %c0_78, %c0_79] : memref<18x18x128xbf16, #tpu.memory_space<vmem>>, vector<16x16x128xbf16>
    %c0_80 = arith.constant 0 : index
    %c0_81 = arith.constant 0 : index
    %c768 = arith.constant 768 : index
    %39 = vector.load %arg11[%c0_80, %c0_81, %c768] : memref<16x16x1152xbf16, #tpu.memory_space<vmem>>, vector<16x16x128xbf16>
    tpu.vector_store %arg11[%c0_80, %c0_81, %c768], %38 {strides = array<i32>} : memref<16x16x1152xbf16, #tpu.memory_space<vmem>>, vector<16x16x128xbf16>,
    %c2_82 = arith.constant 2 : index
    %c1_83 = arith.constant 1 : index
    %c0_84 = arith.constant 0 : index
    %40 = vector.load %arg9[%c2_82, %c1_83, %c0_84] : memref<18x18x128xbf16, #tpu.memory_space<vmem>>, vector<16x16x128xbf16>
    %c0_85 = arith.constant 0 : index
    %c0_86 = arith.constant 0 : index
    %c896 = arith.constant 896 : index
    %41 = vector.load %arg11[%c0_85, %c0_86, %c896] : memref<16x16x1152xbf16, #tpu.memory_space<vmem>>, vector<16x16x128xbf16>
    tpu.vector_store %arg11[%c0_85, %c0_86, %c896], %40 {strides = array<i32>} : memref<16x16x1152xbf16, #tpu.memory_space<vmem>>, vector<16x16x128xbf16>,
    %c2_87 = arith.constant 2 : index
    %c2_88 = arith.constant 2 : index
    %c0_89 = arith.constant 0 : index
    %42 = vector.load %arg9[%c2_87, %c2_88, %c0_89] : memref<18x18x128xbf16, #tpu.memory_space<vmem>>, vector<16x16x128xbf16>
    %c0_90 = arith.constant 0 : index
    %c0_91 = arith.constant 0 : index
    %c1024 = arith.constant 1024 : index
    %43 = vector.load %arg11[%c0_90, %c0_91, %c1024] : memref<16x16x1152xbf16, #tpu.memory_space<vmem>>, vector<16x16x128xbf16>
    tpu.vector_store %arg11[%c0_90, %c0_91, %c1024], %42 {strides = array<i32>} : memref<16x16x1152xbf16, #tpu.memory_space<vmem>>, vector<16x16x128xbf16>,
    %c0_92 = arith.constant 0 : index
    %c0_93 = arith.constant 0 : index
    %c0_94 = arith.constant 0 : index
    %44 = vector.load %arg11[%c0_92, %c0_93, %c0_94] : memref<16x16x1152xbf16, #tpu.memory_space<vmem>>, vector<16x16x1152xbf16>
    %45 = vector.shape_cast %44 : vector<16x16x1152xbf16> to vector<256x1152xbf16>
    %cst_95 = arith.constant dense<0.000000e+00> : vector<256x128xf32>
    %46 = tpu.matmul %45, %20, %cst_95 {dimension_numbers = #tpu.dot_dimension_numbers<[1], [0], [0], [1], [0, 0, 1, 1], [], []>} : vector<256x1152xbf16>, vector<1152x128xbf16>, vector<256x128xf32> -> vector<256x128xf32>
    %47 = vector.broadcast %22 : vector<1x128xf32> to vector<256x128xf32>
    %48 = arith.mulf %46, %47 : vector<256x128xf32>
    %49 = vector.broadcast %23 : vector<1x128xf32> to vector<256x128xf32>
    %50 = arith.addf %48, %49 : vector<256x128xf32>
    %cst_96 = arith.constant 0.000000e+00 : f32
    %51 = vector.broadcast %cst_96 : f32 to vector<256x128xf32>
    %52 = arith.cmpf ogt, %50, %51 : vector<256x128xf32>
    %cst_97 = arith.constant 0.00999999977 : f32
    %53 = vector.broadcast %cst_97 : f32 to vector<256x128xf32>
    %54 = arith.mulf %53, %50 : vector<256x128xf32>
    %55 = arith.select %52, %50, %54 : vector<256x128xi1>, vector<256x128xf32>
    %56 = vector.shape_cast %55 : vector<256x128xf32> to vector<16x16x128xf32>
    %57 = arith.truncf %56 : vector<16x16x128xf32> to vector<16x16x128xbf16>
    %c1_98 = arith.constant 1 : index
    %c1_99 = arith.constant 1 : index
    %c0_100 = arith.constant 0 : index
    %58 = vector.load %arg10[%c1_98, %c1_99, %c0_100] : memref<18x18x128xbf16, #tpu.memory_space<vmem>>, vector<16x16x128xbf16>
    tpu.vector_store %arg10[%c1_98, %c1_99, %c0_100], %57 {strides = array<i32>} : memref<18x18x128xbf16, #tpu.memory_space<vmem>>, vector<16x16x128xbf16>,
    %c0_101 = arith.constant 0 : index
    %c0_102 = arith.constant 0 : index
    %c0_103 = arith.constant 0 : index
    %59 = vector.load %arg10[%c0_101, %c0_102, %c0_103] : memref<18x18x128xbf16, #tpu.memory_space<vmem>>, vector<16x16x128xbf16>
    %c0_104 = arith.constant 0 : index
    %c0_105 = arith.constant 0 : index
    %c0_106 = arith.constant 0 : index
    %60 = vector.load %arg11[%c0_104, %c0_105, %c0_106] : memref<16x16x1152xbf16, #tpu.memory_space<vmem>>, vector<16x16x128xbf16>
    tpu.vector_store %arg11[%c0_104, %c0_105, %c0_106], %59 {strides = array<i32>} : memref<16x16x1152xbf16, #tpu.memory_space<vmem>>, vector<16x16x128xbf16>,
    %c0_107 = arith.constant 0 : index
    %c1_108 = arith.constant 1 : index
    %c0_109 = arith.constant 0 : index
    %61 = vector.load %arg10[%c0_107, %c1_108, %c0_109] : memref<18x18x128xbf16, #tpu.memory_space<vmem>>, vector<16x16x128xbf16>
    %c0_110 = arith.constant 0 : index
    %c0_111 = arith.constant 0 : index
    %c128_112 = arith.constant 128 : index
    %62 = vector.load %arg11[%c0_110, %c0_111, %c128_112] : memref<16x16x1152xbf16, #tpu.memory_space<vmem>>, vector<16x16x128xbf16>
    tpu.vector_store %arg11[%c0_110, %c0_111, %c128_112], %61 {strides = array<i32>} : memref<16x16x1152xbf16, #tpu.memory_space<vmem>>, vector<16x16x128xbf16>,
    %c0_113 = arith.constant 0 : index
    %c2_114 = arith.constant 2 : index
    %c0_115 = arith.constant 0 : index
    %63 = vector.load %arg10[%c0_113, %c2_114, %c0_115] : memref<18x18x128xbf16, #tpu.memory_space<vmem>>, vector<16x16x128xbf16>
    %c0_116 = arith.constant 0 : index
    %c0_117 = arith.constant 0 : index
    %c256_118 = arith.constant 256 : index
    %64 = vector.load %arg11[%c0_116, %c0_117, %c256_118] : memref<16x16x1152xbf16, #tpu.memory_space<vmem>>, vector<16x16x128xbf16>
    tpu.vector_store %arg11[%c0_116, %c0_117, %c256_118], %63 {strides = array<i32>} : memref<16x16x1152xbf16, #tpu.memory_space<vmem>>, vector<16x16x128xbf16>,
    %c1_119 = arith.constant 1 : index
    %c0_120 = arith.constant 0 : index
    %c0_121 = arith.constant 0 : index
    %65 = vector.load %arg10[%c1_119, %c0_120, %c0_121] : memref<18x18x128xbf16, #tpu.memory_space<vmem>>, vector<16x16x128xbf16>
    %c0_122 = arith.constant 0 : index
    %c0_123 = arith.constant 0 : index
    %c384_124 = arith.constant 384 : index
    %66 = vector.load %arg11[%c0_122, %c0_123, %c384_124] : memref<16x16x1152xbf16, #tpu.memory_space<vmem>>, vector<16x16x128xbf16>
    tpu.vector_store %arg11[%c0_122, %c0_123, %c384_124], %65 {strides = array<i32>} : memref<16x16x1152xbf16, #tpu.memory_space<vmem>>, vector<16x16x128xbf16>,
    %c1_125 = arith.constant 1 : index
    %c1_126 = arith.constant 1 : index
    %c0_127 = arith.constant 0 : index
    %67 = vector.load %arg10[%c1_125, %c1_126, %c0_127] : memref<18x18x128xbf16, #tpu.memory_space<vmem>>, vector<16x16x128xbf16>
    %c0_128 = arith.constant 0 : index
    %c0_129 = arith.constant 0 : index
    %c512_130 = arith.constant 512 : index
    %68 = vector.load %arg11[%c0_128, %c0_129, %c512_130] : memref<16x16x1152xbf16, #tpu.memory_space<vmem>>, vector<16x16x128xbf16>
    tpu.vector_store %arg11[%c0_128, %c0_129, %c512_130], %67 {strides = array<i32>} : memref<16x16x1152xbf16, #tpu.memory_space<vmem>>, vector<16x16x128xbf16>,
    %c1_131 = arith.constant 1 : index
    %c2_132 = arith.constant 2 : index
    %c0_133 = arith.constant 0 : index
    %69 = vector.load %arg10[%c1_131, %c2_132, %c0_133] : memref<18x18x128xbf16, #tpu.memory_space<vmem>>, vector<16x16x128xbf16>
    %c0_134 = arith.constant 0 : index
    %c0_135 = arith.constant 0 : index
    %c640_136 = arith.constant 640 : index
    %70 = vector.load %arg11[%c0_134, %c0_135, %c640_136] : memref<16x16x1152xbf16, #tpu.memory_space<vmem>>, vector<16x16x128xbf16>
    tpu.vector_store %arg11[%c0_134, %c0_135, %c640_136], %69 {strides = array<i32>} : memref<16x16x1152xbf16, #tpu.memory_space<vmem>>, vector<16x16x128xbf16>,
    %c2_137 = arith.constant 2 : index
    %c0_138 = arith.constant 0 : index
    %c0_139 = arith.constant 0 : index
    %71 = vector.load %arg10[%c2_137, %c0_138, %c0_139] : memref<18x18x128xbf16, #tpu.memory_space<vmem>>, vector<16x16x128xbf16>
    %c0_140 = arith.constant 0 : index
    %c0_141 = arith.constant 0 : index
    %c768_142 = arith.constant 768 : index
    %72 = vector.load %arg11[%c0_140, %c0_141, %c768_142] : memref<16x16x1152xbf16, #tpu.memory_space<vmem>>, vector<16x16x128xbf16>
    tpu.vector_store %arg11[%c0_140, %c0_141, %c768_142], %71 {strides = array<i32>} : memref<16x16x1152xbf16, #tpu.memory_space<vmem>>, vector<16x16x128xbf16>,
    %c2_143 = arith.constant 2 : index
    %c1_144 = arith.constant 1 : index
    %c0_145 = arith.constant 0 : index
    %73 = vector.load %arg10[%c2_143, %c1_144, %c0_145] : memref<18x18x128xbf16, #tpu.memory_space<vmem>>, vector<16x16x128xbf16>
    %c0_146 = arith.constant 0 : index
    %c0_147 = arith.constant 0 : index
    %c896_148 = arith.constant 896 : index
    %74 = vector.load %arg11[%c0_146, %c0_147, %c896_148] : memref<16x16x1152xbf16, #tpu.memory_space<vmem>>, vector<16x16x128xbf16>
    tpu.vector_store %arg11[%c0_146, %c0_147, %c896_148], %73 {strides = array<i32>} : memref<16x16x1152xbf16, #tpu.memory_space<vmem>>, vector<16x16x128xbf16>,
    %c2_149 = arith.constant 2 : index
    %c2_150 = arith.constant 2 : index
    %c0_151 = arith.constant 0 : index
    %75 = vector.load %arg10[%c2_149, %c2_150, %c0_151] : memref<18x18x128xbf16, #tpu.memory_space<vmem>>, vector<16x16x128xbf16>
    %c0_152 = arith.constant 0 : index
    %c0_153 = arith.constant 0 : index
    %c1024_154 = arith.constant 1024 : index
    %76 = vector.load %arg11[%c0_152, %c0_153, %c1024_154] : memref<16x16x1152xbf16, #tpu.memory_space<vmem>>, vector<16x16x128xbf16>
    tpu.vector_store %arg11[%c0_152, %c0_153, %c1024_154], %75 {strides = array<i32>} : memref<16x16x1152xbf16, #tpu.memory_space<vmem>>, vector<16x16x128xbf16>,
    %c0_155 = arith.constant 0 : index
    %c0_156 = arith.constant 0 : index
    %c0_157 = arith.constant 0 : index
    %77 = vector.load %arg11[%c0_155, %c0_156, %c0_157] : memref<16x16x1152xbf16, #tpu.memory_space<vmem>>, vector<16x16x1152xbf16>
    %78 = vector.shape_cast %77 : vector<16x16x1152xbf16> to vector<256x1152xbf16>
    %cst_158 = arith.constant dense<0.000000e+00> : vector<256x128xf32>
    %79 = tpu.matmul %78, %21, %cst_158 {dimension_numbers = #tpu.dot_dimension_numbers<[1], [0], [0], [1], [0, 0, 1, 1], [], []>} : vector<256x1152xbf16>, vector<1152x128xbf16>, vector<256x128xf32> -> vector<256x128xf32>
    %80 = vector.broadcast %24 : vector<1x128xf32> to vector<256x128xf32>
    %81 = arith.mulf %79, %80 : vector<256x128xf32>
    %82 = vector.broadcast %25 : vector<1x128xf32> to vector<256x128xf32>
    %83 = arith.addf %81, %82 : vector<256x128xf32>
    %cst_159 = arith.constant 0.000000e+00 : f32
    %84 = vector.broadcast %cst_159 : f32 to vector<256x128xf32>
    %85 = arith.cmpf ogt, %83, %84 : vector<256x128xf32>
    %cst_160 = arith.constant 0.00999999977 : f32
    %86 = vector.broadcast %cst_160 : f32 to vector<256x128xf32>
    %87 = arith.mulf %86, %83 : vector<256x128xf32>
    %88 = arith.select %85, %83, %87 : vector<256x128xi1>, vector<256x128xf32>
    %89 = vector.shape_cast %88 : vector<256x128xf32> to vector<16x16x128xf32>
    %c0_161 = arith.constant 0 : index
    %c0_162 = arith.constant 0 : index
    %c0_163 = arith.constant 0 : index
    %c0_164 = arith.constant 0 : index
    %90 = vector.load %arg1[%c0_161, %c0_162, %c0_163, %c0_164] : memref<1x16x16x128xf32, #tpu.memory_space<vmem>>, vector<1x16x16x128xf32>
    %91 = vector.shape_cast %90 : vector<1x16x16x128xf32> to vector<16x16x128xf32>
    %92 = arith.addf %91, %89 : vector<16x16x128xf32>
    %c0_165 = arith.constant 0 : index
    %c0_166 = arith.constant 0 : index
    %c0_167 = arith.constant 0 : index
    %c0_168 = arith.constant 0 : index
    %93 = vector.load %arg8[%c0_165, %c0_166, %c0_167, %c0_168] : memref<1x16x16x128xf32, #tpu.memory_space<vmem>>, vector<1x16x16x128xf32>
    %94 = vector.shape_cast %93 : vector<1x16x16x128xf32> to vector<16x16x128xf32>
    %95 = vector.shape_cast %92 : vector<16x16x128xf32> to vector<1x16x16x128xf32>
    tpu.vector_store %arg8[%c0_165, %c0_166, %c0_167, %c0_168], %95 {strides = array<i32>} : memref<1x16x16x128xf32, #tpu.memory_space<vmem>>, vector<1x16x16x128xf32>,
    return
  }
  func.func @transform_0(%arg0: i32) -> (i32, i32, i32, i32) {
    %c0_i32 = arith.constant 0 : i32
    %c0_i32_0 = arith.constant 0 : i32
    %c0_i32_1 = arith.constant 0 : i32
    %c0_i32_2 = arith.constant 0 : i32
    return %arg0, %c0_i32, %c0_i32_0, %c0_i32_1 : i32, i32, i32, i32
  }
  func.func @transform_1(%arg0: i32) -> (i32, i32) {
    %c0_i32 = arith.constant 0 : i32
    %c0_i32_0 = arith.constant 0 : i32
    %c0_i32_1 = arith.constant 0 : i32
    return %c0_i32, %c0_i32_0 : i32, i32
  }
  func.func @transform_2(%arg0: i32) -> (i32, i32) {
    %c0_i32 = arith.constant 0 : i32
    %c0_i32_0 = arith.constant 0 : i32
    %c0_i32_1 = arith.constant 0 : i32
    return %c0_i32, %c0_i32_0 : i32, i32
  }
  func.func @transform_3(%arg0: i32) -> (i32, i32) {
    %c0_i32 = arith.constant 0 : i32
    %c0_i32_0 = arith.constant 0 : i32
    %c0_i32_1 = arith.constant 0 : i32
    return %c0_i32, %c0_i32_0 : i32, i32
  }
  func.func @transform_4(%arg0: i32) -> (i32, i32) {
    %c0_i32 = arith.constant 0 : i32
    %c0_i32_0 = arith.constant 0 : i32
    %c0_i32_1 = arith.constant 0 : i32
    return %c0_i32, %c0_i32_0 : i32, i32
  }
  func.func @transform_5(%arg0: i32) -> (i32, i32) {
    %c0_i32 = arith.constant 0 : i32
    %c0_i32_0 = arith.constant 0 : i32
    %c0_i32_1 = arith.constant 0 : i32
    return %c0_i32, %c0_i32_0 : i32, i32
  }
  func.func @transform_6(%arg0: i32) -> (i32, i32) {
    %c0_i32 = arith.constant 0 : i32
    %c0_i32_0 = arith.constant 0 : i32
    %c0_i32_1 = arith.constant 0 : i32
    return %c0_i32, %c0_i32_0 : i32, i32
  }
  func.func @transform_7(%arg0: i32) -> (i32, i32, i32, i32) {
    %c0_i32 = arith.constant 0 : i32
    %c0_i32_0 = arith.constant 0 : i32
    %c0_i32_1 = arith.constant 0 : i32
    %c0_i32_2 = arith.constant 0 : i32
    return %arg0, %c0_i32, %c0_i32_0, %c0_i32_1 : i32, i32, i32, i32
  }
}

</mosaic_0001>

<llo_original>
// kernel: tpu_custom_call.1
$region0: #{tpu_custom_call.1}
  #allocation0 [shape = 'u32[]', space=smem, size = 0x4, offset = 0x4, fixed_abs, tag = 'smem constant byte address 0x4 - core index']
  #allocation1 [shape = 'u32[144,128]{1,0:T(1,128)}', space=vmem, size = 0x12000, scoped, tag = 'internal scratch']
  #allocation2 [shape = 'bf16[18,18,128]{2,1,0:T(8,128)(2,1)}', space=vmem, size = 0x1b000, scoped, tag = 'scratch operand']
  #allocation3 [shape = 'bf16[18,18,128]{2,1,0:T(8,128)(2,1)}', space=vmem, size = 0x1b000, scoped, tag = 'scratch operand']
  #allocation4 [shape = 'bf16[16,16,1152]{2,1,0:T(16,128)(2,1)}', space=vmem, size = 0x90000, scoped, tag = 'scratch operand']
  %s0 = inlined_call_operand.hbm [shape: f32[2,16,16,128], index: 0, kind: input, shape index: {}]
  %s1 = inlined_call_operand.hbm [shape: bf16[1152,128], index: 1, kind: input, shape index: {}]
  %s2 = inlined_call_operand.vmem [shape: f32[1,128], index: 2, kind: input, shape index: {}]
  %s3 = inlined_call_operand.vmem [shape: f32[1,128], index: 3, kind: input, shape index: {}]
  %s4 = inlined_call_operand.hbm [shape: bf16[1152,128], index: 4, kind: input, shape index: {}]
  %s5 = inlined_call_operand.vmem [shape: f32[1,128], index: 5, kind: input, shape index: {}]
  %s6 = inlined_call_operand.vmem [shape: f32[1,128], index: 6, kind: input, shape index: {}]
  %s7 = inlined_call_operand.hbm [shape: f32[2,16,16,128], index: 7, kind: output, shape index: {}]
  %s8 = sld [smem:[#allocation0]]
  $region73: #{tpu_custom_call.1} parent=0
    _
  %s10 = ssub.s32 1, %s8
  %s11 = scalar_select 0, %s10, %s8
  $region1: #{tpu_custom_call.1} parent=0
    #allocation5 [shape = 'u8[262144]{0}', space=vmem, size = 0x40000, scoped, tag = 'input window, operand 0']
    #allocation6 [shape = 's32[2]{0}', space=sflag, size = 0x8, scoped, tag = 'scoped memory for tpu_custom_call.1']
    #allocation7 [shape = 's32[2]{0}', space=sflag, size = 0x8, scoped, tag = 'scoped memory for tpu_custom_call.1']
    #allocation8 [shape = 'u8[294912]{0}', space=vmem, size = 0x48000, scoped, tag = 'input window, operand 1, single buffered']
    #allocation9 [shape = 's32[1]{0}', space=sflag, size = 0x4, scoped, tag = 'scoped memory for tpu_custom_call.1']
    #allocation10 [shape = 'u8[294912]{0}', space=vmem, size = 0x48000, scoped, tag = 'input window, operand 4, single buffered']
    #allocation11 [shape = 'u8[262144]{0}', space=vmem, size = 0x40000, scoped, tag = 'output window, operand 0']
    %12 = vsyncpa [#allocation6], 0
    %s13 = scalar_lea.sflag [#allocation6], 1
    %14 = vsyncpa %s13, 0
    %15 = vsyncpa [#allocation9], 0
    %16 = vsyncpa [#allocation7], 0
    %s17 = scalar_lea.sflag [#allocation7], 1
    %18 = vsyncpa %s17, 0
    loop: start=0, step=1, limit=4
    $region2: #{tpu_custom_call.1} parent=1 // loop_pre_header
      _
    $region3: #{tpu_custom_call.1} parent=1 // loop_header
      %s20 = sphi 0, %s24
      %p21 = scmp.ge.s32.totalorder %s20, 4
      %s30 = sphi 0, %s32
      %s33 = sphi 0, %s30
      %s34 = sphi 0, %s33
      %s50 = sphi 0, %s34
      %s54 = sphi 0, %s54
      %s56 = sphi 0, %s54
      %s57 = sphi 0, %s56
      %s71 = sphi 0, %s57
      %s75 = sphi 0, %s75
      %s77 = sphi 0, %s75
      %s78 = sphi 0, %s77
      %s92 = sphi 0, %s78
      %s96 = sphi 0, %s96
      %s98 = sphi 0, %s96
      %s99 = sphi 0, %s98
      %s113 = sphi 0, %s99
      %s117 = sphi 0, %s117
      %s119 = sphi 0, %s117
      %s120 = sphi 0, %s119
      %s134 = sphi 0, %s120
      %s138 = sphi 0, %s138
      %s140 = sphi 0, %s138
      %s141 = sphi 0, %s140
      %s155 = sphi 0, %s141
      %s159 = sphi 0, %s159
      %s161 = sphi 0, %s159
      %s162 = sphi 0, %s161
      %s176 = sphi 0, %s162
      %s182 = sphi 0, %s184
      %s185 = sphi 0, %s182
      %s186 = sphi 0, %s185
      %s202 = sphi 0, %s186
    $region4: #{tpu_custom_call.1} parent=1 // loop_header_branch
      %23 = sbr.rel (%p21) target = $region8
    $region5: #{tpu_custom_call.1} parent=1 // loop_body
      %s25 = ssub.s32 %s20, 1
      %s26 = ssub.s32 %s20, 2
      %s27 = sadd.s32 %s20, 1
      %s28 = ssub.s32 %s20, %s27
      %p29 = scmp.eq.s32.totalorder %s28, 0
      %s31 = sadd.s32 %s30, 1
      %s32 = scalar_select %p29, %s30, %s31
      %p35 = pneg %p29
      %p36 = scmp.eq.s32.totalorder %s20, 1
      %p37 = por %p35, %p36
      %p38 = scmp.ne.s32.totalorder %s30, %s33
      %p39 = scmp.eq.s32.totalorder %s20, 0
      %p40 = por %p38, %p39
      %p41 = scmp.ne.s32.totalorder %s30, %s33
      %p42 = scmp.eq.s32.totalorder %s25, 1
      %p43 = por %p41, %p42
      %p44 = scmp.ne.s32.totalorder %s33, %s34
      %p45 = scmp.eq.s32.totalorder %s25, 0
      %p46 = por %p44, %p45
      %p47 = scmp.ne.s32.totalorder %s33, %s34
      %p48 = scmp.eq.s32.totalorder %s26, 1
      %p49 = por %p47, %p48
      %p51 = scmp.ne.s32.totalorder %s34, %s50
      %p52 = scmp.eq.s32.totalorder %s26, 0
      %p53 = por %p51, %p52
      %s55 = sadd.s32 %s54, 1
      %p58 = scmp.eq.s32.totalorder %s20, 1
      %p59 = scmp.ne.s32.totalorder %s54, %s56
      %p60 = scmp.eq.s32.totalorder %s20, 0
      %p61 = por %p59, %p60
      %p62 = scmp.ne.s32.totalorder %s54, %s56
      %p63 = scmp.eq.s32.totalorder %s25, 1
      %p64 = por %p62, %p63
      %p65 = scmp.ne.s32.totalorder %s56, %s57
      %p66 = scmp.eq.s32.totalorder %s25, 0
      %p67 = por %p65, %p66
      %p68 = scmp.ne.s32.totalorder %s56, %s57
      %p69 = scmp.eq.s32.totalorder %s26, 1
      %p70 = por %p68, %p69
      %p72 = scmp.ne.s32.totalorder %s57, %s71
      %p73 = scmp.eq.s32.totalorder %s26, 0
      %p74 = por %p72, %p73
      %s76 = sadd.s32 %s75, 1
      %p79 = scmp.eq.s32.totalorder %s20, 1
      %p80 = scmp.ne.s32.totalorder %s75, %s77
      %p81 = scmp.eq.s32.totalorder %s20, 0
      %p82 = por %p80, %p81
      %p83 = scmp.ne.s32.totalorder %s75, %s77
      %p84 = scmp.eq.s32.totalorder %s25, 1
      %p85 = por %p83, %p84
      %p86 = scmp.ne.s32.totalorder %s77, %s78
      %p87 = scmp.eq.s32.totalorder %s25, 0
      %p88 = por %p86, %p87
      %p89 = scmp.ne.s32.totalorder %s77, %s78
      %p90 = scmp.eq.s32.totalorder %s26, 1
      %p91 = por %p89, %p90
      %p93 = scmp.ne.s32.totalorder %s78, %s92
      %p94 = scmp.eq.s32.totalorder %s26, 0
      %p95 = por %p93, %p94
      %s97 = sadd.s32 %s96, 1
      %p100 = scmp.eq.s32.totalorder %s20, 1
      %p101 = scmp.ne.s32.totalorder %s96, %s98
      %p102 = scmp.eq.s32.totalorder %s20, 0
      %p103 = por %p101, %p102
      %p104 = scmp.ne.s32.totalorder %s96, %s98
      %p105 = scmp.eq.s32.totalorder %s25, 1
      %p106 = por %p104, %p105
      %p107 = scmp.ne.s32.totalorder %s98, %s99
      %p108 = scmp.eq.s32.totalorder %s25, 0
      %p109 = por %p107, %p108
      %p110 = scmp.ne.s32.totalorder %s98, %s99
      %p111 = scmp.eq.s32.totalorder %s26, 1
      %p112 = por %p110, %p111
      %p114 = scmp.ne.s32.totalorder %s99, %s113
      %p115 = scmp.eq.s32.totalorder %s26, 0
      %p116 = por %p114, %p115
      %s118 = sadd.s32 %s117, 1
      %p121 = scmp.eq.s32.totalorder %s20, 1
      %p122 = scmp.ne.s32.totalorder %s117, %s119
      %p123 = scmp.eq.s32.totalorder %s20, 0
      %p124 = por %p122, %p123
      %p125 = scmp.ne.s32.totalorder %s117, %s119
      %p126 = scmp.eq.s32.totalorder %s25, 1
      %p127 = por %p125, %p126
      %p128 = scmp.ne.s32.totalorder %s119, %s120
      %p129 = scmp.eq.s32.totalorder %s25, 0
      %p130 = por %p128, %p129
      %p131 = scmp.ne.s32.totalorder %s119, %s120
      %p132 = scmp.eq.s32.totalorder %s26, 1
      %p133 = por %p131, %p132
      %p135 = scmp.ne.s32.totalorder %s120, %s134
      %p136 = scmp.eq.s32.totalorder %s26, 0
      %p137 = por %p135, %p136
      %s139 = sadd.s32 %s138, 1
      %p142 = scmp.eq.s32.totalorder %s20, 1
      %p143 = scmp.ne.s32.totalorder %s138, %s140
      %p144 = scmp.eq.s32.totalorder %s20, 0
      %p145 = por %p143, %p144
      %p146 = scmp.ne.s32.totalorder %s138, %s140
      %p147 = scmp.eq.s32.totalorder %s25, 1
      %p148 = por %p146, %p147
      %p149 = scmp.ne.s32.totalorder %s140, %s141
      %p150 = scmp.eq.s32.totalorder %s25, 0
      %p151 = por %p149, %p150
      %p152 = scmp.ne.s32.totalorder %s140, %s141
      %p153 = scmp.eq.s32.totalorder %s26, 1
      %p154 = por %p152, %p153
      %p156 = scmp.ne.s32.totalorder %s141, %s155
      %p157 = scmp.eq.s32.totalorder %s26, 0
      %p158 = por %p156, %p157
      %s160 = sadd.s32 %s159, 1
      %p163 = scmp.eq.s32.totalorder %s20, 1
      %p164 = scmp.ne.s32.totalorder %s159, %s161
      %p165 = scmp.eq.s32.totalorder %s20, 0
      %p166 = por %p164, %p165
      %p167 = scmp.ne.s32.totalorder %s159, %s161
      %p168 = scmp.eq.s32.totalorder %s25, 1
      %p169 = por %p167, %p168
      %p170 = scmp.ne.s32.totalorder %s161, %s162
      %p171 = scmp.eq.s32.totalorder %s25, 0
      %p172 = por %p170, %p171
      %p173 = scmp.ne.s32.totalorder %s161, %s162
      %p174 = scmp.eq.s32.totalorder %s26, 1
      %p175 = por %p173, %p174
      %p177 = scmp.ne.s32.totalorder %s162, %s176
      %p178 = scmp.eq.s32.totalorder %s26, 0
      %p179 = por %p177, %p178
      %s180 = ssub.s32 %s20, %s27
      %p181 = scmp.eq.s32.totalorder %s180, 0
      %s183 = sadd.s32 %s182, 1
      %s184 = scalar_select %p181, %s182, %s183
      %p187 = pneg %p181
      %p188 = scmp.eq.s32.totalorder %s20, 1
      %p189 = por %p187, %p188
      %p190 = scmp.ne.s32.totalorder %s182, %s185
      %p191 = scmp.eq.s32.totalorder %s20, 0
      %p192 = por %p190, %p191
      %p193 = scmp.ne.s32.totalorder %s182, %s185
      %p194 = scmp.eq.s32.totalorder %s25, 1
      %p195 = por %p193, %p194
      %p196 = scmp.ne.s32.totalorder %s185, %s186
      %p197 = scmp.eq.s32.totalorder %s25, 0
      %p198 = por %p196, %p197
      %p199 = scmp.ne.s32.totalorder %s185, %s186
      %p200 = scmp.eq.s32.totalorder %s26, 1
      %p201 = por %p199, %p200
      %p203 = scmp.ne.s32.totalorder %s186, %s202
      %p204 = scmp.eq.s32.totalorder %s26, 0
      %p205 = por %p203, %p204
      %p206 = scmp.le.s32.totalorder 1, %s20
      %p207 = scmp.lt.s32.totalorder %s20, 3
      %p208 = pnand %p206, %p207
      %p209 = pneg %p208
      // Predicated region
      $region9: #{tpu_custom_call.1} parent=5 // pred_check
        _
      $region10: #{tpu_custom_call.1} parent=5 // pred_check_branch
        %211 = sbr.rel (%p208) target = $region12
      $region11: #{tpu_custom_call.1} parent=5 // pred_region
        %s212 = ssub.s32 %s20, 1
        // Predicated region
        $region13: #{tpu_custom_call.1} parent=11 // pred_check
          %p213 = pneg %p67
        $region14: #{tpu_custom_call.1} parent=11 // pred_check_branch
          %215 = sbr.rel (%p213) target = $region16
        $region15: #{tpu_custom_call.1} parent=11 // pred_region
          %s217 = ssub.s32 9216, 9216
          %218 = vsyncadd [#allocation9], %s217
          %s219 = sshll.u32 [#allocation8], 4
          %s220 = int_to_ptr.vmem [resolvable:$true] %s219
          %225 = dma.hbm_to_vmem [thread:$0]  %s1, 9216, %s220, [#allocation9], 64, 64, 4
        $region16: #{tpu_custom_call.1} parent=11 // pred_fallthru
          _
        // Predicated region
        $region17: #{tpu_custom_call.1} parent=11 // pred_check
          %p226 = pneg %p88
        $region18: #{tpu_custom_call.1} parent=11 // pred_check_branch
          %228 = sbr.rel (%p226) target = $region20
        $region19: #{tpu_custom_call.1} parent=11 // pred_region
          _
        $region20: #{tpu_custom_call.1} parent=11 // pred_fallthru
          _
        // Predicated region
        $region21: #{tpu_custom_call.1} parent=11 // pred_check
          %p229 = pneg %p109
        $region22: #{tpu_custom_call.1} parent=11 // pred_check_branch
          %231 = sbr.rel (%p229) target = $region24
        $region23: #{tpu_custom_call.1} parent=11 // pred_region
          _
        $region24: #{tpu_custom_call.1} parent=11 // pred_fallthru
          _
        // Predicated region
        $region25: #{tpu_custom_call.1} parent=11 // pred_check
          %p232 = pneg %p130
        $region26: #{tpu_custom_call.1} parent=11 // pred_check_branch
          %234 = sbr.rel (%p232) target = $region28
        $region27: #{tpu_custom_call.1} parent=11 // pred_region
          %s236 = ssub.s32 9216, 9216
          %237 = vsyncadd [#allocation9], %s236
          %s238 = sshll.u32 [#allocation10], 4
          %s239 = int_to_ptr.vmem [resolvable:$true] %s238
          %244 = dma.hbm_to_vmem [thread:$0]  %s4, 9216, %s239, [#allocation9], 64, 64, 4
        $region28: #{tpu_custom_call.1} parent=11 // pred_fallthru
          _
        // Predicated region
        $region29: #{tpu_custom_call.1} parent=11 // pred_check
          %p245 = pneg %p151
        $region30: #{tpu_custom_call.1} parent=11 // pred_check_branch
          %247 = sbr.rel (%p245) target = $region32
        $region31: #{tpu_custom_call.1} parent=11 // pred_region
          _
        $region32: #{tpu_custom_call.1} parent=11 // pred_fallthru
          _
        // Predicated region
        $region33: #{tpu_custom_call.1} parent=11 // pred_check
          %p248 = pneg %p172
        $region34: #{tpu_custom_call.1} parent=11 // pred_check_branch
          %250 = sbr.rel (%p248) target = $region36
        $region35: #{tpu_custom_call.1} parent=11 // pred_region
          _
        $region36: #{tpu_custom_call.1} parent=11 // pred_fallthru
          _
      $region12: #{tpu_custom_call.1} parent=5 // pred_fallthru
        _
      %p251 = scmp.lt.s32.totalorder %s20, 2
      // Predicated region
      $region37: #{tpu_custom_call.1} parent=5 // pred_check
        %p252 = pneg %p251
      $region38: #{tpu_custom_call.1} parent=5 // pred_check_branch
        %254 = sbr.rel (%p252) target = $region40
      $region39: #{tpu_custom_call.1} parent=5 // pred_region
        // Predicated region
        $region41: #{tpu_custom_call.1} parent=39 // pred_check
          %p255 = pneg %p40
        $region42: #{tpu_custom_call.1} parent=39 // pred_check_branch
          %257 = sbr.rel (%p255) target = $region44
        $region43: #{tpu_custom_call.1} parent=39 // pred_region
          %s258 = sand.u32 %s30, 1
          %s259 = scalar_lea.sflag [#allocation6], %s258
          %s260 = sand.u32 %s30, 1
          %s261 = smul.addr %s260, 256
          %s262 = scalar_lea.vmem [#allocation5], %s261
          %s264 = ssub.s32 4096, 4096
          %265 = vsyncadd %s259, %s264
          %s266 = smul.addr %s20, 32
          %s267 = smul.addr %s266, 128
          %s268 = scalar_lea.hbm %s0, %s267
          %s269 = sshll.u32 %s262, 4
          %s270 = int_to_ptr.vmem [resolvable:$true] %s269
          %275 = dma.hbm_to_vmem [thread:$0]  %s268, 4096, %s270, %s259, 128, 128, 8
        $region44: #{tpu_custom_call.1} parent=39 // pred_fallthru
          _
      $region40: #{tpu_custom_call.1} parent=5 // pred_fallthru
        _
      %p276 = scmp.le.s32.totalorder 1, %s20
      %p277 = scmp.lt.s32.totalorder %s20, 3
      %p278 = pnand %p276, %p277
      %p279 = pneg %p278
      // Predicated region
      $region45: #{tpu_custom_call.1} parent=5 // pred_check
        _
      $region46: #{tpu_custom_call.1} parent=5 // pred_check_branch
        %281 = sbr.rel (%p278) target = $region48
      $region47: #{tpu_custom_call.1} parent=5 // pred_region
        %s282 = ssub.s32 %s20, 1
        %s283 = sand.u32 %s33, 1
        %s284 = scalar_lea.sflag [#allocation6], %s283
        %s285 = sand.u32 %s33, 1
        %s286 = smul.addr %s285, 256
        %s287 = scalar_lea.vmem [#allocation5], %s286
        // Predicated region
        $region49: #{tpu_custom_call.1} parent=47 // pred_check
          %p288 = pneg %p46
        $region50: #{tpu_custom_call.1} parent=47 // pred_check_branch
          %290 = sbr.rel (%p288) target = $region52
        $region51: #{tpu_custom_call.1} parent=47 // pred_region
          %291 = dma.done %s284, 4096
        $region52: #{tpu_custom_call.1} parent=47 // pred_fallthru
          _
        // Predicated region
        $region53: #{tpu_custom_call.1} parent=47 // pred_check
          %p292 = pneg %p67
        $region54: #{tpu_custom_call.1} parent=47 // pred_check_branch
          %294 = sbr.rel (%p292) target = $region56
        $region55: #{tpu_custom_call.1} parent=47 // pred_region
          %295 = dma.done [#allocation9], 9216
        $region56: #{tpu_custom_call.1} parent=47 // pred_fallthru
          _
        // Predicated region
        $region57: #{tpu_custom_call.1} parent=47 // pred_check
          %p296 = pneg %p130
        $region58: #{tpu_custom_call.1} parent=47 // pred_check_branch
          %298 = sbr.rel (%p296) target = $region60
        $region59: #{tpu_custom_call.1} parent=47 // pred_region
          %299 = dma.done [#allocation9], 9216
        $region60: #{tpu_custom_call.1} parent=47 // pred_fallthru
          _
        %s300 = sand.u32 %s33, 1
        %s301 = scalar_lea.sflag [#allocation6], %s300
        %s302 = sand.u32 %s33, 1
        %s303 = smul.addr %s302, 256
        %s304 = scalar_lea.vmem [#allocation5], %s303
        %p305 = pneg %p46
        %p306 = pneg %p43
        %p307 = pneg %p67
        %p308 = pneg %p64
        %p309 = pneg %p88
        %p310 = pneg %p85
        %p311 = pneg %p109
        %p312 = pneg %p106
        %p313 = pneg %p130
        %p314 = pneg %p127
        %p315 = pneg %p151
        %p316 = pneg %p148
        %p317 = pneg %p172
        %p318 = pneg %p169
        %p319 = pneg %p198
        %p320 = pneg %p195
        %s321 = sand.u32 %s185, 1
        %s322 = scalar_lea.sflag [#allocation7], %s321
        %s323 = sand.u32 %s185, 1
        %s324 = smul.addr %s323, 256
        %s325 = scalar_lea.vmem [#allocation11], %s324
        %327 = vst [vmem:[#allocation2] sm:$0xf] 0
        %328 = vst [vmem:[#allocation2 + $0x4] sm:$0xf] 0
        %329 = vst [vmem:[#allocation2 + $0x8] sm:$0x1] 0
        %s330 = scalar_lea.vmem [#allocation2], 204
        %331 = vst [vmem:[%s330] sm:$0xf] 0
        %332 = vst [vmem:[%s330 + $0x4] sm:$0xf] 0
        %333 = vst [vmem:[%s330 + $0x8] sm:$0x1] 0
        %vm334 = vcmask 1040384
        %vm335 = vsmask.f32 256
        %vm336 = vmand %vm334, %vm335
        %v337 = vld [vmem:[#allocation2] sm:$0x1]
        %v338 = vsel %vm336, 0, %v337
        %339 = vst [vmem:[#allocation2] sm:$0x1] %v338
        %v340 = vld [vmem:[#allocation2 + $0xc] sm:$0x1]
        %v341 = vsel %vm336, 0, %v340
        %342 = vst [vmem:[#allocation2 + $0xc] sm:$0x1] %v341
        %v343 = vld [vmem:[#allocation2 + $0x18] sm:$0x1]
        %v344 = vsel %vm336, 0, %v343
        %345 = vst [vmem:[#allocation2 + $0x18] sm:$0x1] %v344
        %v346 = vld [vmem:[#allocation2 + $0x24] sm:$0x1]
        %v347 = vsel %vm336, 0, %v346
        %348 = vst [vmem:[#allocation2 + $0x24] sm:$0x1] %v347
        %v349 = vld [vmem:[#allocation2 + $0x30] sm:$0x1]
        %v350 = vsel %vm336, 0, %v349
        %351 = vst [vmem:[#allocation2 + $0x30] sm:$0x1] %v350
        %v352 = vld [vmem:[#allocation2 + $0x3c] sm:$0x1]
        %v353 = vsel %vm336, 0, %v352
        %354 = vst [vmem:[#allocation2 + $0x3c] sm:$0x1] %v353
        %v355 = vld [vmem:[#allocation2 + $0x48] sm:$0x1]
        %v356 = vsel %vm336, 0, %v355
        %357 = vst [vmem:[#allocation2 + $0x48] sm:$0x1] %v356
        %v358 = vld [vmem:[#allocation2 + $0x54] sm:$0x1]
        %v359 = vsel %vm336, 0, %v358
        %360 = vst [vmem:[#allocation2 + $0x54] sm:$0x1] %v359
        %v361 = vld [vmem:[#allocation2 + $0x60] sm:$0x1]
        %v362 = vsel %vm336, 0, %v361
        %363 = vst [vmem:[#allocation2 + $0x60] sm:$0x1] %v362
        %v364 = vld [vmem:[#allocation2 + $0x6c] sm:$0x1]
        %v365 = vsel %vm336, 0, %v364
        %366 = vst [vmem:[#allocation2 + $0x6c] sm:$0x1] %v365
        %v367 = vld [vmem:[#allocation2 + $0x78] sm:$0x1]
        %v368 = vsel %vm336, 0, %v367
        %369 = vst [vmem:[#allocation2 + $0x78] sm:$0x1] %v368
        %v370 = vld [vmem:[#allocation2 + $0x84] sm:$0x1]
        %v371 = vsel %vm336, 0, %v370
        %372 = vst [vmem:[#allocation2 + $0x84] sm:$0x1] %v371
        %v373 = vld [vmem:[#allocation2 + $0x90] sm:$0x1]
        %v374 = vsel %vm336, 0, %v373
        %375 = vst [vmem:[#allocation2 + $0x90] sm:$0x1] %v374
        %v376 = vld [vmem:[#allocation2 + $0x9c] sm:$0x1]
        %v377 = vsel %vm336, 0, %v376
        %378 = vst [vmem:[#allocation2 + $0x9c] sm:$0x1] %v377
        %v379 = vld [vmem:[#allocation2 + $0xa8] sm:$0x1]
        %v380 = vsel %vm336, 0, %v379
        %381 = vst [vmem:[#allocation2 + $0xa8] sm:$0x1] %v380
        %v382 = vld [vmem:[#allocation2 + $0xb4] sm:$0x1]
        %v383 = vsel %vm336, 0, %v382
        %384 = vst [vmem:[#allocation2 + $0xb4] sm:$0x1] %v383
        %v385 = vld [vmem:[#allocation2 + $0xc0] sm:$0x1]
        %v386 = vsel %vm336, 0, %v385
        %387 = vst [vmem:[#allocation2 + $0xc0] sm:$0x1] %v386
        %v388 = vld [vmem:[#allocation2 + $0xcc] sm:$0x1]
        %v389 = vsel %vm336, 0, %v388
        %390 = vst [vmem:[#allocation2 + $0xcc] sm:$0x1] %v389
        %vm391 = vsmask.f32 7938
        %vm392 = vmand %vm334, %vm391
        %v393 = vld [vmem:[#allocation2 + $0x8] sm:$0x1]
        %v394 = vsel %vm392, 0, %v393
        %395 = vst [vmem:[#allocation2 + $0x8] sm:$0x1] %v394
        %v396 = vld [vmem:[#allocation2 + $0x14] sm:$0x1]
        %v397 = vsel %vm392, 0, %v396
        %398 = vst [vmem:[#allocation2 + $0x14] sm:$0x1] %v397
        %v399 = vld [vmem:[#allocation2 + $0x20] sm:$0x1]
        %v400 = vsel %vm392, 0, %v399
        %401 = vst [vmem:[#allocation2 + $0x20] sm:$0x1] %v400
        %v402 = vld [vmem:[#allocation2 + $0x2c] sm:$0x1]
        %v403 = vsel %vm392, 0, %v402
        %404 = vst [vmem:[#allocation2 + $0x2c] sm:$0x1] %v403
        %v405 = vld [vmem:[#allocation2 + $0x38] sm:$0x1]
        %v406 = vsel %vm392, 0, %v405
        %407 = vst [vmem:[#allocation2 + $0x38] sm:$0x1] %v406
        %v408 = vld [vmem:[#allocation2 + $0x44] sm:$0x1]
        %v409 = vsel %vm392, 0, %v408
        %410 = vst [vmem:[#allocation2 + $0x44] sm:$0x1] %v409
        %v411 = vld [vmem:[#allocation2 + $0x50] sm:$0x1]
        %v412 = vsel %vm392, 0, %v411
        %413 = vst [vmem:[#allocation2 + $0x50] sm:$0x1] %v412
        %v414 = vld [vmem:[#allocation2 + $0x5c] sm:$0x1]
        %v415 = vsel %vm392, 0, %v414
        %416 = vst [vmem:[#allocation2 + $0x5c] sm:$0x1] %v415
        %v417 = vld [vmem:[#allocation2 + $0x68] sm:$0x1]
        %v418 = vsel %vm392, 0, %v417
        %419 = vst [vmem:[#allocation2 + $0x68] sm:$0x1] %v418
        %v420 = vld [vmem:[#allocation2 + $0x74] sm:$0x1]
        %v421 = vsel %vm392, 0, %v420
        %422 = vst [vmem:[#allocation2 + $0x74] sm:$0x1] %v421
        %v423 = vld [vmem:[#allocation2 + $0x80] sm:$0x1]
        %v424 = vsel %vm392, 0, %v423
        %425 = vst [vmem:[#allocation2 + $0x80] sm:$0x1] %v424
        %v426 = vld [vmem:[#allocation2 + $0x8c] sm:$0x1]
        %v427 = vsel %vm392, 0, %v426
        %428 = vst [vmem:[#allocation2 + $0x8c] sm:$0x1] %v427
        %v429 = vld [vmem:[#allocation2 + $0x98] sm:$0x1]
        %v430 = vsel %vm392, 0, %v429
        %431 = vst [vmem:[#allocation2 + $0x98] sm:$0x1] %v430
        %v432 = vld [vmem:[#allocation2 + $0xa4] sm:$0x1]
        %v433 = vsel %vm392, 0, %v432
        %434 = vst [vmem:[#allocation2 + $0xa4] sm:$0x1] %v433
        %v435 = vld [vmem:[#allocation2 + $0xb0] sm:$0x1]
        %v436 = vsel %vm392, 0, %v435
        %437 = vst [vmem:[#allocation2 + $0xb0] sm:$0x1] %v436
        %v438 = vld [vmem:[#allocation2 + $0xbc] sm:$0x1]
        %v439 = vsel %vm392, 0, %v438
        %440 = vst [vmem:[#allocation2 + $0xbc] sm:$0x1] %v439
        %v441 = vld [vmem:[#allocation2 + $0xc8] sm:$0x1]
        %v442 = vsel %vm392, 0, %v441
        %443 = vst [vmem:[#allocation2 + $0xc8] sm:$0x1] %v442
        %v444 = vld [vmem:[#allocation2 + $0xd4] sm:$0x1]
        %v445 = vsel %vm392, 0, %v444
        %446 = vst [vmem:[#allocation2 + $0xd4] sm:$0x1] %v445
        %447 = vst [vmem:[#allocation3] sm:$0xf] 0
        %448 = vst [vmem:[#allocation3 + $0x4] sm:$0xf] 0
        %449 = vst [vmem:[#allocation3 + $0x8] sm:$0x1] 0
        %s450 = scalar_lea.vmem [#allocation3], 204
        %451 = vst [vmem:[%s450] sm:$0xf] 0
        %452 = vst [vmem:[%s450 + $0x4] sm:$0xf] 0
        %453 = vst [vmem:[%s450 + $0x8] sm:$0x1] 0
        %v454 = vld [vmem:[#allocation3] sm:$0x1]
        %v455 = vsel %vm336, 0, %v454
        %456 = vst [vmem:[#allocation3] sm:$0x1] %v455
        %v457 = vld [vmem:[#allocation3 + $0xc] sm:$0x1]
        %v458 = vsel %vm336, 0, %v457
        %459 = vst [vmem:[#allocation3 + $0xc] sm:$0x1] %v458
        %v460 = vld [vmem:[#allocation3 + $0x18] sm:$0x1]
        %v461 = vsel %vm336, 0, %v460
        %462 = vst [vmem:[#allocation3 + $0x18] sm:$0x1] %v461
        %v463 = vld [vmem:[#allocation3 + $0x24] sm:$0x1]
        %v464 = vsel %vm336, 0, %v463
        %465 = vst [vmem:[#allocation3 + $0x24] sm:$0x1] %v464
        %v466 = vld [vmem:[#allocation3 + $0x30] sm:$0x1]
        %v467 = vsel %vm336, 0, %v466
        %468 = vst [vmem:[#allocation3 + $0x30] sm:$0x1] %v467
        %v469 = vld [vmem:[#allocation3 + $0x3c] sm:$0x1]
        %v470 = vsel %vm336, 0, %v469
        %471 = vst [vmem:[#allocation3 + $0x3c] sm:$0x1] %v470
        %v472 = vld [vmem:[#allocation3 + $0x48] sm:$0x1]
        %v473 = vsel %vm336, 0, %v472
        %474 = vst [vmem:[#allocation3 + $0x48] sm:$0x1] %v473
        %v475 = vld [vmem:[#allocation3 + $0x54] sm:$0x1]
        %v476 = vsel %vm336, 0, %v475
        %477 = vst [vmem:[#allocation3 + $0x54] sm:$0x1] %v476
        %v478 = vld [vmem:[#allocation3 + $0x60] sm:$0x1]
        %v479 = vsel %vm336, 0, %v478
        %480 = vst [vmem:[#allocation3 + $0x60] sm:$0x1] %v479
        %v481 = vld [vmem:[#allocation3 + $0x6c] sm:$0x1]
        %v482 = vsel %vm336, 0, %v481
        %483 = vst [vmem:[#allocation3 + $0x6c] sm:$0x1] %v482
        %v484 = vld [vmem:[#allocation3 + $0x78] sm:$0x1]
        %v485 = vsel %vm336, 0, %v484
        %486 = vst [vmem:[#allocation3 + $0x78] sm:$0x1] %v485
        %v487 = vld [vmem:[#allocation3 + $0x84] sm:$0x1]
        %v488 = vsel %vm336, 0, %v487
        %489 = vst [vmem:[#allocation3 + $0x84] sm:$0x1] %v488
        %v490 = vld [vmem:[#allocation3 + $0x90] sm:$0x1]
        %v491 = vsel %vm336, 0, %v490
        %492 = vst [vmem:[#allocation3 + $0x90] sm:$0x1] %v491
        %v493 = vld [vmem:[#allocation3 + $0x9c] sm:$0x1]
        %v494 = vsel %vm336, 0, %v493
        %495 = vst [vmem:[#allocation3 + $0x9c] sm:$0x1] %v494
        %v496 = vld [vmem:[#allocation3 + $0xa8] sm:$0x1]
        %v497 = vsel %vm336, 0, %v496
        %498 = vst [vmem:[#allocation3 + $0xa8] sm:$0x1] %v497
        %v499 = vld [vmem:[#allocation3 + $0xb4] sm:$0x1]
        %v500 = vsel %vm336, 0, %v499
        %501 = vst [vmem:[#allocation3 + $0xb4] sm:$0x1] %v500
        %v502 = vld [vmem:[#allocation3 + $0xc0] sm:$0x1]
        %v503 = vsel %vm336, 0, %v502
        %504 = vst [vmem:[#allocation3 + $0xc0] sm:$0x1] %v503
        %v505 = vld [vmem:[#allocation3 + $0xcc] sm:$0x1]
        %v506 = vsel %vm336, 0, %v505
        %507 = vst [vmem:[#allocation3 + $0xcc] sm:$0x1] %v506
        %v508 = vld [vmem:[#allocation3 + $0x8] sm:$0x1]
        %v509 = vsel %vm392, 0, %v508
        %510 = vst [vmem:[#allocation3 + $0x8] sm:$0x1] %v509
        %v511 = vld [vmem:[#allocation3 + $0x14] sm:$0x1]
        %v512 = vsel %vm392, 0, %v511
        %513 = vst [vmem:[#allocation3 + $0x14] sm:$0x1] %v512
        %v514 = vld [vmem:[#allocation3 + $0x20] sm:$0x1]
        %v515 = vsel %vm392, 0, %v514
        %516 = vst [vmem:[#allocation3 + $0x20] sm:$0x1] %v515
        %v517 = vld [vmem:[#allocation3 + $0x2c] sm:$0x1]
        %v518 = vsel %vm392, 0, %v517
        %519 = vst [vmem:[#allocation3 + $0x2c] sm:$0x1] %v518
        %v520 = vld [vmem:[#allocation3 + $0x38] sm:$0x1]
        %v521 = vsel %vm392, 0, %v520
        %522 = vst [vmem:[#allocation3 + $0x38] sm:$0x1] %v521
        %v523 = vld [vmem:[#allocation3 + $0x44] sm:$0x1]
        %v524 = vsel %vm392, 0, %v523
        %525 = vst [vmem:[#allocation3 + $0x44] sm:$0x1] %v524
        %v526 = vld [vmem:[#allocation3 + $0x50] sm:$0x1]
        %v527 = vsel %vm392, 0, %v526
        %528 = vst [vmem:[#allocation3 + $0x50] sm:$0x1] %v527
        %v529 = vld [vmem:[#allocation3 + $0x5c] sm:$0x1]
        %v530 = vsel %vm392, 0, %v529
        %531 = vst [vmem:[#allocation3 + $0x5c] sm:$0x1] %v530
        %v532 = vld [vmem:[#allocation3 + $0x68] sm:$0x1]
        %v533 = vsel %vm392, 0, %v532
        %534 = vst [vmem:[#allocation3 + $0x68] sm:$0x1] %v533
        %v535 = vld [vmem:[#allocation3 + $0x74] sm:$0x1]
        %v536 = vsel %vm392, 0, %v535
        %537 = vst [vmem:[#allocation3 + $0x74] sm:$0x1] %v536
        %v538 = vld [vmem:[#allocation3 + $0x80] sm:$0x1]
        %v539 = vsel %vm392, 0, %v538
        %540 = vst [vmem:[#allocation3 + $0x80] sm:$0x1] %v539
        %v541 = vld [vmem:[#allocation3 + $0x8c] sm:$0x1]
        %v542 = vsel %vm392, 0, %v541
        %543 = vst [vmem:[#allocation3 + $0x8c] sm:$0x1] %v542
        %v544 = vld [vmem:[#allocation3 + $0x98] sm:$0x1]
        %v545 = vsel %vm392, 0, %v544
        %546 = vst [vmem:[#allocation3 + $0x98] sm:$0x1] %v545
        %v547 = vld [vmem:[#allocation3 + $0xa4] sm:$0x1]
        %v548 = vsel %vm392, 0, %v547
        %549 = vst [vmem:[#allocation3 + $0xa4] sm:$0x1] %v548
        %v550 = vld [vmem:[#allocation3 + $0xb0] sm:$0x1]
        %v551 = vsel %vm392, 0, %v550
        %552 = vst [vmem:[#allocation3 + $0xb0] sm:$0x1] %v551
        %v553 = vld [vmem:[#allocation3 + $0xbc] sm:$0x1]
        %v554 = vsel %vm392, 0, %v553
        %555 = vst [vmem:[#allocation3 + $0xbc] sm:$0x1] %v554
        %v556 = vld [vmem:[#allocation3 + $0xc8] sm:$0x1]
        %v557 = vsel %vm392, 0, %v556
        %558 = vst [vmem:[#allocation3 + $0xc8] sm:$0x1] %v557
        %v559 = vld [vmem:[#allocation3 + $0xd4] sm:$0x1]
        %v560 = vsel %vm392, 0, %v559
        %561 = vst [vmem:[#allocation3 + $0xd4] sm:$0x1] %v560
        %v562 = vld [vmem:[%s287] sm:$0xff]
        %v563 = vld [vmem:[%s287 + $0x8] sm:$0xff]
        %v564 = vld [vmem:[%s287 + $0x10] sm:$0xff]
        %v565 = vld [vmem:[%s287 + $0x18] sm:$0xff]
        %v566 = vld [vmem:[%s287 + $0x20] sm:$0xff]
        %v567 = vld [vmem:[%s287 + $0x28] sm:$0xff]
        %v568 = vld [vmem:[%s287 + $0x30] sm:$0xff]
        %v569 = vld [vmem:[%s287 + $0x38] sm:$0xff]
        %v570 = vld [vmem:[%s287 + $0x40] sm:$0xff]
        %v571 = vld [vmem:[%s287 + $0x48] sm:$0xff]
        %v572 = vld [vmem:[%s287 + $0x50] sm:$0xff]
        %v573 = vld [vmem:[%s287 + $0x58] sm:$0xff]
        %v574 = vld [vmem:[%s287 + $0x60] sm:$0xff]
        %v575 = vld [vmem:[%s287 + $0x68] sm:$0xff]
        %v576 = vld [vmem:[%s287 + $0x70] sm:$0xff]
        %v577 = vld [vmem:[%s287 + $0x78] sm:$0xff]
        %v578 = vld [vmem:[%s287 + $0x80] sm:$0xff]
        %v579 = vld [vmem:[%s287 + $0x88] sm:$0xff]
        %v580 = vld [vmem:[%s287 + $0x90] sm:$0xff]
        %v581 = vld [vmem:[%s287 + $0x98] sm:$0xff]
        %v582 = vld [vmem:[%s287 + $0xa0] sm:$0xff]
        %v583 = vld [vmem:[%s287 + $0xa8] sm:$0xff]
        %v584 = vld [vmem:[%s287 + $0xb0] sm:$0xff]
        %v585 = vld [vmem:[%s287 + $0xb8] sm:$0xff]
        %v586 = vld [vmem:[%s287 + $0xc0] sm:$0xff]
        %v587 = vld [vmem:[%s287 + $0xc8] sm:$0xff]
        %v588 = vld [vmem:[%s287 + $0xd0] sm:$0xff]
        %v589 = vld [vmem:[%s287 + $0xd8] sm:$0xff]
        %v590 = vld [vmem:[%s287 + $0xe0] sm:$0xff]
        %v591 = vld [vmem:[%s287 + $0xe8] sm:$0xff]
        %v592 = vld [vmem:[%s287 + $0xf0] sm:$0xff]
        %v593 = vld [vmem:[%s287 + $0xf8] sm:$0xff]
        %v594 = vpack.c.bf16 %v563, %v562
        %v595 = vpack.c.bf16 %v565, %v564
        %v596 = vpack.c.bf16 %v567, %v566
        %v597 = vpack.c.bf16 %v569, %v568
        %v598 = vpack.c.bf16 %v571, %v570
        %v599 = vpack.c.bf16 %v573, %v572
        %v600 = vpack.c.bf16 %v575, %v574
        %v601 = vpack.c.bf16 %v577, %v576
        %v602 = vpack.c.bf16 %v579, %v578
        %v603 = vpack.c.bf16 %v581, %v580
        %v604 = vpack.c.bf16 %v583, %v582
        %v605 = vpack.c.bf16 %v585, %v584
        %v606 = vpack.c.bf16 %v587, %v586
        %v607 = vpack.c.bf16 %v589, %v588
        %v608 = vpack.c.bf16 %v591, %v590
        %v609 = vpack.c.bf16 %v593, %v592
        %v626 = vunpack.c.l.b16 %v594
        %v627 = vunpack.c.h.b16 %v594
        %v628 = vunpack.c.l.b16 %v595
        %v629 = vunpack.c.h.b16 %v595
        %v630 = vunpack.c.l.b16 %v596
        %v631 = vunpack.c.h.b16 %v596
        %v632 = vunpack.c.l.b16 %v597
        %v633 = vunpack.c.h.b16 %v597
        %v634 = vunpack.c.l.b16 %v598
        %v635 = vunpack.c.h.b16 %v598
        %v636 = vunpack.c.l.b16 %v599
        %v637 = vunpack.c.h.b16 %v599
        %v638 = vunpack.c.l.b16 %v600
        %v639 = vunpack.c.h.b16 %v600
        %v640 = vunpack.c.l.b16 %v601
        %v641 = vunpack.c.h.b16 %v601
        %v642 = vunpack.c.l.b16 %v602
        %v643 = vunpack.c.h.b16 %v602
        %v644 = vunpack.c.l.b16 %v603
        %v645 = vunpack.c.h.b16 %v603
        %v646 = vunpack.c.l.b16 %v604
        %v647 = vunpack.c.h.b16 %v604
        %v648 = vunpack.c.l.b16 %v605
        %v649 = vunpack.c.h.b16 %v605
        %v650 = vunpack.c.l.b16 %v606
        %v651 = vunpack.c.h.b16 %v606
        %v652 = vunpack.c.l.b16 %v607
        %v653 = vunpack.c.h.b16 %v607
        %v654 = vunpack.c.l.b16 %v608
        %v655 = vunpack.c.h.b16 %v608
        %v656 = vunpack.c.l.b16 %v609
        %v657 = vunpack.c.h.b16 %v609
        %v658 = vpack.c.b16 %v626, %v626
        %v659 = vpack.c.b16 %v627, %v627
        %v660 = vpack.c.b16 %v628, %v628
        %v661 = vpack.c.b16 %v629, %v629
        %v662 = vpack.c.b16 %v630, %v630
        %v663 = vpack.c.b16 %v631, %v631
        %v664 = vpack.c.b16 %v632, %v632
        %v665 = vpack.c.b16 %v633, %v633
        %v666 = vpack.c.b16 %v634, %v634
        %v667 = vpack.c.b16 %v635, %v635
        %v668 = vpack.c.b16 %v636, %v636
        %v669 = vpack.c.b16 %v637, %v637
        %v670 = vpack.c.b16 %v638, %v638
        %v671 = vpack.c.b16 %v639, %v639
        %v672 = vpack.c.b16 %v640, %v640
        %v673 = vpack.c.b16 %v641, %v641
        %v674 = vpack.c.b16 %v642, %v642
        %v675 = vpack.c.b16 %v643, %v643
        %v676 = vpack.c.b16 %v644, %v644
        %v677 = vpack.c.b16 %v645, %v645
        %v678 = vpack.c.b16 %v646, %v646
        %v679 = vpack.c.b16 %v647, %v647
        %v680 = vpack.c.b16 %v648, %v648
        %v681 = vpack.c.b16 %v649, %v649
        %v682 = vpack.c.b16 %v650, %v650
        %v683 = vpack.c.b16 %v651, %v651
        %v684 = vpack.c.b16 %v652, %v652
        %v685 = vpack.c.b16 %v653, %v653
        %v686 = vpack.c.b16 %v654, %v654
        %v687 = vpack.c.b16 %v655, %v655
        %v688 = vpack.c.b16 %v656, %v656
        %v689 = vpack.c.b16 %v657, %v657
        %vm690 = vsmask.f32 4368
        %vm691 = vmor %vm335, %vm690
        %v693 = vshrl.u32 %v658, 16
        %v695 = vrot.slane %v693, 7
        %v696 = vshll.u32 %v658, 16
        %v698 = vor.u32 %v695, %v696
        %v699 = vrot.slane %v695, 4
        %v701 = vshrl.u32 %v659, 16
        %v703 = vrot.slane %v701, 7
        %v704 = vshll.u32 %v659, 16
        %v706 = vor.u32 %v703, %v704
        %v707 = vsel %vm691, %v699, %v706
        %v708 = vrot.slane %v703, 4
        %v710 = vshrl.u32 %v660, 16
        %v712 = vrot.slane %v710, 7
        %v713 = vshll.u32 %v660, 16
        %v715 = vor.u32 %v712, %v713
        %v716 = vrot.slane %v712, 4
        %v718 = vshrl.u32 %v661, 16
        %v720 = vrot.slane %v718, 7
        %v721 = vshll.u32 %v661, 16
        %v723 = vor.u32 %v720, %v721
        %v724 = vsel %vm691, %v716, %v723
        %v725 = vrot.slane %v720, 4
        %v727 = vshrl.u32 %v662, 16
        %v729 = vrot.slane %v727, 7
        %v730 = vshll.u32 %v662, 16
        %v732 = vor.u32 %v729, %v730
        %v733 = vrot.slane %v729, 4
        %v735 = vshrl.u32 %v663, 16
        %v737 = vrot.slane %v735, 7
        %v738 = vshll.u32 %v663, 16
        %v740 = vor.u32 %v737, %v738
        %v741 = vsel %vm691, %v733, %v740
        %v742 = vrot.slane %v737, 4
        %v744 = vshrl.u32 %v664, 16
        %v746 = vrot.slane %v744, 7
        %v747 = vshll.u32 %v664, 16
        %v749 = vor.u32 %v746, %v747
        %v750 = vrot.slane %v746, 4
        %v752 = vshrl.u32 %v665, 16
        %v754 = vrot.slane %v752, 7
        %v755 = vshll.u32 %v665, 16
        %v757 = vor.u32 %v754, %v755
        %v758 = vsel %vm691, %v750, %v757
        %v759 = vrot.slane %v754, 4
        %v761 = vshrl.u32 %v666, 16
        %v763 = vrot.slane %v761, 7
        %v764 = vshll.u32 %v666, 16
        %v766 = vor.u32 %v763, %v764
        %v767 = vrot.slane %v763, 4
        %v769 = vshrl.u32 %v667, 16
        %v771 = vrot.slane %v769, 7
        %v772 = vshll.u32 %v667, 16
        %v774 = vor.u32 %v771, %v772
        %v775 = vsel %vm691, %v767, %v774
        %v776 = vrot.slane %v771, 4
        %v778 = vshrl.u32 %v668, 16
        %v780 = vrot.slane %v778, 7
        %v781 = vshll.u32 %v668, 16
        %v783 = vor.u32 %v780, %v781
        %v784 = vrot.slane %v780, 4
        %v786 = vshrl.u32 %v669, 16
        %v788 = vrot.slane %v786, 7
        %v789 = vshll.u32 %v669, 16
        %v791 = vor.u32 %v788, %v789
        %v792 = vsel %vm691, %v784, %v791
        %v793 = vrot.slane %v788, 4
        %v795 = vshrl.u32 %v670, 16
        %v797 = vrot.slane %v795, 7
        %v798 = vshll.u32 %v670, 16
        %v800 = vor.u32 %v797, %v798
        %v801 = vrot.slane %v797, 4
        %v803 = vshrl.u32 %v671, 16
        %v805 = vrot.slane %v803, 7
        %v806 = vshll.u32 %v671, 16
        %v808 = vor.u32 %v805, %v806
        %v809 = vsel %vm691, %v801, %v808
        %v810 = vrot.slane %v805, 4
        %v812 = vshrl.u32 %v672, 16
        %v814 = vrot.slane %v812, 7
        %v815 = vshll.u32 %v672, 16
        %v817 = vor.u32 %v814, %v815
        %v818 = vrot.slane %v814, 4
        %v820 = vshrl.u32 %v673, 16
        %v822 = vrot.slane %v820, 7
        %v823 = vshll.u32 %v673, 16
        %v825 = vor.u32 %v822, %v823
        %v826 = vsel %vm691, %v818, %v825
        %v827 = vrot.slane %v822, 4
        %v829 = vshrl.u32 %v674, 16
        %v831 = vrot.slane %v829, 7
        %v832 = vshll.u32 %v674, 16
        %v834 = vor.u32 %v831, %v832
        %v835 = vrot.slane %v831, 4
        %v837 = vshrl.u32 %v675, 16
        %v839 = vrot.slane %v837, 7
        %v840 = vshll.u32 %v675, 16
        %v842 = vor.u32 %v839, %v840
        %v843 = vsel %vm691, %v835, %v842
        %v844 = vrot.slane %v839, 4
        %v846 = vshrl.u32 %v676, 16
        %v848 = vrot.slane %v846, 7
        %v849 = vshll.u32 %v676, 16
        %v851 = vor.u32 %v848, %v849
        %v852 = vrot.slane %v848, 4
        %v854 = vshrl.u32 %v677, 16
        %v856 = vrot.slane %v854, 7
        %v857 = vshll.u32 %v677, 16
        %v859 = vor.u32 %v856, %v857
        %v860 = vsel %vm691, %v852, %v859
        %v861 = vrot.slane %v856, 4
        %v863 = vshrl.u32 %v678, 16
        %v865 = vrot.slane %v863, 7
        %v866 = vshll.u32 %v678, 16
        %v868 = vor.u32 %v865, %v866
        %v869 = vrot.slane %v865, 4
        %v871 = vshrl.u32 %v679, 16
        %v873 = vrot.slane %v871, 7
        %v874 = vshll.u32 %v679, 16
        %v876 = vor.u32 %v873, %v874
        %v877 = vsel %vm691, %v869, %v876
        %v878 = vrot.slane %v873, 4
        %v880 = vshrl.u32 %v680, 16
        %v882 = vrot.slane %v880, 7
        %v883 = vshll.u32 %v680, 16
        %v885 = vor.u32 %v882, %v883
        %v886 = vrot.slane %v882, 4
        %v888 = vshrl.u32 %v681, 16
        %v890 = vrot.slane %v888, 7
        %v891 = vshll.u32 %v681, 16
        %v893 = vor.u32 %v890, %v891
        %v894 = vsel %vm691, %v886, %v893
        %v895 = vrot.slane %v890, 4
        %v897 = vshrl.u32 %v682, 16
        %v899 = vrot.slane %v897, 7
        %v900 = vshll.u32 %v682, 16
        %v902 = vor.u32 %v899, %v900
        %v903 = vrot.slane %v899, 4
        %v905 = vshrl.u32 %v683, 16
        %v907 = vrot.slane %v905, 7
        %v908 = vshll.u32 %v683, 16
        %v910 = vor.u32 %v907, %v908
        %v911 = vsel %vm691, %v903, %v910
        %v912 = vrot.slane %v907, 4
        %v914 = vshrl.u32 %v684, 16
        %v916 = vrot.slane %v914, 7
        %v917 = vshll.u32 %v684, 16
        %v919 = vor.u32 %v916, %v917
        %v920 = vrot.slane %v916, 4
        %v922 = vshrl.u32 %v685, 16
        %v924 = vrot.slane %v922, 7
        %v925 = vshll.u32 %v685, 16
        %v927 = vor.u32 %v924, %v925
        %v928 = vsel %vm691, %v920, %v927
        %v929 = vrot.slane %v924, 4
        %v931 = vshrl.u32 %v686, 16
        %v933 = vrot.slane %v931, 7
        %v934 = vshll.u32 %v686, 16
        %v936 = vor.u32 %v933, %v934
        %v937 = vrot.slane %v933, 4
        %v939 = vshrl.u32 %v687, 16
        %v941 = vrot.slane %v939, 7
        %v942 = vshll.u32 %v687, 16
        %v944 = vor.u32 %v941, %v942
        %v945 = vsel %vm691, %v937, %v944
        %v946 = vrot.slane %v941, 4
        %v948 = vshrl.u32 %v688, 16
        %v950 = vrot.slane %v948, 7
        %v951 = vshll.u32 %v688, 16
        %v953 = vor.u32 %v950, %v951
        %v954 = vrot.slane %v950, 4
        %v956 = vshrl.u32 %v689, 16
        %v958 = vrot.slane %v956, 7
        %v959 = vshll.u32 %v689, 16
        %v961 = vor.u32 %v958, %v959
        %v962 = vsel %vm691, %v954, %v961
        %v963 = vrot.slane %v958, 4
        %s1012 = scalar_lea.vmem [#allocation2], 12
        %vm1013 = vcmask 1043456
        %vm1014 = vmand %vm1013, %vm391
        %v1015 = vld [vmem:[%s1012] sm:$0xf]
        %v1016 = vsel %vm1014, %v698, %v1015
        %1017 = vst [vmem:[%s1012] sm:$0xf] %v1016
        %1018 = vst [vmem:[%s1012 + $0x4] sm:$0xf] %v707
        %v1019 = vld [vmem:[%s1012 + $0x8] sm:$0x1]
        %v1020 = vsel %vm336, %v708, %v1019
        %1021 = vst [vmem:[%s1012 + $0x8] sm:$0x1] %v1020
        %v1022 = vld [vmem:[%s1012 + $0xc] sm:$0xf]
        %v1023 = vsel %vm1014, %v715, %v1022
        %1024 = vst [vmem:[%s1012 + $0xc] sm:$0xf] %v1023
        %1025 = vst [vmem:[%s1012 + $0x10] sm:$0xf] %v724
        %v1026 = vld [vmem:[%s1012 + $0x14] sm:$0x1]
        %v1027 = vsel %vm336, %v725, %v1026
        %1028 = vst [vmem:[%s1012 + $0x14] sm:$0x1] %v1027
        %v1029 = vld [vmem:[%s1012 + $0x18] sm:$0xf]
        %v1030 = vsel %vm1014, %v732, %v1029
        %1031 = vst [vmem:[%s1012 + $0x18] sm:$0xf] %v1030
        %1032 = vst [vmem:[%s1012 + $0x1c] sm:$0xf] %v741
        %v1033 = vld [vmem:[%s1012 + $0x20] sm:$0x1]
        %v1034 = vsel %vm336, %v742, %v1033
        %1035 = vst [vmem:[%s1012 + $0x20] sm:$0x1] %v1034
        %v1036 = vld [vmem:[%s1012 + $0x24] sm:$0xf]
        %v1037 = vsel %vm1014, %v749, %v1036
        %1038 = vst [vmem:[%s1012 + $0x24] sm:$0xf] %v1037
        %1039 = vst [vmem:[%s1012 + $0x28] sm:$0xf] %v758
        %v1040 = vld [vmem:[%s1012 + $0x2c] sm:$0x1]
        %v1041 = vsel %vm336, %v759, %v1040
        %1042 = vst [vmem:[%s1012 + $0x2c] sm:$0x1] %v1041
        %v1043 = vld [vmem:[%s1012 + $0x30] sm:$0xf]
        %v1044 = vsel %vm1014, %v766, %v1043
        %1045 = vst [vmem:[%s1012 + $0x30] sm:$0xf] %v1044
        %1046 = vst [vmem:[%s1012 + $0x34] sm:$0xf] %v775
        %v1047 = vld [vmem:[%s1012 + $0x38] sm:$0x1]
        %v1048 = vsel %vm336, %v776, %v1047
        %1049 = vst [vmem:[%s1012 + $0x38] sm:$0x1] %v1048
        %v1050 = vld [vmem:[%s1012 + $0x3c] sm:$0xf]
        %v1051 = vsel %vm1014, %v783, %v1050
        %1052 = vst [vmem:[%s1012 + $0x3c] sm:$0xf] %v1051
        %1053 = vst [vmem:[%s1012 + $0x40] sm:$0xf] %v792
        %v1054 = vld [vmem:[%s1012 + $0x44] sm:$0x1]
        %v1055 = vsel %vm336, %v793, %v1054
        %1056 = vst [vmem:[%s1012 + $0x44] sm:$0x1] %v1055
        %v1057 = vld [vmem:[%s1012 + $0x48] sm:$0xf]
        %v1058 = vsel %vm1014, %v800, %v1057
        %1059 = vst [vmem:[%s1012 + $0x48] sm:$0xf] %v1058
        %1060 = vst [vmem:[%s1012 + $0x4c] sm:$0xf] %v809
        %v1061 = vld [vmem:[%s1012 + $0x50] sm:$0x1]
        %v1062 = vsel %vm336, %v810, %v1061
        %1063 = vst [vmem:[%s1012 + $0x50] sm:$0x1] %v1062
        %v1064 = vld [vmem:[%s1012 + $0x54] sm:$0xf]
        %v1065 = vsel %vm1014, %v817, %v1064
        %1066 = vst [vmem:[%s1012 + $0x54] sm:$0xf] %v1065
        %1067 = vst [vmem:[%s1012 + $0x58] sm:$0xf] %v826
        %v1068 = vld [vmem:[%s1012 + $0x5c] sm:$0x1]
        %v1069 = vsel %vm336, %v827, %v1068
        %1070 = vst [vmem:[%s1012 + $0x5c] sm:$0x1] %v1069
        %v1071 = vld [vmem:[%s1012 + $0x60] sm:$0xf]
        %v1072 = vsel %vm1014, %v834, %v1071
        %1073 = vst [vmem:[%s1012 + $0x60] sm:$0xf] %v1072
        %1074 = vst [vmem:[%s1012 + $0x64] sm:$0xf] %v843
        %v1075 = vld [vmem:[%s1012 + $0x68] sm:$0x1]
        %v1076 = vsel %vm336, %v844, %v1075
        %1077 = vst [vmem:[%s1012 + $0x68] sm:$0x1] %v1076
        %v1078 = vld [vmem:[%s1012 + $0x6c] sm:$0xf]
        %v1079 = vsel %vm1014, %v851, %v1078
        %1080 = vst [vmem:[%s1012 + $0x6c] sm:$0xf] %v1079
        %1081 = vst [vmem:[%s1012 + $0x70] sm:$0xf] %v860
        %v1082 = vld [vmem:[%s1012 + $0x74] sm:$0x1]
        %v1083 = vsel %vm336, %v861, %v1082
        %1084 = vst [vmem:[%s1012 + $0x74] sm:$0x1] %v1083
        %v1085 = vld [vmem:[%s1012 + $0x78] sm:$0xf]
        %v1086 = vsel %vm1014, %v868, %v1085
        %1087 = vst [vmem:[%s1012 + $0x78] sm:$0xf] %v1086
        %1088 = vst [vmem:[%s1012 + $0x7c] sm:$0xf] %v877
        %v1089 = vld [vmem:[%s1012 + $0x80] sm:$0x1]
        %v1090 = vsel %vm336, %v878, %v1089
        %1091 = vst [vmem:[%s1012 + $0x80] sm:$0x1] %v1090
        %v1092 = vld [vmem:[%s1012 + $0x84] sm:$0xf]
        %v1093 = vsel %vm1014, %v885, %v1092
        %1094 = vst [vmem:[%s1012 + $0x84] sm:$0xf] %v1093
        %1095 = vst [vmem:[%s1012 + $0x88] sm:$0xf] %v894
        %v1096 = vld [vmem:[%s1012 + $0x8c] sm:$0x1]
        %v1097 = vsel %vm336, %v895, %v1096
        %1098 = vst [vmem:[%s1012 + $0x8c] sm:$0x1] %v1097
        %v1099 = vld [vmem:[%s1012 + $0x90] sm:$0xf]
        %v1100 = vsel %vm1014, %v902, %v1099
        %1101 = vst [vmem:[%s1012 + $0x90] sm:$0xf] %v1100
        %1102 = vst [vmem:[%s1012 + $0x94] sm:$0xf] %v911
        %v1103 = vld [vmem:[%s1012 + $0x98] sm:$0x1]
        %v1104 = vsel %vm336, %v912, %v1103
        %1105 = vst [vmem:[%s1012 + $0x98] sm:$0x1] %v1104
        %v1106 = vld [vmem:[%s1012 + $0x9c] sm:$0xf]
        %v1107 = vsel %vm1014, %v919, %v1106
        %1108 = vst [vmem:[%s1012 + $0x9c] sm:$0xf] %v1107
        %1109 = vst [vmem:[%s1012 + $0xa0] sm:$0xf] %v928
        %v1110 = vld [vmem:[%s1012 + $0xa4] sm:$0x1]
        %v1111 = vsel %vm336, %v929, %v1110
        %1112 = vst [vmem:[%s1012 + $0xa4] sm:$0x1] %v1111
        %v1113 = vld [vmem:[%s1012 + $0xa8] sm:$0xf]
        %v1114 = vsel %vm1014, %v936, %v1113
        %1115 = vst [vmem:[%s1012 + $0xa8] sm:$0xf] %v1114
        %1116 = vst [vmem:[%s1012 + $0xac] sm:$0xf] %v945
        %v1117 = vld [vmem:[%s1012 + $0xb0] sm:$0x1]
        %v1118 = vsel %vm336, %v946, %v1117
        %1119 = vst [vmem:[%s1012 + $0xb0] sm:$0x1] %v1118
        %v1120 = vld [vmem:[%s1012 + $0xb4] sm:$0xf]
        %v1121 = vsel %vm1014, %v953, %v1120
        %1122 = vst [vmem:[%s1012 + $0xb4] sm:$0xf] %v1121
        %1123 = vst [vmem:[%s1012 + $0xb8] sm:$0xf] %v962
        %v1124 = vld [vmem:[%s1012 + $0xbc] sm:$0x1]
        %v1125 = vsel %vm336, %v963, %v1124
        %1126 = vst [vmem:[%s1012 + $0xbc] sm:$0x1] %v1125
        %v1127 = vld [vmem:[#allocation8] sm:$0xf]
        %v1128 = vld [vmem:[#allocation8 + $0x4] sm:$0xf]
        %v1129 = vld [vmem:[#allocation8 + $0x8] sm:$0xf]
        %v1130 = vld [vmem:[#allocation8 + $0xc] sm:$0xf]
        %v1131 = vld [vmem:[#allocation8 + $0x10] sm:$0xf]
        %v1132 = vld [vmem:[#allocation8 + $0x14] sm:$0xf]
        %v1133 = vld [vmem:[#allocation8 + $0x18] sm:$0xf]
        %v1134 = vld [vmem:[#allocation8 + $0x1c] sm:$0xf]
        %v1135 = vld [vmem:[#allocation8 + $0x20] sm:$0xf]
        %v1136 = vld [vmem:[#allocation8 + $0x24] sm:$0xf]
        %v1137 = vld [vmem:[#allocation8 + $0x28] sm:$0xf]
        %v1138 = vld [vmem:[#allocation8 + $0x2c] sm:$0xf]
        %v1139 = vld [vmem:[#allocation8 + $0x30] sm:$0xf]
        %v1140 = vld [vmem:[#allocation8 + $0x34] sm:$0xf]
        %v1141 = vld [vmem:[#allocation8 + $0x38] sm:$0xf]
        %v1142 = vld [vmem:[#allocation8 + $0x3c] sm:$0xf]
        %v1143 = vld [vmem:[#allocation8 + $0x40] sm:$0xf]
        %v1144 = vld [vmem:[#allocation8 + $0x44] sm:$0xf]
        %v1145 = vld [vmem:[#allocation8 + $0x48] sm:$0xf]
        %v1146 = vld [vmem:[#allocation8 + $0x4c] sm:$0xf]
        %v1147 = vld [vmem:[#allocation8 + $0x50] sm:$0xf]
        %v1148 = vld [vmem:[#allocation8 + $0x54] sm:$0xf]
        %v1149 = vld [vmem:[#allocation8 + $0x58] sm:$0xf]
        %v1150 = vld [vmem:[#allocation8 + $0x5c] sm:$0xf]
        %v1151 = vld [vmem:[#allocation8 + $0x60] sm:$0xf]
        %v1152 = vld [vmem:[#allocation8 + $0x64] sm:$0xf]
        %v1153 = vld [vmem:[#allocation8 + $0x68] sm:$0xf]
        %v1154 = vld [vmem:[#allocation8 + $0x6c] sm:$0xf]
        %v1155 = vld [vmem:[#allocation8 + $0x70] sm:$0xf]
        %v1156 = vld [vmem:[#allocation8 + $0x74] sm:$0xf]
        %v1157 = vld [vmem:[#allocation8 + $0x78] sm:$0xf]
        %v1158 = vld [vmem:[#allocation8 + $0x7c] sm:$0xf]
        %v1159 = vld [vmem:[#allocation8 + $0x80] sm:$0xf]
        %v1160 = vld [vmem:[#allocation8 + $0x84] sm:$0xf]
        %v1161 = vld [vmem:[#allocation8 + $0x88] sm:$0xf]
        %v1162 = vld [vmem:[#allocation8 + $0x8c] sm:$0xf]
        %v1163 = vld [vmem:[#allocation8 + $0x90] sm:$0xf]
        %v1164 = vld [vmem:[#allocation8 + $0x94] sm:$0xf]
        %v1165 = vld [vmem:[#allocation8 + $0x98] sm:$0xf]
        %v1166 = vld [vmem:[#allocation8 + $0x9c] sm:$0xf]
        %v1167 = vld [vmem:[#allocation8 + $0xa0] sm:$0xf]
        %v1168 = vld [vmem:[#allocation8 + $0xa4] sm:$0xf]
        %v1169 = vld [vmem:[#allocation8 + $0xa8] sm:$0xf]
        %v1170 = vld [vmem:[#allocation8 + $0xac] sm:$0xf]
        %v1171 = vld [vmem:[#allocation8 + $0xb0] sm:$0xf]
        %v1172 = vld [vmem:[#allocation8 + $0xb4] sm:$0xf]
        %v1173 = vld [vmem:[#allocation8 + $0xb8] sm:$0xf]
        %v1174 = vld [vmem:[#allocation8 + $0xbc] sm:$0xf]
        %v1175 = vld [vmem:[#allocation8 + $0xc0] sm:$0xf]
        %v1176 = vld [vmem:[#allocation8 + $0xc4] sm:$0xf]
        %v1177 = vld [vmem:[#allocation8 + $0xc8] sm:$0xf]
        %v1178 = vld [vmem:[#allocation8 + $0xcc] sm:$0xf]
        %v1179 = vld [vmem:[#allocation8 + $0xd0] sm:$0xf]
        %v1180 = vld [vmem:[#allocation8 + $0xd4] sm:$0xf]
        %v1181 = vld [vmem:[#allocation8 + $0xd8] sm:$0xf]
        %v1182 = vld [vmem:[#allocation8 + $0xdc] sm:$0xf]
        %v1183 = vld [vmem:[#allocation8 + $0xe0] sm:$0xf]
        %v1184 = vld [vmem:[#allocation8 + $0xe4] sm:$0xf]
        %v1185 = vld [vmem:[#allocation8 + $0xe8] sm:$0xf]
        %v1186 = vld [vmem:[#allocation8 + $0xec] sm:$0xf]
        %v1187 = vld [vmem:[#allocation8 + $0xf0] sm:$0xf]
        %v1188 = vld [vmem:[#allocation8 + $0xf4] sm:$0xf]
        %v1189 = vld [vmem:[#allocation8 + $0xf8] sm:$0xf]
        %v1190 = vld [vmem:[#allocation8 + $0xfc] sm:$0xf]
        %v1191 = vld [vmem:[#allocation8 + $0x100] sm:$0xf]
        %v1192 = vld [vmem:[#allocation8 + $0x104] sm:$0xf]
        %v1193 = vld [vmem:[#allocation8 + $0x108] sm:$0xf]
        %v1194 = vld [vmem:[#allocation8 + $0x10c] sm:$0xf]
        %v1195 = vld [vmem:[#allocation8 + $0x110] sm:$0xf]
        %v1196 = vld [vmem:[#allocation8 + $0x114] sm:$0xf]
        %v1197 = vld [vmem:[#allocation8 + $0x118] sm:$0xf]
        %v1198 = vld [vmem:[#allocation8 + $0x11c] sm:$0xf]
        %v1199 = vld [vmem:[#allocation8 + $0x120] sm:$0xf]
        %v1200 = vld [vmem:[#allocation8 + $0x124] sm:$0xf]
        %v1201 = vld [vmem:[#allocation8 + $0x128] sm:$0xf]
        %v1202 = vld [vmem:[#allocation8 + $0x12c] sm:$0xf]
        %v1203 = vld [vmem:[#allocation8 + $0x130] sm:$0xf]
        %v1204 = vld [vmem:[#allocation8 + $0x134] sm:$0xf]
        %v1205 = vld [vmem:[#allocation8 + $0x138] sm:$0xf]
        %v1206 = vld [vmem:[#allocation8 + $0x13c] sm:$0xf]
        %v1207 = vld [vmem:[#allocation8 + $0x140] sm:$0xf]
        %v1208 = vld [vmem:[#allocation8 + $0x144] sm:$0xf]
        %v1209 = vld [vmem:[#allocation8 + $0x148] sm:$0xf]
        %v1210 = vld [vmem:[#allocation8 + $0x14c] sm:$0xf]
        %v1211 = vld [vmem:[#allocation8 + $0x150] sm:$0xf]
        %v1212 = vld [vmem:[#allocation8 + $0x154] sm:$0xf]
        %v1213 = vld [vmem:[#allocation8 + $0x158] sm:$0xf]
        %v1214 = vld [vmem:[#allocation8 + $0x15c] sm:$0xf]
        %v1215 = vld [vmem:[#allocation8 + $0x160] sm:$0xf]
        %v1216 = vld [vmem:[#allocation8 + $0x164] sm:$0xf]
        %v1217 = vld [vmem:[#allocation8 + $0x168] sm:$0xf]
        %v1218 = vld [vmem:[#allocation8 + $0x16c] sm:$0xf]
        %v1219 = vld [vmem:[#allocation8 + $0x170] sm:$0xf]
        %v1220 = vld [vmem:[#allocation8 + $0x174] sm:$0xf]
        %v1221 = vld [vmem:[#allocation8 + $0x178] sm:$0xf]
        %v1222 = vld [vmem:[#allocation8 + $0x17c] sm:$0xf]
        %v1223 = vld [vmem:[#allocation8 + $0x180] sm:$0xf]
        %v1224 = vld [vmem:[#allocation8 + $0x184] sm:$0xf]
        %v1225 = vld [vmem:[#allocation8 + $0x188] sm:$0xf]
        %v1226 = vld [vmem:[#allocation8 + $0x18c] sm:$0xf]
        %v1227 = vld [vmem:[#allocation8 + $0x190] sm:$0xf]
        %v1228 = vld [vmem:[#allocation8 + $0x194] sm:$0xf]
        %v1229 = vld [vmem:[#allocation8 + $0x198] sm:$0xf]
        %v1230 = vld [vmem:[#allocation8 + $0x19c] sm:$0xf]
        %v1231 = vld [vmem:[#allocation8 + $0x1a0] sm:$0xf]
        %v1232 = vld [vmem:[#allocation8 + $0x1a4] sm:$0xf]
        %v1233 = vld [vmem:[#allocation8 + $0x1a8] sm:$0xf]
        %v1234 = vld [vmem:[#allocation8 + $0x1ac] sm:$0xf]
        %v1235 = vld [vmem:[#allocation8 + $0x1b0] sm:$0xf]
        %v1236 = vld [vmem:[#allocation8 + $0x1b4] sm:$0xf]
        %v1237 = vld [vmem:[#allocation8 + $0x1b8] sm:$0xf]
        %v1238 = vld [vmem:[#allocation8 + $0x1bc] sm:$0xf]
        %v1239 = vld [vmem:[#allocation8 + $0x1c0] sm:$0xf]
        %v1240 = vld [vmem:[#allocation8 + $0x1c4] sm:$0xf]
        %v1241 = vld [vmem:[#allocation8 + $0x1c8] sm:$0xf]
        %v1242 = vld [vmem:[#allocation8 + $0x1cc] sm:$0xf]
        %v1243 = vld [vmem:[#allocation8 + $0x1d0] sm:$0xf]
        %v1244 = vld [vmem:[#allocation8 + $0x1d4] sm:$0xf]
        %v1245 = vld [vmem:[#allocation8 + $0x1d8] sm:$0xf]
        %v1246 = vld [vmem:[#allocation8 + $0x1dc] sm:$0xf]
        %v1247 = vld [vmem:[#allocation8 + $0x1e0] sm:$0xf]
        %v1248 = vld [vmem:[#allocation8 + $0x1e4] sm:$0xf]
        %v1249 = vld [vmem:[#allocation8 + $0x1e8] sm:$0xf]
        %v1250 = vld [vmem:[#allocation8 + $0x1ec] sm:$0xf]
        %v1251 = vld [vmem:[#allocation8 + $0x1f0] sm:$0xf]
        %v1252 = vld [vmem:[#allocation8 + $0x1f4] sm:$0xf]
        %v1253 = vld [vmem:[#allocation8 + $0x1f8] sm:$0xf]
        %v1254 = vld [vmem:[#allocation8 + $0x1fc] sm:$0xf]
        %v1255 = vld [vmem:[#allocation8 + $0x200] sm:$0xf]
        %v1256 = vld [vmem:[#allocation8 + $0x204] sm:$0xf]
        %v1257 = vld [vmem:[#allocation8 + $0x208] sm:$0xf]
        %v1258 = vld [vmem:[#allocation8 + $0x20c] sm:$0xf]
        %v1259 = vld [vmem:[#allocation8 + $0x210] sm:$0xf]
        %v1260 = vld [vmem:[#allocation8 + $0x214] sm:$0xf]
        %v1261 = vld [vmem:[#allocation8 + $0x218] sm:$0xf]
        %v1262 = vld [vmem:[#allocation8 + $0x21c] sm:$0xf]
        %v1263 = vld [vmem:[#allocation8 + $0x220] sm:$0xf]
        %v1264 = vld [vmem:[#allocation8 + $0x224] sm:$0xf]
        %v1265 = vld [vmem:[#allocation8 + $0x228] sm:$0xf]
        %v1266 = vld [vmem:[#allocation8 + $0x22c] sm:$0xf]
        %v1267 = vld [vmem:[#allocation8 + $0x230] sm:$0xf]
        %v1268 = vld [vmem:[#allocation8 + $0x234] sm:$0xf]
        %v1269 = vld [vmem:[#allocation8 + $0x238] sm:$0xf]
        %v1270 = vld [vmem:[#allocation8 + $0x23c] sm:$0xf]
        %v1271 = vld [vmem:[#allocation10] sm:$0xf]
        %v1272 = vld [vmem:[#allocation10 + $0x4] sm:$0xf]
        %v1273 = vld [vmem:[#allocation10 + $0x8] sm:$0xf]
        %v1274 = vld [vmem:[#allocation10 + $0xc] sm:$0xf]
        %v1275 = vld [vmem:[#allocation10 + $0x10] sm:$0xf]
        %v1276 = vld [vmem:[#allocation10 + $0x14] sm:$0xf]
        %v1277 = vld [vmem:[#allocation10 + $0x18] sm:$0xf]
        %v1278 = vld [vmem:[#allocation10 + $0x1c] sm:$0xf]
        %v1279 = vld [vmem:[#allocation10 + $0x20] sm:$0xf]
        %v1280 = vld [vmem:[#allocation10 + $0x24] sm:$0xf]
        %v1281 = vld [vmem:[#allocation10 + $0x28] sm:$0xf]
        %v1282 = vld [vmem:[#allocation10 + $0x2c] sm:$0xf]
        %v1283 = vld [vmem:[#allocation10 + $0x30] sm:$0xf]
        %v1284 = vld [vmem:[#allocation10 + $0x34] sm:$0xf]
        %v1285 = vld [vmem:[#allocation10 + $0x38] sm:$0xf]
        %v1286 = vld [vmem:[#allocation10 + $0x3c] sm:$0xf]
        %v1287 = vld [vmem:[#allocation10 + $0x40] sm:$0xf]
        %v1288 = vld [vmem:[#allocation10 + $0x44] sm:$0xf]
        %v1289 = vld [vmem:[#allocation10 + $0x48] sm:$0xf]
        %v1290 = vld [vmem:[#allocation10 + $0x4c] sm:$0xf]
        %v1291 = vld [vmem:[#allocation10 + $0x50] sm:$0xf]
        %v1292 = vld [vmem:[#allocation10 + $0x54] sm:$0xf]
        %v1293 = vld [vmem:[#allocation10 + $0x58] sm:$0xf]
        %v1294 = vld [vmem:[#allocation10 + $0x5c] sm:$0xf]
        %v1295 = vld [vmem:[#allocation10 + $0x60] sm:$0xf]
        %v1296 = vld [vmem:[#allocation10 + $0x64] sm:$0xf]
        %v1297 = vld [vmem:[#allocation10 + $0x68] sm:$0xf]
        %v1298 = vld [vmem:[#allocation10 + $0x6c] sm:$0xf]
        %v1299 = vld [vmem:[#allocation10 + $0x70] sm:$0xf]
        %v1300 = vld [vmem:[#allocation10 + $0x74] sm:$0xf]
        %v1301 = vld [vmem:[#allocation10 + $0x78] sm:$0xf]
        %v1302 = vld [vmem:[#allocation10 + $0x7c] sm:$0xf]
        %v1303 = vld [vmem:[#allocation10 + $0x80] sm:$0xf]
        %v1304 = vld [vmem:[#allocation10 + $0x84] sm:$0xf]
        %v1305 = vld [vmem:[#allocation10 + $0x88] sm:$0xf]
        %v1306 = vld [vmem:[#allocation10 + $0x8c] sm:$0xf]
        %v1307 = vld [vmem:[#allocation10 + $0x90] sm:$0xf]
        %v1308 = vld [vmem:[#allocation10 + $0x94] sm:$0xf]
        %v1309 = vld [vmem:[#allocation10 + $0x98] sm:$0xf]
        %v1310 = vld [vmem:[#allocation10 + $0x9c] sm:$0xf]
        %v1311 = vld [vmem:[#allocation10 + $0xa0] sm:$0xf]
        %v1312 = vld [vmem:[#allocation10 + $0xa4] sm:$0xf]
        %v1313 = vld [vmem:[#allocation10 + $0xa8] sm:$0xf]
        %v1314 = vld [vmem:[#allocation10 + $0xac] sm:$0xf]
        %v1315 = vld [vmem:[#allocation10 + $0xb0] sm:$0xf]
        %v1316 = vld [vmem:[#allocation10 + $0xb4] sm:$0xf]
        %v1317 = vld [vmem:[#allocation10 + $0xb8] sm:$0xf]
        %v1318 = vld [vmem:[#allocation10 + $0xbc] sm:$0xf]
        %v1319 = vld [vmem:[#allocation10 + $0xc0] sm:$0xf]
        %v1320 = vld [vmem:[#allocation10 + $0xc4] sm:$0xf]
        %v1321 = vld [vmem:[#allocation10 + $0xc8] sm:$0xf]
        %v1322 = vld [vmem:[#allocation10 + $0xcc] sm:$0xf]
        %v1323 = vld [vmem:[#allocation10 + $0xd0] sm:$0xf]
        %v1324 = vld [vmem:[#allocation10 + $0xd4] sm:$0xf]
        %v1325 = vld [vmem:[#allocation10 + $0xd8] sm:$0xf]
        %v1326 = vld [vmem:[#allocation10 + $0xdc] sm:$0xf]
        %v1327 = vld [vmem:[#allocation10 + $0xe0] sm:$0xf]
        %v1328 = vld [vmem:[#allocation10 + $0xe4] sm:$0xf]
        %v1329 = vld [vmem:[#allocation10 + $0xe8] sm:$0xf]
        %v1330 = vld [vmem:[#allocation10 + $0xec] sm:$0xf]
        %v1331 = vld [vmem:[#allocation10 + $0xf0] sm:$0xf]
        %v1332 = vld [vmem:[#allocation10 + $0xf4] sm:$0xf]
        %v1333 = vld [vmem:[#allocation10 + $0xf8] sm:$0xf]
        %v1334 = vld [vmem:[#allocation10 + $0xfc] sm:$0xf]
        %v1335 = vld [vmem:[#allocation10 + $0x100] sm:$0xf]
        %v1336 = vld [vmem:[#allocation10 + $0x104] sm:$0xf]
        %v1337 = vld [vmem:[#allocation10 + $0x108] sm:$0xf]
        %v1338 = vld [vmem:[#allocation10 + $0x10c] sm:$0xf]
        %v1339 = vld [vmem:[#allocation10 + $0x110] sm:$0xf]
        %v1340 = vld [vmem:[#allocation10 + $0x114] sm:$0xf]
        %v1341 = vld [vmem:[#allocation10 + $0x118] sm:$0xf]
        %v1342 = vld [vmem:[#allocation10 + $0x11c] sm:$0xf]
        %v1343 = vld [vmem:[#allocation10 + $0x120] sm:$0xf]
        %v1344 = vld [vmem:[#allocation10 + $0x124] sm:$0xf]
        %v1345 = vld [vmem:[#allocation10 + $0x128] sm:$0xf]
        %v1346 = vld [vmem:[#allocation10 + $0x12c] sm:$0xf]
        %v1347 = vld [vmem:[#allocation10 + $0x130] sm:$0xf]
        %v1348 = vld [vmem:[#allocation10 + $0x134] sm:$0xf]
        %v1349 = vld [vmem:[#allocation10 + $0x138] sm:$0xf]
        %v1350 = vld [vmem:[#allocation10 + $0x13c] sm:$0xf]
        %v1351 = vld [vmem:[#allocation10 + $0x140] sm:$0xf]
        %v1352 = vld [vmem:[#allocation10 + $0x144] sm:$0xf]
        %v1353 = vld [vmem:[#allocation10 + $0x148] sm:$0xf]
        %v1354 = vld [vmem:[#allocation10 + $0x14c] sm:$0xf]
        %v1355 = vld [vmem:[#allocation10 + $0x150] sm:$0xf]
        %v1356 = vld [vmem:[#allocation10 + $0x154] sm:$0xf]
        %v1357 = vld [vmem:[#allocation10 + $0x158] sm:$0xf]
        %v1358 = vld [vmem:[#allocation10 + $0x15c] sm:$0xf]
        %v1359 = vld [vmem:[#allocation10 + $0x160] sm:$0xf]
        %v1360 = vld [vmem:[#allocation10 + $0x164] sm:$0xf]
        %v1361 = vld [vmem:[#allocation10 + $0x168] sm:$0xf]
        %v1362 = vld [vmem:[#allocation10 + $0x16c] sm:$0xf]
        %v1363 = vld [vmem:[#allocation10 + $0x170] sm:$0xf]
        %v1364 = vld [vmem:[#allocation10 + $0x174] sm:$0xf]
        %v1365 = vld [vmem:[#allocation10 + $0x178] sm:$0xf]
        %v1366 = vld [vmem:[#allocation10 + $0x17c] sm:$0xf]
        %v1367 = vld [vmem:[#allocation10 + $0x180] sm:$0xf]
        %v1368 = vld [vmem:[#allocation10 + $0x184] sm:$0xf]
        %v1369 = vld [vmem:[#allocation10 + $0x188] sm:$0xf]
        %v1370 = vld [vmem:[#allocation10 + $0x18c] sm:$0xf]
        %v1371 = vld [vmem:[#allocation10 + $0x190] sm:$0xf]
        %v1372 = vld [vmem:[#allocation10 + $0x194] sm:$0xf]
        %v1373 = vld [vmem:[#allocation10 + $0x198] sm:$0xf]
        %v1374 = vld [vmem:[#allocation10 + $0x19c] sm:$0xf]
        %v1375 = vld [vmem:[#allocation10 + $0x1a0] sm:$0xf]
        %v1376 = vld [vmem:[#allocation10 + $0x1a4] sm:$0xf]
        %v1377 = vld [vmem:[#allocation10 + $0x1a8] sm:$0xf]
        %v1378 = vld [vmem:[#allocation10 + $0x1ac] sm:$0xf]
        %v1379 = vld [vmem:[#allocation10 + $0x1b0] sm:$0xf]
        %v1380 = vld [vmem:[#allocation10 + $0x1b4] sm:$0xf]
        %v1381 = vld [vmem:[#allocation10 + $0x1b8] sm:$0xf]
        %v1382 = vld [vmem:[#allocation10 + $0x1bc] sm:$0xf]
        %v1383 = vld [vmem:[#allocation10 + $0x1c0] sm:$0xf]
        %v1384 = vld [vmem:[#allocation10 + $0x1c4] sm:$0xf]
        %v1385 = vld [vmem:[#allocation10 + $0x1c8] sm:$0xf]
        %v1386 = vld [vmem:[#allocation10 + $0x1cc] sm:$0xf]
        %v1387 = vld [vmem:[#allocation10 + $0x1d0] sm:$0xf]
        %v1388 = vld [vmem:[#allocation10 + $0x1d4] sm:$0xf]
        %v1389 = vld [vmem:[#allocation10 + $0x1d8] sm:$0xf]
        %v1390 = vld [vmem:[#allocation10 + $0x1dc] sm:$0xf]
        %v1391 = vld [vmem:[#allocation10 + $0x1e0] sm:$0xf]
        %v1392 = vld [vmem:[#allocation10 + $0x1e4] sm:$0xf]
        %v1393 = vld [vmem:[#allocation10 + $0x1e8] sm:$0xf]
        %v1394 = vld [vmem:[#allocation10 + $0x1ec] sm:$0xf]
        %v1395 = vld [vmem:[#allocation10 + $0x1f0] sm:$0xf]
        %v1396 = vld [vmem:[#allocation10 + $0x1f4] sm:$0xf]
        %v1397 = vld [vmem:[#allocation10 + $0x1f8] sm:$0xf]
        %v1398 = vld [vmem:[#allocation10 + $0x1fc] sm:$0xf]
        %v1399 = vld [vmem:[#allocation10 + $0x200] sm:$0xf]
        %v1400 = vld [vmem:[#allocation10 + $0x204] sm:$0xf]
        %v1401 = vld [vmem:[#allocation10 + $0x208] sm:$0xf]
        %v1402 = vld [vmem:[#allocation10 + $0x20c] sm:$0xf]
        %v1403 = vld [vmem:[#allocation10 + $0x210] sm:$0xf]
        %v1404 = vld [vmem:[#allocation10 + $0x214] sm:$0xf]
        %v1405 = vld [vmem:[#allocation10 + $0x218] sm:$0xf]
        %v1406 = vld [vmem:[#allocation10 + $0x21c] sm:$0xf]
        %v1407 = vld [vmem:[#allocation10 + $0x220] sm:$0xf]
        %v1408 = vld [vmem:[#allocation10 + $0x224] sm:$0xf]
        %v1409 = vld [vmem:[#allocation10 + $0x228] sm:$0xf]
        %v1410 = vld [vmem:[#allocation10 + $0x22c] sm:$0xf]
        %v1411 = vld [vmem:[#allocation10 + $0x230] sm:$0xf]
        %v1412 = vld [vmem:[#allocation10 + $0x234] sm:$0xf]
        %v1413 = vld [vmem:[#allocation10 + $0x238] sm:$0xf]
        %v1414 = vld [vmem:[#allocation10 + $0x23c] sm:$0xf]
        %v1415 = vld [vmem:[%s2] sm:$0x1]
        %v1416 = vld [vmem:[%s3] sm:$0x1]
        %v1417 = vld [vmem:[%s5] sm:$0x1]
        %v1418 = vld [vmem:[%s6] sm:$0x1]
        %v1419 = vld [vmem:[#allocation2] sm:$0xf]
        %v1420 = vld [vmem:[#allocation2 + $0x4] sm:$0xf]
        %v1421 = vld [vmem:[#allocation2 + $0xc] sm:$0xf]
        %v1422 = vld [vmem:[#allocation2 + $0x10] sm:$0xf]
        %v1423 = vld [vmem:[#allocation2 + $0x18] sm:$0xf]
        %v1424 = vld [vmem:[#allocation2 + $0x1c] sm:$0xf]
        %v1425 = vld [vmem:[#allocation2 + $0x24] sm:$0xf]
        %v1426 = vld [vmem:[#allocation2 + $0x28] sm:$0xf]
        %v1427 = vld [vmem:[#allocation2 + $0x30] sm:$0xf]
        %v1428 = vld [vmem:[#allocation2 + $0x34] sm:$0xf]
        %v1429 = vld [vmem:[#allocation2 + $0x3c] sm:$0xf]
        %v1430 = vld [vmem:[#allocation2 + $0x40] sm:$0xf]
        %v1431 = vld [vmem:[#allocation2 + $0x48] sm:$0xf]
        %v1432 = vld [vmem:[#allocation2 + $0x4c] sm:$0xf]
        %v1433 = vld [vmem:[#allocation2 + $0x54] sm:$0xf]
        %v1434 = vld [vmem:[#allocation2 + $0x58] sm:$0xf]
        %v1435 = vld [vmem:[#allocation2 + $0x60] sm:$0xf]
        %v1436 = vld [vmem:[#allocation2 + $0x64] sm:$0xf]
        %v1437 = vld [vmem:[#allocation2 + $0x6c] sm:$0xf]
        %v1438 = vld [vmem:[#allocation2 + $0x70] sm:$0xf]
        %v1439 = vld [vmem:[#allocation2 + $0x78] sm:$0xf]
        %v1440 = vld [vmem:[#allocation2 + $0x7c] sm:$0xf]
        %v1441 = vld [vmem:[#allocation2 + $0x84] sm:$0xf]
        %v1442 = vld [vmem:[#allocation2 + $0x88] sm:$0xf]
        %v1443 = vld [vmem:[#allocation2 + $0x90] sm:$0xf]
        %v1444 = vld [vmem:[#allocation2 + $0x94] sm:$0xf]
        %v1445 = vld [vmem:[#allocation2 + $0x9c] sm:$0xf]
        %v1446 = vld [vmem:[#allocation2 + $0xa0] sm:$0xf]
        %v1447 = vld [vmem:[#allocation2 + $0xa8] sm:$0xf]
        %v1448 = vld [vmem:[#allocation2 + $0xac] sm:$0xf]
        %v1449 = vld [vmem:[#allocation2 + $0xb4] sm:$0xf]
        %v1450 = vld [vmem:[#allocation2 + $0xb8] sm:$0xf]
        %v1483 = vunpack.c.l.b16 %v1419
        %v1484 = vunpack.c.l.b16 %v1420
        %v1485 = vunpack.c.l.b16 %v1421
        %v1486 = vunpack.c.l.b16 %v1422
        %v1487 = vunpack.c.l.b16 %v1423
        %v1488 = vunpack.c.l.b16 %v1424
        %v1489 = vunpack.c.l.b16 %v1425
        %v1490 = vunpack.c.l.b16 %v1426
        %v1491 = vunpack.c.l.b16 %v1427
        %v1492 = vunpack.c.l.b16 %v1428
        %v1493 = vunpack.c.l.b16 %v1429
        %v1494 = vunpack.c.l.b16 %v1430
        %v1495 = vunpack.c.l.b16 %v1431
        %v1496 = vunpack.c.l.b16 %v1432
        %v1497 = vunpack.c.l.b16 %v1433
        %v1498 = vunpack.c.l.b16 %v1434
        %v1499 = vunpack.c.l.b16 %v1435
        %v1500 = vunpack.c.l.b16 %v1436
        %v1501 = vunpack.c.l.b16 %v1437
        %v1502 = vunpack.c.l.b16 %v1438
        %v1503 = vunpack.c.l.b16 %v1439
        %v1504 = vunpack.c.l.b16 %v1440
        %v1505 = vunpack.c.l.b16 %v1441
        %v1506 = vunpack.c.l.b16 %v1442
        %v1507 = vunpack.c.l.b16 %v1443
        %v1508 = vunpack.c.l.b16 %v1444
        %v1509 = vunpack.c.l.b16 %v1445
        %v1510 = vunpack.c.l.b16 %v1446
        %v1511 = vunpack.c.l.b16 %v1447
        %v1512 = vunpack.c.l.b16 %v1448
        %v1513 = vunpack.c.l.b16 %v1449
        %v1514 = vunpack.c.l.b16 %v1450
        %v1515 = vpack.c.b16 %v1484, %v1483
        %v1516 = vpack.c.b16 %v1486, %v1485
        %v1517 = vpack.c.b16 %v1488, %v1487
        %v1518 = vpack.c.b16 %v1490, %v1489
        %v1519 = vpack.c.b16 %v1492, %v1491
        %v1520 = vpack.c.b16 %v1494, %v1493
        %v1521 = vpack.c.b16 %v1496, %v1495
        %v1522 = vpack.c.b16 %v1498, %v1497
        %v1523 = vpack.c.b16 %v1500, %v1499
        %v1524 = vpack.c.b16 %v1502, %v1501
        %v1525 = vpack.c.b16 %v1504, %v1503
        %v1526 = vpack.c.b16 %v1506, %v1505
        %v1527 = vpack.c.b16 %v1508, %v1507
        %v1528 = vpack.c.b16 %v1510, %v1509
        %v1529 = vpack.c.b16 %v1512, %v1511
        %v1530 = vpack.c.b16 %v1514, %v1513
        %1547 = vst [vmem:[#allocation4] sm:$0xff] %v1515
        %1548 = vst [vmem:[#allocation4 + $0x48] sm:$0xff] %v1516
        %1549 = vst [vmem:[#allocation4 + $0x90] sm:$0xff] %v1517
        %1550 = vst [vmem:[#allocation4 + $0xd8] sm:$0xff] %v1518
        %1551 = vst [vmem:[#allocation4 + $0x120] sm:$0xff] %v1519
        %1552 = vst [vmem:[#allocation4 + $0x168] sm:$0xff] %v1520
        %1553 = vst [vmem:[#allocation4 + $0x1b0] sm:$0xff] %v1521
        %1554 = vst [vmem:[#allocation4 + $0x1f8] sm:$0xff] %v1522
        %1555 = vst [vmem:[#allocation4 + $0x240] sm:$0xff] %v1523
        %1556 = vst [vmem:[#allocation4 + $0x288] sm:$0xff] %v1524
        %1557 = vst [vmem:[#allocation4 + $0x2d0] sm:$0xff] %v1525
        %1558 = vst [vmem:[#allocation4 + $0x318] sm:$0xff] %v1526
        %1559 = vst [vmem:[#allocation4 + $0x360] sm:$0xff] %v1527
        %1560 = vst [vmem:[#allocation4 + $0x3a8] sm:$0xff] %v1528
        %1561 = vst [vmem:[#allocation4 + $0x3f0] sm:$0xff] %v1529
        %1562 = vst [vmem:[#allocation4 + $0x438] sm:$0xff] %v1530
        %v1563 = vld [vmem:[#allocation2] sm:$0xf]
        %v1564 = vld [vmem:[#allocation2 + $0x4] sm:$0xf]
        %v1565 = vld [vmem:[#allocation2 + $0x8] sm:$0x1]
        %v1566 = vld [vmem:[#allocation2 + $0xc] sm:$0xf]
        %v1567 = vld [vmem:[#allocation2 + $0x10] sm:$0xf]
        %v1568 = vld [vmem:[#allocation2 + $0x14] sm:$0x1]
        %v1569 = vld [vmem:[#allocation2 + $0x18] sm:$0xf]
        %v1570 = vld [vmem:[#allocation2 + $0x1c] sm:$0xf]
        %v1571 = vld [vmem:[#allocation2 + $0x20] sm:$0x1]
        %v1572 = vld [vmem:[#allocation2 + $0x24] sm:$0xf]
        %v1573 = vld [vmem:[#allocation2 + $0x28] sm:$0xf]
        %v1574 = vld [vmem:[#allocation2 + $0x2c] sm:$0x1]
        %v1575 = vld [vmem:[#allocation2 + $0x30] sm:$0xf]
        %v1576 = vld [vmem:[#allocation2 + $0x34] sm:$0xf]
        %v1577 = vld [vmem:[#allocation2 + $0x38] sm:$0x1]
        %v1578 = vld [vmem:[#allocation2 + $0x3c] sm:$0xf]
        %v1579 = vld [vmem:[#allocation2 + $0x40] sm:$0xf]
        %v1580 = vld [vmem:[#allocation2 + $0x44] sm:$0x1]
        %v1581 = vld [vmem:[#allocation2 + $0x48] sm:$0xf]
        %v1582 = vld [vmem:[#allocation2 + $0x4c] sm:$0xf]
        %v1583 = vld [vmem:[#allocation2 + $0x50] sm:$0x1]
        %v1584 = vld [vmem:[#allocation2 + $0x54] sm:$0xf]
        %v1585 = vld [vmem:[#allocation2 + $0x58] sm:$0xf]
        %v1586 = vld [vmem:[#allocation2 + $0x5c] sm:$0x1]
        %v1587 = vld [vmem:[#allocation2 + $0x60] sm:$0xf]
        %v1588 = vld [vmem:[#allocation2 + $0x64] sm:$0xf]
        %v1589 = vld [vmem:[#allocation2 + $0x68] sm:$0x1]
        %v1590 = vld [vmem:[#allocation2 + $0x6c] sm:$0xf]
        %v1591 = vld [vmem:[#allocation2 + $0x70] sm:$0xf]
        %v1592 = vld [vmem:[#allocation2 + $0x74] sm:$0x1]
        %v1593 = vld [vmem:[#allocation2 + $0x78] sm:$0xf]
        %v1594 = vld [vmem:[#allocation2 + $0x7c] sm:$0xf]
        %v1595 = vld [vmem:[#allocation2 + $0x80] sm:$0x1]
        %v1596 = vld [vmem:[#allocation2 + $0x84] sm:$0xf]
        %v1597 = vld [vmem:[#allocation2 + $0x88] sm:$0xf]
        %v1598 = vld [vmem:[#allocation2 + $0x8c] sm:$0x1]
        %v1599 = vld [vmem:[#allocation2 + $0x90] sm:$0xf]
        %v1600 = vld [vmem:[#allocation2 + $0x94] sm:$0xf]
        %v1601 = vld [vmem:[#allocation2 + $0x98] sm:$0x1]
        %v1602 = vld [vmem:[#allocation2 + $0x9c] sm:$0xf]
        %v1603 = vld [vmem:[#allocation2 + $0xa0] sm:$0xf]
        %v1604 = vld [vmem:[#allocation2 + $0xa4] sm:$0x1]
        %v1605 = vld [vmem:[#allocation2 + $0xa8] sm:$0xf]
        %v1606 = vld [vmem:[#allocation2 + $0xac] sm:$0xf]
        %v1607 = vld [vmem:[#allocation2 + $0xb0] sm:$0x1]
        %v1608 = vld [vmem:[#allocation2 + $0xb4] sm:$0xf]
        %v1609 = vld [vmem:[#allocation2 + $0xb8] sm:$0xf]
        %v1610 = vld [vmem:[#allocation2 + $0xbc] sm:$0x1]
        %v1659 = vunpack.c.l.b16 %v1563
        %v1660 = vunpack.c.l.b16 %v1564
        %v1661 = vunpack.c.l.b16 %v1565
        %v1662 = vunpack.c.l.b16 %v1566
        %v1663 = vunpack.c.l.b16 %v1567
        %v1664 = vunpack.c.l.b16 %v1568
        %v1665 = vunpack.c.l.b16 %v1569
        %v1666 = vunpack.c.l.b16 %v1570
        %v1667 = vunpack.c.l.b16 %v1571
        %v1668 = vunpack.c.l.b16 %v1572
        %v1669 = vunpack.c.l.b16 %v1573
        %v1670 = vunpack.c.l.b16 %v1574
        %v1671 = vunpack.c.l.b16 %v1575
        %v1672 = vunpack.c.l.b16 %v1576
        %v1673 = vunpack.c.l.b16 %v1577
        %v1674 = vunpack.c.l.b16 %v1578
        %v1675 = vunpack.c.l.b16 %v1579
        %v1676 = vunpack.c.l.b16 %v1580
        %v1677 = vunpack.c.l.b16 %v1581
        %v1678 = vunpack.c.l.b16 %v1582
        %v1679 = vunpack.c.l.b16 %v1583
        %v1680 = vunpack.c.l.b16 %v1584
        %v1681 = vunpack.c.l.b16 %v1585
        %v1682 = vunpack.c.l.b16 %v1586
        %v1683 = vunpack.c.l.b16 %v1587
        %v1684 = vunpack.c.l.b16 %v1588
        %v1685 = vunpack.c.l.b16 %v1589
        %v1686 = vunpack.c.l.b16 %v1590
        %v1687 = vunpack.c.l.b16 %v1591
        %v1688 = vunpack.c.l.b16 %v1592
        %v1689 = vunpack.c.l.b16 %v1593
        %v1690 = vunpack.c.l.b16 %v1594
        %v1691 = vunpack.c.l.b16 %v1595
        %v1692 = vunpack.c.l.b16 %v1596
        %v1693 = vunpack.c.l.b16 %v1597
        %v1694 = vunpack.c.l.b16 %v1598
        %v1695 = vunpack.c.l.b16 %v1599
        %v1696 = vunpack.c.l.b16 %v1600
        %v1697 = vunpack.c.l.b16 %v1601
        %v1698 = vunpack.c.l.b16 %v1602
        %v1699 = vunpack.c.l.b16 %v1603
        %v1700 = vunpack.c.l.b16 %v1604
        %v1701 = vunpack.c.l.b16 %v1605
        %v1702 = vunpack.c.l.b16 %v1606
        %v1703 = vunpack.c.l.b16 %v1607
        %v1704 = vunpack.c.l.b16 %v1608
        %v1705 = vunpack.c.l.b16 %v1609
        %v1706 = vunpack.c.l.b16 %v1610
        %v1707 = vpack.c.b16 %v1660, %v1659
        %v1708 = vpack.c.b16 %v1661, %v1661
        %v1709 = vpack.c.b16 %v1663, %v1662
        %v1710 = vpack.c.b16 %v1664, %v1664
        %v1711 = vpack.c.b16 %v1666, %v1665
        %v1712 = vpack.c.b16 %v1667, %v1667
        %v1713 = vpack.c.b16 %v1669, %v1668
        %v1714 = vpack.c.b16 %v1670, %v1670
        %v1715 = vpack.c.b16 %v1672, %v1671
        %v1716 = vpack.c.b16 %v1673, %v1673
        %v1717 = vpack.c.b16 %v1675, %v1674
        %v1718 = vpack.c.b16 %v1676, %v1676
        %v1719 = vpack.c.b16 %v1678, %v1677
        %v1720 = vpack.c.b16 %v1679, %v1679
        %v1721 = vpack.c.b16 %v1681, %v1680
        %v1722 = vpack.c.b16 %v1682, %v1682
        %v1723 = vpack.c.b16 %v1684, %v1683
        %v1724 = vpack.c.b16 %v1685, %v1685
        %v1725 = vpack.c.b16 %v1687, %v1686
        %v1726 = vpack.c.b16 %v1688, %v1688
        %v1727 = vpack.c.b16 %v1690, %v1689
        %v1728 = vpack.c.b16 %v1691, %v1691
        %v1729 = vpack.c.b16 %v1693, %v1692
        %v1730 = vpack.c.b16 %v1694, %v1694
        %v1731 = vpack.c.b16 %v1696, %v1695
        %v1732 = vpack.c.b16 %v1697, %v1697
        %v1733 = vpack.c.b16 %v1699, %v1698
        %v1734 = vpack.c.b16 %v1700, %v1700
        %v1735 = vpack.c.b16 %v1702, %v1701
        %v1736 = vpack.c.b16 %v1703, %v1703
        %v1737 = vpack.c.b16 %v1705, %v1704
        %v1738 = vpack.c.b16 %v1706, %v1706
        %vm1739 = vsmask.f32 7424
        %v1741 = vshrl.u32 %v1707, 16
        %v1743 = vshll.u32 %v1707, 16
        %v1745 = vrot.slane %v1743, 1
        %v1746 = vor.u32 %v1741, %v1745
        %v1748 = vshll.u32 %v1708, 16
        %v1750 = vrot.slane %v1748, 1
        %v1751 = vsel %vm1739, %v1746, %v1750
        %v1753 = vshrl.u32 %v1709, 16
        %v1755 = vshll.u32 %v1709, 16
        %v1757 = vrot.slane %v1755, 1
        %v1758 = vor.u32 %v1753, %v1757
        %v1760 = vshll.u32 %v1710, 16
        %v1762 = vrot.slane %v1760, 1
        %v1763 = vsel %vm1739, %v1758, %v1762
        %v1765 = vshrl.u32 %v1711, 16
        %v1767 = vshll.u32 %v1711, 16
        %v1769 = vrot.slane %v1767, 1
        %v1770 = vor.u32 %v1765, %v1769
        %v1772 = vshll.u32 %v1712, 16
        %v1774 = vrot.slane %v1772, 1
        %v1775 = vsel %vm1739, %v1770, %v1774
        %v1777 = vshrl.u32 %v1713, 16
        %v1779 = vshll.u32 %v1713, 16
        %v1781 = vrot.slane %v1779, 1
        %v1782 = vor.u32 %v1777, %v1781
        %v1784 = vshll.u32 %v1714, 16
        %v1786 = vrot.slane %v1784, 1
        %v1787 = vsel %vm1739, %v1782, %v1786
        %v1789 = vshrl.u32 %v1715, 16
        %v1791 = vshll.u32 %v1715, 16
        %v1793 = vrot.slane %v1791, 1
        %v1794 = vor.u32 %v1789, %v1793
        %v1796 = vshll.u32 %v1716, 16
        %v1798 = vrot.slane %v1796, 1
        %v1799 = vsel %vm1739, %v1794, %v1798
        %v1801 = vshrl.u32 %v1717, 16
        %v1803 = vshll.u32 %v1717, 16
        %v1805 = vrot.slane %v1803, 1
        %v1806 = vor.u32 %v1801, %v1805
        %v1808 = vshll.u32 %v1718, 16
        %v1810 = vrot.slane %v1808, 1
        %v1811 = vsel %vm1739, %v1806, %v1810
        %v1813 = vshrl.u32 %v1719, 16
        %v1815 = vshll.u32 %v1719, 16
        %v1817 = vrot.slane %v1815, 1
        %v1818 = vor.u32 %v1813, %v1817
        %v1820 = vshll.u32 %v1720, 16
        %v1822 = vrot.slane %v1820, 1
        %v1823 = vsel %vm1739, %v1818, %v1822
        %v1825 = vshrl.u32 %v1721, 16
        %v1827 = vshll.u32 %v1721, 16
        %v1829 = vrot.slane %v1827, 1
        %v1830 = vor.u32 %v1825, %v1829
        %v1832 = vshll.u32 %v1722, 16
        %v1834 = vrot.slane %v1832, 1
        %v1835 = vsel %vm1739, %v1830, %v1834
        %v1837 = vshrl.u32 %v1723, 16
        %v1839 = vshll.u32 %v1723, 16
        %v1841 = vrot.slane %v1839, 1
        %v1842 = vor.u32 %v1837, %v1841
        %v1844 = vshll.u32 %v1724, 16
        %v1846 = vrot.slane %v1844, 1
        %v1847 = vsel %vm1739, %v1842, %v1846
        %v1849 = vshrl.u32 %v1725, 16
        %v1851 = vshll.u32 %v1725, 16
        %v1853 = vrot.slane %v1851, 1
        %v1854 = vor.u32 %v1849, %v1853
        %v1856 = vshll.u32 %v1726, 16
        %v1858 = vrot.slane %v1856, 1
        %v1859 = vsel %vm1739, %v1854, %v1858
        %v1861 = vshrl.u32 %v1727, 16
        %v1863 = vshll.u32 %v1727, 16
        %v1865 = vrot.slane %v1863, 1
        %v1866 = vor.u32 %v1861, %v1865
        %v1868 = vshll.u32 %v1728, 16
        %v1870 = vrot.slane %v1868, 1
        %v1871 = vsel %vm1739, %v1866, %v1870
        %v1873 = vshrl.u32 %v1729, 16
        %v1875 = vshll.u32 %v1729, 16
        %v1877 = vrot.slane %v1875, 1
        %v1878 = vor.u32 %v1873, %v1877
        %v1880 = vshll.u32 %v1730, 16
        %v1882 = vrot.slane %v1880, 1
        %v1883 = vsel %vm1739, %v1878, %v1882
        %v1885 = vshrl.u32 %v1731, 16
        %v1887 = vshll.u32 %v1731, 16
        %v1889 = vrot.slane %v1887, 1
        %v1890 = vor.u32 %v1885, %v1889
        %v1892 = vshll.u32 %v1732, 16
        %v1894 = vrot.slane %v1892, 1
        %v1895 = vsel %vm1739, %v1890, %v1894
        %v1897 = vshrl.u32 %v1733, 16
        %v1899 = vshll.u32 %v1733, 16
        %v1901 = vrot.slane %v1899, 1
        %v1902 = vor.u32 %v1897, %v1901
        %v1904 = vshll.u32 %v1734, 16
        %v1906 = vrot.slane %v1904, 1
        %v1907 = vsel %vm1739, %v1902, %v1906
        %v1909 = vshrl.u32 %v1735, 16
        %v1911 = vshll.u32 %v1735, 16
        %v1913 = vrot.slane %v1911, 1
        %v1914 = vor.u32 %v1909, %v1913
        %v1916 = vshll.u32 %v1736, 16
        %v1918 = vrot.slane %v1916, 1
        %v1919 = vsel %vm1739, %v1914, %v1918
        %v1921 = vshrl.u32 %v1737, 16
        %v1923 = vshll.u32 %v1737, 16
        %v1925 = vrot.slane %v1923, 1
        %v1926 = vor.u32 %v1921, %v1925
        %v1928 = vshll.u32 %v1738, 16
        %v1930 = vrot.slane %v1928, 1
        %v1931 = vsel %vm1739, %v1926, %v1930
        %1948 = vst [vmem:[#allocation4 + $0x8] sm:$0xff] %v1751
        %1949 = vst [vmem:[#allocation4 + $0x50] sm:$0xff] %v1763
        %1950 = vst [vmem:[#allocation4 + $0x98] sm:$0xff] %v1775
        %1951 = vst [vmem:[#allocation4 + $0xe0] sm:$0xff] %v1787
        %1952 = vst [vmem:[#allocation4 + $0x128] sm:$0xff] %v1799
        %1953 = vst [vmem:[#allocation4 + $0x170] sm:$0xff] %v1811
        %1954 = vst [vmem:[#allocation4 + $0x1b8] sm:$0xff] %v1823
        %1955 = vst [vmem:[#allocation4 + $0x200] sm:$0xff] %v1835
        %1956 = vst [vmem:[#allocation4 + $0x248] sm:$0xff] %v1847
        %1957 = vst [vmem:[#allocation4 + $0x290] sm:$0xff] %v1859
        %1958 = vst [vmem:[#allocation4 + $0x2d8] sm:$0xff] %v1871
        %1959 = vst [vmem:[#allocation4 + $0x320] sm:$0xff] %v1883
        %1960 = vst [vmem:[#allocation4 + $0x368] sm:$0xff] %v1895
        %1961 = vst [vmem:[#allocation4 + $0x3b0] sm:$0xff] %v1907
        %1962 = vst [vmem:[#allocation4 + $0x3f8] sm:$0xff] %v1919
        %1963 = vst [vmem:[#allocation4 + $0x440] sm:$0xff] %v1931
        %v1964 = vld [vmem:[#allocation2] sm:$0xe]
        %v1965 = vld [vmem:[#allocation2 + $0x4] sm:$0xf]
        %v1966 = vld [vmem:[#allocation2 + $0x8] sm:$0x1]
        %v1967 = vld [vmem:[#allocation2 + $0xc] sm:$0xe]
        %v1968 = vld [vmem:[#allocation2 + $0x10] sm:$0xf]
        %v1969 = vld [vmem:[#allocation2 + $0x14] sm:$0x1]
        %v1970 = vld [vmem:[#allocation2 + $0x18] sm:$0xe]
        %v1971 = vld [vmem:[#allocation2 + $0x1c] sm:$0xf]
        %v1972 = vld [vmem:[#allocation2 + $0x20] sm:$0x1]
        %v1973 = vld [vmem:[#allocation2 + $0x24] sm:$0xe]
        %v1974 = vld [vmem:[#allocation2 + $0x28] sm:$0xf]
        %v1975 = vld [vmem:[#allocation2 + $0x2c] sm:$0x1]
        %v1976 = vld [vmem:[#allocation2 + $0x30] sm:$0xe]
        %v1977 = vld [vmem:[#allocation2 + $0x34] sm:$0xf]
        %v1978 = vld [vmem:[#allocation2 + $0x38] sm:$0x1]
        %v1979 = vld [vmem:[#allocation2 + $0x3c] sm:$0xe]
        %v1980 = vld [vmem:[#allocation2 + $0x40] sm:$0xf]
        %v1981 = vld [vmem:[#allocation2 + $0x44] sm:$0x1]
        %v1982 = vld [vmem:[#allocation2 + $0x48] sm:$0xe]
        %v1983 = vld [vmem:[#allocation2 + $0x4c] sm:$0xf]
        %v1984 = vld [vmem:[#allocation2 + $0x50] sm:$0x1]
        %v1985 = vld [vmem:[#allocation2 + $0x54] sm:$0xe]
        %v1986 = vld [vmem:[#allocation2 + $0x58] sm:$0xf]
        %v1987 = vld [vmem:[#allocation2 + $0x5c] sm:$0x1]
        %v1988 = vld [vmem:[#allocation2 + $0x60] sm:$0xe]
        %v1989 = vld [vmem:[#allocation2 + $0x64] sm:$0xf]
        %v1990 = vld [vmem:[#allocation2 + $0x68] sm:$0x1]
        %v1991 = vld [vmem:[#allocation2 + $0x6c] sm:$0xe]
        %v1992 = vld [vmem:[#allocation2 + $0x70] sm:$0xf]
        %v1993 = vld [vmem:[#allocation2 + $0x74] sm:$0x1]
        %v1994 = vld [vmem:[#allocation2 + $0x78] sm:$0xe]
        %v1995 = vld [vmem:[#allocation2 + $0x7c] sm:$0xf]
        %v1996 = vld [vmem:[#allocation2 + $0x80] sm:$0x1]
        %v1997 = vld [vmem:[#allocation2 + $0x84] sm:$0xe]
        %v1998 = vld [vmem:[#allocation2 + $0x88] sm:$0xf]
        %v1999 = vld [vmem:[#allocation2 + $0x8c] sm:$0x1]
        %v2000 = vld [vmem:[#allocation2 + $0x90] sm:$0xe]
        %v2001 = vld [vmem:[#allocation2 + $0x94] sm:$0xf]
        %v2002 = vld [vmem:[#allocation2 + $0x98] sm:$0x1]
        %v2003 = vld [vmem:[#allocation2 + $0x9c] sm:$0xe]
        %v2004 = vld [vmem:[#allocation2 + $0xa0] sm:$0xf]
        %v2005 = vld [vmem:[#allocation2 + $0xa4] sm:$0x1]
        %v2006 = vld [vmem:[#allocation2 + $0xa8] sm:$0xe]
        %v2007 = vld [vmem:[#allocation2 + $0xac] sm:$0xf]
        %v2008 = vld [vmem:[#allocation2 + $0xb0] sm:$0x1]
        %v2009 = vld [vmem:[#allocation2 + $0xb4] sm:$0xe]
        %v2010 = vld [vmem:[#allocation2 + $0xb8] sm:$0xf]
        %v2011 = vld [vmem:[#allocation2 + $0xbc] sm:$0x1]
        %v2060 = vunpack.c.l.b16 %v1964
        %v2061 = vunpack.c.l.b16 %v1965
        %v2062 = vunpack.c.l.b16 %v1966
        %v2063 = vunpack.c.l.b16 %v1967
        %v2064 = vunpack.c.l.b16 %v1968
        %v2065 = vunpack.c.l.b16 %v1969
        %v2066 = vunpack.c.l.b16 %v1970
        %v2067 = vunpack.c.l.b16 %v1971
        %v2068 = vunpack.c.l.b16 %v1972
        %v2069 = vunpack.c.l.b16 %v1973
        %v2070 = vunpack.c.l.b16 %v1974
        %v2071 = vunpack.c.l.b16 %v1975
        %v2072 = vunpack.c.l.b16 %v1976
        %v2073 = vunpack.c.l.b16 %v1977
        %v2074 = vunpack.c.l.b16 %v1978
        %v2075 = vunpack.c.l.b16 %v1979
        %v2076 = vunpack.c.l.b16 %v1980
        %v2077 = vunpack.c.l.b16 %v1981
        %v2078 = vunpack.c.l.b16 %v1982
        %v2079 = vunpack.c.l.b16 %v1983
        %v2080 = vunpack.c.l.b16 %v1984
        %v2081 = vunpack.c.l.b16 %v1985
        %v2082 = vunpack.c.l.b16 %v1986
        %v2083 = vunpack.c.l.b16 %v1987
        %v2084 = vunpack.c.l.b16 %v1988
        %v2085 = vunpack.c.l.b16 %v1989
        %v2086 = vunpack.c.l.b16 %v1990
        %v2087 = vunpack.c.l.b16 %v1991
        %v2088 = vunpack.c.l.b16 %v1992
        %v2089 = vunpack.c.l.b16 %v1993
        %v2090 = vunpack.c.l.b16 %v1994
        %v2091 = vunpack.c.l.b16 %v1995
        %v2092 = vunpack.c.l.b16 %v1996
        %v2093 = vunpack.c.l.b16 %v1997
        %v2094 = vunpack.c.l.b16 %v1998
        %v2095 = vunpack.c.l.b16 %v1999
        %v2096 = vunpack.c.l.b16 %v2000
        %v2097 = vunpack.c.l.b16 %v2001
        %v2098 = vunpack.c.l.b16 %v2002
        %v2099 = vunpack.c.l.b16 %v2003
        %v2100 = vunpack.c.l.b16 %v2004
        %v2101 = vunpack.c.l.b16 %v2005
        %v2102 = vunpack.c.l.b16 %v2006
        %v2103 = vunpack.c.l.b16 %v2007
        %v2104 = vunpack.c.l.b16 %v2008
        %v2105 = vunpack.c.l.b16 %v2009
        %v2106 = vunpack.c.l.b16 %v2010
        %v2107 = vunpack.c.l.b16 %v2011
        %v2108 = vpack.c.b16 %v2061, %v2060
        %v2109 = vpack.c.b16 %v2062, %v2062
        %v2110 = vpack.c.b16 %v2064, %v2063
        %v2111 = vpack.c.b16 %v2065, %v2065
        %v2112 = vpack.c.b16 %v2067, %v2066
        %v2113 = vpack.c.b16 %v2068, %v2068
        %v2114 = vpack.c.b16 %v2070, %v2069
        %v2115 = vpack.c.b16 %v2071, %v2071
        %v2116 = vpack.c.b16 %v2073, %v2072
        %v2117 = vpack.c.b16 %v2074, %v2074
        %v2118 = vpack.c.b16 %v2076, %v2075
        %v2119 = vpack.c.b16 %v2077, %v2077
        %v2120 = vpack.c.b16 %v2079, %v2078
        %v2121 = vpack.c.b16 %v2080, %v2080
        %v2122 = vpack.c.b16 %v2082, %v2081
        %v2123 = vpack.c.b16 %v2083, %v2083
        %v2124 = vpack.c.b16 %v2085, %v2084
        %v2125 = vpack.c.b16 %v2086, %v2086
        %v2126 = vpack.c.b16 %v2088, %v2087
        %v2127 = vpack.c.b16 %v2089, %v2089
        %v2128 = vpack.c.b16 %v2091, %v2090
        %v2129 = vpack.c.b16 %v2092, %v2092
        %v2130 = vpack.c.b16 %v2094, %v2093
        %v2131 = vpack.c.b16 %v2095, %v2095
        %v2132 = vpack.c.b16 %v2097, %v2096
        %v2133 = vpack.c.b16 %v2098, %v2098
        %v2134 = vpack.c.b16 %v2100, %v2099
        %v2135 = vpack.c.b16 %v2101, %v2101
        %v2136 = vpack.c.b16 %v2103, %v2102
        %v2137 = vpack.c.b16 %v2104, %v2104
        %v2138 = vpack.c.b16 %v2106, %v2105
        %v2139 = vpack.c.b16 %v2107, %v2107
        %vm2140 = vcmask 1046528
        %v2141 = vrot.slane %v2108, 1
        %v2142 = vrot.slane %v2109, 1
        %v2143 = vsel %vm2140, %v2141, %v2142
        %v2144 = vrot.slane %v2110, 1
        %v2145 = vrot.slane %v2111, 1
        %v2146 = vsel %vm2140, %v2144, %v2145
        %v2147 = vrot.slane %v2112, 1
        %v2148 = vrot.slane %v2113, 1
        %v2149 = vsel %vm2140, %v2147, %v2148
        %v2150 = vrot.slane %v2114, 1
        %v2151 = vrot.slane %v2115, 1
        %v2152 = vsel %vm2140, %v2150, %v2151
        %v2153 = vrot.slane %v2116, 1
        %v2154 = vrot.slane %v2117, 1
        %v2155 = vsel %vm2140, %v2153, %v2154
        %v2156 = vrot.slane %v2118, 1
        %v2157 = vrot.slane %v2119, 1
        %v2158 = vsel %vm2140, %v2156, %v2157
        %v2159 = vrot.slane %v2120, 1
        %v2160 = vrot.slane %v2121, 1
        %v2161 = vsel %vm2140, %v2159, %v2160
        %v2162 = vrot.slane %v2122, 1
        %v2163 = vrot.slane %v2123, 1
        %v2164 = vsel %vm2140, %v2162, %v2163
        %v2165 = vrot.slane %v2124, 1
        %v2166 = vrot.slane %v2125, 1
        %v2167 = vsel %vm2140, %v2165, %v2166
        %v2168 = vrot.slane %v2126, 1
        %v2169 = vrot.slane %v2127, 1
        %v2170 = vsel %vm2140, %v2168, %v2169
        %v2171 = vrot.slane %v2128, 1
        %v2172 = vrot.slane %v2129, 1
        %v2173 = vsel %vm2140, %v2171, %v2172
        %v2174 = vrot.slane %v2130, 1
        %v2175 = vrot.slane %v2131, 1
        %v2176 = vsel %vm2140, %v2174, %v2175
        %v2177 = vrot.slane %v2132, 1
        %v2178 = vrot.slane %v2133, 1
        %v2179 = vsel %vm2140, %v2177, %v2178
        %v2180 = vrot.slane %v2134, 1
        %v2181 = vrot.slane %v2135, 1
        %v2182 = vsel %vm2140, %v2180, %v2181
        %v2183 = vrot.slane %v2136, 1
        %v2184 = vrot.slane %v2137, 1
        %v2185 = vsel %vm2140, %v2183, %v2184
        %v2186 = vrot.slane %v2138, 1
        %v2187 = vrot.slane %v2139, 1
        %v2188 = vsel %vm2140, %v2186, %v2187
        %2205 = vst [vmem:[#allocation4 + $0x10] sm:$0xff] %v2143
        %2206 = vst [vmem:[#allocation4 + $0x58] sm:$0xff] %v2146
        %2207 = vst [vmem:[#allocation4 + $0xa0] sm:$0xff] %v2149
        %2208 = vst [vmem:[#allocation4 + $0xe8] sm:$0xff] %v2152
        %2209 = vst [vmem:[#allocation4 + $0x130] sm:$0xff] %v2155
        %2210 = vst [vmem:[#allocation4 + $0x178] sm:$0xff] %v2158
        %2211 = vst [vmem:[#allocation4 + $0x1c0] sm:$0xff] %v2161
        %2212 = vst [vmem:[#allocation4 + $0x208] sm:$0xff] %v2164
        %2213 = vst [vmem:[#allocation4 + $0x250] sm:$0xff] %v2167
        %2214 = vst [vmem:[#allocation4 + $0x298] sm:$0xff] %v2170
        %2215 = vst [vmem:[#allocation4 + $0x2e0] sm:$0xff] %v2173
        %2216 = vst [vmem:[#allocation4 + $0x328] sm:$0xff] %v2176
        %2217 = vst [vmem:[#allocation4 + $0x370] sm:$0xff] %v2179
        %2218 = vst [vmem:[#allocation4 + $0x3b8] sm:$0xff] %v2182
        %2219 = vst [vmem:[#allocation4 + $0x400] sm:$0xff] %v2185
        %2220 = vst [vmem:[#allocation4 + $0x448] sm:$0xff] %v2188
        %v2221 = vld [vmem:[%s1012] sm:$0xf]
        %v2222 = vld [vmem:[%s1012 + $0x4] sm:$0xf]
        %v2223 = vld [vmem:[%s1012 + $0xc] sm:$0xf]
        %v2224 = vld [vmem:[%s1012 + $0x10] sm:$0xf]
        %v2225 = vld [vmem:[%s1012 + $0x18] sm:$0xf]
        %v2226 = vld [vmem:[%s1012 + $0x1c] sm:$0xf]
        %v2227 = vld [vmem:[%s1012 + $0x24] sm:$0xf]
        %v2228 = vld [vmem:[%s1012 + $0x28] sm:$0xf]
        %v2229 = vld [vmem:[%s1012 + $0x30] sm:$0xf]
        %v2230 = vld [vmem:[%s1012 + $0x34] sm:$0xf]
        %v2231 = vld [vmem:[%s1012 + $0x3c] sm:$0xf]
        %v2232 = vld [vmem:[%s1012 + $0x40] sm:$0xf]
        %v2233 = vld [vmem:[%s1012 + $0x48] sm:$0xf]
        %v2234 = vld [vmem:[%s1012 + $0x4c] sm:$0xf]
        %v2235 = vld [vmem:[%s1012 + $0x54] sm:$0xf]
        %v2236 = vld [vmem:[%s1012 + $0x58] sm:$0xf]
        %v2237 = vld [vmem:[%s1012 + $0x60] sm:$0xf]
        %v2238 = vld [vmem:[%s1012 + $0x64] sm:$0xf]
        %v2239 = vld [vmem:[%s1012 + $0x6c] sm:$0xf]
        %v2240 = vld [vmem:[%s1012 + $0x70] sm:$0xf]
        %v2241 = vld [vmem:[%s1012 + $0x78] sm:$0xf]
        %v2242 = vld [vmem:[%s1012 + $0x7c] sm:$0xf]
        %v2243 = vld [vmem:[%s1012 + $0x84] sm:$0xf]
        %v2244 = vld [vmem:[%s1012 + $0x88] sm:$0xf]
        %v2245 = vld [vmem:[%s1012 + $0x90] sm:$0xf]
        %v2246 = vld [vmem:[%s1012 + $0x94] sm:$0xf]
        %v2247 = vld [vmem:[%s1012 + $0x9c] sm:$0xf]
        %v2248 = vld [vmem:[%s1012 + $0xa0] sm:$0xf]
        %v2249 = vld [vmem:[%s1012 + $0xa8] sm:$0xf]
        %v2250 = vld [vmem:[%s1012 + $0xac] sm:$0xf]
        %v2251 = vld [vmem:[%s1012 + $0xb4] sm:$0xf]
        %v2252 = vld [vmem:[%s1012 + $0xb8] sm:$0xf]
        %v2285 = vunpack.c.l.b16 %v2221
        %v2286 = vunpack.c.l.b16 %v2222
        %v2287 = vunpack.c.l.b16 %v2223
        %v2288 = vunpack.c.l.b16 %v2224
        %v2289 = vunpack.c.l.b16 %v2225
        %v2290 = vunpack.c.l.b16 %v2226
        %v2291 = vunpack.c.l.b16 %v2227
        %v2292 = vunpack.c.l.b16 %v2228
        %v2293 = vunpack.c.l.b16 %v2229
        %v2294 = vunpack.c.l.b16 %v2230
        %v2295 = vunpack.c.l.b16 %v2231
        %v2296 = vunpack.c.l.b16 %v2232
        %v2297 = vunpack.c.l.b16 %v2233
        %v2298 = vunpack.c.l.b16 %v2234
        %v2299 = vunpack.c.l.b16 %v2235
        %v2300 = vunpack.c.l.b16 %v2236
        %v2301 = vunpack.c.l.b16 %v2237
        %v2302 = vunpack.c.l.b16 %v2238
        %v2303 = vunpack.c.l.b16 %v2239
        %v2304 = vunpack.c.l.b16 %v2240
        %v2305 = vunpack.c.l.b16 %v2241
        %v2306 = vunpack.c.l.b16 %v2242
        %v2307 = vunpack.c.l.b16 %v2243
        %v2308 = vunpack.c.l.b16 %v2244
        %v2309 = vunpack.c.l.b16 %v2245
        %v2310 = vunpack.c.l.b16 %v2246
        %v2311 = vunpack.c.l.b16 %v2247
        %v2312 = vunpack.c.l.b16 %v2248
        %v2313 = vunpack.c.l.b16 %v2249
        %v2314 = vunpack.c.l.b16 %v2250
        %v2315 = vunpack.c.l.b16 %v2251
        %v2316 = vunpack.c.l.b16 %v2252
        %v2317 = vpack.c.b16 %v2286, %v2285
        %v2318 = vpack.c.b16 %v2288, %v2287
        %v2319 = vpack.c.b16 %v2290, %v2289
        %v2320 = vpack.c.b16 %v2292, %v2291
        %v2321 = vpack.c.b16 %v2294, %v2293
        %v2322 = vpack.c.b16 %v2296, %v2295
        %v2323 = vpack.c.b16 %v2298, %v2297
        %v2324 = vpack.c.b16 %v2300, %v2299
        %v2325 = vpack.c.b16 %v2302, %v2301
        %v2326 = vpack.c.b16 %v2304, %v2303
        %v2327 = vpack.c.b16 %v2306, %v2305
        %v2328 = vpack.c.b16 %v2308, %v2307
        %v2329 = vpack.c.b16 %v2310, %v2309
        %v2330 = vpack.c.b16 %v2312, %v2311
        %v2331 = vpack.c.b16 %v2314, %v2313
        %v2332 = vpack.c.b16 %v2316, %v2315
        %2349 = vst [vmem:[#allocation4 + $0x18] sm:$0xff] %v2317
        %2350 = vst [vmem:[#allocation4 + $0x60] sm:$0xff] %v2318
        %2351 = vst [vmem:[#allocation4 + $0xa8] sm:$0xff] %v2319
        %2352 = vst [vmem:[#allocation4 + $0xf0] sm:$0xff] %v2320
        %2353 = vst [vmem:[#allocation4 + $0x138] sm:$0xff] %v2321
        %2354 = vst [vmem:[#allocation4 + $0x180] sm:$0xff] %v2322
        %2355 = vst [vmem:[#allocation4 + $0x1c8] sm:$0xff] %v2323
        %2356 = vst [vmem:[#allocation4 + $0x210] sm:$0xff] %v2324
        %2357 = vst [vmem:[#allocation4 + $0x258] sm:$0xff] %v2325
        %2358 = vst [vmem:[#allocation4 + $0x2a0] sm:$0xff] %v2326
        %2359 = vst [vmem:[#allocation4 + $0x2e8] sm:$0xff] %v2327
        %2360 = vst [vmem:[#allocation4 + $0x330] sm:$0xff] %v2328
        %2361 = vst [vmem:[#allocation4 + $0x378] sm:$0xff] %v2329
        %2362 = vst [vmem:[#allocation4 + $0x3c0] sm:$0xff] %v2330
        %2363 = vst [vmem:[#allocation4 + $0x408] sm:$0xff] %v2331
        %2364 = vst [vmem:[#allocation4 + $0x450] sm:$0xff] %v2332
        %v2365 = vld [vmem:[%s1012] sm:$0xf]
        %v2366 = vld [vmem:[%s1012 + $0x4] sm:$0xf]
        %v2367 = vld [vmem:[%s1012 + $0x8] sm:$0x1]
        %v2368 = vld [vmem:[%s1012 + $0xc] sm:$0xf]
        %v2369 = vld [vmem:[%s1012 + $0x10] sm:$0xf]
        %v2370 = vld [vmem:[%s1012 + $0x14] sm:$0x1]
        %v2371 = vld [vmem:[%s1012 + $0x18] sm:$0xf]
        %v2372 = vld [vmem:[%s1012 + $0x1c] sm:$0xf]
        %v2373 = vld [vmem:[%s1012 + $0x20] sm:$0x1]
        %v2374 = vld [vmem:[%s1012 + $0x24] sm:$0xf]
        %v2375 = vld [vmem:[%s1012 + $0x28] sm:$0xf]
        %v2376 = vld [vmem:[%s1012 + $0x2c] sm:$0x1]
        %v2377 = vld [vmem:[%s1012 + $0x30] sm:$0xf]
        %v2378 = vld [vmem:[%s1012 + $0x34] sm:$0xf]
        %v2379 = vld [vmem:[%s1012 + $0x38] sm:$0x1]
        %v2380 = vld [vmem:[%s1012 + $0x3c] sm:$0xf]
        %v2381 = vld [vmem:[%s1012 + $0x40] sm:$0xf]
        %v2382 = vld [vmem:[%s1012 + $0x44] sm:$0x1]
        %v2383 = vld [vmem:[%s1012 + $0x48] sm:$0xf]
        %v2384 = vld [vmem:[%s1012 + $0x4c] sm:$0xf]
        %v2385 = vld [vmem:[%s1012 + $0x50] sm:$0x1]
        %v2386 = vld [vmem:[%s1012 + $0x54] sm:$0xf]
        %v2387 = vld [vmem:[%s1012 + $0x58] sm:$0xf]
        %v2388 = vld [vmem:[%s1012 + $0x5c] sm:$0x1]
        %v2389 = vld [vmem:[%s1012 + $0x60] sm:$0xf]
        %v2390 = vld [vmem:[%s1012 + $0x64] sm:$0xf]
        %v2391 = vld [vmem:[%s1012 + $0x68] sm:$0x1]
        %v2392 = vld [vmem:[%s1012 + $0x6c] sm:$0xf]
        %v2393 = vld [vmem:[%s1012 + $0x70] sm:$0xf]
        %v2394 = vld [vmem:[%s1012 + $0x74] sm:$0x1]
        %v2395 = vld [vmem:[%s1012 + $0x78] sm:$0xf]
        %v2396 = vld [vmem:[%s1012 + $0x7c] sm:$0xf]
        %v2397 = vld [vmem:[%s1012 + $0x80] sm:$0x1]
        %v2398 = vld [vmem:[%s1012 + $0x84] sm:$0xf]
        %v2399 = vld [vmem:[%s1012 + $0x88] sm:$0xf]
        %v2400 = vld [vmem:[%s1012 + $0x8c] sm:$0x1]
        %v2401 = vld [vmem:[%s1012 + $0x90] sm:$0xf]
        %v2402 = vld [vmem:[%s1012 + $0x94] sm:$0xf]
        %v2403 = vld [vmem:[%s1012 + $0x98] sm:$0x1]
        %v2404 = vld [vmem:[%s1012 + $0x9c] sm:$0xf]
        %v2405 = vld [vmem:[%s1012 + $0xa0] sm:$0xf]
        %v2406 = vld [vmem:[%s1012 + $0xa4] sm:$0x1]
        %v2407 = vld [vmem:[%s1012 + $0xa8] sm:$0xf]
        %v2408 = vld [vmem:[%s1012 + $0xac] sm:$0xf]
        %v2409 = vld [vmem:[%s1012 + $0xb0] sm:$0x1]
        %v2410 = vld [vmem:[%s1012 + $0xb4] sm:$0xf]
        %v2411 = vld [vmem:[%s1012 + $0xb8] sm:$0xf]
        %v2412 = vld [vmem:[%s1012 + $0xbc] sm:$0x1]
        %v2461 = vunpack.c.l.b16 %v2365
        %v2462 = vunpack.c.l.b16 %v2366
        %v2463 = vunpack.c.l.b16 %v2367
        %v2464 = vunpack.c.l.b16 %v2368
        %v2465 = vunpack.c.l.b16 %v2369
        %v2466 = vunpack.c.l.b16 %v2370
        %v2467 = vunpack.c.l.b16 %v2371
        %v2468 = vunpack.c.l.b16 %v2372
        %v2469 = vunpack.c.l.b16 %v2373
        %v2470 = vunpack.c.l.b16 %v2374
        %v2471 = vunpack.c.l.b16 %v2375
        %v2472 = vunpack.c.l.b16 %v2376
        %v2473 = vunpack.c.l.b16 %v2377
        %v2474 = vunpack.c.l.b16 %v2378
        %v2475 = vunpack.c.l.b16 %v2379
        %v2476 = vunpack.c.l.b16 %v2380
        %v2477 = vunpack.c.l.b16 %v2381
        %v2478 = vunpack.c.l.b16 %v2382
        %v2479 = vunpack.c.l.b16 %v2383
        %v2480 = vunpack.c.l.b16 %v2384
        %v2481 = vunpack.c.l.b16 %v2385
        %v2482 = vunpack.c.l.b16 %v2386
        %v2483 = vunpack.c.l.b16 %v2387
        %v2484 = vunpack.c.l.b16 %v2388
        %v2485 = vunpack.c.l.b16 %v2389
        %v2486 = vunpack.c.l.b16 %v2390
        %v2487 = vunpack.c.l.b16 %v2391
        %v2488 = vunpack.c.l.b16 %v2392
        %v2489 = vunpack.c.l.b16 %v2393
        %v2490 = vunpack.c.l.b16 %v2394
        %v2491 = vunpack.c.l.b16 %v2395
        %v2492 = vunpack.c.l.b16 %v2396
        %v2493 = vunpack.c.l.b16 %v2397
        %v2494 = vunpack.c.l.b16 %v2398
        %v2495 = vunpack.c.l.b16 %v2399
        %v2496 = vunpack.c.l.b16 %v2400
        %v2497 = vunpack.c.l.b16 %v2401
        %v2498 = vunpack.c.l.b16 %v2402
        %v2499 = vunpack.c.l.b16 %v2403
        %v2500 = vunpack.c.l.b16 %v2404
        %v2501 = vunpack.c.l.b16 %v2405
        %v2502 = vunpack.c.l.b16 %v2406
        %v2503 = vunpack.c.l.b16 %v2407
        %v2504 = vunpack.c.l.b16 %v2408
        %v2505 = vunpack.c.l.b16 %v2409
        %v2506 = vunpack.c.l.b16 %v2410
        %v2507 = vunpack.c.l.b16 %v2411
        %v2508 = vunpack.c.l.b16 %v2412
        %v2509 = vpack.c.b16 %v2462, %v2461
        %v2510 = vpack.c.b16 %v2463, %v2463
        %v2511 = vpack.c.b16 %v2465, %v2464
        %v2512 = vpack.c.b16 %v2466, %v2466
        %v2513 = vpack.c.b16 %v2468, %v2467
        %v2514 = vpack.c.b16 %v2469, %v2469
        %v2515 = vpack.c.b16 %v2471, %v2470
        %v2516 = vpack.c.b16 %v2472, %v2472
        %v2517 = vpack.c.b16 %v2474, %v2473
        %v2518 = vpack.c.b16 %v2475, %v2475
        %v2519 = vpack.c.b16 %v2477, %v2476
        %v2520 = vpack.c.b16 %v2478, %v2478
        %v2521 = vpack.c.b16 %v2480, %v2479
        %v2522 = vpack.c.b16 %v2481, %v2481
        %v2523 = vpack.c.b16 %v2483, %v2482
        %v2524 = vpack.c.b16 %v2484, %v2484
        %v2525 = vpack.c.b16 %v2486, %v2485
        %v2526 = vpack.c.b16 %v2487, %v2487
        %v2527 = vpack.c.b16 %v2489, %v2488
        %v2528 = vpack.c.b16 %v2490, %v2490
        %v2529 = vpack.c.b16 %v2492, %v2491
        %v2530 = vpack.c.b16 %v2493, %v2493
        %v2531 = vpack.c.b16 %v2495, %v2494
        %v2532 = vpack.c.b16 %v2496, %v2496
        %v2533 = vpack.c.b16 %v2498, %v2497
        %v2534 = vpack.c.b16 %v2499, %v2499
        %v2535 = vpack.c.b16 %v2501, %v2500
        %v2536 = vpack.c.b16 %v2502, %v2502
        %v2537 = vpack.c.b16 %v2504, %v2503
        %v2538 = vpack.c.b16 %v2505, %v2505
        %v2539 = vpack.c.b16 %v2507, %v2506
        %v2540 = vpack.c.b16 %v2508, %v2508
        %v2542 = vshrl.u32 %v2509, 16
        %v2544 = vshll.u32 %v2509, 16
        %v2546 = vrot.slane %v2544, 1
        %v2547 = vor.u32 %v2542, %v2546
        %v2549 = vshll.u32 %v2510, 16
        %v2551 = vrot.slane %v2549, 1
        %v2552 = vsel %vm1739, %v2547, %v2551
        %v2554 = vshrl.u32 %v2511, 16
        %v2556 = vshll.u32 %v2511, 16
        %v2558 = vrot.slane %v2556, 1
        %v2559 = vor.u32 %v2554, %v2558
        %v2561 = vshll.u32 %v2512, 16
        %v2563 = vrot.slane %v2561, 1
        %v2564 = vsel %vm1739, %v2559, %v2563
        %v2566 = vshrl.u32 %v2513, 16
        %v2568 = vshll.u32 %v2513, 16
        %v2570 = vrot.slane %v2568, 1
        %v2571 = vor.u32 %v2566, %v2570
        %v2573 = vshll.u32 %v2514, 16
        %v2575 = vrot.slane %v2573, 1
        %v2576 = vsel %vm1739, %v2571, %v2575
        %v2578 = vshrl.u32 %v2515, 16
        %v2580 = vshll.u32 %v2515, 16
        %v2582 = vrot.slane %v2580, 1
        %v2583 = vor.u32 %v2578, %v2582
        %v2585 = vshll.u32 %v2516, 16
        %v2587 = vrot.slane %v2585, 1
        %v2588 = vsel %vm1739, %v2583, %v2587
        %v2590 = vshrl.u32 %v2517, 16
        %v2592 = vshll.u32 %v2517, 16
        %v2594 = vrot.slane %v2592, 1
        %v2595 = vor.u32 %v2590, %v2594
        %v2597 = vshll.u32 %v2518, 16
        %v2599 = vrot.slane %v2597, 1
        %v2600 = vsel %vm1739, %v2595, %v2599
        %v2602 = vshrl.u32 %v2519, 16
        %v2604 = vshll.u32 %v2519, 16
        %v2606 = vrot.slane %v2604, 1
        %v2607 = vor.u32 %v2602, %v2606
        %v2609 = vshll.u32 %v2520, 16
        %v2611 = vrot.slane %v2609, 1
        %v2612 = vsel %vm1739, %v2607, %v2611
        %v2614 = vshrl.u32 %v2521, 16
        %v2616 = vshll.u32 %v2521, 16
        %v2618 = vrot.slane %v2616, 1
        %v2619 = vor.u32 %v2614, %v2618
        %v2621 = vshll.u32 %v2522, 16
        %v2623 = vrot.slane %v2621, 1
        %v2624 = vsel %vm1739, %v2619, %v2623
        %v2626 = vshrl.u32 %v2523, 16
        %v2628 = vshll.u32 %v2523, 16
        %v2630 = vrot.slane %v2628, 1
        %v2631 = vor.u32 %v2626, %v2630
        %v2633 = vshll.u32 %v2524, 16
        %v2635 = vrot.slane %v2633, 1
        %v2636 = vsel %vm1739, %v2631, %v2635
        %v2638 = vshrl.u32 %v2525, 16
        %v2640 = vshll.u32 %v2525, 16
        %v2642 = vrot.slane %v2640, 1
        %v2643 = vor.u32 %v2638, %v2642
        %v2645 = vshll.u32 %v2526, 16
        %v2647 = vrot.slane %v2645, 1
        %v2648 = vsel %vm1739, %v2643, %v2647
        %v2650 = vshrl.u32 %v2527, 16
        %v2652 = vshll.u32 %v2527, 16
        %v2654 = vrot.slane %v2652, 1
        %v2655 = vor.u32 %v2650, %v2654
        %v2657 = vshll.u32 %v2528, 16
        %v2659 = vrot.slane %v2657, 1
        %v2660 = vsel %vm1739, %v2655, %v2659
        %v2662 = vshrl.u32 %v2529, 16
        %v2664 = vshll.u32 %v2529, 16
        %v2666 = vrot.slane %v2664, 1
        %v2667 = vor.u32 %v2662, %v2666
        %v2669 = vshll.u32 %v2530, 16
        %v2671 = vrot.slane %v2669, 1
        %v2672 = vsel %vm1739, %v2667, %v2671
        %v2674 = vshrl.u32 %v2531, 16
        %v2676 = vshll.u32 %v2531, 16
        %v2678 = vrot.slane %v2676, 1
        %v2679 = vor.u32 %v2674, %v2678
        %v2681 = vshll.u32 %v2532, 16
        %v2683 = vrot.slane %v2681, 1
        %v2684 = vsel %vm1739, %v2679, %v2683
        %v2686 = vshrl.u32 %v2533, 16
        %v2688 = vshll.u32 %v2533, 16
        %v2690 = vrot.slane %v2688, 1
        %v2691 = vor.u32 %v2686, %v2690
        %v2693 = vshll.u32 %v2534, 16
        %v2695 = vrot.slane %v2693, 1
        %v2696 = vsel %vm1739, %v2691, %v2695
        %v2698 = vshrl.u32 %v2535, 16
        %v2700 = vshll.u32 %v2535, 16
        %v2702 = vrot.slane %v2700, 1
        %v2703 = vor.u32 %v2698, %v2702
        %v2705 = vshll.u32 %v2536, 16
        %v2707 = vrot.slane %v2705, 1
        %v2708 = vsel %vm1739, %v2703, %v2707
        %v2710 = vshrl.u32 %v2537, 16
        %v2712 = vshll.u32 %v2537, 16
        %v2714 = vrot.slane %v2712, 1
        %v2715 = vor.u32 %v2710, %v2714
        %v2717 = vshll.u32 %v2538, 16
        %v2719 = vrot.slane %v2717, 1
        %v2720 = vsel %vm1739, %v2715, %v2719
        %v2722 = vshrl.u32 %v2539, 16
        %v2724 = vshll.u32 %v2539, 16
        %v2726 = vrot.slane %v2724, 1
        %v2727 = vor.u32 %v2722, %v2726
        %v2729 = vshll.u32 %v2540, 16
        %v2731 = vrot.slane %v2729, 1
        %v2732 = vsel %vm1739, %v2727, %v2731
        %2749 = vst [vmem:[#allocation4 + $0x20] sm:$0xff] %v2552
        %2750 = vst [vmem:[#allocation4 + $0x68] sm:$0xff] %v2564
        %2751 = vst [vmem:[#allocation4 + $0xb0] sm:$0xff] %v2576
        %2752 = vst [vmem:[#allocation4 + $0xf8] sm:$0xff] %v2588
        %2753 = vst [vmem:[#allocation4 + $0x140] sm:$0xff] %v2600
        %2754 = vst [vmem:[#allocation4 + $0x188] sm:$0xff] %v2612
        %2755 = vst [vmem:[#allocation4 + $0x1d0] sm:$0xff] %v2624
        %2756 = vst [vmem:[#allocation4 + $0x218] sm:$0xff] %v2636
        %2757 = vst [vmem:[#allocation4 + $0x260] sm:$0xff] %v2648
        %2758 = vst [vmem:[#allocation4 + $0x2a8] sm:$0xff] %v2660
        %2759 = vst [vmem:[#allocation4 + $0x2f0] sm:$0xff] %v2672
        %2760 = vst [vmem:[#allocation4 + $0x338] sm:$0xff] %v2684
        %2761 = vst [vmem:[#allocation4 + $0x380] sm:$0xff] %v2696
        %2762 = vst [vmem:[#allocation4 + $0x3c8] sm:$0xff] %v2708
        %2763 = vst [vmem:[#allocation4 + $0x410] sm:$0xff] %v2720
        %2764 = vst [vmem:[#allocation4 + $0x458] sm:$0xff] %v2732
        %v2765 = vld [vmem:[%s1012] sm:$0xe]
        %v2766 = vld [vmem:[%s1012 + $0x4] sm:$0xf]
        %v2767 = vld [vmem:[%s1012 + $0x8] sm:$0x1]
        %v2768 = vld [vmem:[%s1012 + $0xc] sm:$0xe]
        %v2769 = vld [vmem:[%s1012 + $0x10] sm:$0xf]
        %v2770 = vld [vmem:[%s1012 + $0x14] sm:$0x1]
        %v2771 = vld [vmem:[%s1012 + $0x18] sm:$0xe]
        %v2772 = vld [vmem:[%s1012 + $0x1c] sm:$0xf]
        %v2773 = vld [vmem:[%s1012 + $0x20] sm:$0x1]
        %v2774 = vld [vmem:[%s1012 + $0x24] sm:$0xe]
        %v2775 = vld [vmem:[%s1012 + $0x28] sm:$0xf]
        %v2776 = vld [vmem:[%s1012 + $0x2c] sm:$0x1]
        %v2777 = vld [vmem:[%s1012 + $0x30] sm:$0xe]
        %v2778 = vld [vmem:[%s1012 + $0x34] sm:$0xf]
        %v2779 = vld [vmem:[%s1012 + $0x38] sm:$0x1]
        %v2780 = vld [vmem:[%s1012 + $0x3c] sm:$0xe]
        %v2781 = vld [vmem:[%s1012 + $0x40] sm:$0xf]
        %v2782 = vld [vmem:[%s1012 + $0x44] sm:$0x1]
        %v2783 = vld [vmem:[%s1012 + $0x48] sm:$0xe]
        %v2784 = vld [vmem:[%s1012 + $0x4c] sm:$0xf]
        %v2785 = vld [vmem:[%s1012 + $0x50] sm:$0x1]
        %v2786 = vld [vmem:[%s1012 + $0x54] sm:$0xe]
        %v2787 = vld [vmem:[%s1012 + $0x58] sm:$0xf]
        %v2788 = vld [vmem:[%s1012 + $0x5c] sm:$0x1]
        %v2789 = vld [vmem:[%s1012 + $0x60] sm:$0xe]
        %v2790 = vld [vmem:[%s1012 + $0x64] sm:$0xf]
        %v2791 = vld [vmem:[%s1012 + $0x68] sm:$0x1]
        %v2792 = vld [vmem:[%s1012 + $0x6c] sm:$0xe]
        %v2793 = vld [vmem:[%s1012 + $0x70] sm:$0xf]
        %v2794 = vld [vmem:[%s1012 + $0x74] sm:$0x1]
        %v2795 = vld [vmem:[%s1012 + $0x78] sm:$0xe]
        %v2796 = vld [vmem:[%s1012 + $0x7c] sm:$0xf]
        %v2797 = vld [vmem:[%s1012 + $0x80] sm:$0x1]
        %v2798 = vld [vmem:[%s1012 + $0x84] sm:$0xe]
        %v2799 = vld [vmem:[%s1012 + $0x88] sm:$0xf]
        %v2800 = vld [vmem:[%s1012 + $0x8c] sm:$0x1]
        %v2801 = vld [vmem:[%s1012 + $0x90] sm:$0xe]
        %v2802 = vld [vmem:[%s1012 + $0x94] sm:$0xf]
        %v2803 = vld [vmem:[%s1012 + $0x98] sm:$0x1]
        %v2804 = vld [vmem:[%s1012 + $0x9c] sm:$0xe]
        %v2805 = vld [vmem:[%s1012 + $0xa0] sm:$0xf]
        %v2806 = vld [vmem:[%s1012 + $0xa4] sm:$0x1]
        %v2807 = vld [vmem:[%s1012 + $0xa8] sm:$0xe]
        %v2808 = vld [vmem:[%s1012 + $0xac] sm:$0xf]
        %v2809 = vld [vmem:[%s1012 + $0xb0] sm:$0x1]
        %v2810 = vld [vmem:[%s1012 + $0xb4] sm:$0xe]
        %v2811 = vld [vmem:[%s1012 + $0xb8] sm:$0xf]
        %v2812 = vld [vmem:[%s1012 + $0xbc] sm:$0x1]
        %v2861 = vunpack.c.l.b16 %v2765
        %v2862 = vunpack.c.l.b16 %v2766
        %v2863 = vunpack.c.l.b16 %v2767
        %v2864 = vunpack.c.l.b16 %v2768
        %v2865 = vunpack.c.l.b16 %v2769
        %v2866 = vunpack.c.l.b16 %v2770
        %v2867 = vunpack.c.l.b16 %v2771
        %v2868 = vunpack.c.l.b16 %v2772
        %v2869 = vunpack.c.l.b16 %v2773
        %v2870 = vunpack.c.l.b16 %v2774
        %v2871 = vunpack.c.l.b16 %v2775
        %v2872 = vunpack.c.l.b16 %v2776
        %v2873 = vunpack.c.l.b16 %v2777
        %v2874 = vunpack.c.l.b16 %v2778
        %v2875 = vunpack.c.l.b16 %v2779
        %v2876 = vunpack.c.l.b16 %v2780
        %v2877 = vunpack.c.l.b16 %v2781
        %v2878 = vunpack.c.l.b16 %v2782
        %v2879 = vunpack.c.l.b16 %v2783
        %v2880 = vunpack.c.l.b16 %v2784
        %v2881 = vunpack.c.l.b16 %v2785
        %v2882 = vunpack.c.l.b16 %v2786
        %v2883 = vunpack.c.l.b16 %v2787
        %v2884 = vunpack.c.l.b16 %v2788
        %v2885 = vunpack.c.l.b16 %v2789
        %v2886 = vunpack.c.l.b16 %v2790
        %v2887 = vunpack.c.l.b16 %v2791
        %v2888 = vunpack.c.l.b16 %v2792
        %v2889 = vunpack.c.l.b16 %v2793
        %v2890 = vunpack.c.l.b16 %v2794
        %v2891 = vunpack.c.l.b16 %v2795
        %v2892 = vunpack.c.l.b16 %v2796
        %v2893 = vunpack.c.l.b16 %v2797
        %v2894 = vunpack.c.l.b16 %v2798
        %v2895 = vunpack.c.l.b16 %v2799
        %v2896 = vunpack.c.l.b16 %v2800
        %v2897 = vunpack.c.l.b16 %v2801
        %v2898 = vunpack.c.l.b16 %v2802
        %v2899 = vunpack.c.l.b16 %v2803
        %v2900 = vunpack.c.l.b16 %v2804
        %v2901 = vunpack.c.l.b16 %v2805
        %v2902 = vunpack.c.l.b16 %v2806
        %v2903 = vunpack.c.l.b16 %v2807
        %v2904 = vunpack.c.l.b16 %v2808
        %v2905 = vunpack.c.l.b16 %v2809
        %v2906 = vunpack.c.l.b16 %v2810
        %v2907 = vunpack.c.l.b16 %v2811
        %v2908 = vunpack.c.l.b16 %v2812
        %v2909 = vpack.c.b16 %v2862, %v2861
        %v2910 = vpack.c.b16 %v2863, %v2863
        %v2911 = vpack.c.b16 %v2865, %v2864
        %v2912 = vpack.c.b16 %v2866, %v2866
        %v2913 = vpack.c.b16 %v2868, %v2867
        %v2914 = vpack.c.b16 %v2869, %v2869
        %v2915 = vpack.c.b16 %v2871, %v2870
        %v2916 = vpack.c.b16 %v2872, %v2872
        %v2917 = vpack.c.b16 %v2874, %v2873
        %v2918 = vpack.c.b16 %v2875, %v2875
        %v2919 = vpack.c.b16 %v2877, %v2876
        %v2920 = vpack.c.b16 %v2878, %v2878
        %v2921 = vpack.c.b16 %v2880, %v2879
        %v2922 = vpack.c.b16 %v2881, %v2881
        %v2923 = vpack.c.b16 %v2883, %v2882
        %v2924 = vpack.c.b16 %v2884, %v2884
        %v2925 = vpack.c.b16 %v2886, %v2885
        %v2926 = vpack.c.b16 %v2887, %v2887
        %v2927 = vpack.c.b16 %v2889, %v2888
        %v2928 = vpack.c.b16 %v2890, %v2890
        %v2929 = vpack.c.b16 %v2892, %v2891
        %v2930 = vpack.c.b16 %v2893, %v2893
        %v2931 = vpack.c.b16 %v2895, %v2894
        %v2932 = vpack.c.b16 %v2896, %v2896
        %v2933 = vpack.c.b16 %v2898, %v2897
        %v2934 = vpack.c.b16 %v2899, %v2899
        %v2935 = vpack.c.b16 %v2901, %v2900
        %v2936 = vpack.c.b16 %v2902, %v2902
        %v2937 = vpack.c.b16 %v2904, %v2903
        %v2938 = vpack.c.b16 %v2905, %v2905
        %v2939 = vpack.c.b16 %v2907, %v2906
        %v2940 = vpack.c.b16 %v2908, %v2908
        %v2941 = vrot.slane %v2909, 1
        %v2942 = vrot.slane %v2910, 1
        %v2943 = vsel %vm2140, %v2941, %v2942
        %v2944 = vrot.slane %v2911, 1
        %v2945 = vrot.slane %v2912, 1
        %v2946 = vsel %vm2140, %v2944, %v2945
        %v2947 = vrot.slane %v2913, 1
        %v2948 = vrot.slane %v2914, 1
        %v2949 = vsel %vm2140, %v2947, %v2948
        %v2950 = vrot.slane %v2915, 1
        %v2951 = vrot.slane %v2916, 1
        %v2952 = vsel %vm2140, %v2950, %v2951
        %v2953 = vrot.slane %v2917, 1
        %v2954 = vrot.slane %v2918, 1
        %v2955 = vsel %vm2140, %v2953, %v2954
        %v2956 = vrot.slane %v2919, 1
        %v2957 = vrot.slane %v2920, 1
        %v2958 = vsel %vm2140, %v2956, %v2957
        %v2959 = vrot.slane %v2921, 1
        %v2960 = vrot.slane %v2922, 1
        %v2961 = vsel %vm2140, %v2959, %v2960
        %v2962 = vrot.slane %v2923, 1
        %v2963 = vrot.slane %v2924, 1
        %v2964 = vsel %vm2140, %v2962, %v2963
        %v2965 = vrot.slane %v2925, 1
        %v2966 = vrot.slane %v2926, 1
        %v2967 = vsel %vm2140, %v2965, %v2966
        %v2968 = vrot.slane %v2927, 1
        %v2969 = vrot.slane %v2928, 1
        %v2970 = vsel %vm2140, %v2968, %v2969
        %v2971 = vrot.slane %v2929, 1
        %v2972 = vrot.slane %v2930, 1
        %v2973 = vsel %vm2140, %v2971, %v2972
        %v2974 = vrot.slane %v2931, 1
        %v2975 = vrot.slane %v2932, 1
        %v2976 = vsel %vm2140, %v2974, %v2975
        %v2977 = vrot.slane %v2933, 1
        %v2978 = vrot.slane %v2934, 1
        %v2979 = vsel %vm2140, %v2977, %v2978
        %v2980 = vrot.slane %v2935, 1
        %v2981 = vrot.slane %v2936, 1
        %v2982 = vsel %vm2140, %v2980, %v2981
        %v2983 = vrot.slane %v2937, 1
        %v2984 = vrot.slane %v2938, 1
        %v2985 = vsel %vm2140, %v2983, %v2984
        %v2986 = vrot.slane %v2939, 1
        %v2987 = vrot.slane %v2940, 1
        %v2988 = vsel %vm2140, %v2986, %v2987
        %3005 = vst [vmem:[#allocation4 + $0x28] sm:$0xff] %v2943
        %3006 = vst [vmem:[#allocation4 + $0x70] sm:$0xff] %v2946
        %3007 = vst [vmem:[#allocation4 + $0xb8] sm:$0xff] %v2949
        %3008 = vst [vmem:[#allocation4 + $0x100] sm:$0xff] %v2952
        %3009 = vst [vmem:[#allocation4 + $0x148] sm:$0xff] %v2955
        %3010 = vst [vmem:[#allocation4 + $0x190] sm:$0xff] %v2958
        %3011 = vst [vmem:[#allocation4 + $0x1d8] sm:$0xff] %v2961
        %3012 = vst [vmem:[#allocation4 + $0x220] sm:$0xff] %v2964
        %3013 = vst [vmem:[#allocation4 + $0x268] sm:$0xff] %v2967
        %3014 = vst [vmem:[#allocation4 + $0x2b0] sm:$0xff] %v2970
        %3015 = vst [vmem:[#allocation4 + $0x2f8] sm:$0xff] %v2973
        %3016 = vst [vmem:[#allocation4 + $0x340] sm:$0xff] %v2976
        %3017 = vst [vmem:[#allocation4 + $0x388] sm:$0xff] %v2979
        %3018 = vst [vmem:[#allocation4 + $0x3d0] sm:$0xff] %v2982
        %3019 = vst [vmem:[#allocation4 + $0x418] sm:$0xff] %v2985
        %3020 = vst [vmem:[#allocation4 + $0x460] sm:$0xff] %v2988
        %s3021 = scalar_lea.vmem [#allocation2], 24
        %v3022 = vld [vmem:[%s3021] sm:$0xf]
        %v3023 = vld [vmem:[%s3021 + $0x4] sm:$0xf]
        %v3024 = vld [vmem:[%s3021 + $0xc] sm:$0xf]
        %v3025 = vld [vmem:[%s3021 + $0x10] sm:$0xf]
        %v3026 = vld [vmem:[%s3021 + $0x18] sm:$0xf]
        %v3027 = vld [vmem:[%s3021 + $0x1c] sm:$0xf]
        %v3028 = vld [vmem:[%s3021 + $0x24] sm:$0xf]
        %v3029 = vld [vmem:[%s3021 + $0x28] sm:$0xf]
        %v3030 = vld [vmem:[%s3021 + $0x30] sm:$0xf]
        %v3031 = vld [vmem:[%s3021 + $0x34] sm:$0xf]
        %v3032 = vld [vmem:[%s3021 + $0x3c] sm:$0xf]
        %v3033 = vld [vmem:[%s3021 + $0x40] sm:$0xf]
        %v3034 = vld [vmem:[%s3021 + $0x48] sm:$0xf]
        %v3035 = vld [vmem:[%s3021 + $0x4c] sm:$0xf]
        %v3036 = vld [vmem:[%s3021 + $0x54] sm:$0xf]
        %v3037 = vld [vmem:[%s3021 + $0x58] sm:$0xf]
        %v3038 = vld [vmem:[%s3021 + $0x60] sm:$0xf]
        %v3039 = vld [vmem:[%s3021 + $0x64] sm:$0xf]
        %v3040 = vld [vmem:[%s3021 + $0x6c] sm:$0xf]
        %v3041 = vld [vmem:[%s3021 + $0x70] sm:$0xf]
        %v3042 = vld [vmem:[%s3021 + $0x78] sm:$0xf]
        %v3043 = vld [vmem:[%s3021 + $0x7c] sm:$0xf]
        %v3044 = vld [vmem:[%s3021 + $0x84] sm:$0xf]
        %v3045 = vld [vmem:[%s3021 + $0x88] sm:$0xf]
        %v3046 = vld [vmem:[%s3021 + $0x90] sm:$0xf]
        %v3047 = vld [vmem:[%s3021 + $0x94] sm:$0xf]
        %v3048 = vld [vmem:[%s3021 + $0x9c] sm:$0xf]
        %v3049 = vld [vmem:[%s3021 + $0xa0] sm:$0xf]
        %v3050 = vld [vmem:[%s3021 + $0xa8] sm:$0xf]
        %v3051 = vld [vmem:[%s3021 + $0xac] sm:$0xf]
        %v3052 = vld [vmem:[%s3021 + $0xb4] sm:$0xf]
        %v3053 = vld [vmem:[%s3021 + $0xb8] sm:$0xf]
        %v3086 = vunpack.c.l.b16 %v3022
        %v3087 = vunpack.c.l.b16 %v3023
        %v3088 = vunpack.c.l.b16 %v3024
        %v3089 = vunpack.c.l.b16 %v3025
        %v3090 = vunpack.c.l.b16 %v3026
        %v3091 = vunpack.c.l.b16 %v3027
        %v3092 = vunpack.c.l.b16 %v3028
        %v3093 = vunpack.c.l.b16 %v3029
        %v3094 = vunpack.c.l.b16 %v3030
        %v3095 = vunpack.c.l.b16 %v3031
        %v3096 = vunpack.c.l.b16 %v3032
        %v3097 = vunpack.c.l.b16 %v3033
        %v3098 = vunpack.c.l.b16 %v3034
        %v3099 = vunpack.c.l.b16 %v3035
        %v3100 = vunpack.c.l.b16 %v3036
        %v3101 = vunpack.c.l.b16 %v3037
        %v3102 = vunpack.c.l.b16 %v3038
        %v3103 = vunpack.c.l.b16 %v3039
        %v3104 = vunpack.c.l.b16 %v3040
        %v3105 = vunpack.c.l.b16 %v3041
        %v3106 = vunpack.c.l.b16 %v3042
        %v3107 = vunpack.c.l.b16 %v3043
        %v3108 = vunpack.c.l.b16 %v3044
        %v3109 = vunpack.c.l.b16 %v3045
        %v3110 = vunpack.c.l.b16 %v3046
        %v3111 = vunpack.c.l.b16 %v3047
        %v3112 = vunpack.c.l.b16 %v3048
        %v3113 = vunpack.c.l.b16 %v3049
        %v3114 = vunpack.c.l.b16 %v3050
        %v3115 = vunpack.c.l.b16 %v3051
        %v3116 = vunpack.c.l.b16 %v3052
        %v3117 = vunpack.c.l.b16 %v3053
        %v3118 = vpack.c.b16 %v3087, %v3086
        %v3119 = vpack.c.b16 %v3089, %v3088
        %v3120 = vpack.c.b16 %v3091, %v3090
        %v3121 = vpack.c.b16 %v3093, %v3092
        %v3122 = vpack.c.b16 %v3095, %v3094
        %v3123 = vpack.c.b16 %v3097, %v3096
        %v3124 = vpack.c.b16 %v3099, %v3098
        %v3125 = vpack.c.b16 %v3101, %v3100
        %v3126 = vpack.c.b16 %v3103, %v3102
        %v3127 = vpack.c.b16 %v3105, %v3104
        %v3128 = vpack.c.b16 %v3107, %v3106
        %v3129 = vpack.c.b16 %v3109, %v3108
        %v3130 = vpack.c.b16 %v3111, %v3110
        %v3131 = vpack.c.b16 %v3113, %v3112
        %v3132 = vpack.c.b16 %v3115, %v3114
        %v3133 = vpack.c.b16 %v3117, %v3116
        %3150 = vst [vmem:[#allocation4 + $0x30] sm:$0xff] %v3118
        %3151 = vst [vmem:[#allocation4 + $0x78] sm:$0xff] %v3119
        %3152 = vst [vmem:[#allocation4 + $0xc0] sm:$0xff] %v3120
        %3153 = vst [vmem:[#allocation4 + $0x108] sm:$0xff] %v3121
        %3154 = vst [vmem:[#allocation4 + $0x150] sm:$0xff] %v3122
        %3155 = vst [vmem:[#allocation4 + $0x198] sm:$0xff] %v3123
        %3156 = vst [vmem:[#allocation4 + $0x1e0] sm:$0xff] %v3124
        %3157 = vst [vmem:[#allocation4 + $0x228] sm:$0xff] %v3125
        %3158 = vst [vmem:[#allocation4 + $0x270] sm:$0xff] %v3126
        %3159 = vst [vmem:[#allocation4 + $0x2b8] sm:$0xff] %v3127
        %3160 = vst [vmem:[#allocation4 + $0x300] sm:$0xff] %v3128
        %3161 = vst [vmem:[#allocation4 + $0x348] sm:$0xff] %v3129
        %3162 = vst [vmem:[#allocation4 + $0x390] sm:$0xff] %v3130
        %3163 = vst [vmem:[#allocation4 + $0x3d8] sm:$0xff] %v3131
        %3164 = vst [vmem:[#allocation4 + $0x420] sm:$0xff] %v3132
        %3165 = vst [vmem:[#allocation4 + $0x468] sm:$0xff] %v3133
        %v3166 = vld [vmem:[%s3021] sm:$0xf]
        %v3167 = vld [vmem:[%s3021 + $0x4] sm:$0xf]
        %v3168 = vld [vmem:[%s3021 + $0x8] sm:$0x1]
        %v3169 = vld [vmem:[%s3021 + $0xc] sm:$0xf]
        %v3170 = vld [vmem:[%s3021 + $0x10] sm:$0xf]
        %v3171 = vld [vmem:[%s3021 + $0x14] sm:$0x1]
        %v3172 = vld [vmem:[%s3021 + $0x18] sm:$0xf]
        %v3173 = vld [vmem:[%s3021 + $0x1c] sm:$0xf]
        %v3174 = vld [vmem:[%s3021 + $0x20] sm:$0x1]
        %v3175 = vld [vmem:[%s3021 + $0x24] sm:$0xf]
        %v3176 = vld [vmem:[%s3021 + $0x28] sm:$0xf]
        %v3177 = vld [vmem:[%s3021 + $0x2c] sm:$0x1]
        %v3178 = vld [vmem:[%s3021 + $0x30] sm:$0xf]
        %v3179 = vld [vmem:[%s3021 + $0x34] sm:$0xf]
        %v3180 = vld [vmem:[%s3021 + $0x38] sm:$0x1]
        %v3181 = vld [vmem:[%s3021 + $0x3c] sm:$0xf]
        %v3182 = vld [vmem:[%s3021 + $0x40] sm:$0xf]
        %v3183 = vld [vmem:[%s3021 + $0x44] sm:$0x1]
        %v3184 = vld [vmem:[%s3021 + $0x48] sm:$0xf]
        %v3185 = vld [vmem:[%s3021 + $0x4c] sm:$0xf]
        %v3186 = vld [vmem:[%s3021 + $0x50] sm:$0x1]
        %v3187 = vld [vmem:[%s3021 + $0x54] sm:$0xf]
        %v3188 = vld [vmem:[%s3021 + $0x58] sm:$0xf]
        %v3189 = vld [vmem:[%s3021 + $0x5c] sm:$0x1]
        %v3190 = vld [vmem:[%s3021 + $0x60] sm:$0xf]
        %v3191 = vld [vmem:[%s3021 + $0x64] sm:$0xf]
        %v3192 = vld [vmem:[%s3021 + $0x68] sm:$0x1]
        %v3193 = vld [vmem:[%s3021 + $0x6c] sm:$0xf]
        %v3194 = vld [vmem:[%s3021 + $0x70] sm:$0xf]
        %v3195 = vld [vmem:[%s3021 + $0x74] sm:$0x1]
        %v3196 = vld [vmem:[%s3021 + $0x78] sm:$0xf]
        %v3197 = vld [vmem:[%s3021 + $0x7c] sm:$0xf]
        %v3198 = vld [vmem:[%s3021 + $0x80] sm:$0x1]
        %v3199 = vld [vmem:[%s3021 + $0x84] sm:$0xf]
        %v3200 = vld [vmem:[%s3021 + $0x88] sm:$0xf]
        %v3201 = vld [vmem:[%s3021 + $0x8c] sm:$0x1]
        %v3202 = vld [vmem:[%s3021 + $0x90] sm:$0xf]
        %v3203 = vld [vmem:[%s3021 + $0x94] sm:$0xf]
        %v3204 = vld [vmem:[%s3021 + $0x98] sm:$0x1]
        %v3205 = vld [vmem:[%s3021 + $0x9c] sm:$0xf]
        %v3206 = vld [vmem:[%s3021 + $0xa0] sm:$0xf]
        %v3207 = vld [vmem:[%s3021 + $0xa4] sm:$0x1]
        %v3208 = vld [vmem:[%s3021 + $0xa8] sm:$0xf]
        %v3209 = vld [vmem:[%s3021 + $0xac] sm:$0xf]
        %v3210 = vld [vmem:[%s3021 + $0xb0] sm:$0x1]
        %v3211 = vld [vmem:[%s3021 + $0xb4] sm:$0xf]
        %v3212 = vld [vmem:[%s3021 + $0xb8] sm:$0xf]
        %v3213 = vld [vmem:[%s3021 + $0xbc] sm:$0x1]
        %v3262 = vunpack.c.l.b16 %v3166
        %v3263 = vunpack.c.l.b16 %v3167
        %v3264 = vunpack.c.l.b16 %v3168
        %v3265 = vunpack.c.l.b16 %v3169
        %v3266 = vunpack.c.l.b16 %v3170
        %v3267 = vunpack.c.l.b16 %v3171
        %v3268 = vunpack.c.l.b16 %v3172
        %v3269 = vunpack.c.l.b16 %v3173
        %v3270 = vunpack.c.l.b16 %v3174
        %v3271 = vunpack.c.l.b16 %v3175
        %v3272 = vunpack.c.l.b16 %v3176
        %v3273 = vunpack.c.l.b16 %v3177
        %v3274 = vunpack.c.l.b16 %v3178
        %v3275 = vunpack.c.l.b16 %v3179
        %v3276 = vunpack.c.l.b16 %v3180
        %v3277 = vunpack.c.l.b16 %v3181
        %v3278 = vunpack.c.l.b16 %v3182
        %v3279 = vunpack.c.l.b16 %v3183
        %v3280 = vunpack.c.l.b16 %v3184
        %v3281 = vunpack.c.l.b16 %v3185
        %v3282 = vunpack.c.l.b16 %v3186
        %v3283 = vunpack.c.l.b16 %v3187
        %v3284 = vunpack.c.l.b16 %v3188
        %v3285 = vunpack.c.l.b16 %v3189
        %v3286 = vunpack.c.l.b16 %v3190
        %v3287 = vunpack.c.l.b16 %v3191
        %v3288 = vunpack.c.l.b16 %v3192
        %v3289 = vunpack.c.l.b16 %v3193
        %v3290 = vunpack.c.l.b16 %v3194
        %v3291 = vunpack.c.l.b16 %v3195
        %v3292 = vunpack.c.l.b16 %v3196
        %v3293 = vunpack.c.l.b16 %v3197
        %v3294 = vunpack.c.l.b16 %v3198
        %v3295 = vunpack.c.l.b16 %v3199
        %v3296 = vunpack.c.l.b16 %v3200
        %v3297 = vunpack.c.l.b16 %v3201
        %v3298 = vunpack.c.l.b16 %v3202
        %v3299 = vunpack.c.l.b16 %v3203
        %v3300 = vunpack.c.l.b16 %v3204
        %v3301 = vunpack.c.l.b16 %v3205
        %v3302 = vunpack.c.l.b16 %v3206
        %v3303 = vunpack.c.l.b16 %v3207
        %v3304 = vunpack.c.l.b16 %v3208
        %v3305 = vunpack.c.l.b16 %v3209
        %v3306 = vunpack.c.l.b16 %v3210
        %v3307 = vunpack.c.l.b16 %v3211
        %v3308 = vunpack.c.l.b16 %v3212
        %v3309 = vunpack.c.l.b16 %v3213
        %v3310 = vpack.c.b16 %v3263, %v3262
        %v3311 = vpack.c.b16 %v3264, %v3264
        %v3312 = vpack.c.b16 %v3266, %v3265
        %v3313 = vpack.c.b16 %v3267, %v3267
        %v3314 = vpack.c.b16 %v3269, %v3268
        %v3315 = vpack.c.b16 %v3270, %v3270
        %v3316 = vpack.c.b16 %v3272, %v3271
        %v3317 = vpack.c.b16 %v3273, %v3273
        %v3318 = vpack.c.b16 %v3275, %v3274
        %v3319 = vpack.c.b16 %v3276, %v3276
        %v3320 = vpack.c.b16 %v3278, %v3277
        %v3321 = vpack.c.b16 %v3279, %v3279
        %v3322 = vpack.c.b16 %v3281, %v3280
        %v3323 = vpack.c.b16 %v3282, %v3282
        %v3324 = vpack.c.b16 %v3284, %v3283
        %v3325 = vpack.c.b16 %v3285, %v3285
        %v3326 = vpack.c.b16 %v3287, %v3286
        %v3327 = vpack.c.b16 %v3288, %v3288
        %v3328 = vpack.c.b16 %v3290, %v3289
        %v3329 = vpack.c.b16 %v3291, %v3291
        %v3330 = vpack.c.b16 %v3293, %v3292
        %v3331 = vpack.c.b16 %v3294, %v3294
        %v3332 = vpack.c.b16 %v3296, %v3295
        %v3333 = vpack.c.b16 %v3297, %v3297
        %v3334 = vpack.c.b16 %v3299, %v3298
        %v3335 = vpack.c.b16 %v3300, %v3300
        %v3336 = vpack.c.b16 %v3302, %v3301
        %v3337 = vpack.c.b16 %v3303, %v3303
        %v3338 = vpack.c.b16 %v3305, %v3304
        %v3339 = vpack.c.b16 %v3306, %v3306
        %v3340 = vpack.c.b16 %v3308, %v3307
        %v3341 = vpack.c.b16 %v3309, %v3309
        %v3343 = vshrl.u32 %v3310, 16
        %v3345 = vshll.u32 %v3310, 16
        %v3347 = vrot.slane %v3345, 1
        %v3348 = vor.u32 %v3343, %v3347
        %v3350 = vshll.u32 %v3311, 16
        %v3352 = vrot.slane %v3350, 1
        %v3353 = vsel %vm1739, %v3348, %v3352
        %v3355 = vshrl.u32 %v3312, 16
        %v3357 = vshll.u32 %v3312, 16
        %v3359 = vrot.slane %v3357, 1
        %v3360 = vor.u32 %v3355, %v3359
        %v3362 = vshll.u32 %v3313, 16
        %v3364 = vrot.slane %v3362, 1
        %v3365 = vsel %vm1739, %v3360, %v3364
        %v3367 = vshrl.u32 %v3314, 16
        %v3369 = vshll.u32 %v3314, 16
        %v3371 = vrot.slane %v3369, 1
        %v3372 = vor.u32 %v3367, %v3371
        %v3374 = vshll.u32 %v3315, 16
        %v3376 = vrot.slane %v3374, 1
        %v3377 = vsel %vm1739, %v3372, %v3376
        %v3379 = vshrl.u32 %v3316, 16
        %v3381 = vshll.u32 %v3316, 16
        %v3383 = vrot.slane %v3381, 1
        %v3384 = vor.u32 %v3379, %v3383
        %v3386 = vshll.u32 %v3317, 16
        %v3388 = vrot.slane %v3386, 1
        %v3389 = vsel %vm1739, %v3384, %v3388
        %v3391 = vshrl.u32 %v3318, 16
        %v3393 = vshll.u32 %v3318, 16
        %v3395 = vrot.slane %v3393, 1
        %v3396 = vor.u32 %v3391, %v3395
        %v3398 = vshll.u32 %v3319, 16
        %v3400 = vrot.slane %v3398, 1
        %v3401 = vsel %vm1739, %v3396, %v3400
        %v3403 = vshrl.u32 %v3320, 16
        %v3405 = vshll.u32 %v3320, 16
        %v3407 = vrot.slane %v3405, 1
        %v3408 = vor.u32 %v3403, %v3407
        %v3410 = vshll.u32 %v3321, 16
        %v3412 = vrot.slane %v3410, 1
        %v3413 = vsel %vm1739, %v3408, %v3412
        %v3415 = vshrl.u32 %v3322, 16
        %v3417 = vshll.u32 %v3322, 16
        %v3419 = vrot.slane %v3417, 1
        %v3420 = vor.u32 %v3415, %v3419
        %v3422 = vshll.u32 %v3323, 16
        %v3424 = vrot.slane %v3422, 1
        %v3425 = vsel %vm1739, %v3420, %v3424
        %v3427 = vshrl.u32 %v3324, 16
        %v3429 = vshll.u32 %v3324, 16
        %v3431 = vrot.slane %v3429, 1
        %v3432 = vor.u32 %v3427, %v3431
        %v3434 = vshll.u32 %v3325, 16
        %v3436 = vrot.slane %v3434, 1
        %v3437 = vsel %vm1739, %v3432, %v3436
        %v3439 = vshrl.u32 %v3326, 16
        %v3441 = vshll.u32 %v3326, 16
        %v3443 = vrot.slane %v3441, 1
        %v3444 = vor.u32 %v3439, %v3443
        %v3446 = vshll.u32 %v3327, 16
        %v3448 = vrot.slane %v3446, 1
        %v3449 = vsel %vm1739, %v3444, %v3448
        %v3451 = vshrl.u32 %v3328, 16
        %v3453 = vshll.u32 %v3328, 16
        %v3455 = vrot.slane %v3453, 1
        %v3456 = vor.u32 %v3451, %v3455
        %v3458 = vshll.u32 %v3329, 16
        %v3460 = vrot.slane %v3458, 1
        %v3461 = vsel %vm1739, %v3456, %v3460
        %v3463 = vshrl.u32 %v3330, 16
        %v3465 = vshll.u32 %v3330, 16
        %v3467 = vrot.slane %v3465, 1
        %v3468 = vor.u32 %v3463, %v3467
        %v3470 = vshll.u32 %v3331, 16
        %v3472 = vrot.slane %v3470, 1
        %v3473 = vsel %vm1739, %v3468, %v3472
        %v3475 = vshrl.u32 %v3332, 16
        %v3477 = vshll.u32 %v3332, 16
        %v3479 = vrot.slane %v3477, 1
        %v3480 = vor.u32 %v3475, %v3479
        %v3482 = vshll.u32 %v3333, 16
        %v3484 = vrot.slane %v3482, 1
        %v3485 = vsel %vm1739, %v3480, %v3484
        %v3487 = vshrl.u32 %v3334, 16
        %v3489 = vshll.u32 %v3334, 16
        %v3491 = vrot.slane %v3489, 1
        %v3492 = vor.u32 %v3487, %v3491
        %v3494 = vshll.u32 %v3335, 16
        %v3496 = vrot.slane %v3494, 1
        %v3497 = vsel %vm1739, %v3492, %v3496
        %v3499 = vshrl.u32 %v3336, 16
        %v3501 = vshll.u32 %v3336, 16
        %v3503 = vrot.slane %v3501, 1
        %v3504 = vor.u32 %v3499, %v3503
        %v3506 = vshll.u32 %v3337, 16
        %v3508 = vrot.slane %v3506, 1
        %v3509 = vsel %vm1739, %v3504, %v3508
        %v3511 = vshrl.u32 %v3338, 16
        %v3513 = vshll.u32 %v3338, 16
        %v3515 = vrot.slane %v3513, 1
        %v3516 = vor.u32 %v3511, %v3515
        %v3518 = vshll.u32 %v3339, 16
        %v3520 = vrot.slane %v3518, 1
        %v3521 = vsel %vm1739, %v3516, %v3520
        %v3523 = vshrl.u32 %v3340, 16
        %v3525 = vshll.u32 %v3340, 16
        %v3527 = vrot.slane %v3525, 1
        %v3528 = vor.u32 %v3523, %v3527
        %v3530 = vshll.u32 %v3341, 16
        %v3532 = vrot.slane %v3530, 1
        %v3533 = vsel %vm1739, %v3528, %v3532
        %3550 = vst [vmem:[#allocation4 + $0x38] sm:$0xff] %v3353
        %3551 = vst [vmem:[#allocation4 + $0x80] sm:$0xff] %v3365
        %3552 = vst [vmem:[#allocation4 + $0xc8] sm:$0xff] %v3377
        %3553 = vst [vmem:[#allocation4 + $0x110] sm:$0xff] %v3389
        %3554 = vst [vmem:[#allocation4 + $0x158] sm:$0xff] %v3401
        %3555 = vst [vmem:[#allocation4 + $0x1a0] sm:$0xff] %v3413
        %3556 = vst [vmem:[#allocation4 + $0x1e8] sm:$0xff] %v3425
        %3557 = vst [vmem:[#allocation4 + $0x230] sm:$0xff] %v3437
        %3558 = vst [vmem:[#allocation4 + $0x278] sm:$0xff] %v3449
        %3559 = vst [vmem:[#allocation4 + $0x2c0] sm:$0xff] %v3461
        %3560 = vst [vmem:[#allocation4 + $0x308] sm:$0xff] %v3473
        %3561 = vst [vmem:[#allocation4 + $0x350] sm:$0xff] %v3485
        %3562 = vst [vmem:[#allocation4 + $0x398] sm:$0xff] %v3497
        %3563 = vst [vmem:[#allocation4 + $0x3e0] sm:$0xff] %v3509
        %3564 = vst [vmem:[#allocation4 + $0x428] sm:$0xff] %v3521
        %3565 = vst [vmem:[#allocation4 + $0x470] sm:$0xff] %v3533
        %v3566 = vld [vmem:[%s3021] sm:$0xe]
        %v3567 = vld [vmem:[%s3021 + $0x4] sm:$0xf]
        %v3568 = vld [vmem:[%s3021 + $0x8] sm:$0x1]
        %v3569 = vld [vmem:[%s3021 + $0xc] sm:$0xe]
        %v3570 = vld [vmem:[%s3021 + $0x10] sm:$0xf]
        %v3571 = vld [vmem:[%s3021 + $0x14] sm:$0x1]
        %v3572 = vld [vmem:[%s3021 + $0x18] sm:$0xe]
        %v3573 = vld [vmem:[%s3021 + $0x1c] sm:$0xf]
        %v3574 = vld [vmem:[%s3021 + $0x20] sm:$0x1]
        %v3575 = vld [vmem:[%s3021 + $0x24] sm:$0xe]
        %v3576 = vld [vmem:[%s3021 + $0x28] sm:$0xf]
        %v3577 = vld [vmem:[%s3021 + $0x2c] sm:$0x1]
        %v3578 = vld [vmem:[%s3021 + $0x30] sm:$0xe]
        %v3579 = vld [vmem:[%s3021 + $0x34] sm:$0xf]
        %v3580 = vld [vmem:[%s3021 + $0x38] sm:$0x1]
        %v3581 = vld [vmem:[%s3021 + $0x3c] sm:$0xe]
        %v3582 = vld [vmem:[%s3021 + $0x40] sm:$0xf]
        %v3583 = vld [vmem:[%s3021 + $0x44] sm:$0x1]
        %v3584 = vld [vmem:[%s3021 + $0x48] sm:$0xe]
        %v3585 = vld [vmem:[%s3021 + $0x4c] sm:$0xf]
        %v3586 = vld [vmem:[%s3021 + $0x50] sm:$0x1]
        %v3587 = vld [vmem:[%s3021 + $0x54] sm:$0xe]
        %v3588 = vld [vmem:[%s3021 + $0x58] sm:$0xf]
        %v3589 = vld [vmem:[%s3021 + $0x5c] sm:$0x1]
        %v3590 = vld [vmem:[%s3021 + $0x60] sm:$0xe]
        %v3591 = vld [vmem:[%s3021 + $0x64] sm:$0xf]
        %v3592 = vld [vmem:[%s3021 + $0x68] sm:$0x1]
        %v3593 = vld [vmem:[%s3021 + $0x6c] sm:$0xe]
        %v3594 = vld [vmem:[%s3021 + $0x70] sm:$0xf]
        %v3595 = vld [vmem:[%s3021 + $0x74] sm:$0x1]
        %v3596 = vld [vmem:[%s3021 + $0x78] sm:$0xe]
        %v3597 = vld [vmem:[%s3021 + $0x7c] sm:$0xf]
        %v3598 = vld [vmem:[%s3021 + $0x80] sm:$0x1]
        %v3599 = vld [vmem:[%s3021 + $0x84] sm:$0xe]
        %v3600 = vld [vmem:[%s3021 + $0x88] sm:$0xf]
        %v3601 = vld [vmem:[%s3021 + $0x8c] sm:$0x1]
        %v3602 = vld [vmem:[%s3021 + $0x90] sm:$0xe]
        %v3603 = vld [vmem:[%s3021 + $0x94] sm:$0xf]
        %v3604 = vld [vmem:[%s3021 + $0x98] sm:$0x1]
        %v3605 = vld [vmem:[%s3021 + $0x9c] sm:$0xe]
        %v3606 = vld [vmem:[%s3021 + $0xa0] sm:$0xf]
        %v3607 = vld [vmem:[%s3021 + $0xa4] sm:$0x1]
        %v3608 = vld [vmem:[%s3021 + $0xa8] sm:$0xe]
        %v3609 = vld [vmem:[%s3021 + $0xac] sm:$0xf]
        %v3610 = vld [vmem:[%s3021 + $0xb0] sm:$0x1]
        %v3611 = vld [vmem:[%s3021 + $0xb4] sm:$0xe]
        %v3612 = vld [vmem:[%s3021 + $0xb8] sm:$0xf]
        %v3613 = vld [vmem:[%s3021 + $0xbc] sm:$0x1]
        %v3662 = vunpack.c.l.b16 %v3566
        %v3663 = vunpack.c.l.b16 %v3567
        %v3664 = vunpack.c.l.b16 %v3568
        %v3665 = vunpack.c.l.b16 %v3569
        %v3666 = vunpack.c.l.b16 %v3570
        %v3667 = vunpack.c.l.b16 %v3571
        %v3668 = vunpack.c.l.b16 %v3572
        %v3669 = vunpack.c.l.b16 %v3573
        %v3670 = vunpack.c.l.b16 %v3574
        %v3671 = vunpack.c.l.b16 %v3575
        %v3672 = vunpack.c.l.b16 %v3576
        %v3673 = vunpack.c.l.b16 %v3577
        %v3674 = vunpack.c.l.b16 %v3578
        %v3675 = vunpack.c.l.b16 %v3579
        %v3676 = vunpack.c.l.b16 %v3580
        %v3677 = vunpack.c.l.b16 %v3581
        %v3678 = vunpack.c.l.b16 %v3582
        %v3679 = vunpack.c.l.b16 %v3583
        %v3680 = vunpack.c.l.b16 %v3584
        %v3681 = vunpack.c.l.b16 %v3585
        %v3682 = vunpack.c.l.b16 %v3586
        %v3683 = vunpack.c.l.b16 %v3587
        %v3684 = vunpack.c.l.b16 %v3588
        %v3685 = vunpack.c.l.b16 %v3589
        %v3686 = vunpack.c.l.b16 %v3590
        %v3687 = vunpack.c.l.b16 %v3591
        %v3688 = vunpack.c.l.b16 %v3592
        %v3689 = vunpack.c.l.b16 %v3593
        %v3690 = vunpack.c.l.b16 %v3594
        %v3691 = vunpack.c.l.b16 %v3595
        %v3692 = vunpack.c.l.b16 %v3596
        %v3693 = vunpack.c.l.b16 %v3597
        %v3694 = vunpack.c.l.b16 %v3598
        %v3695 = vunpack.c.l.b16 %v3599
        %v3696 = vunpack.c.l.b16 %v3600
        %v3697 = vunpack.c.l.b16 %v3601
        %v3698 = vunpack.c.l.b16 %v3602
        %v3699 = vunpack.c.l.b16 %v3603
        %v3700 = vunpack.c.l.b16 %v3604
        %v3701 = vunpack.c.l.b16 %v3605
        %v3702 = vunpack.c.l.b16 %v3606
        %v3703 = vunpack.c.l.b16 %v3607
        %v3704 = vunpack.c.l.b16 %v3608
        %v3705 = vunpack.c.l.b16 %v3609
        %v3706 = vunpack.c.l.b16 %v3610
        %v3707 = vunpack.c.l.b16 %v3611
        %v3708 = vunpack.c.l.b16 %v3612
        %v3709 = vunpack.c.l.b16 %v3613
        %v3710 = vpack.c.b16 %v3663, %v3662
        %v3711 = vpack.c.b16 %v3664, %v3664
        %v3712 = vpack.c.b16 %v3666, %v3665
        %v3713 = vpack.c.b16 %v3667, %v3667
        %v3714 = vpack.c.b16 %v3669, %v3668
        %v3715 = vpack.c.b16 %v3670, %v3670
        %v3716 = vpack.c.b16 %v3672, %v3671
        %v3717 = vpack.c.b16 %v3673, %v3673
        %v3718 = vpack.c.b16 %v3675, %v3674
        %v3719 = vpack.c.b16 %v3676, %v3676
        %v3720 = vpack.c.b16 %v3678, %v3677
        %v3721 = vpack.c.b16 %v3679, %v3679
        %v3722 = vpack.c.b16 %v3681, %v3680
        %v3723 = vpack.c.b16 %v3682, %v3682
        %v3724 = vpack.c.b16 %v3684, %v3683
        %v3725 = vpack.c.b16 %v3685, %v3685
        %v3726 = vpack.c.b16 %v3687, %v3686
        %v3727 = vpack.c.b16 %v3688, %v3688
        %v3728 = vpack.c.b16 %v3690, %v3689
        %v3729 = vpack.c.b16 %v3691, %v3691
        %v3730 = vpack.c.b16 %v3693, %v3692
        %v3731 = vpack.c.b16 %v3694, %v3694
        %v3732 = vpack.c.b16 %v3696, %v3695
        %v3733 = vpack.c.b16 %v3697, %v3697
        %v3734 = vpack.c.b16 %v3699, %v3698
        %v3735 = vpack.c.b16 %v3700, %v3700
        %v3736 = vpack.c.b16 %v3702, %v3701
        %v3737 = vpack.c.b16 %v3703, %v3703
        %v3738 = vpack.c.b16 %v3705, %v3704
        %v3739 = vpack.c.b16 %v3706, %v3706
        %v3740 = vpack.c.b16 %v3708, %v3707
        %v3741 = vpack.c.b16 %v3709, %v3709
        %v3742 = vrot.slane %v3710, 1
        %v3743 = vrot.slane %v3711, 1
        %v3744 = vsel %vm2140, %v3742, %v3743
        %v3745 = vrot.slane %v3712, 1
        %v3746 = vrot.slane %v3713, 1
        %v3747 = vsel %vm2140, %v3745, %v3746
        %v3748 = vrot.slane %v3714, 1
        %v3749 = vrot.slane %v3715, 1
        %v3750 = vsel %vm2140, %v3748, %v3749
        %v3751 = vrot.slane %v3716, 1
        %v3752 = vrot.slane %v3717, 1
        %v3753 = vsel %vm2140, %v3751, %v3752
        %v3754 = vrot.slane %v3718, 1
        %v3755 = vrot.slane %v3719, 1
        %v3756 = vsel %vm2140, %v3754, %v3755
        %v3757 = vrot.slane %v3720, 1
        %v3758 = vrot.slane %v3721, 1
        %v3759 = vsel %vm2140, %v3757, %v3758
        %v3760 = vrot.slane %v3722, 1
        %v3761 = vrot.slane %v3723, 1
        %v3762 = vsel %vm2140, %v3760, %v3761
        %v3763 = vrot.slane %v3724, 1
        %v3764 = vrot.slane %v3725, 1
        %v3765 = vsel %vm2140, %v3763, %v3764
        %v3766 = vrot.slane %v3726, 1
        %v3767 = vrot.slane %v3727, 1
        %v3768 = vsel %vm2140, %v3766, %v3767
        %v3769 = vrot.slane %v3728, 1
        %v3770 = vrot.slane %v3729, 1
        %v3771 = vsel %vm2140, %v3769, %v3770
        %v3772 = vrot.slane %v3730, 1
        %v3773 = vrot.slane %v3731, 1
        %v3774 = vsel %vm2140, %v3772, %v3773
        %v3775 = vrot.slane %v3732, 1
        %v3776 = vrot.slane %v3733, 1
        %v3777 = vsel %vm2140, %v3775, %v3776
        %v3778 = vrot.slane %v3734, 1
        %v3779 = vrot.slane %v3735, 1
        %v3780 = vsel %vm2140, %v3778, %v3779
        %v3781 = vrot.slane %v3736, 1
        %v3782 = vrot.slane %v3737, 1
        %v3783 = vsel %vm2140, %v3781, %v3782
        %v3784 = vrot.slane %v3738, 1
        %v3785 = vrot.slane %v3739, 1
        %v3786 = vsel %vm2140, %v3784, %v3785
        %v3787 = vrot.slane %v3740, 1
        %v3788 = vrot.slane %v3741, 1
        %v3789 = vsel %vm2140, %v3787, %v3788
        %3806 = vst [vmem:[#allocation4 + $0x40] sm:$0xff] %v3744
        %3807 = vst [vmem:[#allocation4 + $0x88] sm:$0xff] %v3747
        %3808 = vst [vmem:[#allocation4 + $0xd0] sm:$0xff] %v3750
        %3809 = vst [vmem:[#allocation4 + $0x118] sm:$0xff] %v3753
        %3810 = vst [vmem:[#allocation4 + $0x160] sm:$0xff] %v3756
        %3811 = vst [vmem:[#allocation4 + $0x1a8] sm:$0xff] %v3759
        %3812 = vst [vmem:[#allocation4 + $0x1f0] sm:$0xff] %v3762
        %3813 = vst [vmem:[#allocation4 + $0x238] sm:$0xff] %v3765
        %3814 = vst [vmem:[#allocation4 + $0x280] sm:$0xff] %v3768
        %3815 = vst [vmem:[#allocation4 + $0x2c8] sm:$0xff] %v3771
        %3816 = vst [vmem:[#allocation4 + $0x310] sm:$0xff] %v3774
        %3817 = vst [vmem:[#allocation4 + $0x358] sm:$0xff] %v3777
        %3818 = vst [vmem:[#allocation4 + $0x3a0] sm:$0xff] %v3780
        %3819 = vst [vmem:[#allocation4 + $0x3e8] sm:$0xff] %v3783
        %3820 = vst [vmem:[#allocation4 + $0x430] sm:$0xff] %v3786
        %3821 = vst [vmem:[#allocation4 + $0x478] sm:$0xff] %v3789
        %v3822 = vld [vmem:[#allocation4] sm:$0xff]
        %v3823 = vld [vmem:[#allocation4 + $0x8] sm:$0xff]
        %v3824 = vld [vmem:[#allocation4 + $0x10] sm:$0xff]
        %v3825 = vld [vmem:[#allocation4 + $0x18] sm:$0xff]
        %v3826 = vld [vmem:[#allocation4 + $0x20] sm:$0xff]
        %v3827 = vld [vmem:[#allocation4 + $0x28] sm:$0xff]
        %v3828 = vld [vmem:[#allocation4 + $0x30] sm:$0xff]
        %v3829 = vld [vmem:[#allocation4 + $0x38] sm:$0xff]
        %v3830 = vld [vmem:[#allocation4 + $0x40] sm:$0xff]
        %v3831 = vld [vmem:[#allocation4 + $0x48] sm:$0xff]
        %v3832 = vld [vmem:[#allocation4 + $0x50] sm:$0xff]
        %v3833 = vld [vmem:[#allocation4 + $0x58] sm:$0xff]
        %v3834 = vld [vmem:[#allocation4 + $0x60] sm:$0xff]
        %v3835 = vld [vmem:[#allocation4 + $0x68] sm:$0xff]
        %v3836 = vld [vmem:[#allocation4 + $0x70] sm:$0xff]
        %v3837 = vld [vmem:[#allocation4 + $0x78] sm:$0xff]
        %v3838 = vld [vmem:[#allocation4 + $0x80] sm:$0xff]
        %v3839 = vld [vmem:[#allocation4 + $0x88] sm:$0xff]
        %v3840 = vld [vmem:[#allocation4 + $0x90] sm:$0xff]
        %v3841 = vld [vmem:[#allocation4 + $0x98] sm:$0xff]
        %v3842 = vld [vmem:[#allocation4 + $0xa0] sm:$0xff]
        %v3843 = vld [vmem:[#allocation4 + $0xa8] sm:$0xff]
        %v3844 = vld [vmem:[#allocation4 + $0xb0] sm:$0xff]
        %v3845 = vld [vmem:[#allocation4 + $0xb8] sm:$0xff]
        %v3846 = vld [vmem:[#allocation4 + $0xc0] sm:$0xff]
        %v3847 = vld [vmem:[#allocation4 + $0xc8] sm:$0xff]
        %v3848 = vld [vmem:[#allocation4 + $0xd0] sm:$0xff]
        %v3849 = vld [vmem:[#allocation4 + $0xd8] sm:$0xff]
        %v3850 = vld [vmem:[#allocation4 + $0xe0] sm:$0xff]
        %v3851 = vld [vmem:[#allocation4 + $0xe8] sm:$0xff]
        %v3852 = vld [vmem:[#allocation4 + $0xf0] sm:$0xff]
        %v3853 = vld [vmem:[#allocation4 + $0xf8] sm:$0xff]
        %v3854 = vld [vmem:[#allocation4 + $0x100] sm:$0xff]
        %v3855 = vld [vmem:[#allocation4 + $0x108] sm:$0xff]
        %v3856 = vld [vmem:[#allocation4 + $0x110] sm:$0xff]
        %v3857 = vld [vmem:[#allocation4 + $0x118] sm:$0xff]
        %v3858 = vld [vmem:[#allocation4 + $0x120] sm:$0xff]
        %v3859 = vld [vmem:[#allocation4 + $0x128] sm:$0xff]
        %v3860 = vld [vmem:[#allocation4 + $0x130] sm:$0xff]
        %v3861 = vld [vmem:[#allocation4 + $0x138] sm:$0xff]
        %v3862 = vld [vmem:[#allocation4 + $0x140] sm:$0xff]
        %v3863 = vld [vmem:[#allocation4 + $0x148] sm:$0xff]
        %v3864 = vld [vmem:[#allocation4 + $0x150] sm:$0xff]
        %v3865 = vld [vmem:[#allocation4 + $0x158] sm:$0xff]
        %v3866 = vld [vmem:[#allocation4 + $0x160] sm:$0xff]
        %v3867 = vld [vmem:[#allocation4 + $0x168] sm:$0xff]
        %v3868 = vld [vmem:[#allocation4 + $0x170] sm:$0xff]
        %v3869 = vld [vmem:[#allocation4 + $0x178] sm:$0xff]
        %v3870 = vld [vmem:[#allocation4 + $0x180] sm:$0xff]
        %v3871 = vld [vmem:[#allocation4 + $0x188] sm:$0xff]
        %v3872 = vld [vmem:[#allocation4 + $0x190] sm:$0xff]
        %v3873 = vld [vmem:[#allocation4 + $0x198] sm:$0xff]
        %v3874 = vld [vmem:[#allocation4 + $0x1a0] sm:$0xff]
        %v3875 = vld [vmem:[#allocation4 + $0x1a8] sm:$0xff]
        %v3876 = vld [vmem:[#allocation4 + $0x1b0] sm:$0xff]
        %v3877 = vld [vmem:[#allocation4 + $0x1b8] sm:$0xff]
        %v3878 = vld [vmem:[#allocation4 + $0x1c0] sm:$0xff]
        %v3879 = vld [vmem:[#allocation4 + $0x1c8] sm:$0xff]
        %v3880 = vld [vmem:[#allocation4 + $0x1d0] sm:$0xff]
        %v3881 = vld [vmem:[#allocation4 + $0x1d8] sm:$0xff]
        %v3882 = vld [vmem:[#allocation4 + $0x1e0] sm:$0xff]
        %v3883 = vld [vmem:[#allocation4 + $0x1e8] sm:$0xff]
        %v3884 = vld [vmem:[#allocation4 + $0x1f0] sm:$0xff]
        %v3885 = vld [vmem:[#allocation4 + $0x1f8] sm:$0xff]
        %v3886 = vld [vmem:[#allocation4 + $0x200] sm:$0xff]
        %v3887 = vld [vmem:[#allocation4 + $0x208] sm:$0xff]
        %v3888 = vld [vmem:[#allocation4 + $0x210] sm:$0xff]
        %v3889 = vld [vmem:[#allocation4 + $0x218] sm:$0xff]
        %v3890 = vld [vmem:[#allocation4 + $0x220] sm:$0xff]
        %v3891 = vld [vmem:[#allocation4 + $0x228] sm:$0xff]
        %v3892 = vld [vmem:[#allocation4 + $0x230] sm:$0xff]
        %v3893 = vld [vmem:[#allocation4 + $0x238] sm:$0xff]
        %v3894 = vld [vmem:[#allocation4 + $0x240] sm:$0xff]
        %v3895 = vld [vmem:[#allocation4 + $0x248] sm:$0xff]
        %v3896 = vld [vmem:[#allocation4 + $0x250] sm:$0xff]
        %v3897 = vld [vmem:[#allocation4 + $0x258] sm:$0xff]
        %v3898 = vld [vmem:[#allocation4 + $0x260] sm:$0xff]
        %v3899 = vld [vmem:[#allocation4 + $0x268] sm:$0xff]
        %v3900 = vld [vmem:[#allocation4 + $0x270] sm:$0xff]
        %v3901 = vld [vmem:[#allocation4 + $0x278] sm:$0xff]
        %v3902 = vld [vmem:[#allocation4 + $0x280] sm:$0xff]
        %v3903 = vld [vmem:[#allocation4 + $0x288] sm:$0xff]
        %v3904 = vld [vmem:[#allocation4 + $0x290] sm:$0xff]
        %v3905 = vld [vmem:[#allocation4 + $0x298] sm:$0xff]
        %v3906 = vld [vmem:[#allocation4 + $0x2a0] sm:$0xff]
        %v3907 = vld [vmem:[#allocation4 + $0x2a8] sm:$0xff]
        %v3908 = vld [vmem:[#allocation4 + $0x2b0] sm:$0xff]
        %v3909 = vld [vmem:[#allocation4 + $0x2b8] sm:$0xff]
        %v3910 = vld [vmem:[#allocation4 + $0x2c0] sm:$0xff]
        %v3911 = vld [vmem:[#allocation4 + $0x2c8] sm:$0xff]
        %v3912 = vld [vmem:[#allocation4 + $0x2d0] sm:$0xff]
        %v3913 = vld [vmem:[#allocation4 + $0x2d8] sm:$0xff]
        %v3914 = vld [vmem:[#allocation4 + $0x2e0] sm:$0xff]
        %v3915 = vld [vmem:[#allocation4 + $0x2e8] sm:$0xff]
        %v3916 = vld [vmem:[#allocation4 + $0x2f0] sm:$0xff]
        %v3917 = vld [vmem:[#allocation4 + $0x2f8] sm:$0xff]
        %v3918 = vld [vmem:[#allocation4 + $0x300] sm:$0xff]
        %v3919 = vld [vmem:[#allocation4 + $0x308] sm:$0xff]
        %v3920 = vld [vmem:[#allocation4 + $0x310] sm:$0xff]
        %v3921 = vld [vmem:[#allocation4 + $0x318] sm:$0xff]
        %v3922 = vld [vmem:[#allocation4 + $0x320] sm:$0xff]
        %v3923 = vld [vmem:[#allocation4 + $0x328] sm:$0xff]
        %v3924 = vld [vmem:[#allocation4 + $0x330] sm:$0xff]
        %v3925 = vld [vmem:[#allocation4 + $0x338] sm:$0xff]
        %v3926 = vld [vmem:[#allocation4 + $0x340] sm:$0xff]
        %v3927 = vld [vmem:[#allocation4 + $0x348] sm:$0xff]
        %v3928 = vld [vmem:[#allocation4 + $0x350] sm:$0xff]
        %v3929 = vld [vmem:[#allocation4 + $0x358] sm:$0xff]
        %v3930 = vld [vmem:[#allocation4 + $0x360] sm:$0xff]
        %v3931 = vld [vmem:[#allocation4 + $0x368] sm:$0xff]
        %v3932 = vld [vmem:[#allocation4 + $0x370] sm:$0xff]
        %v3933 = vld [vmem:[#allocation4 + $0x378] sm:$0xff]
        %v3934 = vld [vmem:[#allocation4 + $0x380] sm:$0xff]
        %v3935 = vld [vmem:[#allocation4 + $0x388] sm:$0xff]
        %v3936 = vld [vmem:[#allocation4 + $0x390] sm:$0xff]
        %v3937 = vld [vmem:[#allocation4 + $0x398] sm:$0xff]
        %v3938 = vld [vmem:[#allocation4 + $0x3a0] sm:$0xff]
        %v3939 = vld [vmem:[#allocation4 + $0x3a8] sm:$0xff]
        %v3940 = vld [vmem:[#allocation4 + $0x3b0] sm:$0xff]
        %v3941 = vld [vmem:[#allocation4 + $0x3b8] sm:$0xff]
        %v3942 = vld [vmem:[#allocation4 + $0x3c0] sm:$0xff]
        %v3943 = vld [vmem:[#allocation4 + $0x3c8] sm:$0xff]
        %v3944 = vld [vmem:[#allocation4 + $0x3d0] sm:$0xff]
        %v3945 = vld [vmem:[#allocation4 + $0x3d8] sm:$0xff]
        %v3946 = vld [vmem:[#allocation4 + $0x3e0] sm:$0xff]
        %v3947 = vld [vmem:[#allocation4 + $0x3e8] sm:$0xff]
        %v3948 = vld [vmem:[#allocation4 + $0x3f0] sm:$0xff]
        %v3949 = vld [vmem:[#allocation4 + $0x3f8] sm:$0xff]
        %v3950 = vld [vmem:[#allocation4 + $0x400] sm:$0xff]
        %v3951 = vld [vmem:[#allocation4 + $0x408] sm:$0xff]
        %v3952 = vld [vmem:[#allocation4 + $0x410] sm:$0xff]
        %v3953 = vld [vmem:[#allocation4 + $0x418] sm:$0xff]
        %v3954 = vld [vmem:[#allocation4 + $0x420] sm:$0xff]
        %v3955 = vld [vmem:[#allocation4 + $0x428] sm:$0xff]
        %v3956 = vld [vmem:[#allocation4 + $0x430] sm:$0xff]
        %v3957 = vld [vmem:[#allocation4 + $0x438] sm:$0xff]
        %v3958 = vld [vmem:[#allocation4 + $0x440] sm:$0xff]
        %v3959 = vld [vmem:[#allocation4 + $0x448] sm:$0xff]
        %v3960 = vld [vmem:[#allocation4 + $0x450] sm:$0xff]
        %v3961 = vld [vmem:[#allocation4 + $0x458] sm:$0xff]
        %v3962 = vld [vmem:[#allocation4 + $0x460] sm:$0xff]
        %v3963 = vld [vmem:[#allocation4 + $0x468] sm:$0xff]
        %v3964 = vld [vmem:[#allocation4 + $0x470] sm:$0xff]
        %v3965 = vld [vmem:[#allocation4 + $0x478] sm:$0xff]
        %v4110 = vunpack.c.l.b16 %v1127
        %v4111 = vunpack.c.l.b16 %v1128
        %v4112 = vunpack.c.l.b16 %v1129
        %v4113 = vunpack.c.l.b16 %v1130
        %v4114 = vunpack.c.l.b16 %v1131
        %v4115 = vunpack.c.l.b16 %v1132
        %v4116 = vunpack.c.l.b16 %v1133
        %v4117 = vunpack.c.l.b16 %v1134
        %v4118 = vunpack.c.l.b16 %v1135
        %v4119 = vunpack.c.l.b16 %v1136
        %v4120 = vunpack.c.l.b16 %v1137
        %v4121 = vunpack.c.l.b16 %v1138
        %v4122 = vunpack.c.l.b16 %v1139
        %v4123 = vunpack.c.l.b16 %v1140
        %v4124 = vunpack.c.l.b16 %v1141
        %v4125 = vunpack.c.l.b16 %v1142
        %v4126 = vunpack.c.l.b16 %v1143
        %v4127 = vunpack.c.l.b16 %v1144
        %v4128 = vunpack.c.l.b16 %v1145
        %v4129 = vunpack.c.l.b16 %v1146
        %v4130 = vunpack.c.l.b16 %v1147
        %v4131 = vunpack.c.l.b16 %v1148
        %v4132 = vunpack.c.l.b16 %v1149
        %v4133 = vunpack.c.l.b16 %v1150
        %v4134 = vunpack.c.l.b16 %v1151
        %v4135 = vunpack.c.l.b16 %v1152
        %v4136 = vunpack.c.l.b16 %v1153
        %v4137 = vunpack.c.l.b16 %v1154
        %v4138 = vunpack.c.l.b16 %v1155
        %v4139 = vunpack.c.l.b16 %v1156
        %v4140 = vunpack.c.l.b16 %v1157
        %v4141 = vunpack.c.l.b16 %v1158
        %v4142 = vunpack.c.l.b16 %v1159
        %v4143 = vunpack.c.l.b16 %v1160
        %v4144 = vunpack.c.l.b16 %v1161
        %v4145 = vunpack.c.l.b16 %v1162
        %v4146 = vunpack.c.l.b16 %v1163
        %v4147 = vunpack.c.l.b16 %v1164
        %v4148 = vunpack.c.l.b16 %v1165
        %v4149 = vunpack.c.l.b16 %v1166
        %v4150 = vunpack.c.l.b16 %v1167
        %v4151 = vunpack.c.l.b16 %v1168
        %v4152 = vunpack.c.l.b16 %v1169
        %v4153 = vunpack.c.l.b16 %v1170
        %v4154 = vunpack.c.l.b16 %v1171
        %v4155 = vunpack.c.l.b16 %v1172
        %v4156 = vunpack.c.l.b16 %v1173
        %v4157 = vunpack.c.l.b16 %v1174
        %v4158 = vunpack.c.l.b16 %v1175
        %v4159 = vunpack.c.l.b16 %v1176
        %v4160 = vunpack.c.l.b16 %v1177
        %v4161 = vunpack.c.l.b16 %v1178
        %v4162 = vunpack.c.l.b16 %v1179
        %v4163 = vunpack.c.l.b16 %v1180
        %v4164 = vunpack.c.l.b16 %v1181
        %v4165 = vunpack.c.l.b16 %v1182
        %v4166 = vunpack.c.l.b16 %v1183
        %v4167 = vunpack.c.l.b16 %v1184
        %v4168 = vunpack.c.l.b16 %v1185
        %v4169 = vunpack.c.l.b16 %v1186
        %v4170 = vunpack.c.l.b16 %v1187
        %v4171 = vunpack.c.l.b16 %v1188
        %v4172 = vunpack.c.l.b16 %v1189
        %v4173 = vunpack.c.l.b16 %v1190
        %v4174 = vunpack.c.l.b16 %v1191
        %v4175 = vunpack.c.l.b16 %v1192
        %v4176 = vunpack.c.l.b16 %v1193
        %v4177 = vunpack.c.l.b16 %v1194
        %v4178 = vunpack.c.l.b16 %v1195
        %v4179 = vunpack.c.l.b16 %v1196
        %v4180 = vunpack.c.l.b16 %v1197
        %v4181 = vunpack.c.l.b16 %v1198
        %v4182 = vunpack.c.l.b16 %v1199
        %v4183 = vunpack.c.l.b16 %v1200
        %v4184 = vunpack.c.l.b16 %v1201
        %v4185 = vunpack.c.l.b16 %v1202
        %v4186 = vunpack.c.l.b16 %v1203
        %v4187 = vunpack.c.l.b16 %v1204
        %v4188 = vunpack.c.l.b16 %v1205
        %v4189 = vunpack.c.l.b16 %v1206
        %v4190 = vunpack.c.l.b16 %v1207
        %v4191 = vunpack.c.l.b16 %v1208
        %v4192 = vunpack.c.l.b16 %v1209
        %v4193 = vunpack.c.l.b16 %v1210
        %v4194 = vunpack.c.l.b16 %v1211
        %v4195 = vunpack.c.l.b16 %v1212
        %v4196 = vunpack.c.l.b16 %v1213
        %v4197 = vunpack.c.l.b16 %v1214
        %v4198 = vunpack.c.l.b16 %v1215
        %v4199 = vunpack.c.l.b16 %v1216
        %v4200 = vunpack.c.l.b16 %v1217
        %v4201 = vunpack.c.l.b16 %v1218
        %v4202 = vunpack.c.l.b16 %v1219
        %v4203 = vunpack.c.l.b16 %v1220
        %v4204 = vunpack.c.l.b16 %v1221
        %v4205 = vunpack.c.l.b16 %v1222
        %v4206 = vunpack.c.l.b16 %v1223
        %v4207 = vunpack.c.l.b16 %v1224
        %v4208 = vunpack.c.l.b16 %v1225
        %v4209 = vunpack.c.l.b16 %v1226
        %v4210 = vunpack.c.l.b16 %v1227
        %v4211 = vunpack.c.l.b16 %v1228
        %v4212 = vunpack.c.l.b16 %v1229
        %v4213 = vunpack.c.l.b16 %v1230
        %v4214 = vunpack.c.l.b16 %v1231
        %v4215 = vunpack.c.l.b16 %v1232
        %v4216 = vunpack.c.l.b16 %v1233
        %v4217 = vunpack.c.l.b16 %v1234
        %v4218 = vunpack.c.l.b16 %v1235
        %v4219 = vunpack.c.l.b16 %v1236
        %v4220 = vunpack.c.l.b16 %v1237
        %v4221 = vunpack.c.l.b16 %v1238
        %v4222 = vunpack.c.l.b16 %v1239
        %v4223 = vunpack.c.l.b16 %v1240
        %v4224 = vunpack.c.l.b16 %v1241
        %v4225 = vunpack.c.l.b16 %v1242
        %v4226 = vunpack.c.l.b16 %v1243
        %v4227 = vunpack.c.l.b16 %v1244
        %v4228 = vunpack.c.l.b16 %v1245
        %v4229 = vunpack.c.l.b16 %v1246
        %v4230 = vunpack.c.l.b16 %v1247
        %v4231 = vunpack.c.l.b16 %v1248
        %v4232 = vunpack.c.l.b16 %v1249
        %v4233 = vunpack.c.l.b16 %v1250
        %v4234 = vunpack.c.l.b16 %v1251
        %v4235 = vunpack.c.l.b16 %v1252
        %v4236 = vunpack.c.l.b16 %v1253
        %v4237 = vunpack.c.l.b16 %v1254
        %v4238 = vunpack.c.l.b16 %v1255
        %v4239 = vunpack.c.l.b16 %v1256
        %v4240 = vunpack.c.l.b16 %v1257
        %v4241 = vunpack.c.l.b16 %v1258
        %v4242 = vunpack.c.l.b16 %v1259
        %v4243 = vunpack.c.l.b16 %v1260
        %v4244 = vunpack.c.l.b16 %v1261
        %v4245 = vunpack.c.l.b16 %v1262
        %v4246 = vunpack.c.l.b16 %v1263
        %v4247 = vunpack.c.l.b16 %v1264
        %v4248 = vunpack.c.l.b16 %v1265
        %v4249 = vunpack.c.l.b16 %v1266
        %v4250 = vunpack.c.l.b16 %v1267
        %v4251 = vunpack.c.l.b16 %v1268
        %v4252 = vunpack.c.l.b16 %v1269
        %v4253 = vunpack.c.l.b16 %v1270
        %v4254 = vpack.c.b16 %v4111, %v4110
        %v4255 = vpack.c.b16 %v4113, %v4112
        %v4256 = vpack.c.b16 %v4115, %v4114
        %v4257 = vpack.c.b16 %v4117, %v4116
        %v4258 = vpack.c.b16 %v4119, %v4118
        %v4259 = vpack.c.b16 %v4121, %v4120
        %v4260 = vpack.c.b16 %v4123, %v4122
        %v4261 = vpack.c.b16 %v4125, %v4124
        %v4262 = vpack.c.b16 %v4127, %v4126
        %v4263 = vpack.c.b16 %v4129, %v4128
        %v4264 = vpack.c.b16 %v4131, %v4130
        %v4265 = vpack.c.b16 %v4133, %v4132
        %v4266 = vpack.c.b16 %v4135, %v4134
        %v4267 = vpack.c.b16 %v4137, %v4136
        %v4268 = vpack.c.b16 %v4139, %v4138
        %v4269 = vpack.c.b16 %v4141, %v4140
        %v4270 = vpack.c.b16 %v4143, %v4142
        %v4271 = vpack.c.b16 %v4145, %v4144
        %v4272 = vpack.c.b16 %v4147, %v4146
        %v4273 = vpack.c.b16 %v4149, %v4148
        %v4274 = vpack.c.b16 %v4151, %v4150
        %v4275 = vpack.c.b16 %v4153, %v4152
        %v4276 = vpack.c.b16 %v4155, %v4154
        %v4277 = vpack.c.b16 %v4157, %v4156
        %v4278 = vpack.c.b16 %v4159, %v4158
        %v4279 = vpack.c.b16 %v4161, %v4160
        %v4280 = vpack.c.b16 %v4163, %v4162
        %v4281 = vpack.c.b16 %v4165, %v4164
        %v4282 = vpack.c.b16 %v4167, %v4166
        %v4283 = vpack.c.b16 %v4169, %v4168
        %v4284 = vpack.c.b16 %v4171, %v4170
        %v4285 = vpack.c.b16 %v4173, %v4172
        %v4286 = vpack.c.b16 %v4175, %v4174
        %v4287 = vpack.c.b16 %v4177, %v4176
        %v4288 = vpack.c.b16 %v4179, %v4178
        %v4289 = vpack.c.b16 %v4181, %v4180
        %v4290 = vpack.c.b16 %v4183, %v4182
        %v4291 = vpack.c.b16 %v4185, %v4184
        %v4292 = vpack.c.b16 %v4187, %v4186
        %v4293 = vpack.c.b16 %v4189, %v4188
        %v4294 = vpack.c.b16 %v4191, %v4190
        %v4295 = vpack.c.b16 %v4193, %v4192
        %v4296 = vpack.c.b16 %v4195, %v4194
        %v4297 = vpack.c.b16 %v4197, %v4196
        %v4298 = vpack.c.b16 %v4199, %v4198
        %v4299 = vpack.c.b16 %v4201, %v4200
        %v4300 = vpack.c.b16 %v4203, %v4202
        %v4301 = vpack.c.b16 %v4205, %v4204
        %v4302 = vpack.c.b16 %v4207, %v4206
        %v4303 = vpack.c.b16 %v4209, %v4208
        %v4304 = vpack.c.b16 %v4211, %v4210
        %v4305 = vpack.c.b16 %v4213, %v4212
        %v4306 = vpack.c.b16 %v4215, %v4214
        %v4307 = vpack.c.b16 %v4217, %v4216
        %v4308 = vpack.c.b16 %v4219, %v4218
        %v4309 = vpack.c.b16 %v4221, %v4220
        %v4310 = vpack.c.b16 %v4223, %v4222
        %v4311 = vpack.c.b16 %v4225, %v4224
        %v4312 = vpack.c.b16 %v4227, %v4226
        %v4313 = vpack.c.b16 %v4229, %v4228
        %v4314 = vpack.c.b16 %v4231, %v4230
        %v4315 = vpack.c.b16 %v4233, %v4232
        %v4316 = vpack.c.b16 %v4235, %v4234
        %v4317 = vpack.c.b16 %v4237, %v4236
        %v4318 = vpack.c.b16 %v4239, %v4238
        %v4319 = vpack.c.b16 %v4241, %v4240
        %v4320 = vpack.c.b16 %v4243, %v4242
        %v4321 = vpack.c.b16 %v4245, %v4244
        %v4322 = vpack.c.b16 %v4247, %v4246
        %v4323 = vpack.c.b16 %v4249, %v4248
        %v4324 = vpack.c.b16 %v4251, %v4250
        %v4325 = vpack.c.b16 %v4253, %v4252
        %4398 = vmatprep.subr.bf16.mxu0 0
        %4399 = vmatpush1.bf16.msra.mxu0 %v4254
        %4400 = vmatprep.subr.bf16.mxu0 0
        %4401 = vmatpush1.bf16.msra.mxu0 %v4255
        %4402 = vmatprep.subr.bf16.mxu0 0
        %4403 = vmatpush1.bf16.msra.mxu0 %v4256
        %4404 = vmatprep.subr.bf16.mxu0 0
        %4405 = vmatpush1.bf16.msra.mxu0 %v4257
        %4406 = vmatprep.subr.bf16.mxu0 0
        %4407 = vmatpush1.bf16.msra.mxu0 %v4258
        %4408 = vmatprep.subr.bf16.mxu0 0
        %4409 = vmatpush1.bf16.msra.mxu0 %v4259
        %4410 = vmatprep.subr.bf16.mxu0 0
        %4411 = vmatpush1.bf16.msra.mxu0 %v4260
        %4412 = vmatprep.subr.bf16.mxu0 0
        %4413 = vmatpush1.bf16.msra.mxu0 %v4261
        %4414 = vmatprep.subr.bf16.mxu0 0
        %4415 = vmatpush1.bf16.msra.mxu0 %v4262
        %4416 = vmatprep.subr.bf16.mxu0 0
        %4417 = vmatpush1.bf16.msra.mxu0 %v4263
        %4418 = vmatprep.subr.bf16.mxu0 0
        %4419 = vmatpush1.bf16.msra.mxu0 %v4264
        %4420 = vmatprep.subr.bf16.mxu0 0
        %4421 = vmatpush1.bf16.msra.mxu0 %v4265
        %4422 = vmatprep.subr.bf16.mxu0 0
        %4423 = vmatpush1.bf16.msra.mxu0 %v4266
        %4424 = vmatprep.subr.bf16.mxu0 0
        %4425 = vmatpush1.bf16.msra.mxu0 %v4267
        %4426 = vmatprep.subr.bf16.mxu0 0
        %4427 = vmatpush1.bf16.msra.mxu0 %v4268
        %4428 = vmatprep.subr.bf16.mxu0 0
        %4429 = vmatpush1.bf16.msra.mxu0 %v4269
        %4430 = vmatprep.mubr.bf16.mxu0 %v3823
        %4431 = vmatmul.mubr.bf16.gmra.mrb[0].mxu0 %v3822
        %v4432 = vpop.f32.mrb[0].mxu0
        %v4433 = vadd.f32 0.0, %v4432
        %v4434 = vpop.f32.mrb[0].mxu0
        %v4435 = vpop.f32.mrb[0].mxu0
        %v4436 = vadd.f32 0.0, %v4435
        %v4437 = vpop.f32.mrb[0].mxu0
        %4438 = vmatprep.mubr.bf16.mxu0 %v3832
        %4439 = vmatmul.mubr.bf16.gmra.mrb[0].mxu0 %v3831
        %v4440 = vpop.f32.mrb[0].mxu0
        %v4441 = vadd.f32 0.0, %v4440
        %v4442 = vpop.f32.mrb[0].mxu0
        %v4443 = vpop.f32.mrb[0].mxu0
        %v4444 = vadd.f32 0.0, %v4443
        %v4445 = vpop.f32.mrb[0].mxu0
        %4446 = vmatprep.mubr.bf16.mxu0 %v3841
        %4447 = vmatmul.mubr.bf16.gmra.mrb[0].mxu0 %v3840
        %v4448 = vpop.f32.mrb[0].mxu0
        %v4449 = vadd.f32 0.0, %v4448
        %v4450 = vpop.f32.mrb[0].mxu0
        %v4451 = vpop.f32.mrb[0].mxu0
        %v4452 = vadd.f32 0.0, %v4451
        %v4453 = vpop.f32.mrb[0].mxu0
        %4454 = vmatprep.mubr.bf16.mxu0 %v3850
        %4455 = vmatmul.mubr.bf16.gmra.mrb[0].mxu0 %v3849
        %v4456 = vpop.f32.mrb[0].mxu0
        %v4457 = vadd.f32 0.0, %v4456
        %v4458 = vpop.f32.mrb[0].mxu0
        %v4459 = vpop.f32.mrb[0].mxu0
        %v4460 = vadd.f32 0.0, %v4459
        %v4461 = vpop.f32.mrb[0].mxu0
        %4462 = vmatprep.mubr.bf16.mxu0 %v3859
        %4463 = vmatmul.mubr.bf16.gmra.mrb[0].mxu0 %v3858
        %v4464 = vpop.f32.mrb[0].mxu0
        %v4465 = vadd.f32 0.0, %v4464
        %v4466 = vpop.f32.mrb[0].mxu0
        %v4467 = vpop.f32.mrb[0].mxu0
        %v4468 = vadd.f32 0.0, %v4467
        %v4469 = vpop.f32.mrb[0].mxu0
        %4470 = vmatprep.mubr.bf16.mxu0 %v3868
        %4471 = vmatmul.mubr.bf16.gmra.mrb[0].mxu0 %v3867
        %v4472 = vpop.f32.mrb[0].mxu0
        %v4473 = vadd.f32 0.0, %v4472
        %v4474 = vpop.f32.mrb[0].mxu0
        %v4475 = vpop.f32.mrb[0].mxu0
        %v4476 = vadd.f32 0.0, %v4475
        %v4477 = vpop.f32.mrb[0].mxu0
        %4478 = vmatprep.mubr.bf16.mxu0 %v3877
        %4479 = vmatmul.mubr.bf16.gmra.mrb[0].mxu0 %v3876
        %v4480 = vpop.f32.mrb[0].mxu0
        %v4481 = vadd.f32 0.0, %v4480
        %v4482 = vpop.f32.mrb[0].mxu0
        %v4483 = vpop.f32.mrb[0].mxu0
        %v4484 = vadd.f32 0.0, %v4483
        %v4485 = vpop.f32.mrb[0].mxu0
        %4486 = vmatprep.mubr.bf16.mxu0 %v3886
        %4487 = vmatmul.mubr.bf16.gmra.mrb[0].mxu0 %v3885
        %v4488 = vpop.f32.mrb[0].mxu0
        %v4489 = vadd.f32 0.0, %v4488
        %v4490 = vpop.f32.mrb[0].mxu0
        %v4491 = vpop.f32.mrb[0].mxu0
        %v4492 = vadd.f32 0.0, %v4491
        %v4493 = vpop.f32.mrb[0].mxu0
        %4494 = vmatprep.mubr.bf16.mxu0 %v3895
        %4495 = vmatmul.mubr.bf16.gmra.mrb[0].mxu0 %v3894
        %v4496 = vpop.f32.mrb[0].mxu0
        %v4497 = vadd.f32 0.0, %v4496
        %v4498 = vpop.f32.mrb[0].mxu0
        %v4499 = vpop.f32.mrb[0].mxu0
        %v4500 = vadd.f32 0.0, %v4499
        %v4501 = vpop.f32.mrb[0].mxu0
        %4502 = vmatprep.mubr.bf16.mxu0 %v3904
        %4503 = vmatmul.mubr.bf16.gmra.mrb[0].mxu0 %v3903
        %v4504 = vpop.f32.mrb[0].mxu0
        %v4505 = vadd.f32 0.0, %v4504
        %v4506 = vpop.f32.mrb[0].mxu0
        %v4507 = vpop.f32.mrb[0].mxu0
        %v4508 = vadd.f32 0.0, %v4507
        %v4509 = vpop.f32.mrb[0].mxu0
        %4510 = vmatprep.mubr.bf16.mxu0 %v3913
        %4511 = vmatmul.mubr.bf16.gmra.mrb[0].mxu0 %v3912
        %v4512 = vpop.f32.mrb[0].mxu0
        %v4513 = vadd.f32 0.0, %v4512
        %v4514 = vpop.f32.mrb[0].mxu0
        %v4515 = vpop.f32.mrb[0].mxu0
        %v4516 = vadd.f32 0.0, %v4515
        %v4517 = vpop.f32.mrb[0].mxu0
        %4518 = vmatprep.mubr.bf16.mxu0 %v3922
        %4519 = vmatmul.mubr.bf16.gmra.mrb[0].mxu0 %v3921
        %v4520 = vpop.f32.mrb[0].mxu0
        %v4521 = vadd.f32 0.0, %v4520
        %v4522 = vpop.f32.mrb[0].mxu0
        %v4523 = vpop.f32.mrb[0].mxu0
        %v4524 = vadd.f32 0.0, %v4523
        %v4525 = vpop.f32.mrb[0].mxu0
        %4526 = vmatprep.mubr.bf16.mxu0 %v3931
        %4527 = vmatmul.mubr.bf16.gmra.mrb[0].mxu0 %v3930
        %v4528 = vpop.f32.mrb[0].mxu0
        %v4529 = vadd.f32 0.0, %v4528
        %v4530 = vpop.f32.mrb[0].mxu0
        %v4531 = vpop.f32.mrb[0].mxu0
        %v4532 = vadd.f32 0.0, %v4531
        %v4533 = vpop.f32.mrb[0].mxu0
        %4534 = vmatprep.mubr.bf16.mxu0 %v3940
        %4535 = vmatmul.mubr.bf16.gmra.mrb[0].mxu0 %v3939
        %v4536 = vpop.f32.mrb[0].mxu0
        %v4537 = vadd.f32 0.0, %v4536
        %v4538 = vpop.f32.mrb[0].mxu0
        %v4539 = vpop.f32.mrb[0].mxu0
        %v4540 = vadd.f32 0.0, %v4539
        %v4541 = vpop.f32.mrb[0].mxu0
        %4542 = vmatprep.mubr.bf16.mxu0 %v3949
        %4543 = vmatmul.mubr.bf16.gmra.mrb[0].mxu0 %v3948
        %v4544 = vpop.f32.mrb[0].mxu0
        %v4545 = vadd.f32 0.0, %v4544
        %v4546 = vpop.f32.mrb[0].mxu0
        %v4547 = vpop.f32.mrb[0].mxu0
        %v4548 = vadd.f32 0.0, %v4547
        %v4549 = vpop.f32.mrb[0].mxu0
        %4550 = vmatprep.mubr.bf16.mxu0 %v3958
        %4551 = vmatmul.mubr.bf16.gmra.mrb[0].mxu0 %v3957
        %v4552 = vpop.f32.mrb[0].mxu0
        %v4553 = vadd.f32 0.0, %v4552
        %v4554 = vpop.f32.mrb[0].mxu0
        %v4555 = vpop.f32.mrb[0].mxu0
        %v4556 = vadd.f32 0.0, %v4555
        %v4557 = vpop.f32.mrb[0].mxu0
        %4558 = vdwg.mxu0
        %4559 = vmatprep.subr.bf16.mxu0 0
        %4560 = vmatpush1.bf16.msra.mxu0 %v4270
        %4561 = vmatprep.subr.bf16.mxu0 0
        %4562 = vmatpush1.bf16.msra.mxu0 %v4271
        %4563 = vmatprep.subr.bf16.mxu0 0
        %4564 = vmatpush1.bf16.msra.mxu0 %v4272
        %4565 = vmatprep.subr.bf16.mxu0 0
        %4566 = vmatpush1.bf16.msra.mxu0 %v4273
        %4567 = vmatprep.subr.bf16.mxu0 0
        %4568 = vmatpush1.bf16.msra.mxu0 %v4274
        %4569 = vmatprep.subr.bf16.mxu0 0
        %4570 = vmatpush1.bf16.msra.mxu0 %v4275
        %4571 = vmatprep.subr.bf16.mxu0 0
        %4572 = vmatpush1.bf16.msra.mxu0 %v4276
        %4573 = vmatprep.subr.bf16.mxu0 0
        %4574 = vmatpush1.bf16.msra.mxu0 %v4277
        %4575 = vmatprep.subr.bf16.mxu0 0
        %4576 = vmatpush1.bf16.msra.mxu0 %v4278
        %4577 = vmatprep.subr.bf16.mxu0 0
        %4578 = vmatpush1.bf16.msra.mxu0 %v4279
        %4579 = vmatprep.subr.bf16.mxu0 0
        %4580 = vmatpush1.bf16.msra.mxu0 %v4280
        %4581 = vmatprep.subr.bf16.mxu0 0
        %4582 = vmatpush1.bf16.msra.mxu0 %v4281
        %4583 = vmatprep.subr.bf16.mxu0 0
        %4584 = vmatpush1.bf16.msra.mxu0 %v4282
        %4585 = vmatprep.subr.bf16.mxu0 0
        %4586 = vmatpush1.bf16.msra.mxu0 %v4283
        %4587 = vmatprep.subr.bf16.mxu0 0
        %4588 = vmatpush1.bf16.msra.mxu0 %v4284
        %4589 = vmatprep.subr.bf16.mxu0 0
        %4590 = vmatpush1.bf16.msra.mxu0 %v4285
        %4591 = vmatprep.mubr.bf16.mxu0 %v3825
        %4592 = vmatmul.mubr.bf16.gmra.mrb[0].mxu0 %v3824
        %v4593 = vpop.f32.mrb[0].mxu0
        %v4594 = vadd.f32 %v4433, %v4593
        %v4595 = vpop.f32.mrb[0].mxu0
        %v4596 = vpop.f32.mrb[0].mxu0
        %v4597 = vadd.f32 %v4436, %v4596
        %v4598 = vpop.f32.mrb[0].mxu0
        %4599 = vmatprep.mubr.bf16.mxu0 %v3834
        %4600 = vmatmul.mubr.bf16.gmra.mrb[0].mxu0 %v3833
        %v4601 = vpop.f32.mrb[0].mxu0
        %v4602 = vadd.f32 %v4441, %v4601
        %v4603 = vpop.f32.mrb[0].mxu0
        %v4604 = vpop.f32.mrb[0].mxu0
        %v4605 = vadd.f32 %v4444, %v4604
        %v4606 = vpop.f32.mrb[0].mxu0
        %4607 = vmatprep.mubr.bf16.mxu0 %v3843
        %4608 = vmatmul.mubr.bf16.gmra.mrb[0].mxu0 %v3842
        %v4609 = vpop.f32.mrb[0].mxu0
        %v4610 = vadd.f32 %v4449, %v4609
        %v4611 = vpop.f32.mrb[0].mxu0
        %v4612 = vpop.f32.mrb[0].mxu0
        %v4613 = vadd.f32 %v4452, %v4612
        %v4614 = vpop.f32.mrb[0].mxu0
        %4615 = vmatprep.mubr.bf16.mxu0 %v3852
        %4616 = vmatmul.mubr.bf16.gmra.mrb[0].mxu0 %v3851
        %v4617 = vpop.f32.mrb[0].mxu0
        %v4618 = vadd.f32 %v4457, %v4617
        %v4619 = vpop.f32.mrb[0].mxu0
        %v4620 = vpop.f32.mrb[0].mxu0
        %v4621 = vadd.f32 %v4460, %v4620
        %v4622 = vpop.f32.mrb[0].mxu0
        %4623 = vmatprep.mubr.bf16.mxu0 %v3861
        %4624 = vmatmul.mubr.bf16.gmra.mrb[0].mxu0 %v3860
        %v4625 = vpop.f32.mrb[0].mxu0
        %v4626 = vadd.f32 %v4465, %v4625
        %v4627 = vpop.f32.mrb[0].mxu0
        %v4628 = vpop.f32.mrb[0].mxu0
        %v4629 = vadd.f32 %v4468, %v4628
        %v4630 = vpop.f32.mrb[0].mxu0
        %4631 = vmatprep.mubr.bf16.mxu0 %v3870
        %4632 = vmatmul.mubr.bf16.gmra.mrb[0].mxu0 %v3869
        %v4633 = vpop.f32.mrb[0].mxu0
        %v4634 = vadd.f32 %v4473, %v4633
        %v4635 = vpop.f32.mrb[0].mxu0
        %v4636 = vpop.f32.mrb[0].mxu0
        %v4637 = vadd.f32 %v4476, %v4636
        %v4638 = vpop.f32.mrb[0].mxu0
        %4639 = vmatprep.mubr.bf16.mxu0 %v3879
        %4640 = vmatmul.mubr.bf16.gmra.mrb[0].mxu0 %v3878
        %v4641 = vpop.f32.mrb[0].mxu0
        %v4642 = vadd.f32 %v4481, %v4641
        %v4643 = vpop.f32.mrb[0].mxu0
        %v4644 = vpop.f32.mrb[0].mxu0
        %v4645 = vadd.f32 %v4484, %v4644
        %v4646 = vpop.f32.mrb[0].mxu0
        %4647 = vmatprep.mubr.bf16.mxu0 %v3888
        %4648 = vmatmul.mubr.bf16.gmra.mrb[0].mxu0 %v3887
        %v4649 = vpop.f32.mrb[0].mxu0
        %v4650 = vadd.f32 %v4489, %v4649
        %v4651 = vpop.f32.mrb[0].mxu0
        %v4652 = vpop.f32.mrb[0].mxu0
        %v4653 = vadd.f32 %v4492, %v4652
        %v4654 = vpop.f32.mrb[0].mxu0
        %4655 = vmatprep.mubr.bf16.mxu0 %v3897
        %4656 = vmatmul.mubr.bf16.gmra.mrb[0].mxu0 %v3896
        %v4657 = vpop.f32.mrb[0].mxu0
        %v4658 = vadd.f32 %v4497, %v4657
        %v4659 = vpop.f32.mrb[0].mxu0
        %v4660 = vpop.f32.mrb[0].mxu0
        %v4661 = vadd.f32 %v4500, %v4660
        %v4662 = vpop.f32.mrb[0].mxu0
        %4663 = vmatprep.mubr.bf16.mxu0 %v3906
        %4664 = vmatmul.mubr.bf16.gmra.mrb[0].mxu0 %v3905
        %v4665 = vpop.f32.mrb[0].mxu0
        %v4666 = vadd.f32 %v4505, %v4665
        %v4667 = vpop.f32.mrb[0].mxu0
        %v4668 = vpop.f32.mrb[0].mxu0
        %v4669 = vadd.f32 %v4508, %v4668
        %v4670 = vpop.f32.mrb[0].mxu0
        %4671 = vmatprep.mubr.bf16.mxu0 %v3915
        %4672 = vmatmul.mubr.bf16.gmra.mrb[0].mxu0 %v3914
        %v4673 = vpop.f32.mrb[0].mxu0
        %v4674 = vadd.f32 %v4513, %v4673
        %v4675 = vpop.f32.mrb[0].mxu0
        %v4676 = vpop.f32.mrb[0].mxu0
        %v4677 = vadd.f32 %v4516, %v4676
        %v4678 = vpop.f32.mrb[0].mxu0
        %4679 = vmatprep.mubr.bf16.mxu0 %v3924
        %4680 = vmatmul.mubr.bf16.gmra.mrb[0].mxu0 %v3923
        %v4681 = vpop.f32.mrb[0].mxu0
        %v4682 = vadd.f32 %v4521, %v4681
        %v4683 = vpop.f32.mrb[0].mxu0
        %v4684 = vpop.f32.mrb[0].mxu0
        %v4685 = vadd.f32 %v4524, %v4684
        %v4686 = vpop.f32.mrb[0].mxu0
        %4687 = vmatprep.mubr.bf16.mxu0 %v3933
        %4688 = vmatmul.mubr.bf16.gmra.mrb[0].mxu0 %v3932
        %v4689 = vpop.f32.mrb[0].mxu0
        %v4690 = vadd.f32 %v4529, %v4689
        %v4691 = vpop.f32.mrb[0].mxu0
        %v4692 = vpop.f32.mrb[0].mxu0
        %v4693 = vadd.f32 %v4532, %v4692
        %v4694 = vpop.f32.mrb[0].mxu0
        %4695 = vmatprep.mubr.bf16.mxu0 %v3942
        %4696 = vmatmul.mubr.bf16.gmra.mrb[0].mxu0 %v3941
        %v4697 = vpop.f32.mrb[0].mxu0
        %v4698 = vadd.f32 %v4537, %v4697
        %v4699 = vpop.f32.mrb[0].mxu0
        %v4700 = vpop.f32.mrb[0].mxu0
        %v4701 = vadd.f32 %v4540, %v4700
        %v4702 = vpop.f32.mrb[0].mxu0
        %4703 = vmatprep.mubr.bf16.mxu0 %v3951
        %4704 = vmatmul.mubr.bf16.gmra.mrb[0].mxu0 %v3950
        %v4705 = vpop.f32.mrb[0].mxu0
        %v4706 = vadd.f32 %v4545, %v4705
        %v4707 = vpop.f32.mrb[0].mxu0
        %v4708 = vpop.f32.mrb[0].mxu0
        %v4709 = vadd.f32 %v4548, %v4708
        %v4710 = vpop.f32.mrb[0].mxu0
        %4711 = vmatprep.mubr.bf16.mxu0 %v3960
        %4712 = vmatmul.mubr.bf16.gmra.mrb[0].mxu0 %v3959
        %v4713 = vpop.f32.mrb[0].mxu0
        %v4714 = vadd.f32 %v4553, %v4713
        %v4715 = vpop.f32.mrb[0].mxu0
        %v4716 = vpop.f32.mrb[0].mxu0
        %v4717 = vadd.f32 %v4556, %v4716
        %v4718 = vpop.f32.mrb[0].mxu0
        %4719 = vdwg.mxu0
        %4720 = vmatprep.subr.bf16.mxu0 0
        %4721 = vmatpush1.bf16.msra.mxu0 %v4286
        %4722 = vmatprep.subr.bf16.mxu0 0
        %4723 = vmatpush1.bf16.msra.mxu0 %v4287
        %4724 = vmatprep.subr.bf16.mxu0 0
        %4725 = vmatpush1.bf16.msra.mxu0 %v4288
        %4726 = vmatprep.subr.bf16.mxu0 0
        %4727 = vmatpush1.bf16.msra.mxu0 %v4289
        %4728 = vmatprep.subr.bf16.mxu0 0
        %4729 = vmatpush1.bf16.msra.mxu0 %v4290
        %4730 = vmatprep.subr.bf16.mxu0 0
        %4731 = vmatpush1.bf16.msra.mxu0 %v4291
        %4732 = vmatprep.subr.bf16.mxu0 0
        %4733 = vmatpush1.bf16.msra.mxu0 %v4292
        %4734 = vmatprep.subr.bf16.mxu0 0
        %4735 = vmatpush1.bf16.msra.mxu0 %v4293
        %4736 = vmatprep.subr.bf16.mxu0 0
        %4737 = vmatpush1.bf16.msra.mxu0 %v4294
        %4738 = vmatprep.subr.bf16.mxu0 0
        %4739 = vmatpush1.bf16.msra.mxu0 %v4295
        %4740 = vmatprep.subr.bf16.mxu0 0
        %4741 = vmatpush1.bf16.msra.mxu0 %v4296
        %4742 = vmatprep.subr.bf16.mxu0 0
        %4743 = vmatpush1.bf16.msra.mxu0 %v4297
        %4744 = vmatprep.subr.bf16.mxu0 0
        %4745 = vmatpush1.bf16.msra.mxu0 %v4298
        %4746 = vmatprep.subr.bf16.mxu0 0
        %4747 = vmatpush1.bf16.msra.mxu0 %v4299
        %4748 = vmatprep.subr.bf16.mxu0 0
        %4749 = vmatpush1.bf16.msra.mxu0 %v4300
        %4750 = vmatprep.subr.bf16.mxu0 0
        %4751 = vmatpush1.bf16.msra.mxu0 %v4301
        %4752 = vmatprep.mubr.bf16.mxu0 %v3827
        %4753 = vmatmul.mubr.bf16.gmra.mrb[0].mxu0 %v3826
        %v4754 = vpop.f32.mrb[0].mxu0
        %v4755 = vadd.f32 %v4594, %v4754
        %v4756 = vpop.f32.mrb[0].mxu0
        %v4757 = vpop.f32.mrb[0].mxu0
        %v4758 = vadd.f32 %v4597, %v4757
        %v4759 = vpop.f32.mrb[0].mxu0
        %4760 = vmatprep.mubr.bf16.mxu0 %v3836
        %4761 = vmatmul.mubr.bf16.gmra.mrb[0].mxu0 %v3835
        %v4762 = vpop.f32.mrb[0].mxu0
        %v4763 = vadd.f32 %v4602, %v4762
        %v4764 = vpop.f32.mrb[0].mxu0
        %v4765 = vpop.f32.mrb[0].mxu0
        %v4766 = vadd.f32 %v4605, %v4765
        %v4767 = vpop.f32.mrb[0].mxu0
        %4768 = vmatprep.mubr.bf16.mxu0 %v3845
        %4769 = vmatmul.mubr.bf16.gmra.mrb[0].mxu0 %v3844
        %v4770 = vpop.f32.mrb[0].mxu0
        %v4771 = vadd.f32 %v4610, %v4770
        %v4772 = vpop.f32.mrb[0].mxu0
        %v4773 = vpop.f32.mrb[0].mxu0
        %v4774 = vadd.f32 %v4613, %v4773
        %v4775 = vpop.f32.mrb[0].mxu0
        %4776 = vmatprep.mubr.bf16.mxu0 %v3854
        %4777 = vmatmul.mubr.bf16.gmra.mrb[0].mxu0 %v3853
        %v4778 = vpop.f32.mrb[0].mxu0
        %v4779 = vadd.f32 %v4618, %v4778
        %v4780 = vpop.f32.mrb[0].mxu0
        %v4781 = vpop.f32.mrb[0].mxu0
        %v4782 = vadd.f32 %v4621, %v4781
        %v4783 = vpop.f32.mrb[0].mxu0
        %4784 = vmatprep.mubr.bf16.mxu0 %v3863
        %4785 = vmatmul.mubr.bf16.gmra.mrb[0].mxu0 %v3862
        %v4786 = vpop.f32.mrb[0].mxu0
        %v4787 = vadd.f32 %v4626, %v4786
        %v4788 = vpop.f32.mrb[0].mxu0
        %v4789 = vpop.f32.mrb[0].mxu0
        %v4790 = vadd.f32 %v4629, %v4789
        %v4791 = vpop.f32.mrb[0].mxu0
        %4792 = vmatprep.mubr.bf16.mxu0 %v3872
        %4793 = vmatmul.mubr.bf16.gmra.mrb[0].mxu0 %v3871
        %v4794 = vpop.f32.mrb[0].mxu0
        %v4795 = vadd.f32 %v4634, %v4794
        %v4796 = vpop.f32.mrb[0].mxu0
        %v4797 = vpop.f32.mrb[0].mxu0
        %v4798 = vadd.f32 %v4637, %v4797
        %v4799 = vpop.f32.mrb[0].mxu0
        %4800 = vmatprep.mubr.bf16.mxu0 %v3881
        %4801 = vmatmul.mubr.bf16.gmra.mrb[0].mxu0 %v3880
        %v4802 = vpop.f32.mrb[0].mxu0
        %v4803 = vadd.f32 %v4642, %v4802
        %v4804 = vpop.f32.mrb[0].mxu0
        %v4805 = vpop.f32.mrb[0].mxu0
        %v4806 = vadd.f32 %v4645, %v4805
        %v4807 = vpop.f32.mrb[0].mxu0
        %4808 = vmatprep.mubr.bf16.mxu0 %v3890
        %4809 = vmatmul.mubr.bf16.gmra.mrb[0].mxu0 %v3889
        %v4810 = vpop.f32.mrb[0].mxu0
        %v4811 = vadd.f32 %v4650, %v4810
        %v4812 = vpop.f32.mrb[0].mxu0
        %v4813 = vpop.f32.mrb[0].mxu0
        %v4814 = vadd.f32 %v4653, %v4813
        %v4815 = vpop.f32.mrb[0].mxu0
        %4816 = vmatprep.mubr.bf16.mxu0 %v3899
        %4817 = vmatmul.mubr.bf16.gmra.mrb[0].mxu0 %v3898
        %v4818 = vpop.f32.mrb[0].mxu0
        %v4819 = vadd.f32 %v4658, %v4818
        %v4820 = vpop.f32.mrb[0].mxu0
        %v4821 = vpop.f32.mrb[0].mxu0
        %v4822 = vadd.f32 %v4661, %v4821
        %v4823 = vpop.f32.mrb[0].mxu0
        %4824 = vmatprep.mubr.bf16.mxu0 %v3908
        %4825 = vmatmul.mubr.bf16.gmra.mrb[0].mxu0 %v3907
        %v4826 = vpop.f32.mrb[0].mxu0
        %v4827 = vadd.f32 %v4666, %v4826
        %v4828 = vpop.f32.mrb[0].mxu0
        %v4829 = vpop.f32.mrb[0].mxu0
        %v4830 = vadd.f32 %v4669, %v4829
        %v4831 = vpop.f32.mrb[0].mxu0
        %4832 = vmatprep.mubr.bf16.mxu0 %v3917
        %4833 = vmatmul.mubr.bf16.gmra.mrb[0].mxu0 %v3916
        %v4834 = vpop.f32.mrb[0].mxu0
        %v4835 = vadd.f32 %v4674, %v4834
        %v4836 = vpop.f32.mrb[0].mxu0
        %v4837 = vpop.f32.mrb[0].mxu0
        %v4838 = vadd.f32 %v4677, %v4837
        %v4839 = vpop.f32.mrb[0].mxu0
        %4840 = vmatprep.mubr.bf16.mxu0 %v3926
        %4841 = vmatmul.mubr.bf16.gmra.mrb[0].mxu0 %v3925
        %v4842 = vpop.f32.mrb[0].mxu0
        %v4843 = vadd.f32 %v4682, %v4842
        %v4844 = vpop.f32.mrb[0].mxu0
        %v4845 = vpop.f32.mrb[0].mxu0
        %v4846 = vadd.f32 %v4685, %v4845
        %v4847 = vpop.f32.mrb[0].mxu0
        %4848 = vmatprep.mubr.bf16.mxu0 %v3935
        %4849 = vmatmul.mubr.bf16.gmra.mrb[0].mxu0 %v3934
        %v4850 = vpop.f32.mrb[0].mxu0
        %v4851 = vadd.f32 %v4690, %v4850
        %v4852 = vpop.f32.mrb[0].mxu0
        %v4853 = vpop.f32.mrb[0].mxu0
        %v4854 = vadd.f32 %v4693, %v4853
        %v4855 = vpop.f32.mrb[0].mxu0
        %4856 = vmatprep.mubr.bf16.mxu0 %v3944
        %4857 = vmatmul.mubr.bf16.gmra.mrb[0].mxu0 %v3943
        %v4858 = vpop.f32.mrb[0].mxu0
        %v4859 = vadd.f32 %v4698, %v4858
        %v4860 = vpop.f32.mrb[0].mxu0
        %v4861 = vpop.f32.mrb[0].mxu0
        %v4862 = vadd.f32 %v4701, %v4861
        %v4863 = vpop.f32.mrb[0].mxu0
        %4864 = vmatprep.mubr.bf16.mxu0 %v3953
        %4865 = vmatmul.mubr.bf16.gmra.mrb[0].mxu0 %v3952
        %v4866 = vpop.f32.mrb[0].mxu0
        %v4867 = vadd.f32 %v4706, %v4866
        %v4868 = vpop.f32.mrb[0].mxu0
        %v4869 = vpop.f32.mrb[0].mxu0
        %v4870 = vadd.f32 %v4709, %v4869
        %v4871 = vpop.f32.mrb[0].mxu0
        %4872 = vmatprep.mubr.bf16.mxu0 %v3962
        %4873 = vmatmul.mubr.bf16.gmra.mrb[0].mxu0 %v3961
        %v4874 = vpop.f32.mrb[0].mxu0
        %v4875 = vadd.f32 %v4714, %v4874
        %v4876 = vpop.f32.mrb[0].mxu0
        %v4877 = vpop.f32.mrb[0].mxu0
        %v4878 = vadd.f32 %v4717, %v4877
        %v4879 = vpop.f32.mrb[0].mxu0
        %4880 = vdwg.mxu0
        %4881 = vmatprep.subr.bf16.mxu0 0
        %4882 = vmatpush1.bf16.msra.mxu0 %v4302
        %4883 = vmatprep.subr.bf16.mxu0 0
        %4884 = vmatpush1.bf16.msra.mxu0 %v4303
        %4885 = vmatprep.subr.bf16.mxu0 0
        %4886 = vmatpush1.bf16.msra.mxu0 %v4304
        %4887 = vmatprep.subr.bf16.mxu0 0
        %4888 = vmatpush1.bf16.msra.mxu0 %v4305
        %4889 = vmatprep.subr.bf16.mxu0 0
        %4890 = vmatpush1.bf16.msra.mxu0 %v4306
        %4891 = vmatprep.subr.bf16.mxu0 0
        %4892 = vmatpush1.bf16.msra.mxu0 %v4307
        %4893 = vmatprep.subr.bf16.mxu0 0
        %4894 = vmatpush1.bf16.msra.mxu0 %v4308
        %4895 = vmatprep.subr.bf16.mxu0 0
        %4896 = vmatpush1.bf16.msra.mxu0 %v4309
        %4897 = vmatprep.subr.bf16.mxu0 0
        %4898 = vmatpush1.bf16.msra.mxu0 %v4310
        %4899 = vmatprep.subr.bf16.mxu0 0
        %4900 = vmatpush1.bf16.msra.mxu0 %v4311
        %4901 = vmatprep.subr.bf16.mxu0 0
        %4902 = vmatpush1.bf16.msra.mxu0 %v4312
        %4903 = vmatprep.subr.bf16.mxu0 0
        %4904 = vmatpush1.bf16.msra.mxu0 %v4313
        %4905 = vmatprep.subr.bf16.mxu0 0
        %4906 = vmatpush1.bf16.msra.mxu0 %v4314
        %4907 = vmatprep.subr.bf16.mxu0 0
        %4908 = vmatpush1.bf16.msra.mxu0 %v4315
        %4909 = vmatprep.subr.bf16.mxu0 0
        %4910 = vmatpush1.bf16.msra.mxu0 %v4316
        %4911 = vmatprep.subr.bf16.mxu0 0
        %4912 = vmatpush1.bf16.msra.mxu0 %v4317
        %4913 = vmatprep.mubr.bf16.mxu0 %v3829
        %4914 = vmatmul.mubr.bf16.gmra.mrb[0].mxu0 %v3828
        %v4915 = vpop.f32.mrb[0].mxu0
        %v4916 = vadd.f32 %v4755, %v4915
        %v4917 = vpop.f32.mrb[0].mxu0
        %v4918 = vpop.f32.mrb[0].mxu0
        %v4919 = vadd.f32 %v4758, %v4918
        %v4920 = vpop.f32.mrb[0].mxu0
        %4921 = vmatprep.mubr.bf16.mxu0 %v3838
        %4922 = vmatmul.mubr.bf16.gmra.mrb[0].mxu0 %v3837
        %v4923 = vpop.f32.mrb[0].mxu0
        %v4924 = vadd.f32 %v4763, %v4923
        %v4925 = vpop.f32.mrb[0].mxu0
        %v4926 = vpop.f32.mrb[0].mxu0
        %v4927 = vadd.f32 %v4766, %v4926
        %v4928 = vpop.f32.mrb[0].mxu0
        %4929 = vmatprep.mubr.bf16.mxu0 %v3847
        %4930 = vmatmul.mubr.bf16.gmra.mrb[0].mxu0 %v3846
        %v4931 = vpop.f32.mrb[0].mxu0
        %v4932 = vadd.f32 %v4771, %v4931
        %v4933 = vpop.f32.mrb[0].mxu0
        %v4934 = vpop.f32.mrb[0].mxu0
        %v4935 = vadd.f32 %v4774, %v4934
        %v4936 = vpop.f32.mrb[0].mxu0
        %4937 = vmatprep.mubr.bf16.mxu0 %v3856
        %4938 = vmatmul.mubr.bf16.gmra.mrb[0].mxu0 %v3855
        %v4939 = vpop.f32.mrb[0].mxu0
        %v4940 = vadd.f32 %v4779, %v4939
        %v4941 = vpop.f32.mrb[0].mxu0
        %v4942 = vpop.f32.mrb[0].mxu0
        %v4943 = vadd.f32 %v4782, %v4942
        %v4944 = vpop.f32.mrb[0].mxu0
        %4945 = vmatprep.mubr.bf16.mxu0 %v3865
        %4946 = vmatmul.mubr.bf16.gmra.mrb[0].mxu0 %v3864
        %v4947 = vpop.f32.mrb[0].mxu0
        %v4948 = vadd.f32 %v4787, %v4947
        %v4949 = vpop.f32.mrb[0].mxu0
        %v4950 = vpop.f32.mrb[0].mxu0
        %v4951 = vadd.f32 %v4790, %v4950
        %v4952 = vpop.f32.mrb[0].mxu0
        %4953 = vmatprep.mubr.bf16.mxu0 %v3874
        %4954 = vmatmul.mubr.bf16.gmra.mrb[0].mxu0 %v3873
        %v4955 = vpop.f32.mrb[0].mxu0
        %v4956 = vadd.f32 %v4795, %v4955
        %v4957 = vpop.f32.mrb[0].mxu0
        %v4958 = vpop.f32.mrb[0].mxu0
        %v4959 = vadd.f32 %v4798, %v4958
        %v4960 = vpop.f32.mrb[0].mxu0
        %4961 = vmatprep.mubr.bf16.mxu0 %v3883
        %4962 = vmatmul.mubr.bf16.gmra.mrb[0].mxu0 %v3882
        %v4963 = vpop.f32.mrb[0].mxu0
        %v4964 = vadd.f32 %v4803, %v4963
        %v4965 = vpop.f32.mrb[0].mxu0
        %v4966 = vpop.f32.mrb[0].mxu0
        %v4967 = vadd.f32 %v4806, %v4966
        %v4968 = vpop.f32.mrb[0].mxu0
        %4969 = vmatprep.mubr.bf16.mxu0 %v3892
        %4970 = vmatmul.mubr.bf16.gmra.mrb[0].mxu0 %v3891
        %v4971 = vpop.f32.mrb[0].mxu0
        %v4972 = vadd.f32 %v4811, %v4971
        %v4973 = vpop.f32.mrb[0].mxu0
        %v4974 = vpop.f32.mrb[0].mxu0
        %v4975 = vadd.f32 %v4814, %v4974
        %v4976 = vpop.f32.mrb[0].mxu0
        %4977 = vmatprep.mubr.bf16.mxu0 %v3901
        %4978 = vmatmul.mubr.bf16.gmra.mrb[0].mxu0 %v3900
        %v4979 = vpop.f32.mrb[0].mxu0
        %v4980 = vadd.f32 %v4819, %v4979
        %v4981 = vpop.f32.mrb[0].mxu0
        %v4982 = vpop.f32.mrb[0].mxu0
        %v4983 = vadd.f32 %v4822, %v4982
        %v4984 = vpop.f32.mrb[0].mxu0
        %4985 = vmatprep.mubr.bf16.mxu0 %v3910
        %4986 = vmatmul.mubr.bf16.gmra.mrb[0].mxu0 %v3909
        %v4987 = vpop.f32.mrb[0].mxu0
        %v4988 = vadd.f32 %v4827, %v4987
        %v4989 = vpop.f32.mrb[0].mxu0
        %v4990 = vpop.f32.mrb[0].mxu0
        %v4991 = vadd.f32 %v4830, %v4990
        %v4992 = vpop.f32.mrb[0].mxu0
        %4993 = vmatprep.mubr.bf16.mxu0 %v3919
        %4994 = vmatmul.mubr.bf16.gmra.mrb[0].mxu0 %v3918
        %v4995 = vpop.f32.mrb[0].mxu0
        %v4996 = vadd.f32 %v4835, %v4995
        %v4997 = vpop.f32.mrb[0].mxu0
        %v4998 = vpop.f32.mrb[0].mxu0
        %v4999 = vadd.f32 %v4838, %v4998
        %v5000 = vpop.f32.mrb[0].mxu0
        %5001 = vmatprep.mubr.bf16.mxu0 %v3928
        %5002 = vmatmul.mubr.bf16.gmra.mrb[0].mxu0 %v3927
        %v5003 = vpop.f32.mrb[0].mxu0
        %v5004 = vadd.f32 %v4843, %v5003
        %v5005 = vpop.f32.mrb[0].mxu0
        %v5006 = vpop.f32.mrb[0].mxu0
        %v5007 = vadd.f32 %v4846, %v5006
        %v5008 = vpop.f32.mrb[0].mxu0
        %5009 = vmatprep.mubr.bf16.mxu0 %v3937
        %5010 = vmatmul.mubr.bf16.gmra.mrb[0].mxu0 %v3936
        %v5011 = vpop.f32.mrb[0].mxu0
        %v5012 = vadd.f32 %v4851, %v5011
        %v5013 = vpop.f32.mrb[0].mxu0
        %v5014 = vpop.f32.mrb[0].mxu0
        %v5015 = vadd.f32 %v4854, %v5014
        %v5016 = vpop.f32.mrb[0].mxu0
        %5017 = vmatprep.mubr.bf16.mxu0 %v3946
        %5018 = vmatmul.mubr.bf16.gmra.mrb[0].mxu0 %v3945
        %v5019 = vpop.f32.mrb[0].mxu0
        %v5020 = vadd.f32 %v4859, %v5019
        %v5021 = vpop.f32.mrb[0].mxu0
        %v5022 = vpop.f32.mrb[0].mxu0
        %v5023 = vadd.f32 %v4862, %v5022
        %v5024 = vpop.f32.mrb[0].mxu0
        %5025 = vmatprep.mubr.bf16.mxu0 %v3955
        %5026 = vmatmul.mubr.bf16.gmra.mrb[0].mxu0 %v3954
        %v5027 = vpop.f32.mrb[0].mxu0
        %v5028 = vadd.f32 %v4867, %v5027
        %v5029 = vpop.f32.mrb[0].mxu0
        %v5030 = vpop.f32.mrb[0].mxu0
        %v5031 = vadd.f32 %v4870, %v5030
        %v5032 = vpop.f32.mrb[0].mxu0
        %5033 = vmatprep.mubr.bf16.mxu0 %v3964
        %5034 = vmatmul.mubr.bf16.gmra.mrb[0].mxu0 %v3963
        %v5035 = vpop.f32.mrb[0].mxu0
        %v5036 = vadd.f32 %v4875, %v5035
        %v5037 = vpop.f32.mrb[0].mxu0
        %v5038 = vpop.f32.mrb[0].mxu0
        %v5039 = vadd.f32 %v4878, %v5038
        %v5040 = vpop.f32.mrb[0].mxu0
        %5041 = vdwg.mxu0
        %5042 = vmatprep.subr.bf16.mxu0 0
        %5043 = vmatpush1.bf16.msra.mxu0 %v4318
        %5044 = vmatprep.subr.bf16.mxu0 0
        %5045 = vmatpush1.bf16.msra.mxu0 %v4319
        %5046 = vmatprep.subr.bf16.mxu0 0
        %5047 = vmatpush1.bf16.msra.mxu0 %v4320
        %5048 = vmatprep.subr.bf16.mxu0 0
        %5049 = vmatpush1.bf16.msra.mxu0 %v4321
        %5050 = vmatprep.subr.bf16.mxu0 0
        %5051 = vmatpush1.bf16.msra.mxu0 %v4322
        %5052 = vmatprep.subr.bf16.mxu0 0
        %5053 = vmatpush1.bf16.msra.mxu0 %v4323
        %5054 = vmatprep.subr.bf16.mxu0 0
        %5055 = vmatpush1.bf16.msra.mxu0 %v4324
        %5056 = vmatprep.subr.bf16.mxu0 0
        %5057 = vmatpush1.bf16.msra.mxu0 %v4325
        %5058 = vmatprep.subr.bf16.mxu0 0
        %5059 = vmatpush1.bf16.msra.mxu0 0
        %5060 = vmatprep.subr.bf16.mxu0 0
        %5061 = vmatpush1.bf16.msra.mxu0 0
        %5062 = vmatprep.subr.bf16.mxu0 0
        %5063 = vmatpush1.bf16.msra.mxu0 0
        %5064 = vmatprep.subr.bf16.mxu0 0
        %5065 = vmatpush1.bf16.msra.mxu0 0
        %5066 = vmatprep.subr.bf16.mxu0 0
        %5067 = vmatpush1.bf16.msra.mxu0 0
        %5068 = vmatprep.subr.bf16.mxu0 0
        %5069 = vmatpush1.bf16.msra.mxu0 0
        %5070 = vmatprep.subr.bf16.mxu0 0
        %5071 = vmatpush1.bf16.msra.mxu0 0
        %5072 = vmatprep.subr.bf16.mxu0 0
        %5073 = vmatpush1.bf16.msra.mxu0 0
        %5074 = vmatprep.mubr.bf16.mxu0 0
        %5075 = vmatmul.mubr.bf16.gmra.mrb[0].mxu0 %v3830
        %v5076 = vpop.f32.mrb[0].mxu0
        %v5077 = vadd.f32 %v4916, %v5076
        %v5078 = vpop.f32.mrb[0].mxu0
        %v5079 = vpop.f32.mrb[0].mxu0
        %v5080 = vadd.f32 %v4919, %v5079
        %v5081 = vpop.f32.mrb[0].mxu0
        %5082 = vmatprep.mubr.bf16.mxu0 0
        %5083 = vmatmul.mubr.bf16.gmra.mrb[0].mxu0 %v3839
        %v5084 = vpop.f32.mrb[0].mxu0
        %v5085 = vadd.f32 %v4924, %v5084
        %v5086 = vpop.f32.mrb[0].mxu0
        %v5087 = vpop.f32.mrb[0].mxu0
        %v5088 = vadd.f32 %v4927, %v5087
        %v5089 = vpop.f32.mrb[0].mxu0
        %5090 = vmatprep.mubr.bf16.mxu0 0
        %5091 = vmatmul.mubr.bf16.gmra.mrb[0].mxu0 %v3848
        %v5092 = vpop.f32.mrb[0].mxu0
        %v5093 = vadd.f32 %v4932, %v5092
        %v5094 = vpop.f32.mrb[0].mxu0
        %v5095 = vpop.f32.mrb[0].mxu0
        %v5096 = vadd.f32 %v4935, %v5095
        %v5097 = vpop.f32.mrb[0].mxu0
        %5098 = vmatprep.mubr.bf16.mxu0 0
        %5099 = vmatmul.mubr.bf16.gmra.mrb[0].mxu0 %v3857
        %v5100 = vpop.f32.mrb[0].mxu0
        %v5101 = vadd.f32 %v4940, %v5100
        %v5102 = vpop.f32.mrb[0].mxu0
        %v5103 = vpop.f32.mrb[0].mxu0
        %v5104 = vadd.f32 %v4943, %v5103
        %v5105 = vpop.f32.mrb[0].mxu0
        %5106 = vmatprep.mubr.bf16.mxu0 0
        %5107 = vmatmul.mubr.bf16.gmra.mrb[0].mxu0 %v3866
        %v5108 = vpop.f32.mrb[0].mxu0
        %v5109 = vadd.f32 %v4948, %v5108
        %v5110 = vpop.f32.mrb[0].mxu0
        %v5111 = vpop.f32.mrb[0].mxu0
        %v5112 = vadd.f32 %v4951, %v5111
        %v5113 = vpop.f32.mrb[0].mxu0
        %5114 = vmatprep.mubr.bf16.mxu0 0
        %5115 = vmatmul.mubr.bf16.gmra.mrb[0].mxu0 %v3875
        %v5116 = vpop.f32.mrb[0].mxu0
        %v5117 = vadd.f32 %v4956, %v5116
        %v5118 = vpop.f32.mrb[0].mxu0
        %v5119 = vpop.f32.mrb[0].mxu0
        %v5120 = vadd.f32 %v4959, %v5119
        %v5121 = vpop.f32.mrb[0].mxu0
        %5122 = vmatprep.mubr.bf16.mxu0 0
        %5123 = vmatmul.mubr.bf16.gmra.mrb[0].mxu0 %v3884
        %v5124 = vpop.f32.mrb[0].mxu0
        %v5125 = vadd.f32 %v4964, %v5124
        %v5126 = vpop.f32.mrb[0].mxu0
        %v5127 = vpop.f32.mrb[0].mxu0
        %v5128 = vadd.f32 %v4967, %v5127
        %v5129 = vpop.f32.mrb[0].mxu0
        %5130 = vmatprep.mubr.bf16.mxu0 0
        %5131 = vmatmul.mubr.bf16.gmra.mrb[0].mxu0 %v3893
        %v5132 = vpop.f32.mrb[0].mxu0
        %v5133 = vadd.f32 %v4972, %v5132
        %v5134 = vpop.f32.mrb[0].mxu0
        %v5135 = vpop.f32.mrb[0].mxu0
        %v5136 = vadd.f32 %v4975, %v5135
        %v5137 = vpop.f32.mrb[0].mxu0
        %5138 = vmatprep.mubr.bf16.mxu0 0
        %5139 = vmatmul.mubr.bf16.gmra.mrb[0].mxu0 %v3902
        %v5140 = vpop.f32.mrb[0].mxu0
        %v5141 = vadd.f32 %v4980, %v5140
        %v5142 = vpop.f32.mrb[0].mxu0
        %v5143 = vpop.f32.mrb[0].mxu0
        %v5144 = vadd.f32 %v4983, %v5143
        %v5145 = vpop.f32.mrb[0].mxu0
        %5146 = vmatprep.mubr.bf16.mxu0 0
        %5147 = vmatmul.mubr.bf16.gmra.mrb[0].mxu0 %v3911
        %v5148 = vpop.f32.mrb[0].mxu0
        %v5149 = vadd.f32 %v4988, %v5148
        %v5150 = vpop.f32.mrb[0].mxu0
        %v5151 = vpop.f32.mrb[0].mxu0
        %v5152 = vadd.f32 %v4991, %v5151
        %v5153 = vpop.f32.mrb[0].mxu0
        %5154 = vmatprep.mubr.bf16.mxu0 0
        %5155 = vmatmul.mubr.bf16.gmra.mrb[0].mxu0 %v3920
        %v5156 = vpop.f32.mrb[0].mxu0
        %v5157 = vadd.f32 %v4996, %v5156
        %v5158 = vpop.f32.mrb[0].mxu0
        %v5159 = vpop.f32.mrb[0].mxu0
        %v5160 = vadd.f32 %v4999, %v5159
        %v5161 = vpop.f32.mrb[0].mxu0
        %5162 = vmatprep.mubr.bf16.mxu0 0
        %5163 = vmatmul.mubr.bf16.gmra.mrb[0].mxu0 %v3929
        %v5164 = vpop.f32.mrb[0].mxu0
        %v5165 = vadd.f32 %v5004, %v5164
        %v5166 = vpop.f32.mrb[0].mxu0
        %v5167 = vpop.f32.mrb[0].mxu0
        %v5168 = vadd.f32 %v5007, %v5167
        %v5169 = vpop.f32.mrb[0].mxu0
        %5170 = vmatprep.mubr.bf16.mxu0 0
        %5171 = vmatmul.mubr.bf16.gmra.mrb[0].mxu0 %v3938
        %v5172 = vpop.f32.mrb[0].mxu0
        %v5173 = vadd.f32 %v5012, %v5172
        %v5174 = vpop.f32.mrb[0].mxu0
        %v5175 = vpop.f32.mrb[0].mxu0
        %v5176 = vadd.f32 %v5015, %v5175
        %v5177 = vpop.f32.mrb[0].mxu0
        %5178 = vmatprep.mubr.bf16.mxu0 0
        %5179 = vmatmul.mubr.bf16.gmra.mrb[0].mxu0 %v3947
        %v5180 = vpop.f32.mrb[0].mxu0
        %v5181 = vadd.f32 %v5020, %v5180
        %v5182 = vpop.f32.mrb[0].mxu0
        %v5183 = vpop.f32.mrb[0].mxu0
        %v5184 = vadd.f32 %v5023, %v5183
        %v5185 = vpop.f32.mrb[0].mxu0
        %5186 = vmatprep.mubr.bf16.mxu0 0
        %5187 = vmatmul.mubr.bf16.gmra.mrb[0].mxu0 %v3956
        %v5188 = vpop.f32.mrb[0].mxu0
        %v5189 = vadd.f32 %v5028, %v5188
        %v5190 = vpop.f32.mrb[0].mxu0
        %v5191 = vpop.f32.mrb[0].mxu0
        %v5192 = vadd.f32 %v5031, %v5191
        %v5193 = vpop.f32.mrb[0].mxu0
        %5194 = vmatprep.mubr.bf16.mxu0 0
        %5195 = vmatmul.mubr.bf16.gmra.mrb[0].mxu0 %v3965
        %v5196 = vpop.f32.mrb[0].mxu0
        %v5197 = vadd.f32 %v5036, %v5196
        %v5198 = vpop.f32.mrb[0].mxu0
        %v5199 = vpop.f32.mrb[0].mxu0
        %v5200 = vadd.f32 %v5039, %v5199
        %v5201 = vpop.f32.mrb[0].mxu0
        %5202 = vdwg.mxu0
        %v5204 = vlaneseq
        %v5205 = vshrl.u32 %v5204, 7
        %v5206 = vsub.s32 0, %v5205
        %v5207 = vrot.slane %v1415, %v5206
        %v5209 = vmul.f32 %v5077, %v5207
        %v5210 = vmul.f32 %v5080, %v5207
        %v5211 = vmul.f32 %v5085, %v5207
        %v5212 = vmul.f32 %v5088, %v5207
        %v5213 = vmul.f32 %v5093, %v5207
        %v5214 = vmul.f32 %v5096, %v5207
        %v5215 = vmul.f32 %v5101, %v5207
        %v5216 = vmul.f32 %v5104, %v5207
        %v5217 = vmul.f32 %v5109, %v5207
        %v5218 = vmul.f32 %v5112, %v5207
        %v5219 = vmul.f32 %v5117, %v5207
        %v5220 = vmul.f32 %v5120, %v5207
        %v5221 = vmul.f32 %v5125, %v5207
        %v5222 = vmul.f32 %v5128, %v5207
        %v5223 = vmul.f32 %v5133, %v5207
        %v5224 = vmul.f32 %v5136, %v5207
        %v5225 = vmul.f32 %v5141, %v5207
        %v5226 = vmul.f32 %v5144, %v5207
        %v5227 = vmul.f32 %v5149, %v5207
        %v5228 = vmul.f32 %v5152, %v5207
        %v5229 = vmul.f32 %v5157, %v5207
        %v5230 = vmul.f32 %v5160, %v5207
        %v5231 = vmul.f32 %v5165, %v5207
        %v5232 = vmul.f32 %v5168, %v5207
        %v5233 = vmul.f32 %v5173, %v5207
        %v5234 = vmul.f32 %v5176, %v5207
        %v5235 = vmul.f32 %v5181, %v5207
        %v5236 = vmul.f32 %v5184, %v5207
        %v5237 = vmul.f32 %v5189, %v5207
        %v5238 = vmul.f32 %v5192, %v5207
        %v5239 = vmul.f32 %v5197, %v5207
        %v5240 = vmul.f32 %v5200, %v5207
        %v5242 = vlaneseq
        %v5243 = vshrl.u32 %v5242, 7
        %v5244 = vsub.s32 0, %v5243
        %v5245 = vrot.slane %v1416, %v5244
        %v5247 = vadd.f32 %v5209, %v5245
        %v5248 = vadd.f32 %v5210, %v5245
        %v5249 = vadd.f32 %v5211, %v5245
        %v5250 = vadd.f32 %v5212, %v5245
        %v5251 = vadd.f32 %v5213, %v5245
        %v5252 = vadd.f32 %v5214, %v5245
        %v5253 = vadd.f32 %v5215, %v5245
        %v5254 = vadd.f32 %v5216, %v5245
        %v5255 = vadd.f32 %v5217, %v5245
        %v5256 = vadd.f32 %v5218, %v5245
        %v5257 = vadd.f32 %v5219, %v5245
        %v5258 = vadd.f32 %v5220, %v5245
        %v5259 = vadd.f32 %v5221, %v5245
        %v5260 = vadd.f32 %v5222, %v5245
        %v5261 = vadd.f32 %v5223, %v5245
        %v5262 = vadd.f32 %v5224, %v5245
        %v5263 = vadd.f32 %v5225, %v5245
        %v5264 = vadd.f32 %v5226, %v5245
        %v5265 = vadd.f32 %v5227, %v5245
        %v5266 = vadd.f32 %v5228, %v5245
        %v5267 = vadd.f32 %v5229, %v5245
        %v5268 = vadd.f32 %v5230, %v5245
        %v5269 = vadd.f32 %v5231, %v5245
        %v5270 = vadd.f32 %v5232, %v5245
        %v5271 = vadd.f32 %v5233, %v5245
        %v5272 = vadd.f32 %v5234, %v5245
        %v5273 = vadd.f32 %v5235, %v5245
        %v5274 = vadd.f32 %v5236, %v5245
        %v5275 = vadd.f32 %v5237, %v5245
        %v5276 = vadd.f32 %v5238, %v5245
        %v5277 = vadd.f32 %v5239, %v5245
        %v5278 = vadd.f32 %v5240, %v5245
        %vm5279 = vcmp.gt.f32.partialorder %v5247, 0.0
        %vm5280 = vcmp.gt.f32.partialorder %v5248, 0.0
        %vm5281 = vcmp.gt.f32.partialorder %v5249, 0.0
        %vm5282 = vcmp.gt.f32.partialorder %v5250, 0.0
        %vm5283 = vcmp.gt.f32.partialorder %v5251, 0.0
        %vm5284 = vcmp.gt.f32.partialorder %v5252, 0.0
        %vm5285 = vcmp.gt.f32.partialorder %v5253, 0.0
        %vm5286 = vcmp.gt.f32.partialorder %v5254, 0.0
        %vm5287 = vcmp.gt.f32.partialorder %v5255, 0.0
        %vm5288 = vcmp.gt.f32.partialorder %v5256, 0.0
        %vm5289 = vcmp.gt.f32.partialorder %v5257, 0.0
        %vm5290 = vcmp.gt.f32.partialorder %v5258, 0.0
        %vm5291 = vcmp.gt.f32.partialorder %v5259, 0.0
        %vm5292 = vcmp.gt.f32.partialorder %v5260, 0.0
        %vm5293 = vcmp.gt.f32.partialorder %v5261, 0.0
        %vm5294 = vcmp.gt.f32.partialorder %v5262, 0.0
        %vm5295 = vcmp.gt.f32.partialorder %v5263, 0.0
        %vm5296 = vcmp.gt.f32.partialorder %v5264, 0.0
        %vm5297 = vcmp.gt.f32.partialorder %v5265, 0.0
        %vm5298 = vcmp.gt.f32.partialorder %v5266, 0.0
        %vm5299 = vcmp.gt.f32.partialorder %v5267, 0.0
        %vm5300 = vcmp.gt.f32.partialorder %v5268, 0.0
        %vm5301 = vcmp.gt.f32.partialorder %v5269, 0.0
        %vm5302 = vcmp.gt.f32.partialorder %v5270, 0.0
        %vm5303 = vcmp.gt.f32.partialorder %v5271, 0.0
        %vm5304 = vcmp.gt.f32.partialorder %v5272, 0.0
        %vm5305 = vcmp.gt.f32.partialorder %v5273, 0.0
        %vm5306 = vcmp.gt.f32.partialorder %v5274, 0.0
        %vm5307 = vcmp.gt.f32.partialorder %v5275, 0.0
        %vm5308 = vcmp.gt.f32.partialorder %v5276, 0.0
        %vm5309 = vcmp.gt.f32.partialorder %v5277, 0.0
        %vm5310 = vcmp.gt.f32.partialorder %v5278, 0.0
        %v5311 = vmul.f32 %v5247, 0.01
        %v5312 = vmul.f32 %v5248, 0.01
        %v5313 = vmul.f32 %v5249, 0.01
        %v5314 = vmul.f32 %v5250, 0.01
        %v5315 = vmul.f32 %v5251, 0.01
        %v5316 = vmul.f32 %v5252, 0.01
        %v5317 = vmul.f32 %v5253, 0.01
        %v5318 = vmul.f32 %v5254, 0.01
        %v5319 = vmul.f32 %v5255, 0.01
        %v5320 = vmul.f32 %v5256, 0.01
        %v5321 = vmul.f32 %v5257, 0.01
        %v5322 = vmul.f32 %v5258, 0.01
        %v5323 = vmul.f32 %v5259, 0.01
        %v5324 = vmul.f32 %v5260, 0.01
        %v5325 = vmul.f32 %v5261, 0.01
        %v5326 = vmul.f32 %v5262, 0.01
        %v5327 = vmul.f32 %v5263, 0.01
        %v5328 = vmul.f32 %v5264, 0.01
        %v5329 = vmul.f32 %v5265, 0.01
        %v5330 = vmul.f32 %v5266, 0.01
        %v5331 = vmul.f32 %v5267, 0.01
        %v5332 = vmul.f32 %v5268, 0.01
        %v5333 = vmul.f32 %v5269, 0.01
        %v5334 = vmul.f32 %v5270, 0.01
        %v5335 = vmul.f32 %v5271, 0.01
        %v5336 = vmul.f32 %v5272, 0.01
        %v5337 = vmul.f32 %v5273, 0.01
        %v5338 = vmul.f32 %v5274, 0.01
        %v5339 = vmul.f32 %v5275, 0.01
        %v5340 = vmul.f32 %v5276, 0.01
        %v5341 = vmul.f32 %v5277, 0.01
        %v5342 = vmul.f32 %v5278, 0.01
        %v5343 = vsel %vm5279, %v5247, %v5311
        %v5344 = vsel %vm5280, %v5248, %v5312
        %v5345 = vsel %vm5281, %v5249, %v5313
        %v5346 = vsel %vm5282, %v5250, %v5314
        %v5347 = vsel %vm5283, %v5251, %v5315
        %v5348 = vsel %vm5284, %v5252, %v5316
        %v5349 = vsel %vm5285, %v5253, %v5317
        %v5350 = vsel %vm5286, %v5254, %v5318
        %v5351 = vsel %vm5287, %v5255, %v5319
        %v5352 = vsel %vm5288, %v5256, %v5320
        %v5353 = vsel %vm5289, %v5257, %v5321
        %v5354 = vsel %vm5290, %v5258, %v5322
        %v5355 = vsel %vm5291, %v5259, %v5323
        %v5356 = vsel %vm5292, %v5260, %v5324
        %v5357 = vsel %vm5293, %v5261, %v5325
        %v5358 = vsel %vm5294, %v5262, %v5326
        %v5359 = vsel %vm5295, %v5263, %v5327
        %v5360 = vsel %vm5296, %v5264, %v5328
        %v5361 = vsel %vm5297, %v5265, %v5329
        %v5362 = vsel %vm5298, %v5266, %v5330
        %v5363 = vsel %vm5299, %v5267, %v5331
        %v5364 = vsel %vm5300, %v5268, %v5332
        %v5365 = vsel %vm5301, %v5269, %v5333
        %v5366 = vsel %vm5302, %v5270, %v5334
        %v5367 = vsel %vm5303, %v5271, %v5335
        %v5368 = vsel %vm5304, %v5272, %v5336
        %v5369 = vsel %vm5305, %v5273, %v5337
        %v5370 = vsel %vm5306, %v5274, %v5338
        %v5371 = vsel %vm5307, %v5275, %v5339
        %v5372 = vsel %vm5308, %v5276, %v5340
        %v5373 = vsel %vm5309, %v5277, %v5341
        %v5374 = vsel %vm5310, %v5278, %v5342
        %v5375 = vpack.c.bf16 %v5344, %v5343
        %v5376 = vpack.c.bf16 %v5346, %v5345
        %v5377 = vpack.c.bf16 %v5348, %v5347
        %v5378 = vpack.c.bf16 %v5350, %v5349
        %v5379 = vpack.c.bf16 %v5352, %v5351
        %v5380 = vpack.c.bf16 %v5354, %v5353
        %v5381 = vpack.c.bf16 %v5356, %v5355
        %v5382 = vpack.c.bf16 %v5358, %v5357
        %v5383 = vpack.c.bf16 %v5360, %v5359
        %v5384 = vpack.c.bf16 %v5362, %v5361
        %v5385 = vpack.c.bf16 %v5364, %v5363
        %v5386 = vpack.c.bf16 %v5366, %v5365
        %v5387 = vpack.c.bf16 %v5368, %v5367
        %v5388 = vpack.c.bf16 %v5370, %v5369
        %v5389 = vpack.c.bf16 %v5372, %v5371
        %v5390 = vpack.c.bf16 %v5374, %v5373
        %v5407 = vunpack.c.l.b16 %v5375
        %v5408 = vunpack.c.h.b16 %v5375
        %v5409 = vunpack.c.l.b16 %v5376
        %v5410 = vunpack.c.h.b16 %v5376
        %v5411 = vunpack.c.l.b16 %v5377
        %v5412 = vunpack.c.h.b16 %v5377
        %v5413 = vunpack.c.l.b16 %v5378
        %v5414 = vunpack.c.h.b16 %v5378
        %v5415 = vunpack.c.l.b16 %v5379
        %v5416 = vunpack.c.h.b16 %v5379
        %v5417 = vunpack.c.l.b16 %v5380
        %v5418 = vunpack.c.h.b16 %v5380
        %v5419 = vunpack.c.l.b16 %v5381
        %v5420 = vunpack.c.h.b16 %v5381
        %v5421 = vunpack.c.l.b16 %v5382
        %v5422 = vunpack.c.h.b16 %v5382
        %v5423 = vunpack.c.l.b16 %v5383
        %v5424 = vunpack.c.h.b16 %v5383
        %v5425 = vunpack.c.l.b16 %v5384
        %v5426 = vunpack.c.h.b16 %v5384
        %v5427 = vunpack.c.l.b16 %v5385
        %v5428 = vunpack.c.h.b16 %v5385
        %v5429 = vunpack.c.l.b16 %v5386
        %v5430 = vunpack.c.h.b16 %v5386
        %v5431 = vunpack.c.l.b16 %v5387
        %v5432 = vunpack.c.h.b16 %v5387
        %v5433 = vunpack.c.l.b16 %v5388
        %v5434 = vunpack.c.h.b16 %v5388
        %v5435 = vunpack.c.l.b16 %v5389
        %v5436 = vunpack.c.h.b16 %v5389
        %v5437 = vunpack.c.l.b16 %v5390
        %v5438 = vunpack.c.h.b16 %v5390
        %v5439 = vpack.c.b16 %v5407, %v5407
        %v5440 = vpack.c.b16 %v5408, %v5408
        %v5441 = vpack.c.b16 %v5409, %v5409
        %v5442 = vpack.c.b16 %v5410, %v5410
        %v5443 = vpack.c.b16 %v5411, %v5411
        %v5444 = vpack.c.b16 %v5412, %v5412
        %v5445 = vpack.c.b16 %v5413, %v5413
        %v5446 = vpack.c.b16 %v5414, %v5414
        %v5447 = vpack.c.b16 %v5415, %v5415
        %v5448 = vpack.c.b16 %v5416, %v5416
        %v5449 = vpack.c.b16 %v5417, %v5417
        %v5450 = vpack.c.b16 %v5418, %v5418
        %v5451 = vpack.c.b16 %v5419, %v5419
        %v5452 = vpack.c.b16 %v5420, %v5420
        %v5453 = vpack.c.b16 %v5421, %v5421
        %v5454 = vpack.c.b16 %v5422, %v5422
        %v5455 = vpack.c.b16 %v5423, %v5423
        %v5456 = vpack.c.b16 %v5424, %v5424
        %v5457 = vpack.c.b16 %v5425, %v5425
        %v5458 = vpack.c.b16 %v5426, %v5426
        %v5459 = vpack.c.b16 %v5427, %v5427
        %v5460 = vpack.c.b16 %v5428, %v5428
        %v5461 = vpack.c.b16 %v5429, %v5429
        %v5462 = vpack.c.b16 %v5430, %v5430
        %v5463 = vpack.c.b16 %v5431, %v5431
        %v5464 = vpack.c.b16 %v5432, %v5432
        %v5465 = vpack.c.b16 %v5433, %v5433
        %v5466 = vpack.c.b16 %v5434, %v5434
        %v5467 = vpack.c.b16 %v5435, %v5435
        %v5468 = vpack.c.b16 %v5436, %v5436
        %v5469 = vpack.c.b16 %v5437, %v5437
        %v5470 = vpack.c.b16 %v5438, %v5438
        %v5472 = vshrl.u32 %v5439, 16
        %v5474 = vrot.slane %v5472, 7
        %v5475 = vshll.u32 %v5439, 16
        %v5477 = vor.u32 %v5474, %v5475
        %v5478 = vrot.slane %v5474, 4
        %v5480 = vshrl.u32 %v5440, 16
        %v5482 = vrot.slane %v5480, 7
        %v5483 = vshll.u32 %v5440, 16
        %v5485 = vor.u32 %v5482, %v5483
        %v5486 = vsel %vm691, %v5478, %v5485
        %v5487 = vrot.slane %v5482, 4
        %v5489 = vshrl.u32 %v5441, 16
        %v5491 = vrot.slane %v5489, 7
        %v5492 = vshll.u32 %v5441, 16
        %v5494 = vor.u32 %v5491, %v5492
        %v5495 = vrot.slane %v5491, 4
        %v5497 = vshrl.u32 %v5442, 16
        %v5499 = vrot.slane %v5497, 7
        %v5500 = vshll.u32 %v5442, 16
        %v5502 = vor.u32 %v5499, %v5500
        %v5503 = vsel %vm691, %v5495, %v5502
        %v5504 = vrot.slane %v5499, 4
        %v5506 = vshrl.u32 %v5443, 16
        %v5508 = vrot.slane %v5506, 7
        %v5509 = vshll.u32 %v5443, 16
        %v5511 = vor.u32 %v5508, %v5509
        %v5512 = vrot.slane %v5508, 4
        %v5514 = vshrl.u32 %v5444, 16
        %v5516 = vrot.slane %v5514, 7
        %v5517 = vshll.u32 %v5444, 16
        %v5519 = vor.u32 %v5516, %v5517
        %v5520 = vsel %vm691, %v5512, %v5519
        %v5521 = vrot.slane %v5516, 4
        %v5523 = vshrl.u32 %v5445, 16
        %v5525 = vrot.slane %v5523, 7
        %v5526 = vshll.u32 %v5445, 16
        %v5528 = vor.u32 %v5525, %v5526
        %v5529 = vrot.slane %v5525, 4
        %v5531 = vshrl.u32 %v5446, 16
        %v5533 = vrot.slane %v5531, 7
        %v5534 = vshll.u32 %v5446, 16
        %v5536 = vor.u32 %v5533, %v5534
        %v5537 = vsel %vm691, %v5529, %v5536
        %v5538 = vrot.slane %v5533, 4
        %v5540 = vshrl.u32 %v5447, 16
        %v5542 = vrot.slane %v5540, 7
        %v5543 = vshll.u32 %v5447, 16
        %v5545 = vor.u32 %v5542, %v5543
        %v5546 = vrot.slane %v5542, 4
        %v5548 = vshrl.u32 %v5448, 16
        %v5550 = vrot.slane %v5548, 7
        %v5551 = vshll.u32 %v5448, 16
        %v5553 = vor.u32 %v5550, %v5551
        %v5554 = vsel %vm691, %v5546, %v5553
        %v5555 = vrot.slane %v5550, 4
        %v5557 = vshrl.u32 %v5449, 16
        %v5559 = vrot.slane %v5557, 7
        %v5560 = vshll.u32 %v5449, 16
        %v5562 = vor.u32 %v5559, %v5560
        %v5563 = vrot.slane %v5559, 4
        %v5565 = vshrl.u32 %v5450, 16
        %v5567 = vrot.slane %v5565, 7
        %v5568 = vshll.u32 %v5450, 16
        %v5570 = vor.u32 %v5567, %v5568
        %v5571 = vsel %vm691, %v5563, %v5570
        %v5572 = vrot.slane %v5567, 4
        %v5574 = vshrl.u32 %v5451, 16
        %v5576 = vrot.slane %v5574, 7
        %v5577 = vshll.u32 %v5451, 16
        %v5579 = vor.u32 %v5576, %v5577
        %v5580 = vrot.slane %v5576, 4
        %v5582 = vshrl.u32 %v5452, 16
        %v5584 = vrot.slane %v5582, 7
        %v5585 = vshll.u32 %v5452, 16
        %v5587 = vor.u32 %v5584, %v5585
        %v5588 = vsel %vm691, %v5580, %v5587
        %v5589 = vrot.slane %v5584, 4
        %v5591 = vshrl.u32 %v5453, 16
        %v5593 = vrot.slane %v5591, 7
        %v5594 = vshll.u32 %v5453, 16
        %v5596 = vor.u32 %v5593, %v5594
        %v5597 = vrot.slane %v5593, 4
        %v5599 = vshrl.u32 %v5454, 16
        %v5601 = vrot.slane %v5599, 7
        %v5602 = vshll.u32 %v5454, 16
        %v5604 = vor.u32 %v5601, %v5602
        %v5605 = vsel %vm691, %v5597, %v5604
        %v5606 = vrot.slane %v5601, 4
        %v5608 = vshrl.u32 %v5455, 16
        %v5610 = vrot.slane %v5608, 7
        %v5611 = vshll.u32 %v5455, 16
        %v5613 = vor.u32 %v5610, %v5611
        %v5614 = vrot.slane %v5610, 4
        %v5616 = vshrl.u32 %v5456, 16
        %v5618 = vrot.slane %v5616, 7
        %v5619 = vshll.u32 %v5456, 16
        %v5621 = vor.u32 %v5618, %v5619
        %v5622 = vsel %vm691, %v5614, %v5621
        %v5623 = vrot.slane %v5618, 4
        %v5625 = vshrl.u32 %v5457, 16
        %v5627 = vrot.slane %v5625, 7
        %v5628 = vshll.u32 %v5457, 16
        %v5630 = vor.u32 %v5627, %v5628
        %v5631 = vrot.slane %v5627, 4
        %v5633 = vshrl.u32 %v5458, 16
        %v5635 = vrot.slane %v5633, 7
        %v5636 = vshll.u32 %v5458, 16
        %v5638 = vor.u32 %v5635, %v5636
        %v5639 = vsel %vm691, %v5631, %v5638
        %v5640 = vrot.slane %v5635, 4
        %v5642 = vshrl.u32 %v5459, 16
        %v5644 = vrot.slane %v5642, 7
        %v5645 = vshll.u32 %v5459, 16
        %v5647 = vor.u32 %v5644, %v5645
        %v5648 = vrot.slane %v5644, 4
        %v5650 = vshrl.u32 %v5460, 16
        %v5652 = vrot.slane %v5650, 7
        %v5653 = vshll.u32 %v5460, 16
        %v5655 = vor.u32 %v5652, %v5653
        %v5656 = vsel %vm691, %v5648, %v5655
        %v5657 = vrot.slane %v5652, 4
        %v5659 = vshrl.u32 %v5461, 16
        %v5661 = vrot.slane %v5659, 7
        %v5662 = vshll.u32 %v5461, 16
        %v5664 = vor.u32 %v5661, %v5662
        %v5665 = vrot.slane %v5661, 4
        %v5667 = vshrl.u32 %v5462, 16
        %v5669 = vrot.slane %v5667, 7
        %v5670 = vshll.u32 %v5462, 16
        %v5672 = vor.u32 %v5669, %v5670
        %v5673 = vsel %vm691, %v5665, %v5672
        %v5674 = vrot.slane %v5669, 4
        %v5676 = vshrl.u32 %v5463, 16
        %v5678 = vrot.slane %v5676, 7
        %v5679 = vshll.u32 %v5463, 16
        %v5681 = vor.u32 %v5678, %v5679
        %v5682 = vrot.slane %v5678, 4
        %v5684 = vshrl.u32 %v5464, 16
        %v5686 = vrot.slane %v5684, 7
        %v5687 = vshll.u32 %v5464, 16
        %v5689 = vor.u32 %v5686, %v5687
        %v5690 = vsel %vm691, %v5682, %v5689
        %v5691 = vrot.slane %v5686, 4
        %v5693 = vshrl.u32 %v5465, 16
        %v5695 = vrot.slane %v5693, 7
        %v5696 = vshll.u32 %v5465, 16
        %v5698 = vor.u32 %v5695, %v5696
        %v5699 = vrot.slane %v5695, 4
        %v5701 = vshrl.u32 %v5466, 16
        %v5703 = vrot.slane %v5701, 7
        %v5704 = vshll.u32 %v5466, 16
        %v5706 = vor.u32 %v5703, %v5704
        %v5707 = vsel %vm691, %v5699, %v5706
        %v5708 = vrot.slane %v5703, 4
        %v5710 = vshrl.u32 %v5467, 16
        %v5712 = vrot.slane %v5710, 7
        %v5713 = vshll.u32 %v5467, 16
        %v5715 = vor.u32 %v5712, %v5713
        %v5716 = vrot.slane %v5712, 4
        %v5718 = vshrl.u32 %v5468, 16
        %v5720 = vrot.slane %v5718, 7
        %v5721 = vshll.u32 %v5468, 16
        %v5723 = vor.u32 %v5720, %v5721
        %v5724 = vsel %vm691, %v5716, %v5723
        %v5725 = vrot.slane %v5720, 4
        %v5727 = vshrl.u32 %v5469, 16
        %v5729 = vrot.slane %v5727, 7
        %v5730 = vshll.u32 %v5469, 16
        %v5732 = vor.u32 %v5729, %v5730
        %v5733 = vrot.slane %v5729, 4
        %v5735 = vshrl.u32 %v5470, 16
        %v5737 = vrot.slane %v5735, 7
        %v5738 = vshll.u32 %v5470, 16
        %v5740 = vor.u32 %v5737, %v5738
        %v5741 = vsel %vm691, %v5733, %v5740
        %v5742 = vrot.slane %v5737, 4
        %s5791 = scalar_lea.vmem [#allocation3], 12
        %v5792 = vld [vmem:[%s5791] sm:$0xf]
        %v5793 = vsel %vm1014, %v5477, %v5792
        %5794 = vst [vmem:[%s5791] sm:$0xf] %v5793
        %5795 = vst [vmem:[%s5791 + $0x4] sm:$0xf] %v5486
        %v5796 = vld [vmem:[%s5791 + $0x8] sm:$0x1]
        %v5797 = vsel %vm336, %v5487, %v5796
        %5798 = vst [vmem:[%s5791 + $0x8] sm:$0x1] %v5797
        %v5799 = vld [vmem:[%s5791 + $0xc] sm:$0xf]
        %v5800 = vsel %vm1014, %v5494, %v5799
        %5801 = vst [vmem:[%s5791 + $0xc] sm:$0xf] %v5800
        %5802 = vst [vmem:[%s5791 + $0x10] sm:$0xf] %v5503
        %v5803 = vld [vmem:[%s5791 + $0x14] sm:$0x1]
        %v5804 = vsel %vm336, %v5504, %v5803
        %5805 = vst [vmem:[%s5791 + $0x14] sm:$0x1] %v5804
        %v5806 = vld [vmem:[%s5791 + $0x18] sm:$0xf]
        %v5807 = vsel %vm1014, %v5511, %v5806
        %5808 = vst [vmem:[%s5791 + $0x18] sm:$0xf] %v5807
        %5809 = vst [vmem:[%s5791 + $0x1c] sm:$0xf] %v5520
        %v5810 = vld [vmem:[%s5791 + $0x20] sm:$0x1]
        %v5811 = vsel %vm336, %v5521, %v5810
        %5812 = vst [vmem:[%s5791 + $0x20] sm:$0x1] %v5811
        %v5813 = vld [vmem:[%s5791 + $0x24] sm:$0xf]
        %v5814 = vsel %vm1014, %v5528, %v5813
        %5815 = vst [vmem:[%s5791 + $0x24] sm:$0xf] %v5814
        %5816 = vst [vmem:[%s5791 + $0x28] sm:$0xf] %v5537
        %v5817 = vld [vmem:[%s5791 + $0x2c] sm:$0x1]
        %v5818 = vsel %vm336, %v5538, %v5817
        %5819 = vst [vmem:[%s5791 + $0x2c] sm:$0x1] %v5818
        %v5820 = vld [vmem:[%s5791 + $0x30] sm:$0xf]
        %v5821 = vsel %vm1014, %v5545, %v5820
        %5822 = vst [vmem:[%s5791 + $0x30] sm:$0xf] %v5821
        %5823 = vst [vmem:[%s5791 + $0x34] sm:$0xf] %v5554
        %v5824 = vld [vmem:[%s5791 + $0x38] sm:$0x1]
        %v5825 = vsel %vm336, %v5555, %v5824
        %5826 = vst [vmem:[%s5791 + $0x38] sm:$0x1] %v5825
        %v5827 = vld [vmem:[%s5791 + $0x3c] sm:$0xf]
        %v5828 = vsel %vm1014, %v5562, %v5827
        %5829 = vst [vmem:[%s5791 + $0x3c] sm:$0xf] %v5828
        %5830 = vst [vmem:[%s5791 + $0x40] sm:$0xf] %v5571
        %v5831 = vld [vmem:[%s5791 + $0x44] sm:$0x1]
        %v5832 = vsel %vm336, %v5572, %v5831
        %5833 = vst [vmem:[%s5791 + $0x44] sm:$0x1] %v5832
        %v5834 = vld [vmem:[%s5791 + $0x48] sm:$0xf]
        %v5835 = vsel %vm1014, %v5579, %v5834
        %5836 = vst [vmem:[%s5791 + $0x48] sm:$0xf] %v5835
        %5837 = vst [vmem:[%s5791 + $0x4c] sm:$0xf] %v5588
        %v5838 = vld [vmem:[%s5791 + $0x50] sm:$0x1]
        %v5839 = vsel %vm336, %v5589, %v5838
        %5840 = vst [vmem:[%s5791 + $0x50] sm:$0x1] %v5839
        %v5841 = vld [vmem:[%s5791 + $0x54] sm:$0xf]
        %v5842 = vsel %vm1014, %v5596, %v5841
        %5843 = vst [vmem:[%s5791 + $0x54] sm:$0xf] %v5842
        %5844 = vst [vmem:[%s5791 + $0x58] sm:$0xf] %v5605
        %v5845 = vld [vmem:[%s5791 + $0x5c] sm:$0x1]
        %v5846 = vsel %vm336, %v5606, %v5845
        %5847 = vst [vmem:[%s5791 + $0x5c] sm:$0x1] %v5846
        %v5848 = vld [vmem:[%s5791 + $0x60] sm:$0xf]
        %v5849 = vsel %vm1014, %v5613, %v5848
        %5850 = vst [vmem:[%s5791 + $0x60] sm:$0xf] %v5849
        %5851 = vst [vmem:[%s5791 + $0x64] sm:$0xf] %v5622
        %v5852 = vld [vmem:[%s5791 + $0x68] sm:$0x1]
        %v5853 = vsel %vm336, %v5623, %v5852
        %5854 = vst [vmem:[%s5791 + $0x68] sm:$0x1] %v5853
        %v5855 = vld [vmem:[%s5791 + $0x6c] sm:$0xf]
        %v5856 = vsel %vm1014, %v5630, %v5855
        %5857 = vst [vmem:[%s5791 + $0x6c] sm:$0xf] %v5856
        %5858 = vst [vmem:[%s5791 + $0x70] sm:$0xf] %v5639
        %v5859 = vld [vmem:[%s5791 + $0x74] sm:$0x1]
        %v5860 = vsel %vm336, %v5640, %v5859
        %5861 = vst [vmem:[%s5791 + $0x74] sm:$0x1] %v5860
        %v5862 = vld [vmem:[%s5791 + $0x78] sm:$0xf]
        %v5863 = vsel %vm1014, %v5647, %v5862
        %5864 = vst [vmem:[%s5791 + $0x78] sm:$0xf] %v5863
        %5865 = vst [vmem:[%s5791 + $0x7c] sm:$0xf] %v5656
        %v5866 = vld [vmem:[%s5791 + $0x80] sm:$0x1]
        %v5867 = vsel %vm336, %v5657, %v5866
        %5868 = vst [vmem:[%s5791 + $0x80] sm:$0x1] %v5867
        %v5869 = vld [vmem:[%s5791 + $0x84] sm:$0xf]
        %v5870 = vsel %vm1014, %v5664, %v5869
        %5871 = vst [vmem:[%s5791 + $0x84] sm:$0xf] %v5870
        %5872 = vst [vmem:[%s5791 + $0x88] sm:$0xf] %v5673
        %v5873 = vld [vmem:[%s5791 + $0x8c] sm:$0x1]
        %v5874 = vsel %vm336, %v5674, %v5873
        %5875 = vst [vmem:[%s5791 + $0x8c] sm:$0x1] %v5874
        %v5876 = vld [vmem:[%s5791 + $0x90] sm:$0xf]
        %v5877 = vsel %vm1014, %v5681, %v5876
        %5878 = vst [vmem:[%s5791 + $0x90] sm:$0xf] %v5877
        %5879 = vst [vmem:[%s5791 + $0x94] sm:$0xf] %v5690
        %v5880 = vld [vmem:[%s5791 + $0x98] sm:$0x1]
        %v5881 = vsel %vm336, %v5691, %v5880
        %5882 = vst [vmem:[%s5791 + $0x98] sm:$0x1] %v5881
        %v5883 = vld [vmem:[%s5791 + $0x9c] sm:$0xf]
        %v5884 = vsel %vm1014, %v5698, %v5883
        %5885 = vst [vmem:[%s5791 + $0x9c] sm:$0xf] %v5884
        %5886 = vst [vmem:[%s5791 + $0xa0] sm:$0xf] %v5707
        %v5887 = vld [vmem:[%s5791 + $0xa4] sm:$0x1]
        %v5888 = vsel %vm336, %v5708, %v5887
        %5889 = vst [vmem:[%s5791 + $0xa4] sm:$0x1] %v5888
        %v5890 = vld [vmem:[%s5791 + $0xa8] sm:$0xf]
        %v5891 = vsel %vm1014, %v5715, %v5890
        %5892 = vst [vmem:[%s5791 + $0xa8] sm:$0xf] %v5891
        %5893 = vst [vmem:[%s5791 + $0xac] sm:$0xf] %v5724
        %v5894 = vld [vmem:[%s5791 + $0xb0] sm:$0x1]
        %v5895 = vsel %vm336, %v5725, %v5894
        %5896 = vst [vmem:[%s5791 + $0xb0] sm:$0x1] %v5895
        %v5897 = vld [vmem:[%s5791 + $0xb4] sm:$0xf]
        %v5898 = vsel %vm1014, %v5732, %v5897
        %5899 = vst [vmem:[%s5791 + $0xb4] sm:$0xf] %v5898
        %5900 = vst [vmem:[%s5791 + $0xb8] sm:$0xf] %v5741
        %v5901 = vld [vmem:[%s5791 + $0xbc] sm:$0x1]
        %v5902 = vsel %vm336, %v5742, %v5901
        %5903 = vst [vmem:[%s5791 + $0xbc] sm:$0x1] %v5902
        %v5904 = vld [vmem:[#allocation3] sm:$0xf]
        %v5905 = vld [vmem:[#allocation3 + $0x4] sm:$0xf]
        %v5906 = vld [vmem:[#allocation3 + $0xc] sm:$0xf]
        %v5907 = vld [vmem:[#allocation3 + $0x10] sm:$0xf]
        %v5908 = vld [vmem:[#allocation3 + $0x18] sm:$0xf]
        %v5909 = vld [vmem:[#allocation3 + $0x1c] sm:$0xf]
        %v5910 = vld [vmem:[#allocation3 + $0x24] sm:$0xf]
        %v5911 = vld [vmem:[#allocation3 + $0x28] sm:$0xf]
        %v5912 = vld [vmem:[#allocation3 + $0x30] sm:$0xf]
        %v5913 = vld [vmem:[#allocation3 + $0x34] sm:$0xf]
        %v5914 = vld [vmem:[#allocation3 + $0x3c] sm:$0xf]
        %v5915 = vld [vmem:[#allocation3 + $0x40] sm:$0xf]
        %v5916 = vld [vmem:[#allocation3 + $0x48] sm:$0xf]
        %v5917 = vld [vmem:[#allocation3 + $0x4c] sm:$0xf]
        %v5918 = vld [vmem:[#allocation3 + $0x54] sm:$0xf]
        %v5919 = vld [vmem:[#allocation3 + $0x58] sm:$0xf]
        %v5920 = vld [vmem:[#allocation3 + $0x60] sm:$0xf]
        %v5921 = vld [vmem:[#allocation3 + $0x64] sm:$0xf]
        %v5922 = vld [vmem:[#allocation3 + $0x6c] sm:$0xf]
        %v5923 = vld [vmem:[#allocation3 + $0x70] sm:$0xf]
        %v5924 = vld [vmem:[#allocation3 + $0x78] sm:$0xf]
        %v5925 = vld [vmem:[#allocation3 + $0x7c] sm:$0xf]
        %v5926 = vld [vmem:[#allocation3 + $0x84] sm:$0xf]
        %v5927 = vld [vmem:[#allocation3 + $0x88] sm:$0xf]
        %v5928 = vld [vmem:[#allocation3 + $0x90] sm:$0xf]
        %v5929 = vld [vmem:[#allocation3 + $0x94] sm:$0xf]
        %v5930 = vld [vmem:[#allocation3 + $0x9c] sm:$0xf]
        %v5931 = vld [vmem:[#allocation3 + $0xa0] sm:$0xf]
        %v5932 = vld [vmem:[#allocation3 + $0xa8] sm:$0xf]
        %v5933 = vld [vmem:[#allocation3 + $0xac] sm:$0xf]
        %v5934 = vld [vmem:[#allocation3 + $0xb4] sm:$0xf]
        %v5935 = vld [vmem:[#allocation3 + $0xb8] sm:$0xf]
        %v5968 = vunpack.c.l.b16 %v5904
        %v5969 = vunpack.c.l.b16 %v5905
        %v5970 = vunpack.c.l.b16 %v5906
        %v5971 = vunpack.c.l.b16 %v5907
        %v5972 = vunpack.c.l.b16 %v5908
        %v5973 = vunpack.c.l.b16 %v5909
        %v5974 = vunpack.c.l.b16 %v5910
        %v5975 = vunpack.c.l.b16 %v5911
        %v5976 = vunpack.c.l.b16 %v5912
        %v5977 = vunpack.c.l.b16 %v5913
        %v5978 = vunpack.c.l.b16 %v5914
        %v5979 = vunpack.c.l.b16 %v5915
        %v5980 = vunpack.c.l.b16 %v5916
        %v5981 = vunpack.c.l.b16 %v5917
        %v5982 = vunpack.c.l.b16 %v5918
        %v5983 = vunpack.c.l.b16 %v5919
        %v5984 = vunpack.c.l.b16 %v5920
        %v5985 = vunpack.c.l.b16 %v5921
        %v5986 = vunpack.c.l.b16 %v5922
        %v5987 = vunpack.c.l.b16 %v5923
        %v5988 = vunpack.c.l.b16 %v5924
        %v5989 = vunpack.c.l.b16 %v5925
        %v5990 = vunpack.c.l.b16 %v5926
        %v5991 = vunpack.c.l.b16 %v5927
        %v5992 = vunpack.c.l.b16 %v5928
        %v5993 = vunpack.c.l.b16 %v5929
        %v5994 = vunpack.c.l.b16 %v5930
        %v5995 = vunpack.c.l.b16 %v5931
        %v5996 = vunpack.c.l.b16 %v5932
        %v5997 = vunpack.c.l.b16 %v5933
        %v5998 = vunpack.c.l.b16 %v5934
        %v5999 = vunpack.c.l.b16 %v5935
        %v6000 = vpack.c.b16 %v5969, %v5968
        %v6001 = vpack.c.b16 %v5971, %v5970
        %v6002 = vpack.c.b16 %v5973, %v5972
        %v6003 = vpack.c.b16 %v5975, %v5974
        %v6004 = vpack.c.b16 %v5977, %v5976
        %v6005 = vpack.c.b16 %v5979, %v5978
        %v6006 = vpack.c.b16 %v5981, %v5980
        %v6007 = vpack.c.b16 %v5983, %v5982
        %v6008 = vpack.c.b16 %v5985, %v5984
        %v6009 = vpack.c.b16 %v5987, %v5986
        %v6010 = vpack.c.b16 %v5989, %v5988
        %v6011 = vpack.c.b16 %v5991, %v5990
        %v6012 = vpack.c.b16 %v5993, %v5992
        %v6013 = vpack.c.b16 %v5995, %v5994
        %v6014 = vpack.c.b16 %v5997, %v5996
        %v6015 = vpack.c.b16 %v5999, %v5998
        %6032 = vst [vmem:[#allocation4] sm:$0xff] %v6000
        %6033 = vst [vmem:[#allocation4 + $0x48] sm:$0xff] %v6001
        %6034 = vst [vmem:[#allocation4 + $0x90] sm:$0xff] %v6002
        %6035 = vst [vmem:[#allocation4 + $0xd8] sm:$0xff] %v6003
        %6036 = vst [vmem:[#allocation4 + $0x120] sm:$0xff] %v6004
        %6037 = vst [vmem:[#allocation4 + $0x168] sm:$0xff] %v6005
        %6038 = vst [vmem:[#allocation4 + $0x1b0] sm:$0xff] %v6006
        %6039 = vst [vmem:[#allocation4 + $0x1f8] sm:$0xff] %v6007
        %6040 = vst [vmem:[#allocation4 + $0x240] sm:$0xff] %v6008
        %6041 = vst [vmem:[#allocation4 + $0x288] sm:$0xff] %v6009
        %6042 = vst [vmem:[#allocation4 + $0x2d0] sm:$0xff] %v6010
        %6043 = vst [vmem:[#allocation4 + $0x318] sm:$0xff] %v6011
        %6044 = vst [vmem:[#allocation4 + $0x360] sm:$0xff] %v6012
        %6045 = vst [vmem:[#allocation4 + $0x3a8] sm:$0xff] %v6013
        %6046 = vst [vmem:[#allocation4 + $0x3f0] sm:$0xff] %v6014
        %6047 = vst [vmem:[#allocation4 + $0x438] sm:$0xff] %v6015
        %v6048 = vld [vmem:[#allocation3] sm:$0xf]
        %v6049 = vld [vmem:[#allocation3 + $0x4] sm:$0xf]
        %v6050 = vld [vmem:[#allocation3 + $0x8] sm:$0x1]
        %v6051 = vld [vmem:[#allocation3 + $0xc] sm:$0xf]
        %v6052 = vld [vmem:[#allocation3 + $0x10] sm:$0xf]
        %v6053 = vld [vmem:[#allocation3 + $0x14] sm:$0x1]
        %v6054 = vld [vmem:[#allocation3 + $0x18] sm:$0xf]
        %v6055 = vld [vmem:[#allocation3 + $0x1c] sm:$0xf]
        %v6056 = vld [vmem:[#allocation3 + $0x20] sm:$0x1]
        %v6057 = vld [vmem:[#allocation3 + $0x24] sm:$0xf]
        %v6058 = vld [vmem:[#allocation3 + $0x28] sm:$0xf]
        %v6059 = vld [vmem:[#allocation3 + $0x2c] sm:$0x1]
        %v6060 = vld [vmem:[#allocation3 + $0x30] sm:$0xf]
        %v6061 = vld [vmem:[#allocation3 + $0x34] sm:$0xf]
        %v6062 = vld [vmem:[#allocation3 + $0x38] sm:$0x1]
        %v6063 = vld [vmem:[#allocation3 + $0x3c] sm:$0xf]
        %v6064 = vld [vmem:[#allocation3 + $0x40] sm:$0xf]
        %v6065 = vld [vmem:[#allocation3 + $0x44] sm:$0x1]
        %v6066 = vld [vmem:[#allocation3 + $0x48] sm:$0xf]
        %v6067 = vld [vmem:[#allocation3 + $0x4c] sm:$0xf]
        %v6068 = vld [vmem:[#allocation3 + $0x50] sm:$0x1]
        %v6069 = vld [vmem:[#allocation3 + $0x54] sm:$0xf]
        %v6070 = vld [vmem:[#allocation3 + $0x58] sm:$0xf]
        %v6071 = vld [vmem:[#allocation3 + $0x5c] sm:$0x1]
        %v6072 = vld [vmem:[#allocation3 + $0x60] sm:$0xf]
        %v6073 = vld [vmem:[#allocation3 + $0x64] sm:$0xf]
        %v6074 = vld [vmem:[#allocation3 + $0x68] sm:$0x1]
        %v6075 = vld [vmem:[#allocation3 + $0x6c] sm:$0xf]
        %v6076 = vld [vmem:[#allocation3 + $0x70] sm:$0xf]
        %v6077 = vld [vmem:[#allocation3 + $0x74] sm:$0x1]
        %v6078 = vld [vmem:[#allocation3 + $0x78] sm:$0xf]
        %v6079 = vld [vmem:[#allocation3 + $0x7c] sm:$0xf]
        %v6080 = vld [vmem:[#allocation3 + $0x80] sm:$0x1]
        %v6081 = vld [vmem:[#allocation3 + $0x84] sm:$0xf]
        %v6082 = vld [vmem:[#allocation3 + $0x88] sm:$0xf]
        %v6083 = vld [vmem:[#allocation3 + $0x8c] sm:$0x1]
        %v6084 = vld [vmem:[#allocation3 + $0x90] sm:$0xf]
        %v6085 = vld [vmem:[#allocation3 + $0x94] sm:$0xf]
        %v6086 = vld [vmem:[#allocation3 + $0x98] sm:$0x1]
        %v6087 = vld [vmem:[#allocation3 + $0x9c] sm:$0xf]
        %v6088 = vld [vmem:[#allocation3 + $0xa0] sm:$0xf]
        %v6089 = vld [vmem:[#allocation3 + $0xa4] sm:$0x1]
        %v6090 = vld [vmem:[#allocation3 + $0xa8] sm:$0xf]
        %v6091 = vld [vmem:[#allocation3 + $0xac] sm:$0xf]
        %v6092 = vld [vmem:[#allocation3 + $0xb0] sm:$0x1]
        %v6093 = vld [vmem:[#allocation3 + $0xb4] sm:$0xf]
        %v6094 = vld [vmem:[#allocation3 + $0xb8] sm:$0xf]
        %v6095 = vld [vmem:[#allocation3 + $0xbc] sm:$0x1]
        %v6144 = vunpack.c.l.b16 %v6048
        %v6145 = vunpack.c.l.b16 %v6049
        %v6146 = vunpack.c.l.b16 %v6050
        %v6147 = vunpack.c.l.b16 %v6051
        %v6148 = vunpack.c.l.b16 %v6052
        %v6149 = vunpack.c.l.b16 %v6053
        %v6150 = vunpack.c.l.b16 %v6054
        %v6151 = vunpack.c.l.b16 %v6055
        %v6152 = vunpack.c.l.b16 %v6056
        %v6153 = vunpack.c.l.b16 %v6057
        %v6154 = vunpack.c.l.b16 %v6058
        %v6155 = vunpack.c.l.b16 %v6059
        %v6156 = vunpack.c.l.b16 %v6060
        %v6157 = vunpack.c.l.b16 %v6061
        %v6158 = vunpack.c.l.b16 %v6062
        %v6159 = vunpack.c.l.b16 %v6063
        %v6160 = vunpack.c.l.b16 %v6064
        %v6161 = vunpack.c.l.b16 %v6065
        %v6162 = vunpack.c.l.b16 %v6066
        %v6163 = vunpack.c.l.b16 %v6067
        %v6164 = vunpack.c.l.b16 %v6068
        %v6165 = vunpack.c.l.b16 %v6069
        %v6166 = vunpack.c.l.b16 %v6070
        %v6167 = vunpack.c.l.b16 %v6071
        %v6168 = vunpack.c.l.b16 %v6072
        %v6169 = vunpack.c.l.b16 %v6073
        %v6170 = vunpack.c.l.b16 %v6074
        %v6171 = vunpack.c.l.b16 %v6075
        %v6172 = vunpack.c.l.b16 %v6076
        %v6173 = vunpack.c.l.b16 %v6077
        %v6174 = vunpack.c.l.b16 %v6078
        %v6175 = vunpack.c.l.b16 %v6079
        %v6176 = vunpack.c.l.b16 %v6080
        %v6177 = vunpack.c.l.b16 %v6081
        %v6178 = vunpack.c.l.b16 %v6082
        %v6179 = vunpack.c.l.b16 %v6083
        %v6180 = vunpack.c.l.b16 %v6084
        %v6181 = vunpack.c.l.b16 %v6085
        %v6182 = vunpack.c.l.b16 %v6086
        %v6183 = vunpack.c.l.b16 %v6087
        %v6184 = vunpack.c.l.b16 %v6088
        %v6185 = vunpack.c.l.b16 %v6089
        %v6186 = vunpack.c.l.b16 %v6090
        %v6187 = vunpack.c.l.b16 %v6091
        %v6188 = vunpack.c.l.b16 %v6092
        %v6189 = vunpack.c.l.b16 %v6093
        %v6190 = vunpack.c.l.b16 %v6094
        %v6191 = vunpack.c.l.b16 %v6095
        %v6192 = vpack.c.b16 %v6145, %v6144
        %v6193 = vpack.c.b16 %v6146, %v6146
        %v6194 = vpack.c.b16 %v6148, %v6147
        %v6195 = vpack.c.b16 %v6149, %v6149
        %v6196 = vpack.c.b16 %v6151, %v6150
        %v6197 = vpack.c.b16 %v6152, %v6152
        %v6198 = vpack.c.b16 %v6154, %v6153
        %v6199 = vpack.c.b16 %v6155, %v6155
        %v6200 = vpack.c.b16 %v6157, %v6156
        %v6201 = vpack.c.b16 %v6158, %v6158
        %v6202 = vpack.c.b16 %v6160, %v6159
        %v6203 = vpack.c.b16 %v6161, %v6161
        %v6204 = vpack.c.b16 %v6163, %v6162
        %v6205 = vpack.c.b16 %v6164, %v6164
        %v6206 = vpack.c.b16 %v6166, %v6165
        %v6207 = vpack.c.b16 %v6167, %v6167
        %v6208 = vpack.c.b16 %v6169, %v6168
        %v6209 = vpack.c.b16 %v6170, %v6170
        %v6210 = vpack.c.b16 %v6172, %v6171
        %v6211 = vpack.c.b16 %v6173, %v6173
        %v6212 = vpack.c.b16 %v6175, %v6174
        %v6213 = vpack.c.b16 %v6176, %v6176
        %v6214 = vpack.c.b16 %v6178, %v6177
        %v6215 = vpack.c.b16 %v6179, %v6179
        %v6216 = vpack.c.b16 %v6181, %v6180
        %v6217 = vpack.c.b16 %v6182, %v6182
        %v6218 = vpack.c.b16 %v6184, %v6183
        %v6219 = vpack.c.b16 %v6185, %v6185
        %v6220 = vpack.c.b16 %v6187, %v6186
        %v6221 = vpack.c.b16 %v6188, %v6188
        %v6222 = vpack.c.b16 %v6190, %v6189
        %v6223 = vpack.c.b16 %v6191, %v6191
        %v6225 = vshrl.u32 %v6192, 16
        %v6227 = vshll.u32 %v6192, 16
        %v6229 = vrot.slane %v6227, 1
        %v6230 = vor.u32 %v6225, %v6229
        %v6232 = vshll.u32 %v6193, 16
        %v6234 = vrot.slane %v6232, 1
        %v6235 = vsel %vm1739, %v6230, %v6234
        %v6237 = vshrl.u32 %v6194, 16
        %v6239 = vshll.u32 %v6194, 16
        %v6241 = vrot.slane %v6239, 1
        %v6242 = vor.u32 %v6237, %v6241
        %v6244 = vshll.u32 %v6195, 16
        %v6246 = vrot.slane %v6244, 1
        %v6247 = vsel %vm1739, %v6242, %v6246
        %v6249 = vshrl.u32 %v6196, 16
        %v6251 = vshll.u32 %v6196, 16
        %v6253 = vrot.slane %v6251, 1
        %v6254 = vor.u32 %v6249, %v6253
        %v6256 = vshll.u32 %v6197, 16
        %v6258 = vrot.slane %v6256, 1
        %v6259 = vsel %vm1739, %v6254, %v6258
        %v6261 = vshrl.u32 %v6198, 16
        %v6263 = vshll.u32 %v6198, 16
        %v6265 = vrot.slane %v6263, 1
        %v6266 = vor.u32 %v6261, %v6265
        %v6268 = vshll.u32 %v6199, 16
        %v6270 = vrot.slane %v6268, 1
        %v6271 = vsel %vm1739, %v6266, %v6270
        %v6273 = vshrl.u32 %v6200, 16
        %v6275 = vshll.u32 %v6200, 16
        %v6277 = vrot.slane %v6275, 1
        %v6278 = vor.u32 %v6273, %v6277
        %v6280 = vshll.u32 %v6201, 16
        %v6282 = vrot.slane %v6280, 1
        %v6283 = vsel %vm1739, %v6278, %v6282
        %v6285 = vshrl.u32 %v6202, 16
        %v6287 = vshll.u32 %v6202, 16
        %v6289 = vrot.slane %v6287, 1
        %v6290 = vor.u32 %v6285, %v6289
        %v6292 = vshll.u32 %v6203, 16
        %v6294 = vrot.slane %v6292, 1
        %v6295 = vsel %vm1739, %v6290, %v6294
        %v6297 = vshrl.u32 %v6204, 16
        %v6299 = vshll.u32 %v6204, 16
        %v6301 = vrot.slane %v6299, 1
        %v6302 = vor.u32 %v6297, %v6301
        %v6304 = vshll.u32 %v6205, 16
        %v6306 = vrot.slane %v6304, 1
        %v6307 = vsel %vm1739, %v6302, %v6306
        %v6309 = vshrl.u32 %v6206, 16
        %v6311 = vshll.u32 %v6206, 16
        %v6313 = vrot.slane %v6311, 1
        %v6314 = vor.u32 %v6309, %v6313
        %v6316 = vshll.u32 %v6207, 16
        %v6318 = vrot.slane %v6316, 1
        %v6319 = vsel %vm1739, %v6314, %v6318
        %v6321 = vshrl.u32 %v6208, 16
        %v6323 = vshll.u32 %v6208, 16
        %v6325 = vrot.slane %v6323, 1
        %v6326 = vor.u32 %v6321, %v6325
        %v6328 = vshll.u32 %v6209, 16
        %v6330 = vrot.slane %v6328, 1
        %v6331 = vsel %vm1739, %v6326, %v6330
        %v6333 = vshrl.u32 %v6210, 16
        %v6335 = vshll.u32 %v6210, 16
        %v6337 = vrot.slane %v6335, 1
        %v6338 = vor.u32 %v6333, %v6337
        %v6340 = vshll.u32 %v6211, 16
        %v6342 = vrot.slane %v6340, 1
        %v6343 = vsel %vm1739, %v6338, %v6342
        %v6345 = vshrl.u32 %v6212, 16
        %v6347 = vshll.u32 %v6212, 16
        %v6349 = vrot.slane %v6347, 1
        %v6350 = vor.u32 %v6345, %v6349
        %v6352 = vshll.u32 %v6213, 16
        %v6354 = vrot.slane %v6352, 1
        %v6355 = vsel %vm1739, %v6350, %v6354
        %v6357 = vshrl.u32 %v6214, 16
        %v6359 = vshll.u32 %v6214, 16
        %v6361 = vrot.slane %v6359, 1
        %v6362 = vor.u32 %v6357, %v6361
        %v6364 = vshll.u32 %v6215, 16
        %v6366 = vrot.slane %v6364, 1
        %v6367 = vsel %vm1739, %v6362, %v6366
        %v6369 = vshrl.u32 %v6216, 16
        %v6371 = vshll.u32 %v6216, 16
        %v6373 = vrot.slane %v6371, 1
        %v6374 = vor.u32 %v6369, %v6373
        %v6376 = vshll.u32 %v6217, 16
        %v6378 = vrot.slane %v6376, 1
        %v6379 = vsel %vm1739, %v6374, %v6378
        %v6381 = vshrl.u32 %v6218, 16
        %v6383 = vshll.u32 %v6218, 16
        %v6385 = vrot.slane %v6383, 1
        %v6386 = vor.u32 %v6381, %v6385
        %v6388 = vshll.u32 %v6219, 16
        %v6390 = vrot.slane %v6388, 1
        %v6391 = vsel %vm1739, %v6386, %v6390
        %v6393 = vshrl.u32 %v6220, 16
        %v6395 = vshll.u32 %v6220, 16
        %v6397 = vrot.slane %v6395, 1
        %v6398 = vor.u32 %v6393, %v6397
        %v6400 = vshll.u32 %v6221, 16
        %v6402 = vrot.slane %v6400, 1
        %v6403 = vsel %vm1739, %v6398, %v6402
        %v6405 = vshrl.u32 %v6222, 16
        %v6407 = vshll.u32 %v6222, 16
        %v6409 = vrot.slane %v6407, 1
        %v6410 = vor.u32 %v6405, %v6409
        %v6412 = vshll.u32 %v6223, 16
        %v6414 = vrot.slane %v6412, 1
        %v6415 = vsel %vm1739, %v6410, %v6414
        %6432 = vst [vmem:[#allocation4 + $0x8] sm:$0xff] %v6235
        %6433 = vst [vmem:[#allocation4 + $0x50] sm:$0xff] %v6247
        %6434 = vst [vmem:[#allocation4 + $0x98] sm:$0xff] %v6259
        %6435 = vst [vmem:[#allocation4 + $0xe0] sm:$0xff] %v6271
        %6436 = vst [vmem:[#allocation4 + $0x128] sm:$0xff] %v6283
        %6437 = vst [vmem:[#allocation4 + $0x170] sm:$0xff] %v6295
        %6438 = vst [vmem:[#allocation4 + $0x1b8] sm:$0xff] %v6307
        %6439 = vst [vmem:[#allocation4 + $0x200] sm:$0xff] %v6319
        %6440 = vst [vmem:[#allocation4 + $0x248] sm:$0xff] %v6331
        %6441 = vst [vmem:[#allocation4 + $0x290] sm:$0xff] %v6343
        %6442 = vst [vmem:[#allocation4 + $0x2d8] sm:$0xff] %v6355
        %6443 = vst [vmem:[#allocation4 + $0x320] sm:$0xff] %v6367
        %6444 = vst [vmem:[#allocation4 + $0x368] sm:$0xff] %v6379
        %6445 = vst [vmem:[#allocation4 + $0x3b0] sm:$0xff] %v6391
        %6446 = vst [vmem:[#allocation4 + $0x3f8] sm:$0xff] %v6403
        %6447 = vst [vmem:[#allocation4 + $0x440] sm:$0xff] %v6415
        %v6448 = vld [vmem:[#allocation3] sm:$0xe]
        %v6449 = vld [vmem:[#allocation3 + $0x4] sm:$0xf]
        %v6450 = vld [vmem:[#allocation3 + $0x8] sm:$0x1]
        %v6451 = vld [vmem:[#allocation3 + $0xc] sm:$0xe]
        %v6452 = vld [vmem:[#allocation3 + $0x10] sm:$0xf]
        %v6453 = vld [vmem:[#allocation3 + $0x14] sm:$0x1]
        %v6454 = vld [vmem:[#allocation3 + $0x18] sm:$0xe]
        %v6455 = vld [vmem:[#allocation3 + $0x1c] sm:$0xf]
        %v6456 = vld [vmem:[#allocation3 + $0x20] sm:$0x1]
        %v6457 = vld [vmem:[#allocation3 + $0x24] sm:$0xe]
        %v6458 = vld [vmem:[#allocation3 + $0x28] sm:$0xf]
        %v6459 = vld [vmem:[#allocation3 + $0x2c] sm:$0x1]
        %v6460 = vld [vmem:[#allocation3 + $0x30] sm:$0xe]
        %v6461 = vld [vmem:[#allocation3 + $0x34] sm:$0xf]
        %v6462 = vld [vmem:[#allocation3 + $0x38] sm:$0x1]
        %v6463 = vld [vmem:[#allocation3 + $0x3c] sm:$0xe]
        %v6464 = vld [vmem:[#allocation3 + $0x40] sm:$0xf]
        %v6465 = vld [vmem:[#allocation3 + $0x44] sm:$0x1]
        %v6466 = vld [vmem:[#allocation3 + $0x48] sm:$0xe]
        %v6467 = vld [vmem:[#allocation3 + $0x4c] sm:$0xf]
        %v6468 = vld [vmem:[#allocation3 + $0x50] sm:$0x1]
        %v6469 = vld [vmem:[#allocation3 + $0x54] sm:$0xe]
        %v6470 = vld [vmem:[#allocation3 + $0x58] sm:$0xf]
        %v6471 = vld [vmem:[#allocation3 + $0x5c] sm:$0x1]
        %v6472 = vld [vmem:[#allocation3 + $0x60] sm:$0xe]
        %v6473 = vld [vmem:[#allocation3 + $0x64] sm:$0xf]
        %v6474 = vld [vmem:[#allocation3 + $0x68] sm:$0x1]
        %v6475 = vld [vmem:[#allocation3 + $0x6c] sm:$0xe]
        %v6476 = vld [vmem:[#allocation3 + $0x70] sm:$0xf]
        %v6477 = vld [vmem:[#allocation3 + $0x74] sm:$0x1]
        %v6478 = vld [vmem:[#allocation3 + $0x78] sm:$0xe]
        %v6479 = vld [vmem:[#allocation3 + $0x7c] sm:$0xf]
        %v6480 = vld [vmem:[#allocation3 + $0x80] sm:$0x1]
        %v6481 = vld [vmem:[#allocation3 + $0x84] sm:$0xe]
        %v6482 = vld [vmem:[#allocation3 + $0x88] sm:$0xf]
        %v6483 = vld [vmem:[#allocation3 + $0x8c] sm:$0x1]
        %v6484 = vld [vmem:[#allocation3 + $0x90] sm:$0xe]
        %v6485 = vld [vmem:[#allocation3 + $0x94] sm:$0xf]
        %v6486 = vld [vmem:[#allocation3 + $0x98] sm:$0x1]
        %v6487 = vld [vmem:[#allocation3 + $0x9c] sm:$0xe]
        %v6488 = vld [vmem:[#allocation3 + $0xa0] sm:$0xf]
        %v6489 = vld [vmem:[#allocation3 + $0xa4] sm:$0x1]
        %v6490 = vld [vmem:[#allocation3 + $0xa8] sm:$0xe]
        %v6491 = vld [vmem:[#allocation3 + $0xac] sm:$0xf]
        %v6492 = vld [vmem:[#allocation3 + $0xb0] sm:$0x1]
        %v6493 = vld [vmem:[#allocation3 + $0xb4] sm:$0xe]
        %v6494 = vld [vmem:[#allocation3 + $0xb8] sm:$0xf]
        %v6495 = vld [vmem:[#allocation3 + $0xbc] sm:$0x1]
        %v6544 = vunpack.c.l.b16 %v6448
        %v6545 = vunpack.c.l.b16 %v6449
        %v6546 = vunpack.c.l.b16 %v6450
        %v6547 = vunpack.c.l.b16 %v6451
        %v6548 = vunpack.c.l.b16 %v6452
        %v6549 = vunpack.c.l.b16 %v6453
        %v6550 = vunpack.c.l.b16 %v6454
        %v6551 = vunpack.c.l.b16 %v6455
        %v6552 = vunpack.c.l.b16 %v6456
        %v6553 = vunpack.c.l.b16 %v6457
        %v6554 = vunpack.c.l.b16 %v6458
        %v6555 = vunpack.c.l.b16 %v6459
        %v6556 = vunpack.c.l.b16 %v6460
        %v6557 = vunpack.c.l.b16 %v6461
        %v6558 = vunpack.c.l.b16 %v6462
        %v6559 = vunpack.c.l.b16 %v6463
        %v6560 = vunpack.c.l.b16 %v6464
        %v6561 = vunpack.c.l.b16 %v6465
        %v6562 = vunpack.c.l.b16 %v6466
        %v6563 = vunpack.c.l.b16 %v6467
        %v6564 = vunpack.c.l.b16 %v6468
        %v6565 = vunpack.c.l.b16 %v6469
        %v6566 = vunpack.c.l.b16 %v6470
        %v6567 = vunpack.c.l.b16 %v6471
        %v6568 = vunpack.c.l.b16 %v6472
        %v6569 = vunpack.c.l.b16 %v6473
        %v6570 = vunpack.c.l.b16 %v6474
        %v6571 = vunpack.c.l.b16 %v6475
        %v6572 = vunpack.c.l.b16 %v6476
        %v6573 = vunpack.c.l.b16 %v6477
        %v6574 = vunpack.c.l.b16 %v6478
        %v6575 = vunpack.c.l.b16 %v6479
        %v6576 = vunpack.c.l.b16 %v6480
        %v6577 = vunpack.c.l.b16 %v6481
        %v6578 = vunpack.c.l.b16 %v6482
        %v6579 = vunpack.c.l.b16 %v6483
        %v6580 = vunpack.c.l.b16 %v6484
        %v6581 = vunpack.c.l.b16 %v6485
        %v6582 = vunpack.c.l.b16 %v6486
        %v6583 = vunpack.c.l.b16 %v6487
        %v6584 = vunpack.c.l.b16 %v6488
        %v6585 = vunpack.c.l.b16 %v6489
        %v6586 = vunpack.c.l.b16 %v6490
        %v6587 = vunpack.c.l.b16 %v6491
        %v6588 = vunpack.c.l.b16 %v6492
        %v6589 = vunpack.c.l.b16 %v6493
        %v6590 = vunpack.c.l.b16 %v6494
        %v6591 = vunpack.c.l.b16 %v6495
        %v6592 = vpack.c.b16 %v6545, %v6544
        %v6593 = vpack.c.b16 %v6546, %v6546
        %v6594 = vpack.c.b16 %v6548, %v6547
        %v6595 = vpack.c.b16 %v6549, %v6549
        %v6596 = vpack.c.b16 %v6551, %v6550
        %v6597 = vpack.c.b16 %v6552, %v6552
        %v6598 = vpack.c.b16 %v6554, %v6553
        %v6599 = vpack.c.b16 %v6555, %v6555
        %v6600 = vpack.c.b16 %v6557, %v6556
        %v6601 = vpack.c.b16 %v6558, %v6558
        %v6602 = vpack.c.b16 %v6560, %v6559
        %v6603 = vpack.c.b16 %v6561, %v6561
        %v6604 = vpack.c.b16 %v6563, %v6562
        %v6605 = vpack.c.b16 %v6564, %v6564
        %v6606 = vpack.c.b16 %v6566, %v6565
        %v6607 = vpack.c.b16 %v6567, %v6567
        %v6608 = vpack.c.b16 %v6569, %v6568
        %v6609 = vpack.c.b16 %v6570, %v6570
        %v6610 = vpack.c.b16 %v6572, %v6571
        %v6611 = vpack.c.b16 %v6573, %v6573
        %v6612 = vpack.c.b16 %v6575, %v6574
        %v6613 = vpack.c.b16 %v6576, %v6576
        %v6614 = vpack.c.b16 %v6578, %v6577
        %v6615 = vpack.c.b16 %v6579, %v6579
        %v6616 = vpack.c.b16 %v6581, %v6580
        %v6617 = vpack.c.b16 %v6582, %v6582
        %v6618 = vpack.c.b16 %v6584, %v6583
        %v6619 = vpack.c.b16 %v6585, %v6585
        %v6620 = vpack.c.b16 %v6587, %v6586
        %v6621 = vpack.c.b16 %v6588, %v6588
        %v6622 = vpack.c.b16 %v6590, %v6589
        %v6623 = vpack.c.b16 %v6591, %v6591
        %v6624 = vrot.slane %v6592, 1
        %v6625 = vrot.slane %v6593, 1
        %v6626 = vsel %vm2140, %v6624, %v6625
        %v6627 = vrot.slane %v6594, 1
        %v6628 = vrot.slane %v6595, 1
        %v6629 = vsel %vm2140, %v6627, %v6628
        %v6630 = vrot.slane %v6596, 1
        %v6631 = vrot.slane %v6597, 1
        %v6632 = vsel %vm2140, %v6630, %v6631
        %v6633 = vrot.slane %v6598, 1
        %v6634 = vrot.slane %v6599, 1
        %v6635 = vsel %vm2140, %v6633, %v6634
        %v6636 = vrot.slane %v6600, 1
        %v6637 = vrot.slane %v6601, 1
        %v6638 = vsel %vm2140, %v6636, %v6637
        %v6639 = vrot.slane %v6602, 1
        %v6640 = vrot.slane %v6603, 1
        %v6641 = vsel %vm2140, %v6639, %v6640
        %v6642 = vrot.slane %v6604, 1
        %v6643 = vrot.slane %v6605, 1
        %v6644 = vsel %vm2140, %v6642, %v6643
        %v6645 = vrot.slane %v6606, 1
        %v6646 = vrot.slane %v6607, 1
        %v6647 = vsel %vm2140, %v6645, %v6646
        %v6648 = vrot.slane %v6608, 1
        %v6649 = vrot.slane %v6609, 1
        %v6650 = vsel %vm2140, %v6648, %v6649
        %v6651 = vrot.slane %v6610, 1
        %v6652 = vrot.slane %v6611, 1
        %v6653 = vsel %vm2140, %v6651, %v6652
        %v6654 = vrot.slane %v6612, 1
        %v6655 = vrot.slane %v6613, 1
        %v6656 = vsel %vm2140, %v6654, %v6655
        %v6657 = vrot.slane %v6614, 1
        %v6658 = vrot.slane %v6615, 1
        %v6659 = vsel %vm2140, %v6657, %v6658
        %v6660 = vrot.slane %v6616, 1
        %v6661 = vrot.slane %v6617, 1
        %v6662 = vsel %vm2140, %v6660, %v6661
        %v6663 = vrot.slane %v6618, 1
        %v6664 = vrot.slane %v6619, 1
        %v6665 = vsel %vm2140, %v6663, %v6664
        %v6666 = vrot.slane %v6620, 1
        %v6667 = vrot.slane %v6621, 1
        %v6668 = vsel %vm2140, %v6666, %v6667
        %v6669 = vrot.slane %v6622, 1
        %v6670 = vrot.slane %v6623, 1
        %v6671 = vsel %vm2140, %v6669, %v6670
        %6688 = vst [vmem:[#allocation4 + $0x10] sm:$0xff] %v6626
        %6689 = vst [vmem:[#allocation4 + $0x58] sm:$0xff] %v6629
        %6690 = vst [vmem:[#allocation4 + $0xa0] sm:$0xff] %v6632
        %6691 = vst [vmem:[#allocation4 + $0xe8] sm:$0xff] %v6635
        %6692 = vst [vmem:[#allocation4 + $0x130] sm:$0xff] %v6638
        %6693 = vst [vmem:[#allocation4 + $0x178] sm:$0xff] %v6641
        %6694 = vst [vmem:[#allocation4 + $0x1c0] sm:$0xff] %v6644
        %6695 = vst [vmem:[#allocation4 + $0x208] sm:$0xff] %v6647
        %6696 = vst [vmem:[#allocation4 + $0x250] sm:$0xff] %v6650
        %6697 = vst [vmem:[#allocation4 + $0x298] sm:$0xff] %v6653
        %6698 = vst [vmem:[#allocation4 + $0x2e0] sm:$0xff] %v6656
        %6699 = vst [vmem:[#allocation4 + $0x328] sm:$0xff] %v6659
        %6700 = vst [vmem:[#allocation4 + $0x370] sm:$0xff] %v6662
        %6701 = vst [vmem:[#allocation4 + $0x3b8] sm:$0xff] %v6665
        %6702 = vst [vmem:[#allocation4 + $0x400] sm:$0xff] %v6668
        %6703 = vst [vmem:[#allocation4 + $0x448] sm:$0xff] %v6671
        %v6704 = vld [vmem:[%s5791] sm:$0xf]
        %v6705 = vld [vmem:[%s5791 + $0x4] sm:$0xf]
        %v6706 = vld [vmem:[%s5791 + $0xc] sm:$0xf]
        %v6707 = vld [vmem:[%s5791 + $0x10] sm:$0xf]
        %v6708 = vld [vmem:[%s5791 + $0x18] sm:$0xf]
        %v6709 = vld [vmem:[%s5791 + $0x1c] sm:$0xf]
        %v6710 = vld [vmem:[%s5791 + $0x24] sm:$0xf]
        %v6711 = vld [vmem:[%s5791 + $0x28] sm:$0xf]
        %v6712 = vld [vmem:[%s5791 + $0x30] sm:$0xf]
        %v6713 = vld [vmem:[%s5791 + $0x34] sm:$0xf]
        %v6714 = vld [vmem:[%s5791 + $0x3c] sm:$0xf]
        %v6715 = vld [vmem:[%s5791 + $0x40] sm:$0xf]
        %v6716 = vld [vmem:[%s5791 + $0x48] sm:$0xf]
        %v6717 = vld [vmem:[%s5791 + $0x4c] sm:$0xf]
        %v6718 = vld [vmem:[%s5791 + $0x54] sm:$0xf]
        %v6719 = vld [vmem:[%s5791 + $0x58] sm:$0xf]
        %v6720 = vld [vmem:[%s5791 + $0x60] sm:$0xf]
        %v6721 = vld [vmem:[%s5791 + $0x64] sm:$0xf]
        %v6722 = vld [vmem:[%s5791 + $0x6c] sm:$0xf]
        %v6723 = vld [vmem:[%s5791 + $0x70] sm:$0xf]
        %v6724 = vld [vmem:[%s5791 + $0x78] sm:$0xf]
        %v6725 = vld [vmem:[%s5791 + $0x7c] sm:$0xf]
        %v6726 = vld [vmem:[%s5791 + $0x84] sm:$0xf]
        %v6727 = vld [vmem:[%s5791 + $0x88] sm:$0xf]
        %v6728 = vld [vmem:[%s5791 + $0x90] sm:$0xf]
        %v6729 = vld [vmem:[%s5791 + $0x94] sm:$0xf]
        %v6730 = vld [vmem:[%s5791 + $0x9c] sm:$0xf]
        %v6731 = vld [vmem:[%s5791 + $0xa0] sm:$0xf]
        %v6732 = vld [vmem:[%s5791 + $0xa8] sm:$0xf]
        %v6733 = vld [vmem:[%s5791 + $0xac] sm:$0xf]
        %v6734 = vld [vmem:[%s5791 + $0xb4] sm:$0xf]
        %v6735 = vld [vmem:[%s5791 + $0xb8] sm:$0xf]
        %v6768 = vunpack.c.l.b16 %v6704
        %v6769 = vunpack.c.l.b16 %v6705
        %v6770 = vunpack.c.l.b16 %v6706
        %v6771 = vunpack.c.l.b16 %v6707
        %v6772 = vunpack.c.l.b16 %v6708
        %v6773 = vunpack.c.l.b16 %v6709
        %v6774 = vunpack.c.l.b16 %v6710
        %v6775 = vunpack.c.l.b16 %v6711
        %v6776 = vunpack.c.l.b16 %v6712
        %v6777 = vunpack.c.l.b16 %v6713
        %v6778 = vunpack.c.l.b16 %v6714
        %v6779 = vunpack.c.l.b16 %v6715
        %v6780 = vunpack.c.l.b16 %v6716
        %v6781 = vunpack.c.l.b16 %v6717
        %v6782 = vunpack.c.l.b16 %v6718
        %v6783 = vunpack.c.l.b16 %v6719
        %v6784 = vunpack.c.l.b16 %v6720
        %v6785 = vunpack.c.l.b16 %v6721
        %v6786 = vunpack.c.l.b16 %v6722
        %v6787 = vunpack.c.l.b16 %v6723
        %v6788 = vunpack.c.l.b16 %v6724
        %v6789 = vunpack.c.l.b16 %v6725
        %v6790 = vunpack.c.l.b16 %v6726
        %v6791 = vunpack.c.l.b16 %v6727
        %v6792 = vunpack.c.l.b16 %v6728
        %v6793 = vunpack.c.l.b16 %v6729
        %v6794 = vunpack.c.l.b16 %v6730
        %v6795 = vunpack.c.l.b16 %v6731
        %v6796 = vunpack.c.l.b16 %v6732
        %v6797 = vunpack.c.l.b16 %v6733
        %v6798 = vunpack.c.l.b16 %v6734
        %v6799 = vunpack.c.l.b16 %v6735
        %v6800 = vpack.c.b16 %v6769, %v6768
        %v6801 = vpack.c.b16 %v6771, %v6770
        %v6802 = vpack.c.b16 %v6773, %v6772
        %v6803 = vpack.c.b16 %v6775, %v6774
        %v6804 = vpack.c.b16 %v6777, %v6776
        %v6805 = vpack.c.b16 %v6779, %v6778
        %v6806 = vpack.c.b16 %v6781, %v6780
        %v6807 = vpack.c.b16 %v6783, %v6782
        %v6808 = vpack.c.b16 %v6785, %v6784
        %v6809 = vpack.c.b16 %v6787, %v6786
        %v6810 = vpack.c.b16 %v6789, %v6788
        %v6811 = vpack.c.b16 %v6791, %v6790
        %v6812 = vpack.c.b16 %v6793, %v6792
        %v6813 = vpack.c.b16 %v6795, %v6794
        %v6814 = vpack.c.b16 %v6797, %v6796
        %v6815 = vpack.c.b16 %v6799, %v6798
        %6832 = vst [vmem:[#allocation4 + $0x18] sm:$0xff] %v6800
        %6833 = vst [vmem:[#allocation4 + $0x60] sm:$0xff] %v6801
        %6834 = vst [vmem:[#allocation4 + $0xa8] sm:$0xff] %v6802
        %6835 = vst [vmem:[#allocation4 + $0xf0] sm:$0xff] %v6803
        %6836 = vst [vmem:[#allocation4 + $0x138] sm:$0xff] %v6804
        %6837 = vst [vmem:[#allocation4 + $0x180] sm:$0xff] %v6805
        %6838 = vst [vmem:[#allocation4 + $0x1c8] sm:$0xff] %v6806
        %6839 = vst [vmem:[#allocation4 + $0x210] sm:$0xff] %v6807
        %6840 = vst [vmem:[#allocation4 + $0x258] sm:$0xff] %v6808
        %6841 = vst [vmem:[#allocation4 + $0x2a0] sm:$0xff] %v6809
        %6842 = vst [vmem:[#allocation4 + $0x2e8] sm:$0xff] %v6810
        %6843 = vst [vmem:[#allocation4 + $0x330] sm:$0xff] %v6811
        %6844 = vst [vmem:[#allocation4 + $0x378] sm:$0xff] %v6812
        %6845 = vst [vmem:[#allocation4 + $0x3c0] sm:$0xff] %v6813
        %6846 = vst [vmem:[#allocation4 + $0x408] sm:$0xff] %v6814
        %6847 = vst [vmem:[#allocation4 + $0x450] sm:$0xff] %v6815
        %v6848 = vld [vmem:[%s5791] sm:$0xf]
        %v6849 = vld [vmem:[%s5791 + $0x4] sm:$0xf]
        %v6850 = vld [vmem:[%s5791 + $0x8] sm:$0x1]
        %v6851 = vld [vmem:[%s5791 + $0xc] sm:$0xf]
        %v6852 = vld [vmem:[%s5791 + $0x10] sm:$0xf]
        %v6853 = vld [vmem:[%s5791 + $0x14] sm:$0x1]
        %v6854 = vld [vmem:[%s5791 + $0x18] sm:$0xf]
        %v6855 = vld [vmem:[%s5791 + $0x1c] sm:$0xf]
        %v6856 = vld [vmem:[%s5791 + $0x20] sm:$0x1]
        %v6857 = vld [vmem:[%s5791 + $0x24] sm:$0xf]
        %v6858 = vld [vmem:[%s5791 + $0x28] sm:$0xf]
        %v6859 = vld [vmem:[%s5791 + $0x2c] sm:$0x1]
        %v6860 = vld [vmem:[%s5791 + $0x30] sm:$0xf]
        %v6861 = vld [vmem:[%s5791 + $0x34] sm:$0xf]
        %v6862 = vld [vmem:[%s5791 + $0x38] sm:$0x1]
        %v6863 = vld [vmem:[%s5791 + $0x3c] sm:$0xf]
        %v6864 = vld [vmem:[%s5791 + $0x40] sm:$0xf]
        %v6865 = vld [vmem:[%s5791 + $0x44] sm:$0x1]
        %v6866 = vld [vmem:[%s5791 + $0x48] sm:$0xf]
        %v6867 = vld [vmem:[%s5791 + $0x4c] sm:$0xf]
        %v6868 = vld [vmem:[%s5791 + $0x50] sm:$0x1]
        %v6869 = vld [vmem:[%s5791 + $0x54] sm:$0xf]
        %v6870 = vld [vmem:[%s5791 + $0x58] sm:$0xf]
        %v6871 = vld [vmem:[%s5791 + $0x5c] sm:$0x1]
        %v6872 = vld [vmem:[%s5791 + $0x60] sm:$0xf]
        %v6873 = vld [vmem:[%s5791 + $0x64] sm:$0xf]
        %v6874 = vld [vmem:[%s5791 + $0x68] sm:$0x1]
        %v6875 = vld [vmem:[%s5791 + $0x6c] sm:$0xf]
        %v6876 = vld [vmem:[%s5791 + $0x70] sm:$0xf]
        %v6877 = vld [vmem:[%s5791 + $0x74] sm:$0x1]
        %v6878 = vld [vmem:[%s5791 + $0x78] sm:$0xf]
        %v6879 = vld [vmem:[%s5791 + $0x7c] sm:$0xf]
        %v6880 = vld [vmem:[%s5791 + $0x80] sm:$0x1]
        %v6881 = vld [vmem:[%s5791 + $0x84] sm:$0xf]
        %v6882 = vld [vmem:[%s5791 + $0x88] sm:$0xf]
        %v6883 = vld [vmem:[%s5791 + $0x8c] sm:$0x1]
        %v6884 = vld [vmem:[%s5791 + $0x90] sm:$0xf]
        %v6885 = vld [vmem:[%s5791 + $0x94] sm:$0xf]
        %v6886 = vld [vmem:[%s5791 + $0x98] sm:$0x1]
        %v6887 = vld [vmem:[%s5791 + $0x9c] sm:$0xf]
        %v6888 = vld [vmem:[%s5791 + $0xa0] sm:$0xf]
        %v6889 = vld [vmem:[%s5791 + $0xa4] sm:$0x1]
        %v6890 = vld [vmem:[%s5791 + $0xa8] sm:$0xf]
        %v6891 = vld [vmem:[%s5791 + $0xac] sm:$0xf]
        %v6892 = vld [vmem:[%s5791 + $0xb0] sm:$0x1]
        %v6893 = vld [vmem:[%s5791 + $0xb4] sm:$0xf]
        %v6894 = vld [vmem:[%s5791 + $0xb8] sm:$0xf]
        %v6895 = vld [vmem:[%s5791 + $0xbc] sm:$0x1]
        %v6944 = vunpack.c.l.b16 %v6848
        %v6945 = vunpack.c.l.b16 %v6849
        %v6946 = vunpack.c.l.b16 %v6850
        %v6947 = vunpack.c.l.b16 %v6851
        %v6948 = vunpack.c.l.b16 %v6852
        %v6949 = vunpack.c.l.b16 %v6853
        %v6950 = vunpack.c.l.b16 %v6854
        %v6951 = vunpack.c.l.b16 %v6855
        %v6952 = vunpack.c.l.b16 %v6856
        %v6953 = vunpack.c.l.b16 %v6857
        %v6954 = vunpack.c.l.b16 %v6858
        %v6955 = vunpack.c.l.b16 %v6859
        %v6956 = vunpack.c.l.b16 %v6860
        %v6957 = vunpack.c.l.b16 %v6861
        %v6958 = vunpack.c.l.b16 %v6862
        %v6959 = vunpack.c.l.b16 %v6863
        %v6960 = vunpack.c.l.b16 %v6864
        %v6961 = vunpack.c.l.b16 %v6865
        %v6962 = vunpack.c.l.b16 %v6866
        %v6963 = vunpack.c.l.b16 %v6867
        %v6964 = vunpack.c.l.b16 %v6868
        %v6965 = vunpack.c.l.b16 %v6869
        %v6966 = vunpack.c.l.b16 %v6870
        %v6967 = vunpack.c.l.b16 %v6871
        %v6968 = vunpack.c.l.b16 %v6872
        %v6969 = vunpack.c.l.b16 %v6873
        %v6970 = vunpack.c.l.b16 %v6874
        %v6971 = vunpack.c.l.b16 %v6875
        %v6972 = vunpack.c.l.b16 %v6876
        %v6973 = vunpack.c.l.b16 %v6877
        %v6974 = vunpack.c.l.b16 %v6878
        %v6975 = vunpack.c.l.b16 %v6879
        %v6976 = vunpack.c.l.b16 %v6880
        %v6977 = vunpack.c.l.b16 %v6881
        %v6978 = vunpack.c.l.b16 %v6882
        %v6979 = vunpack.c.l.b16 %v6883
        %v6980 = vunpack.c.l.b16 %v6884
        %v6981 = vunpack.c.l.b16 %v6885
        %v6982 = vunpack.c.l.b16 %v6886
        %v6983 = vunpack.c.l.b16 %v6887
        %v6984 = vunpack.c.l.b16 %v6888
        %v6985 = vunpack.c.l.b16 %v6889
        %v6986 = vunpack.c.l.b16 %v6890
        %v6987 = vunpack.c.l.b16 %v6891
        %v6988 = vunpack.c.l.b16 %v6892
        %v6989 = vunpack.c.l.b16 %v6893
        %v6990 = vunpack.c.l.b16 %v6894
        %v6991 = vunpack.c.l.b16 %v6895
        %v6992 = vpack.c.b16 %v6945, %v6944
        %v6993 = vpack.c.b16 %v6946, %v6946
        %v6994 = vpack.c.b16 %v6948, %v6947
        %v6995 = vpack.c.b16 %v6949, %v6949
        %v6996 = vpack.c.b16 %v6951, %v6950
        %v6997 = vpack.c.b16 %v6952, %v6952
        %v6998 = vpack.c.b16 %v6954, %v6953
        %v6999 = vpack.c.b16 %v6955, %v6955
        %v7000 = vpack.c.b16 %v6957, %v6956
        %v7001 = vpack.c.b16 %v6958, %v6958
        %v7002 = vpack.c.b16 %v6960, %v6959
        %v7003 = vpack.c.b16 %v6961, %v6961
        %v7004 = vpack.c.b16 %v6963, %v6962
        %v7005 = vpack.c.b16 %v6964, %v6964
        %v7006 = vpack.c.b16 %v6966, %v6965
        %v7007 = vpack.c.b16 %v6967, %v6967
        %v7008 = vpack.c.b16 %v6969, %v6968
        %v7009 = vpack.c.b16 %v6970, %v6970
        %v7010 = vpack.c.b16 %v6972, %v6971
        %v7011 = vpack.c.b16 %v6973, %v6973
        %v7012 = vpack.c.b16 %v6975, %v6974
        %v7013 = vpack.c.b16 %v6976, %v6976
        %v7014 = vpack.c.b16 %v6978, %v6977
        %v7015 = vpack.c.b16 %v6979, %v6979
        %v7016 = vpack.c.b16 %v6981, %v6980
        %v7017 = vpack.c.b16 %v6982, %v6982
        %v7018 = vpack.c.b16 %v6984, %v6983
        %v7019 = vpack.c.b16 %v6985, %v6985
        %v7020 = vpack.c.b16 %v6987, %v6986
        %v7021 = vpack.c.b16 %v6988, %v6988
        %v7022 = vpack.c.b16 %v6990, %v6989
        %v7023 = vpack.c.b16 %v6991, %v6991
        %v7025 = vshrl.u32 %v6992, 16
        %v7027 = vshll.u32 %v6992, 16
        %v7029 = vrot.slane %v7027, 1
        %v7030 = vor.u32 %v7025, %v7029
        %v7032 = vshll.u32 %v6993, 16
        %v7034 = vrot.slane %v7032, 1
        %v7035 = vsel %vm1739, %v7030, %v7034
        %v7037 = vshrl.u32 %v6994, 16
        %v7039 = vshll.u32 %v6994, 16
        %v7041 = vrot.slane %v7039, 1
        %v7042 = vor.u32 %v7037, %v7041
        %v7044 = vshll.u32 %v6995, 16
        %v7046 = vrot.slane %v7044, 1
        %v7047 = vsel %vm1739, %v7042, %v7046
        %v7049 = vshrl.u32 %v6996, 16
        %v7051 = vshll.u32 %v6996, 16
        %v7053 = vrot.slane %v7051, 1
        %v7054 = vor.u32 %v7049, %v7053
        %v7056 = vshll.u32 %v6997, 16
        %v7058 = vrot.slane %v7056, 1
        %v7059 = vsel %vm1739, %v7054, %v7058
        %v7061 = vshrl.u32 %v6998, 16
        %v7063 = vshll.u32 %v6998, 16
        %v7065 = vrot.slane %v7063, 1
        %v7066 = vor.u32 %v7061, %v7065
        %v7068 = vshll.u32 %v6999, 16
        %v7070 = vrot.slane %v7068, 1
        %v7071 = vsel %vm1739, %v7066, %v7070
        %v7073 = vshrl.u32 %v7000, 16
        %v7075 = vshll.u32 %v7000, 16
        %v7077 = vrot.slane %v7075, 1
        %v7078 = vor.u32 %v7073, %v7077
        %v7080 = vshll.u32 %v7001, 16
        %v7082 = vrot.slane %v7080, 1
        %v7083 = vsel %vm1739, %v7078, %v7082
        %v7085 = vshrl.u32 %v7002, 16
        %v7087 = vshll.u32 %v7002, 16
        %v7089 = vrot.slane %v7087, 1
        %v7090 = vor.u32 %v7085, %v7089
        %v7092 = vshll.u32 %v7003, 16
        %v7094 = vrot.slane %v7092, 1
        %v7095 = vsel %vm1739, %v7090, %v7094
        %v7097 = vshrl.u32 %v7004, 16
        %v7099 = vshll.u32 %v7004, 16
        %v7101 = vrot.slane %v7099, 1
        %v7102 = vor.u32 %v7097, %v7101
        %v7104 = vshll.u32 %v7005, 16
        %v7106 = vrot.slane %v7104, 1
        %v7107 = vsel %vm1739, %v7102, %v7106
        %v7109 = vshrl.u32 %v7006, 16
        %v7111 = vshll.u32 %v7006, 16
        %v7113 = vrot.slane %v7111, 1
        %v7114 = vor.u32 %v7109, %v7113
        %v7116 = vshll.u32 %v7007, 16
        %v7118 = vrot.slane %v7116, 1
        %v7119 = vsel %vm1739, %v7114, %v7118
        %v7121 = vshrl.u32 %v7008, 16
        %v7123 = vshll.u32 %v7008, 16
        %v7125 = vrot.slane %v7123, 1
        %v7126 = vor.u32 %v7121, %v7125
        %v7128 = vshll.u32 %v7009, 16
        %v7130 = vrot.slane %v7128, 1
        %v7131 = vsel %vm1739, %v7126, %v7130
        %v7133 = vshrl.u32 %v7010, 16
        %v7135 = vshll.u32 %v7010, 16
        %v7137 = vrot.slane %v7135, 1
        %v7138 = vor.u32 %v7133, %v7137
        %v7140 = vshll.u32 %v7011, 16
        %v7142 = vrot.slane %v7140, 1
        %v7143 = vsel %vm1739, %v7138, %v7142
        %v7145 = vshrl.u32 %v7012, 16
        %v7147 = vshll.u32 %v7012, 16
        %v7149 = vrot.slane %v7147, 1
        %v7150 = vor.u32 %v7145, %v7149
        %v7152 = vshll.u32 %v7013, 16
        %v7154 = vrot.slane %v7152, 1
        %v7155 = vsel %vm1739, %v7150, %v7154
        %v7157 = vshrl.u32 %v7014, 16
        %v7159 = vshll.u32 %v7014, 16
        %v7161 = vrot.slane %v7159, 1
        %v7162 = vor.u32 %v7157, %v7161
        %v7164 = vshll.u32 %v7015, 16
        %v7166 = vrot.slane %v7164, 1
        %v7167 = vsel %vm1739, %v7162, %v7166
        %v7169 = vshrl.u32 %v7016, 16
        %v7171 = vshll.u32 %v7016, 16
        %v7173 = vrot.slane %v7171, 1
        %v7174 = vor.u32 %v7169, %v7173
        %v7176 = vshll.u32 %v7017, 16
        %v7178 = vrot.slane %v7176, 1
        %v7179 = vsel %vm1739, %v7174, %v7178
        %v7181 = vshrl.u32 %v7018, 16
        %v7183 = vshll.u32 %v7018, 16
        %v7185 = vrot.slane %v7183, 1
        %v7186 = vor.u32 %v7181, %v7185
        %v7188 = vshll.u32 %v7019, 16
        %v7190 = vrot.slane %v7188, 1
        %v7191 = vsel %vm1739, %v7186, %v7190
        %v7193 = vshrl.u32 %v7020, 16
        %v7195 = vshll.u32 %v7020, 16
        %v7197 = vrot.slane %v7195, 1
        %v7198 = vor.u32 %v7193, %v7197
        %v7200 = vshll.u32 %v7021, 16
        %v7202 = vrot.slane %v7200, 1
        %v7203 = vsel %vm1739, %v7198, %v7202
        %v7205 = vshrl.u32 %v7022, 16
        %v7207 = vshll.u32 %v7022, 16
        %v7209 = vrot.slane %v7207, 1
        %v7210 = vor.u32 %v7205, %v7209
        %v7212 = vshll.u32 %v7023, 16
        %v7214 = vrot.slane %v7212, 1
        %v7215 = vsel %vm1739, %v7210, %v7214
        %7232 = vst [vmem:[#allocation4 + $0x20] sm:$0xff] %v7035
        %7233 = vst [vmem:[#allocation4 + $0x68] sm:$0xff] %v7047
        %7234 = vst [vmem:[#allocation4 + $0xb0] sm:$0xff] %v7059
        %7235 = vst [vmem:[#allocation4 + $0xf8] sm:$0xff] %v7071
        %7236 = vst [vmem:[#allocation4 + $0x140] sm:$0xff] %v7083
        %7237 = vst [vmem:[#allocation4 + $0x188] sm:$0xff] %v7095
        %7238 = vst [vmem:[#allocation4 + $0x1d0] sm:$0xff] %v7107
        %7239 = vst [vmem:[#allocation4 + $0x218] sm:$0xff] %v7119
        %7240 = vst [vmem:[#allocation4 + $0x260] sm:$0xff] %v7131
        %7241 = vst [vmem:[#allocation4 + $0x2a8] sm:$0xff] %v7143
        %7242 = vst [vmem:[#allocation4 + $0x2f0] sm:$0xff] %v7155
        %7243 = vst [vmem:[#allocation4 + $0x338] sm:$0xff] %v7167
        %7244 = vst [vmem:[#allocation4 + $0x380] sm:$0xff] %v7179
        %7245 = vst [vmem:[#allocation4 + $0x3c8] sm:$0xff] %v7191
        %7246 = vst [vmem:[#allocation4 + $0x410] sm:$0xff] %v7203
        %7247 = vst [vmem:[#allocation4 + $0x458] sm:$0xff] %v7215
        %v7248 = vld [vmem:[%s5791] sm:$0xe]
        %v7249 = vld [vmem:[%s5791 + $0x4] sm:$0xf]
        %v7250 = vld [vmem:[%s5791 + $0x8] sm:$0x1]
        %v7251 = vld [vmem:[%s5791 + $0xc] sm:$0xe]
        %v7252 = vld [vmem:[%s5791 + $0x10] sm:$0xf]
        %v7253 = vld [vmem:[%s5791 + $0x14] sm:$0x1]
        %v7254 = vld [vmem:[%s5791 + $0x18] sm:$0xe]
        %v7255 = vld [vmem:[%s5791 + $0x1c] sm:$0xf]
        %v7256 = vld [vmem:[%s5791 + $0x20] sm:$0x1]
        %v7257 = vld [vmem:[%s5791 + $0x24] sm:$0xe]
        %v7258 = vld [vmem:[%s5791 + $0x28] sm:$0xf]
        %v7259 = vld [vmem:[%s5791 + $0x2c] sm:$0x1]
        %v7260 = vld [vmem:[%s5791 + $0x30] sm:$0xe]
        %v7261 = vld [vmem:[%s5791 + $0x34] sm:$0xf]
        %v7262 = vld [vmem:[%s5791 + $0x38] sm:$0x1]
        %v7263 = vld [vmem:[%s5791 + $0x3c] sm:$0xe]
        %v7264 = vld [vmem:[%s5791 + $0x40] sm:$0xf]
        %v7265 = vld [vmem:[%s5791 + $0x44] sm:$0x1]
        %v7266 = vld [vmem:[%s5791 + $0x48] sm:$0xe]
        %v7267 = vld [vmem:[%s5791 + $0x4c] sm:$0xf]
        %v7268 = vld [vmem:[%s5791 + $0x50] sm:$0x1]
        %v7269 = vld [vmem:[%s5791 + $0x54] sm:$0xe]
        %v7270 = vld [vmem:[%s5791 + $0x58] sm:$0xf]
        %v7271 = vld [vmem:[%s5791 + $0x5c] sm:$0x1]
        %v7272 = vld [vmem:[%s5791 + $0x60] sm:$0xe]
        %v7273 = vld [vmem:[%s5791 + $0x64] sm:$0xf]
        %v7274 = vld [vmem:[%s5791 + $0x68] sm:$0x1]
        %v7275 = vld [vmem:[%s5791 + $0x6c] sm:$0xe]
        %v7276 = vld [vmem:[%s5791 + $0x70] sm:$0xf]
        %v7277 = vld [vmem:[%s5791 + $0x74] sm:$0x1]
        %v7278 = vld [vmem:[%s5791 + $0x78] sm:$0xe]
        %v7279 = vld [vmem:[%s5791 + $0x7c] sm:$0xf]
        %v7280 = vld [vmem:[%s5791 + $0x80] sm:$0x1]
        %v7281 = vld [vmem:[%s5791 + $0x84] sm:$0xe]
        %v7282 = vld [vmem:[%s5791 + $0x88] sm:$0xf]
        %v7283 = vld [vmem:[%s5791 + $0x8c] sm:$0x1]
        %v7284 = vld [vmem:[%s5791 + $0x90] sm:$0xe]
        %v7285 = vld [vmem:[%s5791 + $0x94] sm:$0xf]
        %v7286 = vld [vmem:[%s5791 + $0x98] sm:$0x1]
        %v7287 = vld [vmem:[%s5791 + $0x9c] sm:$0xe]
        %v7288 = vld [vmem:[%s5791 + $0xa0] sm:$0xf]
        %v7289 = vld [vmem:[%s5791 + $0xa4] sm:$0x1]
        %v7290 = vld [vmem:[%s5791 + $0xa8] sm:$0xe]
        %v7291 = vld [vmem:[%s5791 + $0xac] sm:$0xf]
        %v7292 = vld [vmem:[%s5791 + $0xb0] sm:$0x1]
        %v7293 = vld [vmem:[%s5791 + $0xb4] sm:$0xe]
        %v7294 = vld [vmem:[%s5791 + $0xb8] sm:$0xf]
        %v7295 = vld [vmem:[%s5791 + $0xbc] sm:$0x1]
        %v7344 = vunpack.c.l.b16 %v7248
        %v7345 = vunpack.c.l.b16 %v7249
        %v7346 = vunpack.c.l.b16 %v7250
        %v7347 = vunpack.c.l.b16 %v7251
        %v7348 = vunpack.c.l.b16 %v7252
        %v7349 = vunpack.c.l.b16 %v7253
        %v7350 = vunpack.c.l.b16 %v7254
        %v7351 = vunpack.c.l.b16 %v7255
        %v7352 = vunpack.c.l.b16 %v7256
        %v7353 = vunpack.c.l.b16 %v7257
        %v7354 = vunpack.c.l.b16 %v7258
        %v7355 = vunpack.c.l.b16 %v7259
        %v7356 = vunpack.c.l.b16 %v7260
        %v7357 = vunpack.c.l.b16 %v7261
        %v7358 = vunpack.c.l.b16 %v7262
        %v7359 = vunpack.c.l.b16 %v7263
        %v7360 = vunpack.c.l.b16 %v7264
        %v7361 = vunpack.c.l.b16 %v7265
        %v7362 = vunpack.c.l.b16 %v7266
        %v7363 = vunpack.c.l.b16 %v7267
        %v7364 = vunpack.c.l.b16 %v7268
        %v7365 = vunpack.c.l.b16 %v7269
        %v7366 = vunpack.c.l.b16 %v7270
        %v7367 = vunpack.c.l.b16 %v7271
        %v7368 = vunpack.c.l.b16 %v7272
        %v7369 = vunpack.c.l.b16 %v7273
        %v7370 = vunpack.c.l.b16 %v7274
        %v7371 = vunpack.c.l.b16 %v7275
        %v7372 = vunpack.c.l.b16 %v7276
        %v7373 = vunpack.c.l.b16 %v7277
        %v7374 = vunpack.c.l.b16 %v7278
        %v7375 = vunpack.c.l.b16 %v7279
        %v7376 = vunpack.c.l.b16 %v7280
        %v7377 = vunpack.c.l.b16 %v7281
        %v7378 = vunpack.c.l.b16 %v7282
        %v7379 = vunpack.c.l.b16 %v7283
        %v7380 = vunpack.c.l.b16 %v7284
        %v7381 = vunpack.c.l.b16 %v7285
        %v7382 = vunpack.c.l.b16 %v7286
        %v7383 = vunpack.c.l.b16 %v7287
        %v7384 = vunpack.c.l.b16 %v7288
        %v7385 = vunpack.c.l.b16 %v7289
        %v7386 = vunpack.c.l.b16 %v7290
        %v7387 = vunpack.c.l.b16 %v7291
        %v7388 = vunpack.c.l.b16 %v7292
        %v7389 = vunpack.c.l.b16 %v7293
        %v7390 = vunpack.c.l.b16 %v7294
        %v7391 = vunpack.c.l.b16 %v7295
        %v7392 = vpack.c.b16 %v7345, %v7344
        %v7393 = vpack.c.b16 %v7346, %v7346
        %v7394 = vpack.c.b16 %v7348, %v7347
        %v7395 = vpack.c.b16 %v7349, %v7349
        %v7396 = vpack.c.b16 %v7351, %v7350
        %v7397 = vpack.c.b16 %v7352, %v7352
        %v7398 = vpack.c.b16 %v7354, %v7353
        %v7399 = vpack.c.b16 %v7355, %v7355
        %v7400 = vpack.c.b16 %v7357, %v7356
        %v7401 = vpack.c.b16 %v7358, %v7358
        %v7402 = vpack.c.b16 %v7360, %v7359
        %v7403 = vpack.c.b16 %v7361, %v7361
        %v7404 = vpack.c.b16 %v7363, %v7362
        %v7405 = vpack.c.b16 %v7364, %v7364
        %v7406 = vpack.c.b16 %v7366, %v7365
        %v7407 = vpack.c.b16 %v7367, %v7367
        %v7408 = vpack.c.b16 %v7369, %v7368
        %v7409 = vpack.c.b16 %v7370, %v7370
        %v7410 = vpack.c.b16 %v7372, %v7371
        %v7411 = vpack.c.b16 %v7373, %v7373
        %v7412 = vpack.c.b16 %v7375, %v7374
        %v7413 = vpack.c.b16 %v7376, %v7376
        %v7414 = vpack.c.b16 %v7378, %v7377
        %v7415 = vpack.c.b16 %v7379, %v7379
        %v7416 = vpack.c.b16 %v7381, %v7380
        %v7417 = vpack.c.b16 %v7382, %v7382
        %v7418 = vpack.c.b16 %v7384, %v7383
        %v7419 = vpack.c.b16 %v7385, %v7385
        %v7420 = vpack.c.b16 %v7387, %v7386
        %v7421 = vpack.c.b16 %v7388, %v7388
        %v7422 = vpack.c.b16 %v7390, %v7389
        %v7423 = vpack.c.b16 %v7391, %v7391
        %v7424 = vrot.slane %v7392, 1
        %v7425 = vrot.slane %v7393, 1
        %v7426 = vsel %vm2140, %v7424, %v7425
        %v7427 = vrot.slane %v7394, 1
        %v7428 = vrot.slane %v7395, 1
        %v7429 = vsel %vm2140, %v7427, %v7428
        %v7430 = vrot.slane %v7396, 1
        %v7431 = vrot.slane %v7397, 1
        %v7432 = vsel %vm2140, %v7430, %v7431
        %v7433 = vrot.slane %v7398, 1
        %v7434 = vrot.slane %v7399, 1
        %v7435 = vsel %vm2140, %v7433, %v7434
        %v7436 = vrot.slane %v7400, 1
        %v7437 = vrot.slane %v7401, 1
        %v7438 = vsel %vm2140, %v7436, %v7437
        %v7439 = vrot.slane %v7402, 1
        %v7440 = vrot.slane %v7403, 1
        %v7441 = vsel %vm2140, %v7439, %v7440
        %v7442 = vrot.slane %v7404, 1
        %v7443 = vrot.slane %v7405, 1
        %v7444 = vsel %vm2140, %v7442, %v7443
        %v7445 = vrot.slane %v7406, 1
        %v7446 = vrot.slane %v7407, 1
        %v7447 = vsel %vm2140, %v7445, %v7446
        %v7448 = vrot.slane %v7408, 1
        %v7449 = vrot.slane %v7409, 1
        %v7450 = vsel %vm2140, %v7448, %v7449
        %v7451 = vrot.slane %v7410, 1
        %v7452 = vrot.slane %v7411, 1
        %v7453 = vsel %vm2140, %v7451, %v7452
        %v7454 = vrot.slane %v7412, 1
        %v7455 = vrot.slane %v7413, 1
        %v7456 = vsel %vm2140, %v7454, %v7455
        %v7457 = vrot.slane %v7414, 1
        %v7458 = vrot.slane %v7415, 1
        %v7459 = vsel %vm2140, %v7457, %v7458
        %v7460 = vrot.slane %v7416, 1
        %v7461 = vrot.slane %v7417, 1
        %v7462 = vsel %vm2140, %v7460, %v7461
        %v7463 = vrot.slane %v7418, 1
        %v7464 = vrot.slane %v7419, 1
        %v7465 = vsel %vm2140, %v7463, %v7464
        %v7466 = vrot.slane %v7420, 1
        %v7467 = vrot.slane %v7421, 1
        %v7468 = vsel %vm2140, %v7466, %v7467
        %v7469 = vrot.slane %v7422, 1
        %v7470 = vrot.slane %v7423, 1
        %v7471 = vsel %vm2140, %v7469, %v7470
        %7488 = vst [vmem:[#allocation4 + $0x28] sm:$0xff] %v7426
        %7489 = vst [vmem:[#allocation4 + $0x70] sm:$0xff] %v7429
        %7490 = vst [vmem:[#allocation4 + $0xb8] sm:$0xff] %v7432
        %7491 = vst [vmem:[#allocation4 + $0x100] sm:$0xff] %v7435
        %7492 = vst [vmem:[#allocation4 + $0x148] sm:$0xff] %v7438
        %7493 = vst [vmem:[#allocation4 + $0x190] sm:$0xff] %v7441
        %7494 = vst [vmem:[#allocation4 + $0x1d8] sm:$0xff] %v7444
        %7495 = vst [vmem:[#allocation4 + $0x220] sm:$0xff] %v7447
        %7496 = vst [vmem:[#allocation4 + $0x268] sm:$0xff] %v7450
        %7497 = vst [vmem:[#allocation4 + $0x2b0] sm:$0xff] %v7453
        %7498 = vst [vmem:[#allocation4 + $0x2f8] sm:$0xff] %v7456
        %7499 = vst [vmem:[#allocation4 + $0x340] sm:$0xff] %v7459
        %7500 = vst [vmem:[#allocation4 + $0x388] sm:$0xff] %v7462
        %7501 = vst [vmem:[#allocation4 + $0x3d0] sm:$0xff] %v7465
        %7502 = vst [vmem:[#allocation4 + $0x418] sm:$0xff] %v7468
        %7503 = vst [vmem:[#allocation4 + $0x460] sm:$0xff] %v7471
        %s7504 = scalar_lea.vmem [#allocation3], 24
        %v7505 = vld [vmem:[%s7504] sm:$0xf]
        %v7506 = vld [vmem:[%s7504 + $0x4] sm:$0xf]
        %v7507 = vld [vmem:[%s7504 + $0xc] sm:$0xf]
        %v7508 = vld [vmem:[%s7504 + $0x10] sm:$0xf]
        %v7509 = vld [vmem:[%s7504 + $0x18] sm:$0xf]
        %v7510 = vld [vmem:[%s7504 + $0x1c] sm:$0xf]
        %v7511 = vld [vmem:[%s7504 + $0x24] sm:$0xf]
        %v7512 = vld [vmem:[%s7504 + $0x28] sm:$0xf]
        %v7513 = vld [vmem:[%s7504 + $0x30] sm:$0xf]
        %v7514 = vld [vmem:[%s7504 + $0x34] sm:$0xf]
        %v7515 = vld [vmem:[%s7504 + $0x3c] sm:$0xf]
        %v7516 = vld [vmem:[%s7504 + $0x40] sm:$0xf]
        %v7517 = vld [vmem:[%s7504 + $0x48] sm:$0xf]
        %v7518 = vld [vmem:[%s7504 + $0x4c] sm:$0xf]
        %v7519 = vld [vmem:[%s7504 + $0x54] sm:$0xf]
        %v7520 = vld [vmem:[%s7504 + $0x58] sm:$0xf]
        %v7521 = vld [vmem:[%s7504 + $0x60] sm:$0xf]
        %v7522 = vld [vmem:[%s7504 + $0x64] sm:$0xf]
        %v7523 = vld [vmem:[%s7504 + $0x6c] sm:$0xf]
        %v7524 = vld [vmem:[%s7504 + $0x70] sm:$0xf]
        %v7525 = vld [vmem:[%s7504 + $0x78] sm:$0xf]
        %v7526 = vld [vmem:[%s7504 + $0x7c] sm:$0xf]
        %v7527 = vld [vmem:[%s7504 + $0x84] sm:$0xf]
        %v7528 = vld [vmem:[%s7504 + $0x88] sm:$0xf]
        %v7529 = vld [vmem:[%s7504 + $0x90] sm:$0xf]
        %v7530 = vld [vmem:[%s7504 + $0x94] sm:$0xf]
        %v7531 = vld [vmem:[%s7504 + $0x9c] sm:$0xf]
        %v7532 = vld [vmem:[%s7504 + $0xa0] sm:$0xf]
        %v7533 = vld [vmem:[%s7504 + $0xa8] sm:$0xf]
        %v7534 = vld [vmem:[%s7504 + $0xac] sm:$0xf]
        %v7535 = vld [vmem:[%s7504 + $0xb4] sm:$0xf]
        %v7536 = vld [vmem:[%s7504 + $0xb8] sm:$0xf]
        %v7569 = vunpack.c.l.b16 %v7505
        %v7570 = vunpack.c.l.b16 %v7506
        %v7571 = vunpack.c.l.b16 %v7507
        %v7572 = vunpack.c.l.b16 %v7508
        %v7573 = vunpack.c.l.b16 %v7509
        %v7574 = vunpack.c.l.b16 %v7510
        %v7575 = vunpack.c.l.b16 %v7511
        %v7576 = vunpack.c.l.b16 %v7512
        %v7577 = vunpack.c.l.b16 %v7513
        %v7578 = vunpack.c.l.b16 %v7514
        %v7579 = vunpack.c.l.b16 %v7515
        %v7580 = vunpack.c.l.b16 %v7516
        %v7581 = vunpack.c.l.b16 %v7517
        %v7582 = vunpack.c.l.b16 %v7518
        %v7583 = vunpack.c.l.b16 %v7519
        %v7584 = vunpack.c.l.b16 %v7520
        %v7585 = vunpack.c.l.b16 %v7521
        %v7586 = vunpack.c.l.b16 %v7522
        %v7587 = vunpack.c.l.b16 %v7523
        %v7588 = vunpack.c.l.b16 %v7524
        %v7589 = vunpack.c.l.b16 %v7525
        %v7590 = vunpack.c.l.b16 %v7526
        %v7591 = vunpack.c.l.b16 %v7527
        %v7592 = vunpack.c.l.b16 %v7528
        %v7593 = vunpack.c.l.b16 %v7529
        %v7594 = vunpack.c.l.b16 %v7530
        %v7595 = vunpack.c.l.b16 %v7531
        %v7596 = vunpack.c.l.b16 %v7532
        %v7597 = vunpack.c.l.b16 %v7533
        %v7598 = vunpack.c.l.b16 %v7534
        %v7599 = vunpack.c.l.b16 %v7535
        %v7600 = vunpack.c.l.b16 %v7536
        %v7601 = vpack.c.b16 %v7570, %v7569
        %v7602 = vpack.c.b16 %v7572, %v7571
        %v7603 = vpack.c.b16 %v7574, %v7573
        %v7604 = vpack.c.b16 %v7576, %v7575
        %v7605 = vpack.c.b16 %v7578, %v7577
        %v7606 = vpack.c.b16 %v7580, %v7579
        %v7607 = vpack.c.b16 %v7582, %v7581
        %v7608 = vpack.c.b16 %v7584, %v7583
        %v7609 = vpack.c.b16 %v7586, %v7585
        %v7610 = vpack.c.b16 %v7588, %v7587
        %v7611 = vpack.c.b16 %v7590, %v7589
        %v7612 = vpack.c.b16 %v7592, %v7591
        %v7613 = vpack.c.b16 %v7594, %v7593
        %v7614 = vpack.c.b16 %v7596, %v7595
        %v7615 = vpack.c.b16 %v7598, %v7597
        %v7616 = vpack.c.b16 %v7600, %v7599
        %7633 = vst [vmem:[#allocation4 + $0x30] sm:$0xff] %v7601
        %7634 = vst [vmem:[#allocation4 + $0x78] sm:$0xff] %v7602
        %7635 = vst [vmem:[#allocation4 + $0xc0] sm:$0xff] %v7603
        %7636 = vst [vmem:[#allocation4 + $0x108] sm:$0xff] %v7604
        %7637 = vst [vmem:[#allocation4 + $0x150] sm:$0xff] %v7605
        %7638 = vst [vmem:[#allocation4 + $0x198] sm:$0xff] %v7606
        %7639 = vst [vmem:[#allocation4 + $0x1e0] sm:$0xff] %v7607
        %7640 = vst [vmem:[#allocation4 + $0x228] sm:$0xff] %v7608
        %7641 = vst [vmem:[#allocation4 + $0x270] sm:$0xff] %v7609
        %7642 = vst [vmem:[#allocation4 + $0x2b8] sm:$0xff] %v7610
        %7643 = vst [vmem:[#allocation4 + $0x300] sm:$0xff] %v7611
        %7644 = vst [vmem:[#allocation4 + $0x348] sm:$0xff] %v7612
        %7645 = vst [vmem:[#allocation4 + $0x390] sm:$0xff] %v7613
        %7646 = vst [vmem:[#allocation4 + $0x3d8] sm:$0xff] %v7614
        %7647 = vst [vmem:[#allocation4 + $0x420] sm:$0xff] %v7615
        %7648 = vst [vmem:[#allocation4 + $0x468] sm:$0xff] %v7616
        %v7649 = vld [vmem:[%s7504] sm:$0xf]
        %v7650 = vld [vmem:[%s7504 + $0x4] sm:$0xf]
        %v7651 = vld [vmem:[%s7504 + $0x8] sm:$0x1]
        %v7652 = vld [vmem:[%s7504 + $0xc] sm:$0xf]
        %v7653 = vld [vmem:[%s7504 + $0x10] sm:$0xf]
        %v7654 = vld [vmem:[%s7504 + $0x14] sm:$0x1]
        %v7655 = vld [vmem:[%s7504 + $0x18] sm:$0xf]
        %v7656 = vld [vmem:[%s7504 + $0x1c] sm:$0xf]
        %v7657 = vld [vmem:[%s7504 + $0x20] sm:$0x1]
        %v7658 = vld [vmem:[%s7504 + $0x24] sm:$0xf]
        %v7659 = vld [vmem:[%s7504 + $0x28] sm:$0xf]
        %v7660 = vld [vmem:[%s7504 + $0x2c] sm:$0x1]
        %v7661 = vld [vmem:[%s7504 + $0x30] sm:$0xf]
        %v7662 = vld [vmem:[%s7504 + $0x34] sm:$0xf]
        %v7663 = vld [vmem:[%s7504 + $0x38] sm:$0x1]
        %v7664 = vld [vmem:[%s7504 + $0x3c] sm:$0xf]
        %v7665 = vld [vmem:[%s7504 + $0x40] sm:$0xf]
        %v7666 = vld [vmem:[%s7504 + $0x44] sm:$0x1]
        %v7667 = vld [vmem:[%s7504 + $0x48] sm:$0xf]
        %v7668 = vld [vmem:[%s7504 + $0x4c] sm:$0xf]
        %v7669 = vld [vmem:[%s7504 + $0x50] sm:$0x1]
        %v7670 = vld [vmem:[%s7504 + $0x54] sm:$0xf]
        %v7671 = vld [vmem:[%s7504 + $0x58] sm:$0xf]
        %v7672 = vld [vmem:[%s7504 + $0x5c] sm:$0x1]
        %v7673 = vld [vmem:[%s7504 + $0x60] sm:$0xf]
        %v7674 = vld [vmem:[%s7504 + $0x64] sm:$0xf]
        %v7675 = vld [vmem:[%s7504 + $0x68] sm:$0x1]
        %v7676 = vld [vmem:[%s7504 + $0x6c] sm:$0xf]
        %v7677 = vld [vmem:[%s7504 + $0x70] sm:$0xf]
        %v7678 = vld [vmem:[%s7504 + $0x74] sm:$0x1]
        %v7679 = vld [vmem:[%s7504 + $0x78] sm:$0xf]
        %v7680 = vld [vmem:[%s7504 + $0x7c] sm:$0xf]
        %v7681 = vld [vmem:[%s7504 + $0x80] sm:$0x1]
        %v7682 = vld [vmem:[%s7504 + $0x84] sm:$0xf]
        %v7683 = vld [vmem:[%s7504 + $0x88] sm:$0xf]
        %v7684 = vld [vmem:[%s7504 + $0x8c] sm:$0x1]
        %v7685 = vld [vmem:[%s7504 + $0x90] sm:$0xf]
        %v7686 = vld [vmem:[%s7504 + $0x94] sm:$0xf]
        %v7687 = vld [vmem:[%s7504 + $0x98] sm:$0x1]
        %v7688 = vld [vmem:[%s7504 + $0x9c] sm:$0xf]
        %v7689 = vld [vmem:[%s7504 + $0xa0] sm:$0xf]
        %v7690 = vld [vmem:[%s7504 + $0xa4] sm:$0x1]
        %v7691 = vld [vmem:[%s7504 + $0xa8] sm:$0xf]
        %v7692 = vld [vmem:[%s7504 + $0xac] sm:$0xf]
        %v7693 = vld [vmem:[%s7504 + $0xb0] sm:$0x1]
        %v7694 = vld [vmem:[%s7504 + $0xb4] sm:$0xf]
        %v7695 = vld [vmem:[%s7504 + $0xb8] sm:$0xf]
        %v7696 = vld [vmem:[%s7504 + $0xbc] sm:$0x1]
        %v7745 = vunpack.c.l.b16 %v7649
        %v7746 = vunpack.c.l.b16 %v7650
        %v7747 = vunpack.c.l.b16 %v7651
        %v7748 = vunpack.c.l.b16 %v7652
        %v7749 = vunpack.c.l.b16 %v7653
        %v7750 = vunpack.c.l.b16 %v7654
        %v7751 = vunpack.c.l.b16 %v7655
        %v7752 = vunpack.c.l.b16 %v7656
        %v7753 = vunpack.c.l.b16 %v7657
        %v7754 = vunpack.c.l.b16 %v7658
        %v7755 = vunpack.c.l.b16 %v7659
        %v7756 = vunpack.c.l.b16 %v7660
        %v7757 = vunpack.c.l.b16 %v7661
        %v7758 = vunpack.c.l.b16 %v7662
        %v7759 = vunpack.c.l.b16 %v7663
        %v7760 = vunpack.c.l.b16 %v7664
        %v7761 = vunpack.c.l.b16 %v7665
        %v7762 = vunpack.c.l.b16 %v7666
        %v7763 = vunpack.c.l.b16 %v7667
        %v7764 = vunpack.c.l.b16 %v7668
        %v7765 = vunpack.c.l.b16 %v7669
        %v7766 = vunpack.c.l.b16 %v7670
        %v7767 = vunpack.c.l.b16 %v7671
        %v7768 = vunpack.c.l.b16 %v7672
        %v7769 = vunpack.c.l.b16 %v7673
        %v7770 = vunpack.c.l.b16 %v7674
        %v7771 = vunpack.c.l.b16 %v7675
        %v7772 = vunpack.c.l.b16 %v7676
        %v7773 = vunpack.c.l.b16 %v7677
        %v7774 = vunpack.c.l.b16 %v7678
        %v7775 = vunpack.c.l.b16 %v7679
        %v7776 = vunpack.c.l.b16 %v7680
        %v7777 = vunpack.c.l.b16 %v7681
        %v7778 = vunpack.c.l.b16 %v7682
        %v7779 = vunpack.c.l.b16 %v7683
        %v7780 = vunpack.c.l.b16 %v7684
        %v7781 = vunpack.c.l.b16 %v7685
        %v7782 = vunpack.c.l.b16 %v7686
        %v7783 = vunpack.c.l.b16 %v7687
        %v7784 = vunpack.c.l.b16 %v7688
        %v7785 = vunpack.c.l.b16 %v7689
        %v7786 = vunpack.c.l.b16 %v7690
        %v7787 = vunpack.c.l.b16 %v7691
        %v7788 = vunpack.c.l.b16 %v7692
        %v7789 = vunpack.c.l.b16 %v7693
        %v7790 = vunpack.c.l.b16 %v7694
        %v7791 = vunpack.c.l.b16 %v7695
        %v7792 = vunpack.c.l.b16 %v7696
        %v7793 = vpack.c.b16 %v7746, %v7745
        %v7794 = vpack.c.b16 %v7747, %v7747
        %v7795 = vpack.c.b16 %v7749, %v7748
        %v7796 = vpack.c.b16 %v7750, %v7750
        %v7797 = vpack.c.b16 %v7752, %v7751
        %v7798 = vpack.c.b16 %v7753, %v7753
        %v7799 = vpack.c.b16 %v7755, %v7754
        %v7800 = vpack.c.b16 %v7756, %v7756
        %v7801 = vpack.c.b16 %v7758, %v7757
        %v7802 = vpack.c.b16 %v7759, %v7759
        %v7803 = vpack.c.b16 %v7761, %v7760
        %v7804 = vpack.c.b16 %v7762, %v7762
        %v7805 = vpack.c.b16 %v7764, %v7763
        %v7806 = vpack.c.b16 %v7765, %v7765
        %v7807 = vpack.c.b16 %v7767, %v7766
        %v7808 = vpack.c.b16 %v7768, %v7768
        %v7809 = vpack.c.b16 %v7770, %v7769
        %v7810 = vpack.c.b16 %v7771, %v7771
        %v7811 = vpack.c.b16 %v7773, %v7772
        %v7812 = vpack.c.b16 %v7774, %v7774
        %v7813 = vpack.c.b16 %v7776, %v7775
        %v7814 = vpack.c.b16 %v7777, %v7777
        %v7815 = vpack.c.b16 %v7779, %v7778
        %v7816 = vpack.c.b16 %v7780, %v7780
        %v7817 = vpack.c.b16 %v7782, %v7781
        %v7818 = vpack.c.b16 %v7783, %v7783
        %v7819 = vpack.c.b16 %v7785, %v7784
        %v7820 = vpack.c.b16 %v7786, %v7786
        %v7821 = vpack.c.b16 %v7788, %v7787
        %v7822 = vpack.c.b16 %v7789, %v7789
        %v7823 = vpack.c.b16 %v7791, %v7790
        %v7824 = vpack.c.b16 %v7792, %v7792
        %v7826 = vshrl.u32 %v7793, 16
        %v7828 = vshll.u32 %v7793, 16
        %v7830 = vrot.slane %v7828, 1
        %v7831 = vor.u32 %v7826, %v7830
        %v7833 = vshll.u32 %v7794, 16
        %v7835 = vrot.slane %v7833, 1
        %v7836 = vsel %vm1739, %v7831, %v7835
        %v7838 = vshrl.u32 %v7795, 16
        %v7840 = vshll.u32 %v7795, 16
        %v7842 = vrot.slane %v7840, 1
        %v7843 = vor.u32 %v7838, %v7842
        %v7845 = vshll.u32 %v7796, 16
        %v7847 = vrot.slane %v7845, 1
        %v7848 = vsel %vm1739, %v7843, %v7847
        %v7850 = vshrl.u32 %v7797, 16
        %v7852 = vshll.u32 %v7797, 16
        %v7854 = vrot.slane %v7852, 1
        %v7855 = vor.u32 %v7850, %v7854
        %v7857 = vshll.u32 %v7798, 16
        %v7859 = vrot.slane %v7857, 1
        %v7860 = vsel %vm1739, %v7855, %v7859
        %v7862 = vshrl.u32 %v7799, 16
        %v7864 = vshll.u32 %v7799, 16
        %v7866 = vrot.slane %v7864, 1
        %v7867 = vor.u32 %v7862, %v7866
        %v7869 = vshll.u32 %v7800, 16
        %v7871 = vrot.slane %v7869, 1
        %v7872 = vsel %vm1739, %v7867, %v7871
        %v7874 = vshrl.u32 %v7801, 16
        %v7876 = vshll.u32 %v7801, 16
        %v7878 = vrot.slane %v7876, 1
        %v7879 = vor.u32 %v7874, %v7878
        %v7881 = vshll.u32 %v7802, 16
        %v7883 = vrot.slane %v7881, 1
        %v7884 = vsel %vm1739, %v7879, %v7883
        %v7886 = vshrl.u32 %v7803, 16
        %v7888 = vshll.u32 %v7803, 16
        %v7890 = vrot.slane %v7888, 1
        %v7891 = vor.u32 %v7886, %v7890
        %v7893 = vshll.u32 %v7804, 16
        %v7895 = vrot.slane %v7893, 1
        %v7896 = vsel %vm1739, %v7891, %v7895
        %v7898 = vshrl.u32 %v7805, 16
        %v7900 = vshll.u32 %v7805, 16
        %v7902 = vrot.slane %v7900, 1
        %v7903 = vor.u32 %v7898, %v7902
        %v7905 = vshll.u32 %v7806, 16
        %v7907 = vrot.slane %v7905, 1
        %v7908 = vsel %vm1739, %v7903, %v7907
        %v7910 = vshrl.u32 %v7807, 16
        %v7912 = vshll.u32 %v7807, 16
        %v7914 = vrot.slane %v7912, 1
        %v7915 = vor.u32 %v7910, %v7914
        %v7917 = vshll.u32 %v7808, 16
        %v7919 = vrot.slane %v7917, 1
        %v7920 = vsel %vm1739, %v7915, %v7919
        %v7922 = vshrl.u32 %v7809, 16
        %v7924 = vshll.u32 %v7809, 16
        %v7926 = vrot.slane %v7924, 1
        %v7927 = vor.u32 %v7922, %v7926
        %v7929 = vshll.u32 %v7810, 16
        %v7931 = vrot.slane %v7929, 1
        %v7932 = vsel %vm1739, %v7927, %v7931
        %v7934 = vshrl.u32 %v7811, 16
        %v7936 = vshll.u32 %v7811, 16
        %v7938 = vrot.slane %v7936, 1
        %v7939 = vor.u32 %v7934, %v7938
        %v7941 = vshll.u32 %v7812, 16
        %v7943 = vrot.slane %v7941, 1
        %v7944 = vsel %vm1739, %v7939, %v7943
        %v7946 = vshrl.u32 %v7813, 16
        %v7948 = vshll.u32 %v7813, 16
        %v7950 = vrot.slane %v7948, 1
        %v7951 = vor.u32 %v7946, %v7950
        %v7953 = vshll.u32 %v7814, 16
        %v7955 = vrot.slane %v7953, 1
        %v7956 = vsel %vm1739, %v7951, %v7955
        %v7958 = vshrl.u32 %v7815, 16
        %v7960 = vshll.u32 %v7815, 16
        %v7962 = vrot.slane %v7960, 1
        %v7963 = vor.u32 %v7958, %v7962
        %v7965 = vshll.u32 %v7816, 16
        %v7967 = vrot.slane %v7965, 1
        %v7968 = vsel %vm1739, %v7963, %v7967
        %v7970 = vshrl.u32 %v7817, 16
        %v7972 = vshll.u32 %v7817, 16
        %v7974 = vrot.slane %v7972, 1
        %v7975 = vor.u32 %v7970, %v7974
        %v7977 = vshll.u32 %v7818, 16
        %v7979 = vrot.slane %v7977, 1
        %v7980 = vsel %vm1739, %v7975, %v7979
        %v7982 = vshrl.u32 %v7819, 16
        %v7984 = vshll.u32 %v7819, 16
        %v7986 = vrot.slane %v7984, 1
        %v7987 = vor.u32 %v7982, %v7986
        %v7989 = vshll.u32 %v7820, 16
        %v7991 = vrot.slane %v7989, 1
        %v7992 = vsel %vm1739, %v7987, %v7991
        %v7994 = vshrl.u32 %v7821, 16
        %v7996 = vshll.u32 %v7821, 16
        %v7998 = vrot.slane %v7996, 1
        %v7999 = vor.u32 %v7994, %v7998
        %v8001 = vshll.u32 %v7822, 16
        %v8003 = vrot.slane %v8001, 1
        %v8004 = vsel %vm1739, %v7999, %v8003
        %v8006 = vshrl.u32 %v7823, 16
        %v8008 = vshll.u32 %v7823, 16
        %v8010 = vrot.slane %v8008, 1
        %v8011 = vor.u32 %v8006, %v8010
        %v8013 = vshll.u32 %v7824, 16
        %v8015 = vrot.slane %v8013, 1
        %v8016 = vsel %vm1739, %v8011, %v8015
        %8033 = vst [vmem:[#allocation4 + $0x38] sm:$0xff] %v7836
        %8034 = vst [vmem:[#allocation4 + $0x80] sm:$0xff] %v7848
        %8035 = vst [vmem:[#allocation4 + $0xc8] sm:$0xff] %v7860
        %8036 = vst [vmem:[#allocation4 + $0x110] sm:$0xff] %v7872
        %8037 = vst [vmem:[#allocation4 + $0x158] sm:$0xff] %v7884
        %8038 = vst [vmem:[#allocation4 + $0x1a0] sm:$0xff] %v7896
        %8039 = vst [vmem:[#allocation4 + $0x1e8] sm:$0xff] %v7908
        %8040 = vst [vmem:[#allocation4 + $0x230] sm:$0xff] %v7920
        %8041 = vst [vmem:[#allocation4 + $0x278] sm:$0xff] %v7932
        %8042 = vst [vmem:[#allocation4 + $0x2c0] sm:$0xff] %v7944
        %8043 = vst [vmem:[#allocation4 + $0x308] sm:$0xff] %v7956
        %8044 = vst [vmem:[#allocation4 + $0x350] sm:$0xff] %v7968
        %8045 = vst [vmem:[#allocation4 + $0x398] sm:$0xff] %v7980
        %8046 = vst [vmem:[#allocation4 + $0x3e0] sm:$0xff] %v7992
        %8047 = vst [vmem:[#allocation4 + $0x428] sm:$0xff] %v8004
        %8048 = vst [vmem:[#allocation4 + $0x470] sm:$0xff] %v8016
        %v8049 = vld [vmem:[%s7504] sm:$0xe]
        %v8050 = vld [vmem:[%s7504 + $0x4] sm:$0xf]
        %v8051 = vld [vmem:[%s7504 + $0x8] sm:$0x1]
        %v8052 = vld [vmem:[%s7504 + $0xc] sm:$0xe]
        %v8053 = vld [vmem:[%s7504 + $0x10] sm:$0xf]
        %v8054 = vld [vmem:[%s7504 + $0x14] sm:$0x1]
        %v8055 = vld [vmem:[%s7504 + $0x18] sm:$0xe]
        %v8056 = vld [vmem:[%s7504 + $0x1c] sm:$0xf]
        %v8057 = vld [vmem:[%s7504 + $0x20] sm:$0x1]
        %v8058 = vld [vmem:[%s7504 + $0x24] sm:$0xe]
        %v8059 = vld [vmem:[%s7504 + $0x28] sm:$0xf]
        %v8060 = vld [vmem:[%s7504 + $0x2c] sm:$0x1]
        %v8061 = vld [vmem:[%s7504 + $0x30] sm:$0xe]
        %v8062 = vld [vmem:[%s7504 + $0x34] sm:$0xf]
        %v8063 = vld [vmem:[%s7504 + $0x38] sm:$0x1]
        %v8064 = vld [vmem:[%s7504 + $0x3c] sm:$0xe]
        %v8065 = vld [vmem:[%s7504 + $0x40] sm:$0xf]
        %v8066 = vld [vmem:[%s7504 + $0x44] sm:$0x1]
        %v8067 = vld [vmem:[%s7504 + $0x48] sm:$0xe]
        %v8068 = vld [vmem:[%s7504 + $0x4c] sm:$0xf]
        %v8069 = vld [vmem:[%s7504 + $0x50] sm:$0x1]
        %v8070 = vld [vmem:[%s7504 + $0x54] sm:$0xe]
        %v8071 = vld [vmem:[%s7504 + $0x58] sm:$0xf]
        %v8072 = vld [vmem:[%s7504 + $0x5c] sm:$0x1]
        %v8073 = vld [vmem:[%s7504 + $0x60] sm:$0xe]
        %v8074 = vld [vmem:[%s7504 + $0x64] sm:$0xf]
        %v8075 = vld [vmem:[%s7504 + $0x68] sm:$0x1]
        %v8076 = vld [vmem:[%s7504 + $0x6c] sm:$0xe]
        %v8077 = vld [vmem:[%s7504 + $0x70] sm:$0xf]
        %v8078 = vld [vmem:[%s7504 + $0x74] sm:$0x1]
        %v8079 = vld [vmem:[%s7504 + $0x78] sm:$0xe]
        %v8080 = vld [vmem:[%s7504 + $0x7c] sm:$0xf]
        %v8081 = vld [vmem:[%s7504 + $0x80] sm:$0x1]
        %v8082 = vld [vmem:[%s7504 + $0x84] sm:$0xe]
        %v8083 = vld [vmem:[%s7504 + $0x88] sm:$0xf]
        %v8084 = vld [vmem:[%s7504 + $0x8c] sm:$0x1]
        %v8085 = vld [vmem:[%s7504 + $0x90] sm:$0xe]
        %v8086 = vld [vmem:[%s7504 + $0x94] sm:$0xf]
        %v8087 = vld [vmem:[%s7504 + $0x98] sm:$0x1]
        %v8088 = vld [vmem:[%s7504 + $0x9c] sm:$0xe]
        %v8089 = vld [vmem:[%s7504 + $0xa0] sm:$0xf]
        %v8090 = vld [vmem:[%s7504 + $0xa4] sm:$0x1]
        %v8091 = vld [vmem:[%s7504 + $0xa8] sm:$0xe]
        %v8092 = vld [vmem:[%s7504 + $0xac] sm:$0xf]
        %v8093 = vld [vmem:[%s7504 + $0xb0] sm:$0x1]
        %v8094 = vld [vmem:[%s7504 + $0xb4] sm:$0xe]
        %v8095 = vld [vmem:[%s7504 + $0xb8] sm:$0xf]
        %v8096 = vld [vmem:[%s7504 + $0xbc] sm:$0x1]
        %v8145 = vunpack.c.l.b16 %v8049
        %v8146 = vunpack.c.l.b16 %v8050
        %v8147 = vunpack.c.l.b16 %v8051
        %v8148 = vunpack.c.l.b16 %v8052
        %v8149 = vunpack.c.l.b16 %v8053
        %v8150 = vunpack.c.l.b16 %v8054
        %v8151 = vunpack.c.l.b16 %v8055
        %v8152 = vunpack.c.l.b16 %v8056
        %v8153 = vunpack.c.l.b16 %v8057
        %v8154 = vunpack.c.l.b16 %v8058
        %v8155 = vunpack.c.l.b16 %v8059
        %v8156 = vunpack.c.l.b16 %v8060
        %v8157 = vunpack.c.l.b16 %v8061
        %v8158 = vunpack.c.l.b16 %v8062
        %v8159 = vunpack.c.l.b16 %v8063
        %v8160 = vunpack.c.l.b16 %v8064
        %v8161 = vunpack.c.l.b16 %v8065
        %v8162 = vunpack.c.l.b16 %v8066
        %v8163 = vunpack.c.l.b16 %v8067
        %v8164 = vunpack.c.l.b16 %v8068
        %v8165 = vunpack.c.l.b16 %v8069
        %v8166 = vunpack.c.l.b16 %v8070
        %v8167 = vunpack.c.l.b16 %v8071
        %v8168 = vunpack.c.l.b16 %v8072
        %v8169 = vunpack.c.l.b16 %v8073
        %v8170 = vunpack.c.l.b16 %v8074
        %v8171 = vunpack.c.l.b16 %v8075
        %v8172 = vunpack.c.l.b16 %v8076
        %v8173 = vunpack.c.l.b16 %v8077
        %v8174 = vunpack.c.l.b16 %v8078
        %v8175 = vunpack.c.l.b16 %v8079
        %v8176 = vunpack.c.l.b16 %v8080
        %v8177 = vunpack.c.l.b16 %v8081
        %v8178 = vunpack.c.l.b16 %v8082
        %v8179 = vunpack.c.l.b16 %v8083
        %v8180 = vunpack.c.l.b16 %v8084
        %v8181 = vunpack.c.l.b16 %v8085
        %v8182 = vunpack.c.l.b16 %v8086
        %v8183 = vunpack.c.l.b16 %v8087
        %v8184 = vunpack.c.l.b16 %v8088
        %v8185 = vunpack.c.l.b16 %v8089
        %v8186 = vunpack.c.l.b16 %v8090
        %v8187 = vunpack.c.l.b16 %v8091
        %v8188 = vunpack.c.l.b16 %v8092
        %v8189 = vunpack.c.l.b16 %v8093
        %v8190 = vunpack.c.l.b16 %v8094
        %v8191 = vunpack.c.l.b16 %v8095
        %v8192 = vunpack.c.l.b16 %v8096
        %v8193 = vpack.c.b16 %v8146, %v8145
        %v8194 = vpack.c.b16 %v8147, %v8147
        %v8195 = vpack.c.b16 %v8149, %v8148
        %v8196 = vpack.c.b16 %v8150, %v8150
        %v8197 = vpack.c.b16 %v8152, %v8151
        %v8198 = vpack.c.b16 %v8153, %v8153
        %v8199 = vpack.c.b16 %v8155, %v8154
        %v8200 = vpack.c.b16 %v8156, %v8156
        %v8201 = vpack.c.b16 %v8158, %v8157
        %v8202 = vpack.c.b16 %v8159, %v8159
        %v8203 = vpack.c.b16 %v8161, %v8160
        %v8204 = vpack.c.b16 %v8162, %v8162
        %v8205 = vpack.c.b16 %v8164, %v8163
        %v8206 = vpack.c.b16 %v8165, %v8165
        %v8207 = vpack.c.b16 %v8167, %v8166
        %v8208 = vpack.c.b16 %v8168, %v8168
        %v8209 = vpack.c.b16 %v8170, %v8169
        %v8210 = vpack.c.b16 %v8171, %v8171
        %v8211 = vpack.c.b16 %v8173, %v8172
        %v8212 = vpack.c.b16 %v8174, %v8174
        %v8213 = vpack.c.b16 %v8176, %v8175
        %v8214 = vpack.c.b16 %v8177, %v8177
        %v8215 = vpack.c.b16 %v8179, %v8178
        %v8216 = vpack.c.b16 %v8180, %v8180
        %v8217 = vpack.c.b16 %v8182, %v8181
        %v8218 = vpack.c.b16 %v8183, %v8183
        %v8219 = vpack.c.b16 %v8185, %v8184
        %v8220 = vpack.c.b16 %v8186, %v8186
        %v8221 = vpack.c.b16 %v8188, %v8187
        %v8222 = vpack.c.b16 %v8189, %v8189
        %v8223 = vpack.c.b16 %v8191, %v8190
        %v8224 = vpack.c.b16 %v8192, %v8192
        %v8225 = vrot.slane %v8193, 1
        %v8226 = vrot.slane %v8194, 1
        %v8227 = vsel %vm2140, %v8225, %v8226
        %v8228 = vrot.slane %v8195, 1
        %v8229 = vrot.slane %v8196, 1
        %v8230 = vsel %vm2140, %v8228, %v8229
        %v8231 = vrot.slane %v8197, 1
        %v8232 = vrot.slane %v8198, 1
        %v8233 = vsel %vm2140, %v8231, %v8232
        %v8234 = vrot.slane %v8199, 1
        %v8235 = vrot.slane %v8200, 1
        %v8236 = vsel %vm2140, %v8234, %v8235
        %v8237 = vrot.slane %v8201, 1
        %v8238 = vrot.slane %v8202, 1
        %v8239 = vsel %vm2140, %v8237, %v8238
        %v8240 = vrot.slane %v8203, 1
        %v8241 = vrot.slane %v8204, 1
        %v8242 = vsel %vm2140, %v8240, %v8241
        %v8243 = vrot.slane %v8205, 1
        %v8244 = vrot.slane %v8206, 1
        %v8245 = vsel %vm2140, %v8243, %v8244
        %v8246 = vrot.slane %v8207, 1
        %v8247 = vrot.slane %v8208, 1
        %v8248 = vsel %vm2140, %v8246, %v8247
        %v8249 = vrot.slane %v8209, 1
        %v8250 = vrot.slane %v8210, 1
        %v8251 = vsel %vm2140, %v8249, %v8250
        %v8252 = vrot.slane %v8211, 1
        %v8253 = vrot.slane %v8212, 1
        %v8254 = vsel %vm2140, %v8252, %v8253
        %v8255 = vrot.slane %v8213, 1
        %v8256 = vrot.slane %v8214, 1
        %v8257 = vsel %vm2140, %v8255, %v8256
        %v8258 = vrot.slane %v8215, 1
        %v8259 = vrot.slane %v8216, 1
        %v8260 = vsel %vm2140, %v8258, %v8259
        %v8261 = vrot.slane %v8217, 1
        %v8262 = vrot.slane %v8218, 1
        %v8263 = vsel %vm2140, %v8261, %v8262
        %v8264 = vrot.slane %v8219, 1
        %v8265 = vrot.slane %v8220, 1
        %v8266 = vsel %vm2140, %v8264, %v8265
        %v8267 = vrot.slane %v8221, 1
        %v8268 = vrot.slane %v8222, 1
        %v8269 = vsel %vm2140, %v8267, %v8268
        %v8270 = vrot.slane %v8223, 1
        %v8271 = vrot.slane %v8224, 1
        %v8272 = vsel %vm2140, %v8270, %v8271
        %8289 = vst [vmem:[#allocation4 + $0x40] sm:$0xff] %v8227
        %8290 = vst [vmem:[#allocation4 + $0x88] sm:$0xff] %v8230
        %8291 = vst [vmem:[#allocation4 + $0xd0] sm:$0xff] %v8233
        %8292 = vst [vmem:[#allocation4 + $0x118] sm:$0xff] %v8236
        %8293 = vst [vmem:[#allocation4 + $0x160] sm:$0xff] %v8239
        %8294 = vst [vmem:[#allocation4 + $0x1a8] sm:$0xff] %v8242
        %8295 = vst [vmem:[#allocation4 + $0x1f0] sm:$0xff] %v8245
        %8296 = vst [vmem:[#allocation4 + $0x238] sm:$0xff] %v8248
        %8297 = vst [vmem:[#allocation4 + $0x280] sm:$0xff] %v8251
        %8298 = vst [vmem:[#allocation4 + $0x2c8] sm:$0xff] %v8254
        %8299 = vst [vmem:[#allocation4 + $0x310] sm:$0xff] %v8257
        %8300 = vst [vmem:[#allocation4 + $0x358] sm:$0xff] %v8260
        %8301 = vst [vmem:[#allocation4 + $0x3a0] sm:$0xff] %v8263
        %8302 = vst [vmem:[#allocation4 + $0x3e8] sm:$0xff] %v8266
        %8303 = vst [vmem:[#allocation4 + $0x430] sm:$0xff] %v8269
        %8304 = vst [vmem:[#allocation4 + $0x478] sm:$0xff] %v8272
        %v8305 = vld [vmem:[#allocation4] sm:$0xff]
        %v8306 = vld [vmem:[#allocation4 + $0x8] sm:$0xff]
        %v8307 = vld [vmem:[#allocation4 + $0x10] sm:$0xff]
        %v8308 = vld [vmem:[#allocation4 + $0x18] sm:$0xff]
        %v8309 = vld [vmem:[#allocation4 + $0x20] sm:$0xff]
        %v8310 = vld [vmem:[#allocation4 + $0x28] sm:$0xff]
        %v8311 = vld [vmem:[#allocation4 + $0x30] sm:$0xff]
        %v8312 = vld [vmem:[#allocation4 + $0x38] sm:$0xff]
        %v8313 = vld [vmem:[#allocation4 + $0x40] sm:$0xff]
        %v8314 = vld [vmem:[#allocation4 + $0x48] sm:$0xff]
        %v8315 = vld [vmem:[#allocation4 + $0x50] sm:$0xff]
        %v8316 = vld [vmem:[#allocation4 + $0x58] sm:$0xff]
        %v8317 = vld [vmem:[#allocation4 + $0x60] sm:$0xff]
        %v8318 = vld [vmem:[#allocation4 + $0x68] sm:$0xff]
        %v8319 = vld [vmem:[#allocation4 + $0x70] sm:$0xff]
        %v8320 = vld [vmem:[#allocation4 + $0x78] sm:$0xff]
        %v8321 = vld [vmem:[#allocation4 + $0x80] sm:$0xff]
        %v8322 = vld [vmem:[#allocation4 + $0x88] sm:$0xff]
        %v8323 = vld [vmem:[#allocation4 + $0x90] sm:$0xff]
        %v8324 = vld [vmem:[#allocation4 + $0x98] sm:$0xff]
        %v8325 = vld [vmem:[#allocation4 + $0xa0] sm:$0xff]
        %v8326 = vld [vmem:[#allocation4 + $0xa8] sm:$0xff]
        %v8327 = vld [vmem:[#allocation4 + $0xb0] sm:$0xff]
        %v8328 = vld [vmem:[#allocation4 + $0xb8] sm:$0xff]
        %v8329 = vld [vmem:[#allocation4 + $0xc0] sm:$0xff]
        %v8330 = vld [vmem:[#allocation4 + $0xc8] sm:$0xff]
        %v8331 = vld [vmem:[#allocation4 + $0xd0] sm:$0xff]
        %v8332 = vld [vmem:[#allocation4 + $0xd8] sm:$0xff]
        %v8333 = vld [vmem:[#allocation4 + $0xe0] sm:$0xff]
        %v8334 = vld [vmem:[#allocation4 + $0xe8] sm:$0xff]
        %v8335 = vld [vmem:[#allocation4 + $0xf0] sm:$0xff]
        %v8336 = vld [vmem:[#allocation4 + $0xf8] sm:$0xff]
        %v8337 = vld [vmem:[#allocation4 + $0x100] sm:$0xff]
        %v8338 = vld [vmem:[#allocation4 + $0x108] sm:$0xff]
        %v8339 = vld [vmem:[#allocation4 + $0x110] sm:$0xff]
        %v8340 = vld [vmem:[#allocation4 + $0x118] sm:$0xff]
        %v8341 = vld [vmem:[#allocation4 + $0x120] sm:$0xff]
        %v8342 = vld [vmem:[#allocation4 + $0x128] sm:$0xff]
        %v8343 = vld [vmem:[#allocation4 + $0x130] sm:$0xff]
        %v8344 = vld [vmem:[#allocation4 + $0x138] sm:$0xff]
        %v8345 = vld [vmem:[#allocation4 + $0x140] sm:$0xff]
        %v8346 = vld [vmem:[#allocation4 + $0x148] sm:$0xff]
        %v8347 = vld [vmem:[#allocation4 + $0x150] sm:$0xff]
        %v8348 = vld [vmem:[#allocation4 + $0x158] sm:$0xff]
        %v8349 = vld [vmem:[#allocation4 + $0x160] sm:$0xff]
        %v8350 = vld [vmem:[#allocation4 + $0x168] sm:$0xff]
        %v8351 = vld [vmem:[#allocation4 + $0x170] sm:$0xff]
        %v8352 = vld [vmem:[#allocation4 + $0x178] sm:$0xff]
        %v8353 = vld [vmem:[#allocation4 + $0x180] sm:$0xff]
        %v8354 = vld [vmem:[#allocation4 + $0x188] sm:$0xff]
        %v8355 = vld [vmem:[#allocation4 + $0x190] sm:$0xff]
        %v8356 = vld [vmem:[#allocation4 + $0x198] sm:$0xff]
        %v8357 = vld [vmem:[#allocation4 + $0x1a0] sm:$0xff]
        %v8358 = vld [vmem:[#allocation4 + $0x1a8] sm:$0xff]
        %v8359 = vld [vmem:[#allocation4 + $0x1b0] sm:$0xff]
        %v8360 = vld [vmem:[#allocation4 + $0x1b8] sm:$0xff]
        %v8361 = vld [vmem:[#allocation4 + $0x1c0] sm:$0xff]
        %v8362 = vld [vmem:[#allocation4 + $0x1c8] sm:$0xff]
        %v8363 = vld [vmem:[#allocation4 + $0x1d0] sm:$0xff]
        %v8364 = vld [vmem:[#allocation4 + $0x1d8] sm:$0xff]
        %v8365 = vld [vmem:[#allocation4 + $0x1e0] sm:$0xff]
        %v8366 = vld [vmem:[#allocation4 + $0x1e8] sm:$0xff]
        %v8367 = vld [vmem:[#allocation4 + $0x1f0] sm:$0xff]
        %v8368 = vld [vmem:[#allocation4 + $0x1f8] sm:$0xff]
        %v8369 = vld [vmem:[#allocation4 + $0x200] sm:$0xff]
        %v8370 = vld [vmem:[#allocation4 + $0x208] sm:$0xff]
        %v8371 = vld [vmem:[#allocation4 + $0x210] sm:$0xff]
        %v8372 = vld [vmem:[#allocation4 + $0x218] sm:$0xff]
        %v8373 = vld [vmem:[#allocation4 + $0x220] sm:$0xff]
        %v8374 = vld [vmem:[#allocation4 + $0x228] sm:$0xff]
        %v8375 = vld [vmem:[#allocation4 + $0x230] sm:$0xff]
        %v8376 = vld [vmem:[#allocation4 + $0x238] sm:$0xff]
        %v8377 = vld [vmem:[#allocation4 + $0x240] sm:$0xff]
        %v8378 = vld [vmem:[#allocation4 + $0x248] sm:$0xff]
        %v8379 = vld [vmem:[#allocation4 + $0x250] sm:$0xff]
        %v8380 = vld [vmem:[#allocation4 + $0x258] sm:$0xff]
        %v8381 = vld [vmem:[#allocation4 + $0x260] sm:$0xff]
        %v8382 = vld [vmem:[#allocation4 + $0x268] sm:$0xff]
        %v8383 = vld [vmem:[#allocation4 + $0x270] sm:$0xff]
        %v8384 = vld [vmem:[#allocation4 + $0x278] sm:$0xff]
        %v8385 = vld [vmem:[#allocation4 + $0x280] sm:$0xff]
        %v8386 = vld [vmem:[#allocation4 + $0x288] sm:$0xff]
        %v8387 = vld [vmem:[#allocation4 + $0x290] sm:$0xff]
        %v8388 = vld [vmem:[#allocation4 + $0x298] sm:$0xff]
        %v8389 = vld [vmem:[#allocation4 + $0x2a0] sm:$0xff]
        %v8390 = vld [vmem:[#allocation4 + $0x2a8] sm:$0xff]
        %v8391 = vld [vmem:[#allocation4 + $0x2b0] sm:$0xff]
        %v8392 = vld [vmem:[#allocation4 + $0x2b8] sm:$0xff]
        %v8393 = vld [vmem:[#allocation4 + $0x2c0] sm:$0xff]
        %v8394 = vld [vmem:[#allocation4 + $0x2c8] sm:$0xff]
        %v8395 = vld [vmem:[#allocation4 + $0x2d0] sm:$0xff]
        %v8396 = vld [vmem:[#allocation4 + $0x2d8] sm:$0xff]
        %v8397 = vld [vmem:[#allocation4 + $0x2e0] sm:$0xff]
        %v8398 = vld [vmem:[#allocation4 + $0x2e8] sm:$0xff]
        %v8399 = vld [vmem:[#allocation4 + $0x2f0] sm:$0xff]
        %v8400 = vld [vmem:[#allocation4 + $0x2f8] sm:$0xff]
        %v8401 = vld [vmem:[#allocation4 + $0x300] sm:$0xff]
        %v8402 = vld [vmem:[#allocation4 + $0x308] sm:$0xff]
        %v8403 = vld [vmem:[#allocation4 + $0x310] sm:$0xff]
        %v8404 = vld [vmem:[#allocation4 + $0x318] sm:$0xff]
        %v8405 = vld [vmem:[#allocation4 + $0x320] sm:$0xff]
        %v8406 = vld [vmem:[#allocation4 + $0x328] sm:$0xff]
        %v8407 = vld [vmem:[#allocation4 + $0x330] sm:$0xff]
        %v8408 = vld [vmem:[#allocation4 + $0x338] sm:$0xff]
        %v8409 = vld [vmem:[#allocation4 + $0x340] sm:$0xff]
        %v8410 = vld [vmem:[#allocation4 + $0x348] sm:$0xff]
        %v8411 = vld [vmem:[#allocation4 + $0x350] sm:$0xff]
        %v8412 = vld [vmem:[#allocation4 + $0x358] sm:$0xff]
        %v8413 = vld [vmem:[#allocation4 + $0x360] sm:$0xff]
        %v8414 = vld [vmem:[#allocation4 + $0x368] sm:$0xff]
        %v8415 = vld [vmem:[#allocation4 + $0x370] sm:$0xff]
        %v8416 = vld [vmem:[#allocation4 + $0x378] sm:$0xff]
        %v8417 = vld [vmem:[#allocation4 + $0x380] sm:$0xff]
        %v8418 = vld [vmem:[#allocation4 + $0x388] sm:$0xff]
        %v8419 = vld [vmem:[#allocation4 + $0x390] sm:$0xff]
        %v8420 = vld [vmem:[#allocation4 + $0x398] sm:$0xff]
        %v8421 = vld [vmem:[#allocation4 + $0x3a0] sm:$0xff]
        %v8422 = vld [vmem:[#allocation4 + $0x3a8] sm:$0xff]
        %v8423 = vld [vmem:[#allocation4 + $0x3b0] sm:$0xff]
        %v8424 = vld [vmem:[#allocation4 + $0x3b8] sm:$0xff]
        %v8425 = vld [vmem:[#allocation4 + $0x3c0] sm:$0xff]
        %v8426 = vld [vmem:[#allocation4 + $0x3c8] sm:$0xff]
        %v8427 = vld [vmem:[#allocation4 + $0x3d0] sm:$0xff]
        %v8428 = vld [vmem:[#allocation4 + $0x3d8] sm:$0xff]
        %v8429 = vld [vmem:[#allocation4 + $0x3e0] sm:$0xff]
        %v8430 = vld [vmem:[#allocation4 + $0x3e8] sm:$0xff]
        %v8431 = vld [vmem:[#allocation4 + $0x3f0] sm:$0xff]
        %v8432 = vld [vmem:[#allocation4 + $0x3f8] sm:$0xff]
        %v8433 = vld [vmem:[#allocation4 + $0x400] sm:$0xff]
        %v8434 = vld [vmem:[#allocation4 + $0x408] sm:$0xff]
        %v8435 = vld [vmem:[#allocation4 + $0x410] sm:$0xff]
        %v8436 = vld [vmem:[#allocation4 + $0x418] sm:$0xff]
        %v8437 = vld [vmem:[#allocation4 + $0x420] sm:$0xff]
        %v8438 = vld [vmem:[#allocation4 + $0x428] sm:$0xff]
        %v8439 = vld [vmem:[#allocation4 + $0x430] sm:$0xff]
        %v8440 = vld [vmem:[#allocation4 + $0x438] sm:$0xff]
        %v8441 = vld [vmem:[#allocation4 + $0x440] sm:$0xff]
        %v8442 = vld [vmem:[#allocation4 + $0x448] sm:$0xff]
        %v8443 = vld [vmem:[#allocation4 + $0x450] sm:$0xff]
        %v8444 = vld [vmem:[#allocation4 + $0x458] sm:$0xff]
        %v8445 = vld [vmem:[#allocation4 + $0x460] sm:$0xff]
        %v8446 = vld [vmem:[#allocation4 + $0x468] sm:$0xff]
        %v8447 = vld [vmem:[#allocation4 + $0x470] sm:$0xff]
        %v8448 = vld [vmem:[#allocation4 + $0x478] sm:$0xff]
        %v8593 = vunpack.c.l.b16 %v1271
        %v8594 = vunpack.c.l.b16 %v1272
        %v8595 = vunpack.c.l.b16 %v1273
        %v8596 = vunpack.c.l.b16 %v1274
        %v8597 = vunpack.c.l.b16 %v1275
        %v8598 = vunpack.c.l.b16 %v1276
        %v8599 = vunpack.c.l.b16 %v1277
        %v8600 = vunpack.c.l.b16 %v1278
        %v8601 = vunpack.c.l.b16 %v1279
        %v8602 = vunpack.c.l.b16 %v1280
        %v8603 = vunpack.c.l.b16 %v1281
        %v8604 = vunpack.c.l.b16 %v1282
        %v8605 = vunpack.c.l.b16 %v1283
        %v8606 = vunpack.c.l.b16 %v1284
        %v8607 = vunpack.c.l.b16 %v1285
        %v8608 = vunpack.c.l.b16 %v1286
        %v8609 = vunpack.c.l.b16 %v1287
        %v8610 = vunpack.c.l.b16 %v1288
        %v8611 = vunpack.c.l.b16 %v1289
        %v8612 = vunpack.c.l.b16 %v1290
        %v8613 = vunpack.c.l.b16 %v1291
        %v8614 = vunpack.c.l.b16 %v1292
        %v8615 = vunpack.c.l.b16 %v1293
        %v8616 = vunpack.c.l.b16 %v1294
        %v8617 = vunpack.c.l.b16 %v1295
        %v8618 = vunpack.c.l.b16 %v1296
        %v8619 = vunpack.c.l.b16 %v1297
        %v8620 = vunpack.c.l.b16 %v1298
        %v8621 = vunpack.c.l.b16 %v1299
        %v8622 = vunpack.c.l.b16 %v1300
        %v8623 = vunpack.c.l.b16 %v1301
        %v8624 = vunpack.c.l.b16 %v1302
        %v8625 = vunpack.c.l.b16 %v1303
        %v8626 = vunpack.c.l.b16 %v1304
        %v8627 = vunpack.c.l.b16 %v1305
        %v8628 = vunpack.c.l.b16 %v1306
        %v8629 = vunpack.c.l.b16 %v1307
        %v8630 = vunpack.c.l.b16 %v1308
        %v8631 = vunpack.c.l.b16 %v1309
        %v8632 = vunpack.c.l.b16 %v1310
        %v8633 = vunpack.c.l.b16 %v1311
        %v8634 = vunpack.c.l.b16 %v1312
        %v8635 = vunpack.c.l.b16 %v1313
        %v8636 = vunpack.c.l.b16 %v1314
        %v8637 = vunpack.c.l.b16 %v1315
        %v8638 = vunpack.c.l.b16 %v1316
        %v8639 = vunpack.c.l.b16 %v1317
        %v8640 = vunpack.c.l.b16 %v1318
        %v8641 = vunpack.c.l.b16 %v1319
        %v8642 = vunpack.c.l.b16 %v1320
        %v8643 = vunpack.c.l.b16 %v1321
        %v8644 = vunpack.c.l.b16 %v1322
        %v8645 = vunpack.c.l.b16 %v1323
        %v8646 = vunpack.c.l.b16 %v1324
        %v8647 = vunpack.c.l.b16 %v1325
        %v8648 = vunpack.c.l.b16 %v1326
        %v8649 = vunpack.c.l.b16 %v1327
        %v8650 = vunpack.c.l.b16 %v1328
        %v8651 = vunpack.c.l.b16 %v1329
        %v8652 = vunpack.c.l.b16 %v1330
        %v8653 = vunpack.c.l.b16 %v1331
        %v8654 = vunpack.c.l.b16 %v1332
        %v8655 = vunpack.c.l.b16 %v1333
        %v8656 = vunpack.c.l.b16 %v1334
        %v8657 = vunpack.c.l.b16 %v1335
        %v8658 = vunpack.c.l.b16 %v1336
        %v8659 = vunpack.c.l.b16 %v1337
        %v8660 = vunpack.c.l.b16 %v1338
        %v8661 = vunpack.c.l.b16 %v1339
        %v8662 = vunpack.c.l.b16 %v1340
        %v8663 = vunpack.c.l.b16 %v1341
        %v8664 = vunpack.c.l.b16 %v1342
        %v8665 = vunpack.c.l.b16 %v1343
        %v8666 = vunpack.c.l.b16 %v1344
        %v8667 = vunpack.c.l.b16 %v1345
        %v8668 = vunpack.c.l.b16 %v1346
        %v8669 = vunpack.c.l.b16 %v1347
        %v8670 = vunpack.c.l.b16 %v1348
        %v8671 = vunpack.c.l.b16 %v1349
        %v8672 = vunpack.c.l.b16 %v1350
        %v8673 = vunpack.c.l.b16 %v1351
        %v8674 = vunpack.c.l.b16 %v1352
        %v8675 = vunpack.c.l.b16 %v1353
        %v8676 = vunpack.c.l.b16 %v1354
        %v8677 = vunpack.c.l.b16 %v1355
        %v8678 = vunpack.c.l.b16 %v1356
        %v8679 = vunpack.c.l.b16 %v1357
        %v8680 = vunpack.c.l.b16 %v1358
        %v8681 = vunpack.c.l.b16 %v1359
        %v8682 = vunpack.c.l.b16 %v1360
        %v8683 = vunpack.c.l.b16 %v1361
        %v8684 = vunpack.c.l.b16 %v1362
        %v8685 = vunpack.c.l.b16 %v1363
        %v8686 = vunpack.c.l.b16 %v1364
        %v8687 = vunpack.c.l.b16 %v1365
        %v8688 = vunpack.c.l.b16 %v1366
        %v8689 = vunpack.c.l.b16 %v1367
        %v8690 = vunpack.c.l.b16 %v1368
        %v8691 = vunpack.c.l.b16 %v1369
        %v8692 = vunpack.c.l.b16 %v1370
        %v8693 = vunpack.c.l.b16 %v1371
        %v8694 = vunpack.c.l.b16 %v1372
        %v8695 = vunpack.c.l.b16 %v1373
        %v8696 = vunpack.c.l.b16 %v1374
        %v8697 = vunpack.c.l.b16 %v1375
        %v8698 = vunpack.c.l.b16 %v1376
        %v8699 = vunpack.c.l.b16 %v1377
        %v8700 = vunpack.c.l.b16 %v1378
        %v8701 = vunpack.c.l.b16 %v1379
        %v8702 = vunpack.c.l.b16 %v1380
        %v8703 = vunpack.c.l.b16 %v1381
        %v8704 = vunpack.c.l.b16 %v1382
        %v8705 = vunpack.c.l.b16 %v1383
        %v8706 = vunpack.c.l.b16 %v1384
        %v8707 = vunpack.c.l.b16 %v1385
        %v8708 = vunpack.c.l.b16 %v1386
        %v8709 = vunpack.c.l.b16 %v1387
        %v8710 = vunpack.c.l.b16 %v1388
        %v8711 = vunpack.c.l.b16 %v1389
        %v8712 = vunpack.c.l.b16 %v1390
        %v8713 = vunpack.c.l.b16 %v1391
        %v8714 = vunpack.c.l.b16 %v1392
        %v8715 = vunpack.c.l.b16 %v1393
        %v8716 = vunpack.c.l.b16 %v1394
        %v8717 = vunpack.c.l.b16 %v1395
        %v8718 = vunpack.c.l.b16 %v1396
        %v8719 = vunpack.c.l.b16 %v1397
        %v8720 = vunpack.c.l.b16 %v1398
        %v8721 = vunpack.c.l.b16 %v1399
        %v8722 = vunpack.c.l.b16 %v1400
        %v8723 = vunpack.c.l.b16 %v1401
        %v8724 = vunpack.c.l.b16 %v1402
        %v8725 = vunpack.c.l.b16 %v1403
        %v8726 = vunpack.c.l.b16 %v1404
        %v8727 = vunpack.c.l.b16 %v1405
        %v8728 = vunpack.c.l.b16 %v1406
        %v8729 = vunpack.c.l.b16 %v1407
        %v8730 = vunpack.c.l.b16 %v1408
        %v8731 = vunpack.c.l.b16 %v1409
        %v8732 = vunpack.c.l.b16 %v1410
        %v8733 = vunpack.c.l.b16 %v1411
        %v8734 = vunpack.c.l.b16 %v1412
        %v8735 = vunpack.c.l.b16 %v1413
        %v8736 = vunpack.c.l.b16 %v1414
        %v8737 = vpack.c.b16 %v8594, %v8593
        %v8738 = vpack.c.b16 %v8596, %v8595
        %v8739 = vpack.c.b16 %v8598, %v8597
        %v8740 = vpack.c.b16 %v8600, %v8599
        %v8741 = vpack.c.b16 %v8602, %v8601
        %v8742 = vpack.c.b16 %v8604, %v8603
        %v8743 = vpack.c.b16 %v8606, %v8605
        %v8744 = vpack.c.b16 %v8608, %v8607
        %v8745 = vpack.c.b16 %v8610, %v8609
        %v8746 = vpack.c.b16 %v8612, %v8611
        %v8747 = vpack.c.b16 %v8614, %v8613
        %v8748 = vpack.c.b16 %v8616, %v8615
        %v8749 = vpack.c.b16 %v8618, %v8617
        %v8750 = vpack.c.b16 %v8620, %v8619
        %v8751 = vpack.c.b16 %v8622, %v8621
        %v8752 = vpack.c.b16 %v8624, %v8623
        %v8753 = vpack.c.b16 %v8626, %v8625
        %v8754 = vpack.c.b16 %v8628, %v8627
        %v8755 = vpack.c.b16 %v8630, %v8629
        %v8756 = vpack.c.b16 %v8632, %v8631
        %v8757 = vpack.c.b16 %v8634, %v8633
        %v8758 = vpack.c.b16 %v8636, %v8635
        %v8759 = vpack.c.b16 %v8638, %v8637
        %v8760 = vpack.c.b16 %v8640, %v8639
        %v8761 = vpack.c.b16 %v8642, %v8641
        %v8762 = vpack.c.b16 %v8644, %v8643
        %v8763 = vpack.c.b16 %v8646, %v8645
        %v8764 = vpack.c.b16 %v8648, %v8647
        %v8765 = vpack.c.b16 %v8650, %v8649
        %v8766 = vpack.c.b16 %v8652, %v8651
        %v8767 = vpack.c.b16 %v8654, %v8653
        %v8768 = vpack.c.b16 %v8656, %v8655
        %v8769 = vpack.c.b16 %v8658, %v8657
        %v8770 = vpack.c.b16 %v8660, %v8659
        %v8771 = vpack.c.b16 %v8662, %v8661
        %v8772 = vpack.c.b16 %v8664, %v8663
        %v8773 = vpack.c.b16 %v8666, %v8665
        %v8774 = vpack.c.b16 %v8668, %v8667
        %v8775 = vpack.c.b16 %v8670, %v8669
        %v8776 = vpack.c.b16 %v8672, %v8671
        %v8777 = vpack.c.b16 %v8674, %v8673
        %v8778 = vpack.c.b16 %v8676, %v8675
        %v8779 = vpack.c.b16 %v8678, %v8677
        %v8780 = vpack.c.b16 %v8680, %v8679
        %v8781 = vpack.c.b16 %v8682, %v8681
        %v8782 = vpack.c.b16 %v8684, %v8683
        %v8783 = vpack.c.b16 %v8686, %v8685
        %v8784 = vpack.c.b16 %v8688, %v8687
        %v8785 = vpack.c.b16 %v8690, %v8689
        %v8786 = vpack.c.b16 %v8692, %v8691
        %v8787 = vpack.c.b16 %v8694, %v8693
        %v8788 = vpack.c.b16 %v8696, %v8695
        %v8789 = vpack.c.b16 %v8698, %v8697
        %v8790 = vpack.c.b16 %v8700, %v8699
        %v8791 = vpack.c.b16 %v8702, %v8701
        %v8792 = vpack.c.b16 %v8704, %v8703
        %v8793 = vpack.c.b16 %v8706, %v8705
        %v8794 = vpack.c.b16 %v8708, %v8707
        %v8795 = vpack.c.b16 %v8710, %v8709
        %v8796 = vpack.c.b16 %v8712, %v8711
        %v8797 = vpack.c.b16 %v8714, %v8713
        %v8798 = vpack.c.b16 %v8716, %v8715
        %v8799 = vpack.c.b16 %v8718, %v8717
        %v8800 = vpack.c.b16 %v8720, %v8719
        %v8801 = vpack.c.b16 %v8722, %v8721
        %v8802 = vpack.c.b16 %v8724, %v8723
        %v8803 = vpack.c.b16 %v8726, %v8725
        %v8804 = vpack.c.b16 %v8728, %v8727
        %v8805 = vpack.c.b16 %v8730, %v8729
        %v8806 = vpack.c.b16 %v8732, %v8731
        %v8807 = vpack.c.b16 %v8734, %v8733
        %v8808 = vpack.c.b16 %v8736, %v8735
        %8881 = vmatprep.subr.bf16.mxu0 0
        %8882 = vmatpush1.bf16.msra.mxu0 %v8737
        %8883 = vmatprep.subr.bf16.mxu0 0
        %8884 = vmatpush1.bf16.msra.mxu0 %v8738
        %8885 = vmatprep.subr.bf16.mxu0 0
        %8886 = vmatpush1.bf16.msra.mxu0 %v8739
        %8887 = vmatprep.subr.bf16.mxu0 0
        %8888 = vmatpush1.bf16.msra.mxu0 %v8740
        %8889 = vmatprep.subr.bf16.mxu0 0
        %8890 = vmatpush1.bf16.msra.mxu0 %v8741
        %8891 = vmatprep.subr.bf16.mxu0 0
        %8892 = vmatpush1.bf16.msra.mxu0 %v8742
        %8893 = vmatprep.subr.bf16.mxu0 0
        %8894 = vmatpush1.bf16.msra.mxu0 %v8743
        %8895 = vmatprep.subr.bf16.mxu0 0
        %8896 = vmatpush1.bf16.msra.mxu0 %v8744
        %8897 = vmatprep.subr.bf16.mxu0 0
        %8898 = vmatpush1.bf16.msra.mxu0 %v8745
        %8899 = vmatprep.subr.bf16.mxu0 0
        %8900 = vmatpush1.bf16.msra.mxu0 %v8746
        %8901 = vmatprep.subr.bf16.mxu0 0
        %8902 = vmatpush1.bf16.msra.mxu0 %v8747
        %8903 = vmatprep.subr.bf16.mxu0 0
        %8904 = vmatpush1.bf16.msra.mxu0 %v8748
        %8905 = vmatprep.subr.bf16.mxu0 0
        %8906 = vmatpush1.bf16.msra.mxu0 %v8749
        %8907 = vmatprep.subr.bf16.mxu0 0
        %8908 = vmatpush1.bf16.msra.mxu0 %v8750
        %8909 = vmatprep.subr.bf16.mxu0 0
        %8910 = vmatpush1.bf16.msra.mxu0 %v8751
        %8911 = vmatprep.subr.bf16.mxu0 0
        %8912 = vmatpush1.bf16.msra.mxu0 %v8752
        %8913 = vmatprep.mubr.bf16.mxu0 %v8306
        %8914 = vmatmul.mubr.bf16.gmra.mrb[0].mxu0 %v8305
        %v8915 = vpop.f32.mrb[0].mxu0
        %v8916 = vadd.f32 0.0, %v8915
        %v8917 = vpop.f32.mrb[0].mxu0
        %v8918 = vpop.f32.mrb[0].mxu0
        %v8919 = vadd.f32 0.0, %v8918
        %v8920 = vpop.f32.mrb[0].mxu0
        %8921 = vmatprep.mubr.bf16.mxu0 %v8315
        %8922 = vmatmul.mubr.bf16.gmra.mrb[0].mxu0 %v8314
        %v8923 = vpop.f32.mrb[0].mxu0
        %v8924 = vadd.f32 0.0, %v8923
        %v8925 = vpop.f32.mrb[0].mxu0
        %v8926 = vpop.f32.mrb[0].mxu0
        %v8927 = vadd.f32 0.0, %v8926
        %v8928 = vpop.f32.mrb[0].mxu0
        %8929 = vmatprep.mubr.bf16.mxu0 %v8324
        %8930 = vmatmul.mubr.bf16.gmra.mrb[0].mxu0 %v8323
        %v8931 = vpop.f32.mrb[0].mxu0
        %v8932 = vadd.f32 0.0, %v8931
        %v8933 = vpop.f32.mrb[0].mxu0
        %v8934 = vpop.f32.mrb[0].mxu0
        %v8935 = vadd.f32 0.0, %v8934
        %v8936 = vpop.f32.mrb[0].mxu0
        %8937 = vmatprep.mubr.bf16.mxu0 %v8333
        %8938 = vmatmul.mubr.bf16.gmra.mrb[0].mxu0 %v8332
        %v8939 = vpop.f32.mrb[0].mxu0
        %v8940 = vadd.f32 0.0, %v8939
        %v8941 = vpop.f32.mrb[0].mxu0
        %v8942 = vpop.f32.mrb[0].mxu0
        %v8943 = vadd.f32 0.0, %v8942
        %v8944 = vpop.f32.mrb[0].mxu0
        %8945 = vmatprep.mubr.bf16.mxu0 %v8342
        %8946 = vmatmul.mubr.bf16.gmra.mrb[0].mxu0 %v8341
        %v8947 = vpop.f32.mrb[0].mxu0
        %v8948 = vadd.f32 0.0, %v8947
        %v8949 = vpop.f32.mrb[0].mxu0
        %v8950 = vpop.f32.mrb[0].mxu0
        %v8951 = vadd.f32 0.0, %v8950
        %v8952 = vpop.f32.mrb[0].mxu0
        %8953 = vmatprep.mubr.bf16.mxu0 %v8351
        %8954 = vmatmul.mubr.bf16.gmra.mrb[0].mxu0 %v8350
        %v8955 = vpop.f32.mrb[0].mxu0
        %v8956 = vadd.f32 0.0, %v8955
        %v8957 = vpop.f32.mrb[0].mxu0
        %v8958 = vpop.f32.mrb[0].mxu0
        %v8959 = vadd.f32 0.0, %v8958
        %v8960 = vpop.f32.mrb[0].mxu0
        %8961 = vmatprep.mubr.bf16.mxu0 %v8360
        %8962 = vmatmul.mubr.bf16.gmra.mrb[0].mxu0 %v8359
        %v8963 = vpop.f32.mrb[0].mxu0
        %v8964 = vadd.f32 0.0, %v8963
        %v8965 = vpop.f32.mrb[0].mxu0
        %v8966 = vpop.f32.mrb[0].mxu0
        %v8967 = vadd.f32 0.0, %v8966
        %v8968 = vpop.f32.mrb[0].mxu0
        %8969 = vmatprep.mubr.bf16.mxu0 %v8369
        %8970 = vmatmul.mubr.bf16.gmra.mrb[0].mxu0 %v8368
        %v8971 = vpop.f32.mrb[0].mxu0
        %v8972 = vadd.f32 0.0, %v8971
        %v8973 = vpop.f32.mrb[0].mxu0
        %v8974 = vpop.f32.mrb[0].mxu0
        %v8975 = vadd.f32 0.0, %v8974
        %v8976 = vpop.f32.mrb[0].mxu0
        %8977 = vmatprep.mubr.bf16.mxu0 %v8378
        %8978 = vmatmul.mubr.bf16.gmra.mrb[0].mxu0 %v8377
        %v8979 = vpop.f32.mrb[0].mxu0
        %v8980 = vadd.f32 0.0, %v8979
        %v8981 = vpop.f32.mrb[0].mxu0
        %v8982 = vpop.f32.mrb[0].mxu0
        %v8983 = vadd.f32 0.0, %v8982
        %v8984 = vpop.f32.mrb[0].mxu0
        %8985 = vmatprep.mubr.bf16.mxu0 %v8387
        %8986 = vmatmul.mubr.bf16.gmra.mrb[0].mxu0 %v8386
        %v8987 = vpop.f32.mrb[0].mxu0
        %v8988 = vadd.f32 0.0, %v8987
        %v8989 = vpop.f32.mrb[0].mxu0
        %v8990 = vpop.f32.mrb[0].mxu0
        %v8991 = vadd.f32 0.0, %v8990
        %v8992 = vpop.f32.mrb[0].mxu0
        %8993 = vmatprep.mubr.bf16.mxu0 %v8396
        %8994 = vmatmul.mubr.bf16.gmra.mrb[0].mxu0 %v8395
        %v8995 = vpop.f32.mrb[0].mxu0
        %v8996 = vadd.f32 0.0, %v8995
        %v8997 = vpop.f32.mrb[0].mxu0
        %v8998 = vpop.f32.mrb[0].mxu0
        %v8999 = vadd.f32 0.0, %v8998
        %v9000 = vpop.f32.mrb[0].mxu0
        %9001 = vmatprep.mubr.bf16.mxu0 %v8405
        %9002 = vmatmul.mubr.bf16.gmra.mrb[0].mxu0 %v8404
        %v9003 = vpop.f32.mrb[0].mxu0
        %v9004 = vadd.f32 0.0, %v9003
        %v9005 = vpop.f32.mrb[0].mxu0
        %v9006 = vpop.f32.mrb[0].mxu0
        %v9007 = vadd.f32 0.0, %v9006
        %v9008 = vpop.f32.mrb[0].mxu0
        %9009 = vmatprep.mubr.bf16.mxu0 %v8414
        %9010 = vmatmul.mubr.bf16.gmra.mrb[0].mxu0 %v8413
        %v9011 = vpop.f32.mrb[0].mxu0
        %v9012 = vadd.f32 0.0, %v9011
        %v9013 = vpop.f32.mrb[0].mxu0
        %v9014 = vpop.f32.mrb[0].mxu0
        %v9015 = vadd.f32 0.0, %v9014
        %v9016 = vpop.f32.mrb[0].mxu0
        %9017 = vmatprep.mubr.bf16.mxu0 %v8423
        %9018 = vmatmul.mubr.bf16.gmra.mrb[0].mxu0 %v8422
        %v9019 = vpop.f32.mrb[0].mxu0
        %v9020 = vadd.f32 0.0, %v9019
        %v9021 = vpop.f32.mrb[0].mxu0
        %v9022 = vpop.f32.mrb[0].mxu0
        %v9023 = vadd.f32 0.0, %v9022
        %v9024 = vpop.f32.mrb[0].mxu0
        %9025 = vmatprep.mubr.bf16.mxu0 %v8432
        %9026 = vmatmul.mubr.bf16.gmra.mrb[0].mxu0 %v8431
        %v9027 = vpop.f32.mrb[0].mxu0
        %v9028 = vadd.f32 0.0, %v9027
        %v9029 = vpop.f32.mrb[0].mxu0
        %v9030 = vpop.f32.mrb[0].mxu0
        %v9031 = vadd.f32 0.0, %v9030
        %v9032 = vpop.f32.mrb[0].mxu0
        %9033 = vmatprep.mubr.bf16.mxu0 %v8441
        %9034 = vmatmul.mubr.bf16.gmra.mrb[0].mxu0 %v8440
        %v9035 = vpop.f32.mrb[0].mxu0
        %v9036 = vadd.f32 0.0, %v9035
        %v9037 = vpop.f32.mrb[0].mxu0
        %v9038 = vpop.f32.mrb[0].mxu0
        %v9039 = vadd.f32 0.0, %v9038
        %v9040 = vpop.f32.mrb[0].mxu0
        %9041 = vdwg.mxu0
        %9042 = vmatprep.subr.bf16.mxu0 0
        %9043 = vmatpush1.bf16.msra.mxu0 %v8753
        %9044 = vmatprep.subr.bf16.mxu0 0
        %9045 = vmatpush1.bf16.msra.mxu0 %v8754
        %9046 = vmatprep.subr.bf16.mxu0 0
        %9047 = vmatpush1.bf16.msra.mxu0 %v8755
        %9048 = vmatprep.subr.bf16.mxu0 0
        %9049 = vmatpush1.bf16.msra.mxu0 %v8756
        %9050 = vmatprep.subr.bf16.mxu0 0
        %9051 = vmatpush1.bf16.msra.mxu0 %v8757
        %9052 = vmatprep.subr.bf16.mxu0 0
        %9053 = vmatpush1.bf16.msra.mxu0 %v8758
        %9054 = vmatprep.subr.bf16.mxu0 0
        %9055 = vmatpush1.bf16.msra.mxu0 %v8759
        %9056 = vmatprep.subr.bf16.mxu0 0
        %9057 = vmatpush1.bf16.msra.mxu0 %v8760
        %9058 = vmatprep.subr.bf16.mxu0 0
        %9059 = vmatpush1.bf16.msra.mxu0 %v8761
        %9060 = vmatprep.subr.bf16.mxu0 0
        %9061 = vmatpush1.bf16.msra.mxu0 %v8762
        %9062 = vmatprep.subr.bf16.mxu0 0
        %9063 = vmatpush1.bf16.msra.mxu0 %v8763
        %9064 = vmatprep.subr.bf16.mxu0 0
        %9065 = vmatpush1.bf16.msra.mxu0 %v8764
        %9066 = vmatprep.subr.bf16.mxu0 0
        %9067 = vmatpush1.bf16.msra.mxu0 %v8765
        %9068 = vmatprep.subr.bf16.mxu0 0
        %9069 = vmatpush1.bf16.msra.mxu0 %v8766
        %9070 = vmatprep.subr.bf16.mxu0 0
        %9071 = vmatpush1.bf16.msra.mxu0 %v8767
        %9072 = vmatprep.subr.bf16.mxu0 0
        %9073 = vmatpush1.bf16.msra.mxu0 %v8768
        %9074 = vmatprep.mubr.bf16.mxu0 %v8308
        %9075 = vmatmul.mubr.bf16.gmra.mrb[0].mxu0 %v8307
        %v9076 = vpop.f32.mrb[0].mxu0
        %v9077 = vadd.f32 %v8916, %v9076
        %v9078 = vpop.f32.mrb[0].mxu0
        %v9079 = vpop.f32.mrb[0].mxu0
        %v9080 = vadd.f32 %v8919, %v9079
        %v9081 = vpop.f32.mrb[0].mxu0
        %9082 = vmatprep.mubr.bf16.mxu0 %v8317
        %9083 = vmatmul.mubr.bf16.gmra.mrb[0].mxu0 %v8316
        %v9084 = vpop.f32.mrb[0].mxu0
        %v9085 = vadd.f32 %v8924, %v9084
        %v9086 = vpop.f32.mrb[0].mxu0
        %v9087 = vpop.f32.mrb[0].mxu0
        %v9088 = vadd.f32 %v8927, %v9087
        %v9089 = vpop.f32.mrb[0].mxu0
        %9090 = vmatprep.mubr.bf16.mxu0 %v8326
        %9091 = vmatmul.mubr.bf16.gmra.mrb[0].mxu0 %v8325
        %v9092 = vpop.f32.mrb[0].mxu0
        %v9093 = vadd.f32 %v8932, %v9092
        %v9094 = vpop.f32.mrb[0].mxu0
        %v9095 = vpop.f32.mrb[0].mxu0
        %v9096 = vadd.f32 %v8935, %v9095
        %v9097 = vpop.f32.mrb[0].mxu0
        %9098 = vmatprep.mubr.bf16.mxu0 %v8335
        %9099 = vmatmul.mubr.bf16.gmra.mrb[0].mxu0 %v8334
        %v9100 = vpop.f32.mrb[0].mxu0
        %v9101 = vadd.f32 %v8940, %v9100
        %v9102 = vpop.f32.mrb[0].mxu0
        %v9103 = vpop.f32.mrb[0].mxu0
        %v9104 = vadd.f32 %v8943, %v9103
        %v9105 = vpop.f32.mrb[0].mxu0
        %9106 = vmatprep.mubr.bf16.mxu0 %v8344
        %9107 = vmatmul.mubr.bf16.gmra.mrb[0].mxu0 %v8343
        %v9108 = vpop.f32.mrb[0].mxu0
        %v9109 = vadd.f32 %v8948, %v9108
        %v9110 = vpop.f32.mrb[0].mxu0
        %v9111 = vpop.f32.mrb[0].mxu0
        %v9112 = vadd.f32 %v8951, %v9111
        %v9113 = vpop.f32.mrb[0].mxu0
        %9114 = vmatprep.mubr.bf16.mxu0 %v8353
        %9115 = vmatmul.mubr.bf16.gmra.mrb[0].mxu0 %v8352
        %v9116 = vpop.f32.mrb[0].mxu0
        %v9117 = vadd.f32 %v8956, %v9116
        %v9118 = vpop.f32.mrb[0].mxu0
        %v9119 = vpop.f32.mrb[0].mxu0
        %v9120 = vadd.f32 %v8959, %v9119
        %v9121 = vpop.f32.mrb[0].mxu0
        %9122 = vmatprep.mubr.bf16.mxu0 %v8362
        %9123 = vmatmul.mubr.bf16.gmra.mrb[0].mxu0 %v8361
        %v9124 = vpop.f32.mrb[0].mxu0
        %v9125 = vadd.f32 %v8964, %v9124
        %v9126 = vpop.f32.mrb[0].mxu0
        %v9127 = vpop.f32.mrb[0].mxu0
        %v9128 = vadd.f32 %v8967, %v9127
        %v9129 = vpop.f32.mrb[0].mxu0
        %9130 = vmatprep.mubr.bf16.mxu0 %v8371
        %9131 = vmatmul.mubr.bf16.gmra.mrb[0].mxu0 %v8370
        %v9132 = vpop.f32.mrb[0].mxu0
        %v9133 = vadd.f32 %v8972, %v9132
        %v9134 = vpop.f32.mrb[0].mxu0
        %v9135 = vpop.f32.mrb[0].mxu0
        %v9136 = vadd.f32 %v8975, %v9135
        %v9137 = vpop.f32.mrb[0].mxu0
        %9138 = vmatprep.mubr.bf16.mxu0 %v8380
        %9139 = vmatmul.mubr.bf16.gmra.mrb[0].mxu0 %v8379
        %v9140 = vpop.f32.mrb[0].mxu0
        %v9141 = vadd.f32 %v8980, %v9140
        %v9142 = vpop.f32.mrb[0].mxu0
        %v9143 = vpop.f32.mrb[0].mxu0
        %v9144 = vadd.f32 %v8983, %v9143
        %v9145 = vpop.f32.mrb[0].mxu0
        %9146 = vmatprep.mubr.bf16.mxu0 %v8389
        %9147 = vmatmul.mubr.bf16.gmra.mrb[0].mxu0 %v8388
        %v9148 = vpop.f32.mrb[0].mxu0
        %v9149 = vadd.f32 %v8988, %v9148
        %v9150 = vpop.f32.mrb[0].mxu0
        %v9151 = vpop.f32.mrb[0].mxu0
        %v9152 = vadd.f32 %v8991, %v9151
        %v9153 = vpop.f32.mrb[0].mxu0
        %9154 = vmatprep.mubr.bf16.mxu0 %v8398
        %9155 = vmatmul.mubr.bf16.gmra.mrb[0].mxu0 %v8397
        %v9156 = vpop.f32.mrb[0].mxu0
        %v9157 = vadd.f32 %v8996, %v9156
        %v9158 = vpop.f32.mrb[0].mxu0
        %v9159 = vpop.f32.mrb[0].mxu0
        %v9160 = vadd.f32 %v8999, %v9159
        %v9161 = vpop.f32.mrb[0].mxu0
        %9162 = vmatprep.mubr.bf16.mxu0 %v8407
        %9163 = vmatmul.mubr.bf16.gmra.mrb[0].mxu0 %v8406
        %v9164 = vpop.f32.mrb[0].mxu0
        %v9165 = vadd.f32 %v9004, %v9164
        %v9166 = vpop.f32.mrb[0].mxu0
        %v9167 = vpop.f32.mrb[0].mxu0
        %v9168 = vadd.f32 %v9007, %v9167
        %v9169 = vpop.f32.mrb[0].mxu0
        %9170 = vmatprep.mubr.bf16.mxu0 %v8416
        %9171 = vmatmul.mubr.bf16.gmra.mrb[0].mxu0 %v8415
        %v9172 = vpop.f32.mrb[0].mxu0
        %v9173 = vadd.f32 %v9012, %v9172
        %v9174 = vpop.f32.mrb[0].mxu0
        %v9175 = vpop.f32.mrb[0].mxu0
        %v9176 = vadd.f32 %v9015, %v9175
        %v9177 = vpop.f32.mrb[0].mxu0
        %9178 = vmatprep.mubr.bf16.mxu0 %v8425
        %9179 = vmatmul.mubr.bf16.gmra.mrb[0].mxu0 %v8424
        %v9180 = vpop.f32.mrb[0].mxu0
        %v9181 = vadd.f32 %v9020, %v9180
        %v9182 = vpop.f32.mrb[0].mxu0
        %v9183 = vpop.f32.mrb[0].mxu0
        %v9184 = vadd.f32 %v9023, %v9183
        %v9185 = vpop.f32.mrb[0].mxu0
        %9186 = vmatprep.mubr.bf16.mxu0 %v8434
        %9187 = vmatmul.mubr.bf16.gmra.mrb[0].mxu0 %v8433
        %v9188 = vpop.f32.mrb[0].mxu0
        %v9189 = vadd.f32 %v9028, %v9188
        %v9190 = vpop.f32.mrb[0].mxu0
        %v9191 = vpop.f32.mrb[0].mxu0
        %v9192 = vadd.f32 %v9031, %v9191
        %v9193 = vpop.f32.mrb[0].mxu0
        %9194 = vmatprep.mubr.bf16.mxu0 %v8443
        %9195 = vmatmul.mubr.bf16.gmra.mrb[0].mxu0 %v8442
        %v9196 = vpop.f32.mrb[0].mxu0
        %v9197 = vadd.f32 %v9036, %v9196
        %v9198 = vpop.f32.mrb[0].mxu0
        %v9199 = vpop.f32.mrb[0].mxu0
        %v9200 = vadd.f32 %v9039, %v9199
        %v9201 = vpop.f32.mrb[0].mxu0
        %9202 = vdwg.mxu0
        %9203 = vmatprep.subr.bf16.mxu0 0
        %9204 = vmatpush1.bf16.msra.mxu0 %v8769
        %9205 = vmatprep.subr.bf16.mxu0 0
        %9206 = vmatpush1.bf16.msra.mxu0 %v8770
        %9207 = vmatprep.subr.bf16.mxu0 0
        %9208 = vmatpush1.bf16.msra.mxu0 %v8771
        %9209 = vmatprep.subr.bf16.mxu0 0
        %9210 = vmatpush1.bf16.msra.mxu0 %v8772
        %9211 = vmatprep.subr.bf16.mxu0 0
        %9212 = vmatpush1.bf16.msra.mxu0 %v8773
        %9213 = vmatprep.subr.bf16.mxu0 0
        %9214 = vmatpush1.bf16.msra.mxu0 %v8774
        %9215 = vmatprep.subr.bf16.mxu0 0
        %9216 = vmatpush1.bf16.msra.mxu0 %v8775
        %9217 = vmatprep.subr.bf16.mxu0 0
        %9218 = vmatpush1.bf16.msra.mxu0 %v8776
        %9219 = vmatprep.subr.bf16.mxu0 0
        %9220 = vmatpush1.bf16.msra.mxu0 %v8777
        %9221 = vmatprep.subr.bf16.mxu0 0
        %9222 = vmatpush1.bf16.msra.mxu0 %v8778
        %9223 = vmatprep.subr.bf16.mxu0 0
        %9224 = vmatpush1.bf16.msra.mxu0 %v8779
        %9225 = vmatprep.subr.bf16.mxu0 0
        %9226 = vmatpush1.bf16.msra.mxu0 %v8780
        %9227 = vmatprep.subr.bf16.mxu0 0
        %9228 = vmatpush1.bf16.msra.mxu0 %v8781
        %9229 = vmatprep.subr.bf16.mxu0 0
        %9230 = vmatpush1.bf16.msra.mxu0 %v8782
        %9231 = vmatprep.subr.bf16.mxu0 0
        %9232 = vmatpush1.bf16.msra.mxu0 %v8783
        %9233 = vmatprep.subr.bf16.mxu0 0
        %9234 = vmatpush1.bf16.msra.mxu0 %v8784
        %9235 = vmatprep.mubr.bf16.mxu0 %v8310
        %9236 = vmatmul.mubr.bf16.gmra.mrb[0].mxu0 %v8309
        %v9237 = vpop.f32.mrb[0].mxu0
        %v9238 = vadd.f32 %v9077, %v9237
        %v9239 = vpop.f32.mrb[0].mxu0
        %v9240 = vpop.f32.mrb[0].mxu0
        %v9241 = vadd.f32 %v9080, %v9240
        %v9242 = vpop.f32.mrb[0].mxu0
        %9243 = vmatprep.mubr.bf16.mxu0 %v8319
        %9244 = vmatmul.mubr.bf16.gmra.mrb[0].mxu0 %v8318
        %v9245 = vpop.f32.mrb[0].mxu0
        %v9246 = vadd.f32 %v9085, %v9245
        %v9247 = vpop.f32.mrb[0].mxu0
        %v9248 = vpop.f32.mrb[0].mxu0
        %v9249 = vadd.f32 %v9088, %v9248
        %v9250 = vpop.f32.mrb[0].mxu0
        %9251 = vmatprep.mubr.bf16.mxu0 %v8328
        %9252 = vmatmul.mubr.bf16.gmra.mrb[0].mxu0 %v8327
        %v9253 = vpop.f32.mrb[0].mxu0
        %v9254 = vadd.f32 %v9093, %v9253
        %v9255 = vpop.f32.mrb[0].mxu0
        %v9256 = vpop.f32.mrb[0].mxu0
        %v9257 = vadd.f32 %v9096, %v9256
        %v9258 = vpop.f32.mrb[0].mxu0
        %9259 = vmatprep.mubr.bf16.mxu0 %v8337
        %9260 = vmatmul.mubr.bf16.gmra.mrb[0].mxu0 %v8336
        %v9261 = vpop.f32.mrb[0].mxu0
        %v9262 = vadd.f32 %v9101, %v9261
        %v9263 = vpop.f32.mrb[0].mxu0
        %v9264 = vpop.f32.mrb[0].mxu0
        %v9265 = vadd.f32 %v9104, %v9264
        %v9266 = vpop.f32.mrb[0].mxu0
        %9267 = vmatprep.mubr.bf16.mxu0 %v8346
        %9268 = vmatmul.mubr.bf16.gmra.mrb[0].mxu0 %v8345
        %v9269 = vpop.f32.mrb[0].mxu0
        %v9270 = vadd.f32 %v9109, %v9269
        %v9271 = vpop.f32.mrb[0].mxu0
        %v9272 = vpop.f32.mrb[0].mxu0
        %v9273 = vadd.f32 %v9112, %v9272
        %v9274 = vpop.f32.mrb[0].mxu0
        %9275 = vmatprep.mubr.bf16.mxu0 %v8355
        %9276 = vmatmul.mubr.bf16.gmra.mrb[0].mxu0 %v8354
        %v9277 = vpop.f32.mrb[0].mxu0
        %v9278 = vadd.f32 %v9117, %v9277
        %v9279 = vpop.f32.mrb[0].mxu0
        %v9280 = vpop.f32.mrb[0].mxu0
        %v9281 = vadd.f32 %v9120, %v9280
        %v9282 = vpop.f32.mrb[0].mxu0
        %9283 = vmatprep.mubr.bf16.mxu0 %v8364
        %9284 = vmatmul.mubr.bf16.gmra.mrb[0].mxu0 %v8363
        %v9285 = vpop.f32.mrb[0].mxu0
        %v9286 = vadd.f32 %v9125, %v9285
        %v9287 = vpop.f32.mrb[0].mxu0
        %v9288 = vpop.f32.mrb[0].mxu0
        %v9289 = vadd.f32 %v9128, %v9288
        %v9290 = vpop.f32.mrb[0].mxu0
        %9291 = vmatprep.mubr.bf16.mxu0 %v8373
        %9292 = vmatmul.mubr.bf16.gmra.mrb[0].mxu0 %v8372
        %v9293 = vpop.f32.mrb[0].mxu0
        %v9294 = vadd.f32 %v9133, %v9293
        %v9295 = vpop.f32.mrb[0].mxu0
        %v9296 = vpop.f32.mrb[0].mxu0
        %v9297 = vadd.f32 %v9136, %v9296
        %v9298 = vpop.f32.mrb[0].mxu0
        %9299 = vmatprep.mubr.bf16.mxu0 %v8382
        %9300 = vmatmul.mubr.bf16.gmra.mrb[0].mxu0 %v8381
        %v9301 = vpop.f32.mrb[0].mxu0
        %v9302 = vadd.f32 %v9141, %v9301
        %v9303 = vpop.f32.mrb[0].mxu0
        %v9304 = vpop.f32.mrb[0].mxu0
        %v9305 = vadd.f32 %v9144, %v9304
        %v9306 = vpop.f32.mrb[0].mxu0
        %9307 = vmatprep.mubr.bf16.mxu0 %v8391
        %9308 = vmatmul.mubr.bf16.gmra.mrb[0].mxu0 %v8390
        %v9309 = vpop.f32.mrb[0].mxu0
        %v9310 = vadd.f32 %v9149, %v9309
        %v9311 = vpop.f32.mrb[0].mxu0
        %v9312 = vpop.f32.mrb[0].mxu0
        %v9313 = vadd.f32 %v9152, %v9312
        %v9314 = vpop.f32.mrb[0].mxu0
        %9315 = vmatprep.mubr.bf16.mxu0 %v8400
        %9316 = vmatmul.mubr.bf16.gmra.mrb[0].mxu0 %v8399
        %v9317 = vpop.f32.mrb[0].mxu0
        %v9318 = vadd.f32 %v9157, %v9317
        %v9319 = vpop.f32.mrb[0].mxu0
        %v9320 = vpop.f32.mrb[0].mxu0
        %v9321 = vadd.f32 %v9160, %v9320
        %v9322 = vpop.f32.mrb[0].mxu0
        %9323 = vmatprep.mubr.bf16.mxu0 %v8409
        %9324 = vmatmul.mubr.bf16.gmra.mrb[0].mxu0 %v8408
        %v9325 = vpop.f32.mrb[0].mxu0
        %v9326 = vadd.f32 %v9165, %v9325
        %v9327 = vpop.f32.mrb[0].mxu0
        %v9328 = vpop.f32.mrb[0].mxu0
        %v9329 = vadd.f32 %v9168, %v9328
        %v9330 = vpop.f32.mrb[0].mxu0
        %9331 = vmatprep.mubr.bf16.mxu0 %v8418
        %9332 = vmatmul.mubr.bf16.gmra.mrb[0].mxu0 %v8417
        %v9333 = vpop.f32.mrb[0].mxu0
        %v9334 = vadd.f32 %v9173, %v9333
        %v9335 = vpop.f32.mrb[0].mxu0
        %v9336 = vpop.f32.mrb[0].mxu0
        %v9337 = vadd.f32 %v9176, %v9336
        %v9338 = vpop.f32.mrb[0].mxu0
        %9339 = vmatprep.mubr.bf16.mxu0 %v8427
        %9340 = vmatmul.mubr.bf16.gmra.mrb[0].mxu0 %v8426
        %v9341 = vpop.f32.mrb[0].mxu0
        %v9342 = vadd.f32 %v9181, %v9341
        %v9343 = vpop.f32.mrb[0].mxu0
        %v9344 = vpop.f32.mrb[0].mxu0
        %v9345 = vadd.f32 %v9184, %v9344
        %v9346 = vpop.f32.mrb[0].mxu0
        %9347 = vmatprep.mubr.bf16.mxu0 %v8436
        %9348 = vmatmul.mubr.bf16.gmra.mrb[0].mxu0 %v8435
        %v9349 = vpop.f32.mrb[0].mxu0
        %v9350 = vadd.f32 %v9189, %v9349
        %v9351 = vpop.f32.mrb[0].mxu0
        %v9352 = vpop.f32.mrb[0].mxu0
        %v9353 = vadd.f32 %v9192, %v9352
        %v9354 = vpop.f32.mrb[0].mxu0
        %9355 = vmatprep.mubr.bf16.mxu0 %v8445
        %9356 = vmatmul.mubr.bf16.gmra.mrb[0].mxu0 %v8444
        %v9357 = vpop.f32.mrb[0].mxu0
        %v9358 = vadd.f32 %v9197, %v9357
        %v9359 = vpop.f32.mrb[0].mxu0
        %v9360 = vpop.f32.mrb[0].mxu0
        %v9361 = vadd.f32 %v9200, %v9360
        %v9362 = vpop.f32.mrb[0].mxu0
        %9363 = vdwg.mxu0
        %9364 = vmatprep.subr.bf16.mxu0 0
        %9365 = vmatpush1.bf16.msra.mxu0 %v8785
        %9366 = vmatprep.subr.bf16.mxu0 0
        %9367 = vmatpush1.bf16.msra.mxu0 %v8786
        %9368 = vmatprep.subr.bf16.mxu0 0
        %9369 = vmatpush1.bf16.msra.mxu0 %v8787
        %9370 = vmatprep.subr.bf16.mxu0 0
        %9371 = vmatpush1.bf16.msra.mxu0 %v8788
        %9372 = vmatprep.subr.bf16.mxu0 0
        %9373 = vmatpush1.bf16.msra.mxu0 %v8789
        %9374 = vmatprep.subr.bf16.mxu0 0
        %9375 = vmatpush1.bf16.msra.mxu0 %v8790
        %9376 = vmatprep.subr.bf16.mxu0 0
        %9377 = vmatpush1.bf16.msra.mxu0 %v8791
        %9378 = vmatprep.subr.bf16.mxu0 0
        %9379 = vmatpush1.bf16.msra.mxu0 %v8792
        %9380 = vmatprep.subr.bf16.mxu0 0
        %9381 = vmatpush1.bf16.msra.mxu0 %v8793
        %9382 = vmatprep.subr.bf16.mxu0 0
        %9383 = vmatpush1.bf16.msra.mxu0 %v8794
        %9384 = vmatprep.subr.bf16.mxu0 0
        %9385 = vmatpush1.bf16.msra.mxu0 %v8795
        %9386 = vmatprep.subr.bf16.mxu0 0
        %9387 = vmatpush1.bf16.msra.mxu0 %v8796
        %9388 = vmatprep.subr.bf16.mxu0 0
        %9389 = vmatpush1.bf16.msra.mxu0 %v8797
        %9390 = vmatprep.subr.bf16.mxu0 0
        %9391 = vmatpush1.bf16.msra.mxu0 %v8798
        %9392 = vmatprep.subr.bf16.mxu0 0
        %9393 = vmatpush1.bf16.msra.mxu0 %v8799
        %9394 = vmatprep.subr.bf16.mxu0 0
        %9395 = vmatpush1.bf16.msra.mxu0 %v8800
        %9396 = vmatprep.mubr.bf16.mxu0 %v8312
        %9397 = vmatmul.mubr.bf16.gmra.mrb[0].mxu0 %v8311
        %v9398 = vpop.f32.mrb[0].mxu0
        %v9399 = vadd.f32 %v9238, %v9398
        %v9400 = vpop.f32.mrb[0].mxu0
        %v9401 = vpop.f32.mrb[0].mxu0
        %v9402 = vadd.f32 %v9241, %v9401
        %v9403 = vpop.f32.mrb[0].mxu0
        %9404 = vmatprep.mubr.bf16.mxu0 %v8321
        %9405 = vmatmul.mubr.bf16.gmra.mrb[0].mxu0 %v8320
        %v9406 = vpop.f32.mrb[0].mxu0
        %v9407 = vadd.f32 %v9246, %v9406
        %v9408 = vpop.f32.mrb[0].mxu0
        %v9409 = vpop.f32.mrb[0].mxu0
        %v9410 = vadd.f32 %v9249, %v9409
        %v9411 = vpop.f32.mrb[0].mxu0
        %9412 = vmatprep.mubr.bf16.mxu0 %v8330
        %9413 = vmatmul.mubr.bf16.gmra.mrb[0].mxu0 %v8329
        %v9414 = vpop.f32.mrb[0].mxu0
        %v9415 = vadd.f32 %v9254, %v9414
        %v9416 = vpop.f32.mrb[0].mxu0
        %v9417 = vpop.f32.mrb[0].mxu0
        %v9418 = vadd.f32 %v9257, %v9417
        %v9419 = vpop.f32.mrb[0].mxu0
        %9420 = vmatprep.mubr.bf16.mxu0 %v8339
        %9421 = vmatmul.mubr.bf16.gmra.mrb[0].mxu0 %v8338
        %v9422 = vpop.f32.mrb[0].mxu0
        %v9423 = vadd.f32 %v9262, %v9422
        %v9424 = vpop.f32.mrb[0].mxu0
        %v9425 = vpop.f32.mrb[0].mxu0
        %v9426 = vadd.f32 %v9265, %v9425
        %v9427 = vpop.f32.mrb[0].mxu0
        %9428 = vmatprep.mubr.bf16.mxu0 %v8348
        %9429 = vmatmul.mubr.bf16.gmra.mrb[0].mxu0 %v8347
        %v9430 = vpop.f32.mrb[0].mxu0
        %v9431 = vadd.f32 %v9270, %v9430
        %v9432 = vpop.f32.mrb[0].mxu0
        %v9433 = vpop.f32.mrb[0].mxu0
        %v9434 = vadd.f32 %v9273, %v9433
        %v9435 = vpop.f32.mrb[0].mxu0
        %9436 = vmatprep.mubr.bf16.mxu0 %v8357
        %9437 = vmatmul.mubr.bf16.gmra.mrb[0].mxu0 %v8356
        %v9438 = vpop.f32.mrb[0].mxu0
        %v9439 = vadd.f32 %v9278, %v9438
        %v9440 = vpop.f32.mrb[0].mxu0
        %v9441 = vpop.f32.mrb[0].mxu0
        %v9442 = vadd.f32 %v9281, %v9441
        %v9443 = vpop.f32.mrb[0].mxu0
        %9444 = vmatprep.mubr.bf16.mxu0 %v8366
        %9445 = vmatmul.mubr.bf16.gmra.mrb[0].mxu0 %v8365
        %v9446 = vpop.f32.mrb[0].mxu0
        %v9447 = vadd.f32 %v9286, %v9446
        %v9448 = vpop.f32.mrb[0].mxu0
        %v9449 = vpop.f32.mrb[0].mxu0
        %v9450 = vadd.f32 %v9289, %v9449
        %v9451 = vpop.f32.mrb[0].mxu0
        %9452 = vmatprep.mubr.bf16.mxu0 %v8375
        %9453 = vmatmul.mubr.bf16.gmra.mrb[0].mxu0 %v8374
        %v9454 = vpop.f32.mrb[0].mxu0
        %v9455 = vadd.f32 %v9294, %v9454
        %v9456 = vpop.f32.mrb[0].mxu0
        %v9457 = vpop.f32.mrb[0].mxu0
        %v9458 = vadd.f32 %v9297, %v9457
        %v9459 = vpop.f32.mrb[0].mxu0
        %9460 = vmatprep.mubr.bf16.mxu0 %v8384
        %9461 = vmatmul.mubr.bf16.gmra.mrb[0].mxu0 %v8383
        %v9462 = vpop.f32.mrb[0].mxu0
        %v9463 = vadd.f32 %v9302, %v9462
        %v9464 = vpop.f32.mrb[0].mxu0
        %v9465 = vpop.f32.mrb[0].mxu0
        %v9466 = vadd.f32 %v9305, %v9465
        %v9467 = vpop.f32.mrb[0].mxu0
        %9468 = vmatprep.mubr.bf16.mxu0 %v8393
        %9469 = vmatmul.mubr.bf16.gmra.mrb[0].mxu0 %v8392
        %v9470 = vpop.f32.mrb[0].mxu0
        %v9471 = vadd.f32 %v9310, %v9470
        %v9472 = vpop.f32.mrb[0].mxu0
        %v9473 = vpop.f32.mrb[0].mxu0
        %v9474 = vadd.f32 %v9313, %v9473
        %v9475 = vpop.f32.mrb[0].mxu0
        %9476 = vmatprep.mubr.bf16.mxu0 %v8402
        %9477 = vmatmul.mubr.bf16.gmra.mrb[0].mxu0 %v8401
        %v9478 = vpop.f32.mrb[0].mxu0
        %v9479 = vadd.f32 %v9318, %v9478
        %v9480 = vpop.f32.mrb[0].mxu0
        %v9481 = vpop.f32.mrb[0].mxu0
        %v9482 = vadd.f32 %v9321, %v9481
        %v9483 = vpop.f32.mrb[0].mxu0
        %9484 = vmatprep.mubr.bf16.mxu0 %v8411
        %9485 = vmatmul.mubr.bf16.gmra.mrb[0].mxu0 %v8410
        %v9486 = vpop.f32.mrb[0].mxu0
        %v9487 = vadd.f32 %v9326, %v9486
        %v9488 = vpop.f32.mrb[0].mxu0
        %v9489 = vpop.f32.mrb[0].mxu0
        %v9490 = vadd.f32 %v9329, %v9489
        %v9491 = vpop.f32.mrb[0].mxu0
        %9492 = vmatprep.mubr.bf16.mxu0 %v8420
        %9493 = vmatmul.mubr.bf16.gmra.mrb[0].mxu0 %v8419
        %v9494 = vpop.f32.mrb[0].mxu0
        %v9495 = vadd.f32 %v9334, %v9494
        %v9496 = vpop.f32.mrb[0].mxu0
        %v9497 = vpop.f32.mrb[0].mxu0
        %v9498 = vadd.f32 %v9337, %v9497
        %v9499 = vpop.f32.mrb[0].mxu0
        %9500 = vmatprep.mubr.bf16.mxu0 %v8429
        %9501 = vmatmul.mubr.bf16.gmra.mrb[0].mxu0 %v8428
        %v9502 = vpop.f32.mrb[0].mxu0
        %v9503 = vadd.f32 %v9342, %v9502
        %v9504 = vpop.f32.mrb[0].mxu0
        %v9505 = vpop.f32.mrb[0].mxu0
        %v9506 = vadd.f32 %v9345, %v9505
        %v9507 = vpop.f32.mrb[0].mxu0
        %9508 = vmatprep.mubr.bf16.mxu0 %v8438
        %9509 = vmatmul.mubr.bf16.gmra.mrb[0].mxu0 %v8437
        %v9510 = vpop.f32.mrb[0].mxu0
        %v9511 = vadd.f32 %v9350, %v9510
        %v9512 = vpop.f32.mrb[0].mxu0
        %v9513 = vpop.f32.mrb[0].mxu0
        %v9514 = vadd.f32 %v9353, %v9513
        %v9515 = vpop.f32.mrb[0].mxu0
        %9516 = vmatprep.mubr.bf16.mxu0 %v8447
        %9517 = vmatmul.mubr.bf16.gmra.mrb[0].mxu0 %v8446
        %v9518 = vpop.f32.mrb[0].mxu0
        %v9519 = vadd.f32 %v9358, %v9518
        %v9520 = vpop.f32.mrb[0].mxu0
        %v9521 = vpop.f32.mrb[0].mxu0
        %v9522 = vadd.f32 %v9361, %v9521
        %v9523 = vpop.f32.mrb[0].mxu0
        %9524 = vdwg.mxu0
        %9525 = vmatprep.subr.bf16.mxu0 0
        %9526 = vmatpush1.bf16.msra.mxu0 %v8801
        %9527 = vmatprep.subr.bf16.mxu0 0
        %9528 = vmatpush1.bf16.msra.mxu0 %v8802
        %9529 = vmatprep.subr.bf16.mxu0 0
        %9530 = vmatpush1.bf16.msra.mxu0 %v8803
        %9531 = vmatprep.subr.bf16.mxu0 0
        %9532 = vmatpush1.bf16.msra.mxu0 %v8804
        %9533 = vmatprep.subr.bf16.mxu0 0
        %9534 = vmatpush1.bf16.msra.mxu0 %v8805
        %9535 = vmatprep.subr.bf16.mxu0 0
        %9536 = vmatpush1.bf16.msra.mxu0 %v8806
        %9537 = vmatprep.subr.bf16.mxu0 0
        %9538 = vmatpush1.bf16.msra.mxu0 %v8807
        %9539 = vmatprep.subr.bf16.mxu0 0
        %9540 = vmatpush1.bf16.msra.mxu0 %v8808
        %9541 = vmatprep.subr.bf16.mxu0 0
        %9542 = vmatpush1.bf16.msra.mxu0 0
        %9543 = vmatprep.subr.bf16.mxu0 0
        %9544 = vmatpush1.bf16.msra.mxu0 0
        %9545 = vmatprep.subr.bf16.mxu0 0
        %9546 = vmatpush1.bf16.msra.mxu0 0
        %9547 = vmatprep.subr.bf16.mxu0 0
        %9548 = vmatpush1.bf16.msra.mxu0 0
        %9549 = vmatprep.subr.bf16.mxu0 0
        %9550 = vmatpush1.bf16.msra.mxu0 0
        %9551 = vmatprep.subr.bf16.mxu0 0
        %9552 = vmatpush1.bf16.msra.mxu0 0
        %9553 = vmatprep.subr.bf16.mxu0 0
        %9554 = vmatpush1.bf16.msra.mxu0 0
        %9555 = vmatprep.subr.bf16.mxu0 0
        %9556 = vmatpush1.bf16.msra.mxu0 0
        %9557 = vmatprep.mubr.bf16.mxu0 0
        %9558 = vmatmul.mubr.bf16.gmra.mrb[0].mxu0 %v8313
        %v9559 = vpop.f32.mrb[0].mxu0
        %v9560 = vadd.f32 %v9399, %v9559
        %v9561 = vpop.f32.mrb[0].mxu0
        %v9562 = vpop.f32.mrb[0].mxu0
        %v9563 = vadd.f32 %v9402, %v9562
        %v9564 = vpop.f32.mrb[0].mxu0
        %9565 = vmatprep.mubr.bf16.mxu0 0
        %9566 = vmatmul.mubr.bf16.gmra.mrb[0].mxu0 %v8322
        %v9567 = vpop.f32.mrb[0].mxu0
        %v9568 = vadd.f32 %v9407, %v9567
        %v9569 = vpop.f32.mrb[0].mxu0
        %v9570 = vpop.f32.mrb[0].mxu0
        %v9571 = vadd.f32 %v9410, %v9570
        %v9572 = vpop.f32.mrb[0].mxu0
        %9573 = vmatprep.mubr.bf16.mxu0 0
        %9574 = vmatmul.mubr.bf16.gmra.mrb[0].mxu0 %v8331
        %v9575 = vpop.f32.mrb[0].mxu0
        %v9576 = vadd.f32 %v9415, %v9575
        %v9577 = vpop.f32.mrb[0].mxu0
        %v9578 = vpop.f32.mrb[0].mxu0
        %v9579 = vadd.f32 %v9418, %v9578
        %v9580 = vpop.f32.mrb[0].mxu0
        %9581 = vmatprep.mubr.bf16.mxu0 0
        %9582 = vmatmul.mubr.bf16.gmra.mrb[0].mxu0 %v8340
        %v9583 = vpop.f32.mrb[0].mxu0
        %v9584 = vadd.f32 %v9423, %v9583
        %v9585 = vpop.f32.mrb[0].mxu0
        %v9586 = vpop.f32.mrb[0].mxu0
        %v9587 = vadd.f32 %v9426, %v9586
        %v9588 = vpop.f32.mrb[0].mxu0
        %9589 = vmatprep.mubr.bf16.mxu0 0
        %9590 = vmatmul.mubr.bf16.gmra.mrb[0].mxu0 %v8349
        %v9591 = vpop.f32.mrb[0].mxu0
        %v9592 = vadd.f32 %v9431, %v9591
        %v9593 = vpop.f32.mrb[0].mxu0
        %v9594 = vpop.f32.mrb[0].mxu0
        %v9595 = vadd.f32 %v9434, %v9594
        %v9596 = vpop.f32.mrb[0].mxu0
        %9597 = vmatprep.mubr.bf16.mxu0 0
        %9598 = vmatmul.mubr.bf16.gmra.mrb[0].mxu0 %v8358
        %v9599 = vpop.f32.mrb[0].mxu0
        %v9600 = vadd.f32 %v9439, %v9599
        %v9601 = vpop.f32.mrb[0].mxu0
        %v9602 = vpop.f32.mrb[0].mxu0
        %v9603 = vadd.f32 %v9442, %v9602
        %v9604 = vpop.f32.mrb[0].mxu0
        %9605 = vmatprep.mubr.bf16.mxu0 0
        %9606 = vmatmul.mubr.bf16.gmra.mrb[0].mxu0 %v8367
        %v9607 = vpop.f32.mrb[0].mxu0
        %v9608 = vadd.f32 %v9447, %v9607
        %v9609 = vpop.f32.mrb[0].mxu0
        %v9610 = vpop.f32.mrb[0].mxu0
        %v9611 = vadd.f32 %v9450, %v9610
        %v9612 = vpop.f32.mrb[0].mxu0
        %9613 = vmatprep.mubr.bf16.mxu0 0
        %9614 = vmatmul.mubr.bf16.gmra.mrb[0].mxu0 %v8376
        %v9615 = vpop.f32.mrb[0].mxu0
        %v9616 = vadd.f32 %v9455, %v9615
        %v9617 = vpop.f32.mrb[0].mxu0
        %v9618 = vpop.f32.mrb[0].mxu0
        %v9619 = vadd.f32 %v9458, %v9618
        %v9620 = vpop.f32.mrb[0].mxu0
        %9621 = vmatprep.mubr.bf16.mxu0 0
        %9622 = vmatmul.mubr.bf16.gmra.mrb[0].mxu0 %v8385
        %v9623 = vpop.f32.mrb[0].mxu0
        %v9624 = vadd.f32 %v9463, %v9623
        %v9625 = vpop.f32.mrb[0].mxu0
        %v9626 = vpop.f32.mrb[0].mxu0
        %v9627 = vadd.f32 %v9466, %v9626
        %v9628 = vpop.f32.mrb[0].mxu0
        %9629 = vmatprep.mubr.bf16.mxu0 0
        %9630 = vmatmul.mubr.bf16.gmra.mrb[0].mxu0 %v8394
        %v9631 = vpop.f32.mrb[0].mxu0
        %v9632 = vadd.f32 %v9471, %v9631
        %v9633 = vpop.f32.mrb[0].mxu0
        %v9634 = vpop.f32.mrb[0].mxu0
        %v9635 = vadd.f32 %v9474, %v9634
        %v9636 = vpop.f32.mrb[0].mxu0
        %9637 = vmatprep.mubr.bf16.mxu0 0
        %9638 = vmatmul.mubr.bf16.gmra.mrb[0].mxu0 %v8403
        %v9639 = vpop.f32.mrb[0].mxu0
        %v9640 = vadd.f32 %v9479, %v9639
        %v9641 = vpop.f32.mrb[0].mxu0
        %v9642 = vpop.f32.mrb[0].mxu0
        %v9643 = vadd.f32 %v9482, %v9642
        %v9644 = vpop.f32.mrb[0].mxu0
        %9645 = vmatprep.mubr.bf16.mxu0 0
        %9646 = vmatmul.mubr.bf16.gmra.mrb[0].mxu0 %v8412
        %v9647 = vpop.f32.mrb[0].mxu0
        %v9648 = vadd.f32 %v9487, %v9647
        %v9649 = vpop.f32.mrb[0].mxu0
        %v9650 = vpop.f32.mrb[0].mxu0
        %v9651 = vadd.f32 %v9490, %v9650
        %v9652 = vpop.f32.mrb[0].mxu0
        %9653 = vmatprep.mubr.bf16.mxu0 0
        %9654 = vmatmul.mubr.bf16.gmra.mrb[0].mxu0 %v8421
        %v9655 = vpop.f32.mrb[0].mxu0
        %v9656 = vadd.f32 %v9495, %v9655
        %v9657 = vpop.f32.mrb[0].mxu0
        %v9658 = vpop.f32.mrb[0].mxu0
        %v9659 = vadd.f32 %v9498, %v9658
        %v9660 = vpop.f32.mrb[0].mxu0
        %9661 = vmatprep.mubr.bf16.mxu0 0
        %9662 = vmatmul.mubr.bf16.gmra.mrb[0].mxu0 %v8430
        %v9663 = vpop.f32.mrb[0].mxu0
        %v9664 = vadd.f32 %v9503, %v9663
        %v9665 = vpop.f32.mrb[0].mxu0
        %v9666 = vpop.f32.mrb[0].mxu0
        %v9667 = vadd.f32 %v9506, %v9666
        %v9668 = vpop.f32.mrb[0].mxu0
        %9669 = vmatprep.mubr.bf16.mxu0 0
        %9670 = vmatmul.mubr.bf16.gmra.mrb[0].mxu0 %v8439
        %v9671 = vpop.f32.mrb[0].mxu0
        %v9672 = vadd.f32 %v9511, %v9671
        %v9673 = vpop.f32.mrb[0].mxu0
        %v9674 = vpop.f32.mrb[0].mxu0
        %v9675 = vadd.f32 %v9514, %v9674
        %v9676 = vpop.f32.mrb[0].mxu0
        %9677 = vmatprep.mubr.bf16.mxu0 0
        %9678 = vmatmul.mubr.bf16.gmra.mrb[0].mxu0 %v8448
        %v9679 = vpop.f32.mrb[0].mxu0
        %v9680 = vadd.f32 %v9519, %v9679
        %v9681 = vpop.f32.mrb[0].mxu0
        %v9682 = vpop.f32.mrb[0].mxu0
        %v9683 = vadd.f32 %v9522, %v9682
        %v9684 = vpop.f32.mrb[0].mxu0
        %9685 = vdwg.mxu0
        %v9687 = vlaneseq
        %v9688 = vshrl.u32 %v9687, 7
        %v9689 = vsub.s32 0, %v9688
        %v9690 = vrot.slane %v1417, %v9689
        %v9692 = vmul.f32 %v9560, %v9690
        %v9693 = vmul.f32 %v9563, %v9690
        %v9694 = vmul.f32 %v9568, %v9690
        %v9695 = vmul.f32 %v9571, %v9690
        %v9696 = vmul.f32 %v9576, %v9690
        %v9697 = vmul.f32 %v9579, %v9690
        %v9698 = vmul.f32 %v9584, %v9690
        %v9699 = vmul.f32 %v9587, %v9690
        %v9700 = vmul.f32 %v9592, %v9690
        %v9701 = vmul.f32 %v9595, %v9690
        %v9702 = vmul.f32 %v9600, %v9690
        %v9703 = vmul.f32 %v9603, %v9690
        %v9704 = vmul.f32 %v9608, %v9690
        %v9705 = vmul.f32 %v9611, %v9690
        %v9706 = vmul.f32 %v9616, %v9690
        %v9707 = vmul.f32 %v9619, %v9690
        %v9708 = vmul.f32 %v9624, %v9690
        %v9709 = vmul.f32 %v9627, %v9690
        %v9710 = vmul.f32 %v9632, %v9690
        %v9711 = vmul.f32 %v9635, %v9690
        %v9712 = vmul.f32 %v9640, %v9690
        %v9713 = vmul.f32 %v9643, %v9690
        %v9714 = vmul.f32 %v9648, %v9690
        %v9715 = vmul.f32 %v9651, %v9690
        %v9716 = vmul.f32 %v9656, %v9690
        %v9717 = vmul.f32 %v9659, %v9690
        %v9718 = vmul.f32 %v9664, %v9690
        %v9719 = vmul.f32 %v9667, %v9690
        %v9720 = vmul.f32 %v9672, %v9690
        %v9721 = vmul.f32 %v9675, %v9690
        %v9722 = vmul.f32 %v9680, %v9690
        %v9723 = vmul.f32 %v9683, %v9690
        %v9725 = vlaneseq
        %v9726 = vshrl.u32 %v9725, 7
        %v9727 = vsub.s32 0, %v9726
        %v9728 = vrot.slane %v1418, %v9727
        %v9730 = vadd.f32 %v9692, %v9728
        %v9731 = vadd.f32 %v9693, %v9728
        %v9732 = vadd.f32 %v9694, %v9728
        %v9733 = vadd.f32 %v9695, %v9728
        %v9734 = vadd.f32 %v9696, %v9728
        %v9735 = vadd.f32 %v9697, %v9728
        %v9736 = vadd.f32 %v9698, %v9728
        %v9737 = vadd.f32 %v9699, %v9728
        %v9738 = vadd.f32 %v9700, %v9728
        %v9739 = vadd.f32 %v9701, %v9728
        %v9740 = vadd.f32 %v9702, %v9728
        %v9741 = vadd.f32 %v9703, %v9728
        %v9742 = vadd.f32 %v9704, %v9728
        %v9743 = vadd.f32 %v9705, %v9728
        %v9744 = vadd.f32 %v9706, %v9728
        %v9745 = vadd.f32 %v9707, %v9728
        %v9746 = vadd.f32 %v9708, %v9728
        %v9747 = vadd.f32 %v9709, %v9728
        %v9748 = vadd.f32 %v9710, %v9728
        %v9749 = vadd.f32 %v9711, %v9728
        %v9750 = vadd.f32 %v9712, %v9728
        %v9751 = vadd.f32 %v9713, %v9728
        %v9752 = vadd.f32 %v9714, %v9728
        %v9753 = vadd.f32 %v9715, %v9728
        %v9754 = vadd.f32 %v9716, %v9728
        %v9755 = vadd.f32 %v9717, %v9728
        %v9756 = vadd.f32 %v9718, %v9728
        %v9757 = vadd.f32 %v9719, %v9728
        %v9758 = vadd.f32 %v9720, %v9728
        %v9759 = vadd.f32 %v9721, %v9728
        %v9760 = vadd.f32 %v9722, %v9728
        %v9761 = vadd.f32 %v9723, %v9728
        %vm9762 = vcmp.gt.f32.partialorder %v9730, 0.0
        %vm9763 = vcmp.gt.f32.partialorder %v9731, 0.0
        %vm9764 = vcmp.gt.f32.partialorder %v9732, 0.0
        %vm9765 = vcmp.gt.f32.partialorder %v9733, 0.0
        %vm9766 = vcmp.gt.f32.partialorder %v9734, 0.0
        %vm9767 = vcmp.gt.f32.partialorder %v9735, 0.0
        %vm9768 = vcmp.gt.f32.partialorder %v9736, 0.0
        %vm9769 = vcmp.gt.f32.partialorder %v9737, 0.0
        %vm9770 = vcmp.gt.f32.partialorder %v9738, 0.0
        %vm9771 = vcmp.gt.f32.partialorder %v9739, 0.0
        %vm9772 = vcmp.gt.f32.partialorder %v9740, 0.0
        %vm9773 = vcmp.gt.f32.partialorder %v9741, 0.0
        %vm9774 = vcmp.gt.f32.partialorder %v9742, 0.0
        %vm9775 = vcmp.gt.f32.partialorder %v9743, 0.0
        %vm9776 = vcmp.gt.f32.partialorder %v9744, 0.0
        %vm9777 = vcmp.gt.f32.partialorder %v9745, 0.0
        %vm9778 = vcmp.gt.f32.partialorder %v9746, 0.0
        %vm9779 = vcmp.gt.f32.partialorder %v9747, 0.0
        %vm9780 = vcmp.gt.f32.partialorder %v9748, 0.0
        %vm9781 = vcmp.gt.f32.partialorder %v9749, 0.0
        %vm9782 = vcmp.gt.f32.partialorder %v9750, 0.0
        %vm9783 = vcmp.gt.f32.partialorder %v9751, 0.0
        %vm9784 = vcmp.gt.f32.partialorder %v9752, 0.0
        %vm9785 = vcmp.gt.f32.partialorder %v9753, 0.0
        %vm9786 = vcmp.gt.f32.partialorder %v9754, 0.0
        %vm9787 = vcmp.gt.f32.partialorder %v9755, 0.0
        %vm9788 = vcmp.gt.f32.partialorder %v9756, 0.0
        %vm9789 = vcmp.gt.f32.partialorder %v9757, 0.0
        %vm9790 = vcmp.gt.f32.partialorder %v9758, 0.0
        %vm9791 = vcmp.gt.f32.partialorder %v9759, 0.0
        %vm9792 = vcmp.gt.f32.partialorder %v9760, 0.0
        %vm9793 = vcmp.gt.f32.partialorder %v9761, 0.0
        %v9794 = vmul.f32 %v9730, 0.01
        %v9795 = vmul.f32 %v9731, 0.01
        %v9796 = vmul.f32 %v9732, 0.01
        %v9797 = vmul.f32 %v9733, 0.01
        %v9798 = vmul.f32 %v9734, 0.01
        %v9799 = vmul.f32 %v9735, 0.01
        %v9800 = vmul.f32 %v9736, 0.01
        %v9801 = vmul.f32 %v9737, 0.01
        %v9802 = vmul.f32 %v9738, 0.01
        %v9803 = vmul.f32 %v9739, 0.01
        %v9804 = vmul.f32 %v9740, 0.01
        %v9805 = vmul.f32 %v9741, 0.01
        %v9806 = vmul.f32 %v9742, 0.01
        %v9807 = vmul.f32 %v9743, 0.01
        %v9808 = vmul.f32 %v9744, 0.01
        %v9809 = vmul.f32 %v9745, 0.01
        %v9810 = vmul.f32 %v9746, 0.01
        %v9811 = vmul.f32 %v9747, 0.01
        %v9812 = vmul.f32 %v9748, 0.01
        %v9813 = vmul.f32 %v9749, 0.01
        %v9814 = vmul.f32 %v9750, 0.01
        %v9815 = vmul.f32 %v9751, 0.01
        %v9816 = vmul.f32 %v9752, 0.01
        %v9817 = vmul.f32 %v9753, 0.01
        %v9818 = vmul.f32 %v9754, 0.01
        %v9819 = vmul.f32 %v9755, 0.01
        %v9820 = vmul.f32 %v9756, 0.01
        %v9821 = vmul.f32 %v9757, 0.01
        %v9822 = vmul.f32 %v9758, 0.01
        %v9823 = vmul.f32 %v9759, 0.01
        %v9824 = vmul.f32 %v9760, 0.01
        %v9825 = vmul.f32 %v9761, 0.01
        %v9826 = vsel %vm9762, %v9730, %v9794
        %v9827 = vsel %vm9763, %v9731, %v9795
        %v9828 = vsel %vm9764, %v9732, %v9796
        %v9829 = vsel %vm9765, %v9733, %v9797
        %v9830 = vsel %vm9766, %v9734, %v9798
        %v9831 = vsel %vm9767, %v9735, %v9799
        %v9832 = vsel %vm9768, %v9736, %v9800
        %v9833 = vsel %vm9769, %v9737, %v9801
        %v9834 = vsel %vm9770, %v9738, %v9802
        %v9835 = vsel %vm9771, %v9739, %v9803
        %v9836 = vsel %vm9772, %v9740, %v9804
        %v9837 = vsel %vm9773, %v9741, %v9805
        %v9838 = vsel %vm9774, %v9742, %v9806
        %v9839 = vsel %vm9775, %v9743, %v9807
        %v9840 = vsel %vm9776, %v9744, %v9808
        %v9841 = vsel %vm9777, %v9745, %v9809
        %v9842 = vsel %vm9778, %v9746, %v9810
        %v9843 = vsel %vm9779, %v9747, %v9811
        %v9844 = vsel %vm9780, %v9748, %v9812
        %v9845 = vsel %vm9781, %v9749, %v9813
        %v9846 = vsel %vm9782, %v9750, %v9814
        %v9847 = vsel %vm9783, %v9751, %v9815
        %v9848 = vsel %vm9784, %v9752, %v9816
        %v9849 = vsel %vm9785, %v9753, %v9817
        %v9850 = vsel %vm9786, %v9754, %v9818
        %v9851 = vsel %vm9787, %v9755, %v9819
        %v9852 = vsel %vm9788, %v9756, %v9820
        %v9853 = vsel %vm9789, %v9757, %v9821
        %v9854 = vsel %vm9790, %v9758, %v9822
        %v9855 = vsel %vm9791, %v9759, %v9823
        %v9856 = vsel %vm9792, %v9760, %v9824
        %v9857 = vsel %vm9793, %v9761, %v9825
        %v9858 = vld [vmem:[%s287] sm:$0xff]
        %v9859 = vld [vmem:[%s287 + $0x8] sm:$0xff]
        %v9860 = vld [vmem:[%s287 + $0x10] sm:$0xff]
        %v9861 = vld [vmem:[%s287 + $0x18] sm:$0xff]
        %v9862 = vld [vmem:[%s287 + $0x20] sm:$0xff]
        %v9863 = vld [vmem:[%s287 + $0x28] sm:$0xff]
        %v9864 = vld [vmem:[%s287 + $0x30] sm:$0xff]
        %v9865 = vld [vmem:[%s287 + $0x38] sm:$0xff]
        %v9866 = vld [vmem:[%s287 + $0x40] sm:$0xff]
        %v9867 = vld [vmem:[%s287 + $0x48] sm:$0xff]
        %v9868 = vld [vmem:[%s287 + $0x50] sm:$0xff]
        %v9869 = vld [vmem:[%s287 + $0x58] sm:$0xff]
        %v9870 = vld [vmem:[%s287 + $0x60] sm:$0xff]
        %v9871 = vld [vmem:[%s287 + $0x68] sm:$0xff]
        %v9872 = vld [vmem:[%s287 + $0x70] sm:$0xff]
        %v9873 = vld [vmem:[%s287 + $0x78] sm:$0xff]
        %v9874 = vld [vmem:[%s287 + $0x80] sm:$0xff]
        %v9875 = vld [vmem:[%s287 + $0x88] sm:$0xff]
        %v9876 = vld [vmem:[%s287 + $0x90] sm:$0xff]
        %v9877 = vld [vmem:[%s287 + $0x98] sm:$0xff]
        %v9878 = vld [vmem:[%s287 + $0xa0] sm:$0xff]
        %v9879 = vld [vmem:[%s287 + $0xa8] sm:$0xff]
        %v9880 = vld [vmem:[%s287 + $0xb0] sm:$0xff]
        %v9881 = vld [vmem:[%s287 + $0xb8] sm:$0xff]
        %v9882 = vld [vmem:[%s287 + $0xc0] sm:$0xff]
        %v9883 = vld [vmem:[%s287 + $0xc8] sm:$0xff]
        %v9884 = vld [vmem:[%s287 + $0xd0] sm:$0xff]
        %v9885 = vld [vmem:[%s287 + $0xd8] sm:$0xff]
        %v9886 = vld [vmem:[%s287 + $0xe0] sm:$0xff]
        %v9887 = vld [vmem:[%s287 + $0xe8] sm:$0xff]
        %v9888 = vld [vmem:[%s287 + $0xf0] sm:$0xff]
        %v9889 = vld [vmem:[%s287 + $0xf8] sm:$0xff]
        %v9890 = vadd.f32 %v9858, %v9826
        %v9891 = vadd.f32 %v9859, %v9827
        %v9892 = vadd.f32 %v9860, %v9828
        %v9893 = vadd.f32 %v9861, %v9829
        %v9894 = vadd.f32 %v9862, %v9830
        %v9895 = vadd.f32 %v9863, %v9831
        %v9896 = vadd.f32 %v9864, %v9832
        %v9897 = vadd.f32 %v9865, %v9833
        %v9898 = vadd.f32 %v9866, %v9834
        %v9899 = vadd.f32 %v9867, %v9835
        %v9900 = vadd.f32 %v9868, %v9836
        %v9901 = vadd.f32 %v9869, %v9837
        %v9902 = vadd.f32 %v9870, %v9838
        %v9903 = vadd.f32 %v9871, %v9839
        %v9904 = vadd.f32 %v9872, %v9840
        %v9905 = vadd.f32 %v9873, %v9841
        %v9906 = vadd.f32 %v9874, %v9842
        %v9907 = vadd.f32 %v9875, %v9843
        %v9908 = vadd.f32 %v9876, %v9844
        %v9909 = vadd.f32 %v9877, %v9845
        %v9910 = vadd.f32 %v9878, %v9846
        %v9911 = vadd.f32 %v9879, %v9847
        %v9912 = vadd.f32 %v9880, %v9848
        %v9913 = vadd.f32 %v9881, %v9849
        %v9914 = vadd.f32 %v9882, %v9850
        %v9915 = vadd.f32 %v9883, %v9851
        %v9916 = vadd.f32 %v9884, %v9852
        %v9917 = vadd.f32 %v9885, %v9853
        %v9918 = vadd.f32 %v9886, %v9854
        %v9919 = vadd.f32 %v9887, %v9855
        %v9920 = vadd.f32 %v9888, %v9856
        %v9921 = vadd.f32 %v9889, %v9857
        %9922 = vst [vmem:[%s325] sm:$0xff] %v9890
        %9923 = vst [vmem:[%s325 + $0x8] sm:$0xff] %v9891
        %9924 = vst [vmem:[%s325 + $0x10] sm:$0xff] %v9892
        %9925 = vst [vmem:[%s325 + $0x18] sm:$0xff] %v9893
        %9926 = vst [vmem:[%s325 + $0x20] sm:$0xff] %v9894
        %9927 = vst [vmem:[%s325 + $0x28] sm:$0xff] %v9895
        %9928 = vst [vmem:[%s325 + $0x30] sm:$0xff] %v9896
        %9929 = vst [vmem:[%s325 + $0x38] sm:$0xff] %v9897
        %9930 = vst [vmem:[%s325 + $0x40] sm:$0xff] %v9898
        %9931 = vst [vmem:[%s325 + $0x48] sm:$0xff] %v9899
        %9932 = vst [vmem:[%s325 + $0x50] sm:$0xff] %v9900
        %9933 = vst [vmem:[%s325 + $0x58] sm:$0xff] %v9901
        %9934 = vst [vmem:[%s325 + $0x60] sm:$0xff] %v9902
        %9935 = vst [vmem:[%s325 + $0x68] sm:$0xff] %v9903
        %9936 = vst [vmem:[%s325 + $0x70] sm:$0xff] %v9904
        %9937 = vst [vmem:[%s325 + $0x78] sm:$0xff] %v9905
        %9938 = vst [vmem:[%s325 + $0x80] sm:$0xff] %v9906
        %9939 = vst [vmem:[%s325 + $0x88] sm:$0xff] %v9907
        %9940 = vst [vmem:[%s325 + $0x90] sm:$0xff] %v9908
        %9941 = vst [vmem:[%s325 + $0x98] sm:$0xff] %v9909
        %9942 = vst [vmem:[%s325 + $0xa0] sm:$0xff] %v9910
        %9943 = vst [vmem:[%s325 + $0xa8] sm:$0xff] %v9911
        %9944 = vst [vmem:[%s325 + $0xb0] sm:$0xff] %v9912
        %9945 = vst [vmem:[%s325 + $0xb8] sm:$0xff] %v9913
        %9946 = vst [vmem:[%s325 + $0xc0] sm:$0xff] %v9914
        %9947 = vst [vmem:[%s325 + $0xc8] sm:$0xff] %v9915
        %9948 = vst [vmem:[%s325 + $0xd0] sm:$0xff] %v9916
        %9949 = vst [vmem:[%s325 + $0xd8] sm:$0xff] %v9917
        %9950 = vst [vmem:[%s325 + $0xe0] sm:$0xff] %v9918
        %9951 = vst [vmem:[%s325 + $0xe8] sm:$0xff] %v9919
        %9952 = vst [vmem:[%s325 + $0xf0] sm:$0xff] %v9920
        %9953 = vst [vmem:[%s325 + $0xf8] sm:$0xff] %v9921
        %s9954 = sand.u32 %s185, 1
        %s9955 = scalar_lea.sflag [#allocation7], %s9954
        %s9956 = sand.u32 %s185, 1
        %s9957 = smul.addr %s9956, 256
        %s9958 = scalar_lea.vmem [#allocation11], %s9957
        // Predicated region
        $region61: #{tpu_custom_call.1} parent=47 // pred_check
          %p9959 = pneg %p195
        $region62: #{tpu_custom_call.1} parent=47 // pred_check_branch
          %9961 = sbr.rel (%p9959) target = $region64
        $region63: #{tpu_custom_call.1} parent=47 // pred_region
          %s9963 = ssub.s32 4096, 4096
          %9964 = vsyncadd %s9955, %s9963
          %s9965 = smul.addr %s25, 32
          %s9966 = smul.addr %s9965, 128
          %s9967 = scalar_lea.hbm %s7, %s9966
          %s9968 = sshll.u32 %s9958, 4
          %s9969 = int_to_ptr.vmem [resolvable:$true] %s9968
          %9974 = dma.vmem_to_hbm [thread:$0]  %s9969, 4096, %s9967, %s9955, 128, 128, 8
        $region64: #{tpu_custom_call.1} parent=47 // pred_fallthru
          _
      $region48: #{tpu_custom_call.1} parent=5 // pred_fallthru
        _
      %p9975 = scmp.le.s32.totalorder 2, %s20
      // Predicated region
      $region65: #{tpu_custom_call.1} parent=5 // pred_check
        %p9976 = pneg %p9975
      $region66: #{tpu_custom_call.1} parent=5 // pred_check_branch
        %9978 = sbr.rel (%p9976) target = $region68
      $region67: #{tpu_custom_call.1} parent=5 // pred_region
        %s9979 = ssub.s32 %s20, 2
        // Predicated region
        $region69: #{tpu_custom_call.1} parent=67 // pred_check
          %p9980 = pneg %p201
        $region70: #{tpu_custom_call.1} parent=67 // pred_check_branch
          %9982 = sbr.rel (%p9980) target = $region72
        $region71: #{tpu_custom_call.1} parent=67 // pred_region
          %s9983 = sand.u32 %s186, 1
          %s9984 = scalar_lea.sflag [#allocation7], %s9983
          %s9985 = sand.u32 %s186, 1
          %s9986 = smul.addr %s9985, 256
          %s9987 = scalar_lea.vmem [#allocation11], %s9986
          %9988 = dma.done %s9984, 4096
        $region72: #{tpu_custom_call.1} parent=67 // pred_fallthru
          _
      $region68: #{tpu_custom_call.1} parent=5 // pred_fallthru
        _
    $region6: #{tpu_custom_call.1} parent=1 // loop_footer
      %s24 = sadd.s32 1, %s20
    $region7: #{tpu_custom_call.1} parent=1 // loop_footer_branch
      %19 = sbr.rel target = $region3
    $region8: #{tpu_custom_call.1} parent=1 // loop_exit
      _
    %9989 = vsyncpa [#allocation6], 1
    %s9990 = scalar_lea.sflag [#allocation6], 1
    %9991 = vsyncpa %s9990, 1
    %9992 = vsyncpa [#allocation9], 1
    %9993 = vsyncpa [#allocation7], 1
    %s9994 = scalar_lea.sflag [#allocation7], 1
    %9995 = vsyncpa %s9994, 1

</llo_original>
